<compile_context>
chip_gen: v7x
topology: tpu7x:2x2x1
jax: 0.10.0
libtpu: 0.0.40
codegen_flags: <defaults>
</compile_context>

<pallas_src>
import jax
import jax.numpy as jnp
from jax import lax
from jax.experimental import pallas as pl
from jax.experimental.pallas import tpu as pltpu

# Matmul tile preferences (working set stays ~6 MiB -> safe on v5e/v6e/v7x).
TM_PREF = 512                     # rows  (M = N*H*W)
TK_PREF = 512                     # reduction
VMEM_LIMIT_BYTES = 32 * 1024 * 1024

# small config used in __main__ (same op structure as densenet121)
SMALL_CONFIG = dict(growth=8, init_features=16, block_config=(2, 2, 2, 2), bn_size=4)
DENSENET121_CONFIG = dict(growth=32, init_features=64, block_config=(6, 12, 24, 16), bn_size=4)

# Only split row tiles for megacore when the chip actually has 2 TensorCores.
try:
    _KIND = jax.devices()[0].device_kind.lower()
    _TC_PER_CHIP = 2 if ("v7" in _KIND or "7x" in _KIND) else 1
except Exception:   # pragma: no cover - be conservative if detection fails
    _TC_PER_CHIP = 1


# ----------------------------------------------------------------------------
# small static helpers (trace-time only)
# ----------------------------------------------------------------------------
def _round_up(x, m):
    return (x + m - 1) // m * m


def _pad_axis(x, mult, axis):
    pad = (-x.shape[axis]) % mult
    if pad == 0:
        return x
    cfg = [(0, 0)] * x.ndim
    cfg[axis] = (0, pad)
    return jnp.pad(x, cfg)


def _pad_dim_to(x, size, axis=0):
    if x.shape[axis] == size:
        return x
    cfg = [(0, 0)] * x.ndim
    cfg[axis] = (0, size - x.shape[axis])
    return jnp.pad(x, cfg)


def _pad_vec_to(v, n):
    return v if v.shape[0] == n else jnp.pad(v, (0, n - v.shape[0]))


def _pick_row_tile(d, pref=TM_PREF):
    """Row (second-minor) tile: multiple of 16 (bf16-friendly sublanes); prefers
    an exact divisor of d so big operands never need a padding copy.  Splits in
    two only on 2-TensorCore chips (v7x) so both cores see >= 2 blocks."""
    if d <= pref:
        d16 = _round_up(d, 16)
        if _TC_PER_CHIP > 1 and d16 >= 256 and d16 % 32 == 0:
            return d16 // 2
        return d16
    t = pref
    while t >= 16:
        if t % 16 == 0 and d % t == 0:
            return t
        t -= 16
    return pref                     # caller pads rows


def _pick_lane_tile(d):
    """Lane (minor) tile for N: never below 128 (lane-dense stores); single
    tile up to 512 so transition convs read the A slab exactly once."""
    if d <= 512:
        return max(128, _round_up(d, 128))
    dr = _round_up(d, 128)
    t = 512
    while t > 128 and dr % t != 0:
        t -= 128
    return t


def _pick_k_tile(kb, pref=TK_PREF):
    """Reduction tile for the generic (Ka == Kb) matmul path."""
    k8 = _round_up(kb, 8)
    if k8 <= pref:
        return k8
    kr = _round_up(kb, 128)
    t = pref - pref % 128
    while t >= 128:
        if kr % t == 0:
            return t
        t -= 128
    return 128


# ----------------------------------------------------------------------------
# Pallas kernels
# ----------------------------------------------------------------------------
def _make_matmul_kernel(pre, post):
    """(bf16 BN+ReLU prologue) -> bf16 MXU matmul (f32 VMEM accumulator) ->
    (f32 BN+ReLU epilogue) -> single bf16 store at the last K step."""

    def kernel(*refs):
        idx = 0
        a_ref = refs[idx]; idx += 1
        b_ref = refs[idx]; idx += 1
        if pre:
            ps_ref, pb_ref = refs[idx], refs[idx + 1]; idx += 2
        if post:
            qs_ref, qb_ref = refs[idx], refs[idx + 1]; idx += 2
        o_ref, acc_ref = refs[idx], refs[idx + 1]

        k = pl.program_id(2)

        @pl.when(k == 0)
        def _init():
            acc_ref[...] = jnp.zeros_like(acc_ref)

        a = a_ref[...]
        if pre:
            # fused eval-BatchNorm + ReLU prologue computed in bf16 on the bf16
            # activation tile (only the tiny (1, tk) vectors get cast).
            ps = ps_ref[...].astype(jnp.bfloat16)
            pb = pb_ref[...].astype(jnp.bfloat16)
            a = jnp.maximum(a * ps + pb, 0).astype(jnp.bfloat16)
        acc_ref[...] += jnp.dot(a, b_ref[...], preferred_element_type=jnp.float32)

        @pl.when(k == pl.num_programs(2) - 1)
        def _fin():
            r = acc_ref[...]
            if post:
                # fused eval-BatchNorm + ReLU epilogue on the f32 accumulator.
                r = jnp.maximum(r * qs_ref[...] + qb_ref[...], 0.0)
            o_ref[...] = r.astype(o_ref.dtype)

    return kernel


def _make_gap_kernel(inv_hw):
    """Fused norm5 (+ReLU) + global average pool: reads the bf16 feature slab
    once and emits only the (1, 1, C) pooled row per image."""

    def kernel(x_ref, s_ref, t_ref, o_ref):
        x = x_ref[...].astype(jnp.float32)                       # (1, hw, C)
        y = jnp.maximum(x * s_ref[...] + t_ref[...], 0.0)
        o_ref[...] = jnp.sum(y, axis=1, keepdims=True) * inv_hw  # (1, 1, C)

    return kernel


# ----------------------------------------------------------------------------
# Pallas wrappers
# ----------------------------------------------------------------------------
def fused_matmul(a, b, pre=None, post=None, out_dtype=jnp.bfloat16):
    """out = post_bn_relu( pre_bn_relu(a)[:, :Kb] @ b ),  f32 accumulation,
    bf16 output by default.

    a    : (M, Ka) bf16 activations.  Ka >= Kb; only the first Kb columns take
           part in the reduction (Ka > Kb is the dense-feature-buffer path:
           not-yet-written channels are simply skipped by the K grid).
    b    : (Kb, N) bf16 weight matrix (pre-reshaped / 128-row-padded).
    pre  : optional (scale, shift), each (Kb,)  -> relu(a*scale+shift) prologue.
    post : optional (scale, shift), each (N,)   -> relu(out*scale+shift) epilogue.
    """
    M, Ka = a.shape
    Kb, N = b.shape
    assert Ka >= Kb, (Ka, Kb)

    tm = _pick_row_tile(M)
    tn = _pick_lane_tile(N)
    if Ka == Kb:
        tk = _pick_k_tile(Kb)
        a_p = _pad_axis(_pad_axis(a, tm, 0), tk, 1)
        b_p = _pad_axis(b, tk, 0)
    else:
        # Dense-buffer path: the K grid never addresses A beyond Kb, so tk only
        # has to divide Kb -> let it grow toward TK_PREF.
        assert Kb % 128 == 0, Kb
        tk = 128
        while tk * 2 <= TK_PREF and Kb % (tk * 2) == 0:
            tk *= 2
        a_p = _pad_axis(a, tm, 0)
        b_p = b
    b_p = _pad_axis(b_p, tn, 1)

    Mp, Kp, Np = a_p.shape[0], b_p.shape[0], b_p.shape[1]

    inputs = [a_p, b_p]
    in_specs = [pl.BlockSpec((tm, tk), lambda i, j, k: (i, k)),
                pl.BlockSpec((tk, tn), lambda i, j, k: (k, j))]
    if pre is not None:
        ps = _pad_axis(pre[0].reshape(1, -1).astype(jnp.float32), tk, 1)
        pb = _pad_axis(pre[1].reshape(1, -1).astype(jnp.float32), tk, 1)
        inputs += [ps, pb]
        in_specs += [pl.BlockSpec((1, tk), lambda i, j, k: (0, k)),
                     pl.BlockSpec((1, tk), lambda i, j, k: (0, k))]
    if post is not None:
        qs = _pad_axis(post[0].reshape(1, -1).astype(jnp.float32), tn, 1)
        qb = _pad_axis(post[1].reshape(1, -1).astype(jnp.float32), tn, 1)
        inputs += [qs, qb]
        in_specs += [pl.BlockSpec((1, tn), lambda i, j, k: (0, j)),
                     pl.BlockSpec((1, tn), lambda i, j, k: (0, j))]

    out = pl.pallas_call(
        _make_matmul_kernel(pre is not None, post is not None),
        out_shape=jax.ShapeDtypeStruct((Mp, Np), out_dtype),
        grid=(Mp // tm, Np // tn, Kp // tk),
        in_specs=in_specs,
        out_specs=pl.BlockSpec((tm, tn), lambda i, j, k: (i, j)),
        scratch_shapes=[pltpu.VMEM((tm, tn), jnp.float32)],
        compiler_params=pltpu.CompilerParams(
            dimension_semantics=("parallel", "parallel", "arbitrary"),
            vmem_limit_bytes=VMEM_LIMIT_BYTES),
    )(*inputs)
    if Mp != M or Np != N:
        out = out[:M, :N]
    return out


def pallas_bn_relu_gap(x_nhwc, scale, shift):
    """pooled[n, c] = mean_{h,w} relu(x[n,h,w,c]*scale[c]+shift[c]); one grid
    step per image, the (M, C) post-norm slab never touches HBM."""
    n, h, w, c = x_nhwc.shape
    hw = h * w
    xr = x_nhwc.reshape(n, hw, c)
    s = scale.reshape(1, c).astype(jnp.float32)
    t = shift.reshape(1, c).astype(jnp.float32)
    out = pl.pallas_call(
        _make_gap_kernel(1.0 / hw),
        out_shape=jax.ShapeDtypeStruct((n, 1, c), jnp.float32),
        grid=(n,),
        in_specs=[pl.BlockSpec((1, hw, c), lambda i: (i, 0, 0)),
                  pl.BlockSpec((1, c), lambda i: (0, 0)),
                  pl.BlockSpec((1, c), lambda i: (0, 0))],
        out_specs=pl.BlockSpec((1, 1, c), lambda i: (i, 0, 0)),
        compiler_params=pltpu.CompilerParams(
            dimension_semantics=("parallel",),
            vmem_limit_bytes=VMEM_LIMIT_BYTES),
    )(xr, s, t)
    return out.reshape(n, c)


# ----------------------------------------------------------------------------
# conv / pooling glue (runs fused inside the single jax.jit)
# ----------------------------------------------------------------------------
def conv2d_im2col(x, w_mat, kh, kw, *, stride, padding, post=None):
    """Convolution via bf16 im2col + fused Pallas matmul.
    x: (N,H,W,Cin) bf16; w_mat: (round_up(kh*kw*Cin, 128), Cout) bf16.
    The lane-alignment zero padding of K is folded into the same concatenate.
    TODO(synk): replace im2col with a tap-accumulation grid axis (direct conv)."""
    n, h, w_, cin = x.shape
    hout = (h + 2 * padding - kh) // stride + 1
    wout = (w_ + 2 * padding - kw) // stride + 1
    xp = jnp.pad(x, ((0, 0), (padding, padding), (padding, padding), (0, 0)))
    cols = [xp[:, i:i + stride * hout:stride, j:j + stride * wout:stride, :]
            for i in range(kh) for j in range(kw)]
    kc = kh * kw * cin
    kp = w_mat.shape[0]
    assert kp >= kc, (kp, kc)
    if kp > kc:
        cols.append(jnp.zeros((n, hout, wout, kp - kc), x.dtype))
    patches = jnp.concatenate(cols, axis=-1).astype(jnp.bfloat16)
    a = patches.reshape(n * hout * wout, kp)
    y = fused_matmul(a, w_mat, post=post)
    return y.reshape(n, hout, wout, -1)


def maxpool_3x3_s2_p1(x):
    n, h, w, c = x.shape
    xp = jnp.pad(x, ((0, 0), (1, 1), (1, 1), (0, 0)), constant_values=-jnp.inf)
    hout = (h + 2 - 3) // 2 + 1
    wout = (w + 2 - 3) // 2 + 1
    out = None
    for i in range(3):
        for j in range(3):
            s = xp[:, i:i + 2 * hout:2, j:j + 2 * wout:2, :]
            out = s if out is None else jnp.maximum(out, s)
    return out


def avgpool_2x2_s2(x):
    # PyTorch AvgPool2d(2, 2) floors odd spatial sizes.
    n, h, w, c = x.shape
    hc, wc = (h // 2) * 2, (w // 2) * 2
    x = x[:, :hc, :wc, :]
    return x.reshape(n, hc // 2, 2, wc // 2, 2, c).mean(axis=(2, 4))


# ----------------------------------------------------------------------------
# Deterministic parameter init (synthetic, PyTorch weight layouts)
# ----------------------------------------------------------------------------
def _conv_w(key, cout, cin, kh, kw):
    std = (2.0 / (cin * kh * kw)) ** 0.5
    return std * jax.random.normal(key, (cout, cin, kh, kw), jnp.float32)


def _bn_params(key, c):
    k1, k2, k3, k4 = jax.random.split(key, 4)
    gamma = 1.0 + 0.1 * jax.random.normal(k1, (c,), jnp.float32)
    beta = 0.1 * jax.random.normal(k2, (c,), jnp.float32)
    mean = 0.1 * jax.random.normal(k3, (c,), jnp.float32)
    var = 1.0 + 0.1 * jnp.abs(jax.random.normal(k4, (c,), jnp.float32))
    return (gamma, beta, mean, var)


def init_densenet_params(key, num_classes, *, growth, init_features, block_config, bn_size):
    keys = iter(jax.random.split(key, 4096))
    p = {}
    p["conv0"] = _conv_w(next(keys), init_features, 3, 7, 7)
    p["norm0"] = _bn_params(next(keys), init_features)
    feat = init_features
    blocks = []
    for bi, nlayers in enumerate(block_config):
        layers = []
        for _ in range(nlayers):
            layers.append({
                "norm1": _bn_params(next(keys), feat),
                "conv1": _conv_w(next(keys), bn_size * growth, feat, 1, 1),
                "norm2": _bn_params(next(keys), bn_size * growth),
                "conv2": _conv_w(next(keys), growth, bn_size * growth, 3, 3),
            })
            feat += growth
        block = {"layers": layers}
        if bi != len(block_config) - 1:
            block["trans_norm"] = _bn_params(next(keys), feat)
            block["trans_conv"] = _conv_w(next(keys), feat // 2, feat, 1, 1)
            feat = feat // 2
        blocks.append(block)
    p["blocks"] = blocks
    p["norm5"] = _bn_params(next(keys), feat)
    # fresh classifier (the finetuned Linear in DenseNetFinetune)
    p["cls_w"] = 0.05 * jax.random.normal(next(keys), (num_classes, feat), jnp.float32)
    p["cls_b"] = jnp.zeros((num_classes,), jnp.float32)
    return p


# ----------------------------------------------------------------------------
# One-time parameter preprocessing (hoisted out of the forward pass)
# ----------------------------------------------------------------------------
def _fold_bn(bn, eps=1e-5):
    gamma, beta, mean, var = bn
    scale = gamma * lax.rsqrt(var + eps)
    shift = beta - mean * scale
    return scale.astype(jnp.float32), shift.astype(jnp.float32)


def _w_to_mat(w):
    """PyTorch conv weight (Cout, Cin, kh, kw) -> im2col matrix, rows zero-
    padded up to a multiple of 128 (lane-aligned K), bf16."""
    cout = w.shape[0]
    m = jnp.transpose(w, (2, 3, 1, 0)).reshape(-1, cout).astype(jnp.bfloat16)
    return _pad_dim_to(m, _round_up(m.shape[0], 128), 0)


def preprocess_params(p, eps=1e-5):
    """Convert PyTorch-layout parameters into Pallas-friendly operands: bf16
    128-row-padded im2col weight matrices and eval-BatchNorm folded to
    (scale, shift) vectors."""
    pp = {}
    pp["conv0_w"] = _w_to_mat(p["conv0"])                         # K: 147 -> 256
    s0, b0 = _fold_bn(p["norm0"], eps)
    pp["conv0_post_s"], pp["conv0_post_b"] = s0, b0               # norm0+ReLU as conv0 epilogue

    feat = p["conv0"].shape[0]
    blocks = []
    for blk in p["blocks"]:
        layers = []
        for layer in blk["layers"]:
            w1 = _w_to_mat(layer["conv1"])                        # (round_up(feat,128), bn*growth)
            s1, b1 = _fold_bn(layer["norm1"], eps)                # prologue of the 1x1 conv
            s2, b2 = _fold_bn(layer["norm2"], eps)                # epilogue of the 1x1 conv
            layers.append(dict(
                w1=w1,
                pre1_s=_pad_vec_to(s1, w1.shape[0]),
                pre1_b=_pad_vec_to(b1, w1.shape[0]),
                post1_s=s2, post1_b=b2,
                w2=_w_to_mat(layer["conv2"]),
            ))
            feat += layer["conv2"].shape[0]
        bpp = {"layers": layers}
        if "trans_conv" in blk:
            wt = _w_to_mat(blk["trans_conv"])
            st, bt = _fold_bn(blk["trans_norm"], eps)             # prologue of transition conv
            bpp["trans_w"] = wt
            bpp["trans_pre_s"] = _pad_vec_to(st, wt.shape[0])
            bpp["trans_pre_b"] = _pad_vec_to(bt, wt.shape[0])
            feat = blk["trans_conv"].shape[0]
        blocks.append(bpp)
    pp["blocks"] = blocks

    c_last = _round_up(feat, 128)
    s5, b5 = _fold_bn(p["norm5"], eps)
    pp["norm5_s"] = _pad_vec_to(s5, c_last)
    pp["norm5_b"] = _pad_vec_to(b5, c_last)
    # fresh classifier of DenseNetFinetune: tiny matmul, left to plain XLA.
    pp["cls_w"] = _pad_dim_to(p["cls_w"].T.astype(jnp.float32), c_last, 0)
    pp["cls_b"] = p["cls_b"].astype(jnp.float32)
    return pp


# ----------------------------------------------------------------------------
# Forward pass (== DenseNetFinetune.forward == torchvision DenseNet, eval mode)
# ----------------------------------------------------------------------------
def densenet_finetune_forward(params, x_nchw):
    x = jnp.transpose(x_nchw, (0, 2, 3, 1)).astype(jnp.bfloat16)     # NCHW -> NHWC bf16

    # stem: conv0 (7x7/2) with fused norm0+ReLU epilogue, then 3x3/2 maxpool
    x = conv2d_im2col(x, params["conv0_w"], 7, 7, stride=2, padding=3,
                      post=(params["conv0_post_s"], params["conv0_post_b"]))
    x = maxpool_3x3_s2_p1(x)

    for blk in params["blocks"]:
        n, h, w, c_in = x.shape
        m = n * h * w
        growth_sum = sum(l["w2"].shape[1] for l in blk["layers"])
        c_buf = _round_up(c_in + growth_sum, 128)
        # Dense connectivity without per-layer concat: one bf16 channel buffer
        # per block, written in place; the 1x1 convs read only the valid
        # channel prefix (their K grid stops at the 128-padded weight length).
        buf = jnp.pad(x, ((0, 0), (0, 0), (0, 0), (0, c_buf - c_in)))
        c = c_in
        for layer in blk["layers"]:
            a = buf.reshape(m, c_buf)
            # 1x1 bottleneck conv: norm1+ReLU prologue, norm2+ReLU epilogue fused.
            y1 = fused_matmul(a, layer["w1"],
                              pre=(layer["pre1_s"], layer["pre1_b"]),
                              post=(layer["post1_s"], layer["post1_b"]))
            y1 = y1.reshape(n, h, w, -1)
            # 3x3 conv producing `growth` new channels (bf16 straight from Pallas).
            y2 = conv2d_im2col(y1, layer["w2"], 3, 3, stride=1, padding=1)
            # TODO(synk): write y2 in place via input_output_aliases with a
            #             128-aligned channel slot instead of this DUS copy.
            buf = lax.dynamic_update_slice(buf, y2, (0, 0, 0, c))
            c += y2.shape[-1]
        if "trans_w" in blk:
            # transition: norm+ReLU prologue fused into the 1x1 conv, then 2x2 avgpool
            t = fused_matmul(buf.reshape(m, c_buf), blk["trans_w"],
                             pre=(blk["trans_pre_s"], blk["trans_pre_b"]))
            x = avgpool_2x2_s2(t.reshape(n, h, w, -1))
        else:
            x = buf

    # fused norm5+ReLU+global-average-pool (Pallas), then fresh Linear classifier.
    pooled = pallas_bn_relu_gap(x, params["norm5_s"], params["norm5_b"])
    # padded / never-written channels carry zero scale and zero classifier rows.
    return jnp.dot(pooled, params["cls_w"]) + params["cls_b"][None, :]


# ----------------------------------------------------------------------------
if __name__ == "__main__":
    key = jax.random.PRNGKey(0)
    pkey, xkey = jax.random.split(key)

    num_classes = 10
    raw_params = init_densenet_params(pkey, num_classes, **SMALL_CONFIG)
    params = preprocess_params(raw_params)       # one-time layout / BN folding

    # PyTorch-convention NCHW input, small spatial size for a quick run.
    x = jax.random.normal(xkey, (2, 3, 32, 32), jnp.float32)

    fwd = jax.jit(densenet_finetune_forward)
    logits = fwd(params, x)
    jax.block_until_ready(logits)

    assert logits.shape == (2, num_classes), logits.shape
    assert logits.dtype == jnp.float32
    assert bool(jnp.all(jnp.isfinite(logits)))
    print("KERNEL_OK")
</pallas_src>

<mosaic_0001>
module attributes {stable_mosaic.version = 11 : i64} {
  func.func @kernel(%arg0: i32, %arg1: i32, %arg2: i32, %arg3: memref<512x256xbf16, #tpu.memory_space<vmem>>, %arg4: memref<256x128xbf16, #tpu.memory_space<vmem>>, %arg5: memref<1x128xf32, #tpu.memory_space<vmem>>, %arg6: memref<1x128xf32, #tpu.memory_space<vmem>>, %arg7: memref<512x128xbf16, #tpu.memory_space<vmem>>, %arg8: memref<512x128xf32, #tpu.memory_space<vmem>>) attributes {dimension_semantics = [#tpu.dimension_semantics<parallel>, #tpu.dimension_semantics<parallel>, #tpu.dimension_semantics<arbitrary>], iteration_bounds = array<i64: 1, 1, 1>, scalar_prefetch = 0 : i64, scratch_operands = 1 : i64, tpu.core_type = #tpu.core_type<tc>, window_params = [{transform_indices = @transform_0, window_bounds = array<i64: 512, 256>}, {transform_indices = @transform_1, window_bounds = array<i64: 256, 128>}, {transform_indices = @transform_2, window_bounds = array<i64: 1, 128>}, {transform_indices = @transform_3, window_bounds = array<i64: 1, 128>}, {transform_indices = @transform_4, window_bounds = array<i64: 512, 128>}]} {
    %c0_i32 = arith.constant 0 : i32
    %0 = arith.cmpi eq, %arg2, %c0_i32 : i32
    %1 = arith.extui %0 : i1 to i32
    %c0_i32_0 = arith.constant 0 : i32
    %2 = arith.cmpi ne, %1, %c0_i32_0 : i32
    scf.if %2 {
      %cst_10 = arith.constant 0.000000e+00 : f32
      %12 = vector.broadcast %cst_10 : f32 to vector<512x128xf32>
      %c0_11 = arith.constant 0 : index
      %c0_12 = arith.constant 0 : index
      %13 = vector.load %arg8[%c0_11, %c0_12] : memref<512x128xf32, #tpu.memory_space<vmem>>, vector<512x128xf32>
      tpu.vector_store %arg8[%c0_11, %c0_12], %12 {strides = array<i32>} : memref<512x128xf32, #tpu.memory_space<vmem>>, vector<512x128xf32>,
    } else {
    }
    %c0 = arith.constant 0 : index
    %c0_1 = arith.constant 0 : index
    %3 = vector.load %arg3[%c0, %c0_1] : memref<512x256xbf16, #tpu.memory_space<vmem>>, vector<512x256xbf16>
    %c0_2 = arith.constant 0 : index
    %c0_3 = arith.constant 0 : index
    %4 = vector.load %arg8[%c0_2, %c0_3] : memref<512x128xf32, #tpu.memory_space<vmem>>, vector<512x128xf32>
    %c0_4 = arith.constant 0 : index
    %c0_5 = arith.constant 0 : index
    %5 = vector.load %arg4[%c0_4, %c0_5] : memref<256x128xbf16, #tpu.memory_space<vmem>>, vector<256x128xbf16>
    %cst = arith.constant dense<0.000000e+00> : vector<512x128xf32>
    %6 = tpu.matmul %3, %5, %cst {dimension_numbers = #tpu.dot_dimension_numbers<[1], [0], [0], [1], [0, 0, 1, 1], [], []>} : vector<512x256xbf16>, vector<256x128xbf16>, vector<512x128xf32> -> vector<512x128xf32>
    %7 = arith.addf %4, %6 : vector<512x128xf32>
    %c0_6 = arith.constant 0 : index
    %c0_7 = arith.constant 0 : index
    %8 = vector.load %arg8[%c0_6, %c0_7] : memref<512x128xf32, #tpu.memory_space<vmem>>, vector<512x128xf32>
    tpu.vector_store %arg8[%c0_6, %c0_7], %7 {strides = array<i32>} : memref<512x128xf32, #tpu.memory_space<vmem>>, vector<512x128xf32>,
    %c0_i32_8 = arith.constant 0 : i32
    %9 = arith.cmpi eq, %arg2, %c0_i32_8 : i32
    %10 = arith.extui %9 : i1 to i32
    %c0_i32_9 = arith.constant 0 : i32
    %11 = arith.cmpi ne, %10, %c0_i32_9 : i32
    scf.if %11 {
      %c0_10 = arith.constant 0 : index
      %c0_11 = arith.constant 0 : index
      %12 = vector.load %arg8[%c0_10, %c0_11] : memref<512x128xf32, #tpu.memory_space<vmem>>, vector<512x128xf32>
      %c0_12 = arith.constant 0 : index
      %c0_13 = arith.constant 0 : index
      %13 = vector.load %arg5[%c0_12, %c0_13] : memref<1x128xf32, #tpu.memory_space<vmem>>, vector<1x128xf32>
      %14 = vector.broadcast %13 : vector<1x128xf32> to vector<512x128xf32>
      %15 = arith.mulf %12, %14 : vector<512x128xf32>
      %c0_14 = arith.constant 0 : index
      %c0_15 = arith.constant 0 : index
      %16 = vector.load %arg6[%c0_14, %c0_15] : memref<1x128xf32, #tpu.memory_space<vmem>>, vector<1x128xf32>
      %17 = vector.broadcast %16 : vector<1x128xf32> to vector<512x128xf32>
      %18 = arith.addf %15, %17 : vector<512x128xf32>
      %cst_16 = arith.constant 0.000000e+00 : f32
      %19 = vector.broadcast %cst_16 : f32 to vector<512x128xf32>
      %20 = arith.maximumf %18, %19 : vector<512x128xf32>
      %21 = arith.truncf %20 : vector<512x128xf32> to vector<512x128xbf16>
      %c0_17 = arith.constant 0 : index
      %c0_18 = arith.constant 0 : index
      %22 = vector.load %arg7[%c0_17, %c0_18] : memref<512x128xbf16, #tpu.memory_space<vmem>>, vector<512x128xbf16>
      tpu.vector_store %arg7[%c0_17, %c0_18], %21 {strides = array<i32>} : memref<512x128xbf16, #tpu.memory_space<vmem>>, vector<512x128xbf16>,
    } else {
    }
    return
  }
  func.func @transform_0(%arg0: i32, %arg1: i32, %arg2: i32) -> (i32, i32) {
    %c0_i32 = arith.constant 0 : i32
    return %arg0, %arg2 : i32, i32
  }
  func.func @transform_1(%arg0: i32, %arg1: i32, %arg2: i32) -> (i32, i32) {
    %c0_i32 = arith.constant 0 : i32
    return %arg2, %arg1 : i32, i32
  }
  func.func @transform_2(%arg0: i32, %arg1: i32, %arg2: i32) -> (i32, i32) {
    %c0_i32 = arith.constant 0 : i32
    %c0_i32_0 = arith.constant 0 : i32
    return %c0_i32, %arg1 : i32, i32
  }
  func.func @transform_3(%arg0: i32, %arg1: i32, %arg2: i32) -> (i32, i32) {
    %c0_i32 = arith.constant 0 : i32
    %c0_i32_0 = arith.constant 0 : i32
    return %c0_i32, %arg1 : i32, i32
  }
  func.func @transform_4(%arg0: i32, %arg1: i32, %arg2: i32) -> (i32, i32) {
    %c0_i32 = arith.constant 0 : i32
    return %arg0, %arg1 : i32, i32
  }
}

module attributes {stable_mosaic.version = 11 : i64} {
  func.func @kernel(%arg0: i32, %arg1: i32, %arg2: i32, %arg3: memref<128x128xbf16, #tpu.memory_space<vmem>>, %arg4: memref<128x128xbf16, #tpu.memory_space<vmem>>, %arg5: memref<1x128xf32, #tpu.memory_space<vmem>>, %arg6: memref<1x128xf32, #tpu.memory_space<vmem>>, %arg7: memref<1x128xf32, #tpu.memory_space<vmem>>, %arg8: memref<1x128xf32, #tpu.memory_space<vmem>>, %arg9: memref<128x128xbf16, #tpu.memory_space<vmem>>, %arg10: memref<128x128xf32, #tpu.memory_space<vmem>>) attributes {dimension_semantics = [#tpu.dimension_semantics<parallel>, #tpu.dimension_semantics<parallel>, #tpu.dimension_semantics<arbitrary>], iteration_bounds = array<i64: 1, 1, 1>, scalar_prefetch = 0 : i64, scratch_operands = 1 : i64, tpu.core_type = #tpu.core_type<tc>, window_params = [{transform_indices = @transform_0, window_bounds = array<i64: 128, 128>}, {transform_indices = @transform_1, window_bounds = array<i64: 128, 128>}, {transform_indices = @transform_2, window_bounds = array<i64: 1, 128>}, {transform_indices = @transform_3, window_bounds = array<i64: 1, 128>}, {transform_indices = @transform_4, window_bounds = array<i64: 1, 128>}, {transform_indices = @transform_5, window_bounds = array<i64: 1, 128>}, {transform_indices = @transform_6, window_bounds = array<i64: 128, 128>}]} {
    %c0_i32 = arith.constant 0 : i32
    %0 = arith.cmpi eq, %arg2, %c0_i32 : i32
    %1 = arith.extui %0 : i1 to i32
    %c0_i32_0 = arith.constant 0 : i32
    %2 = arith.cmpi ne, %1, %c0_i32_0 : i32
    scf.if %2 {
      %cst_15 = arith.constant 0.000000e+00 : f32
      %22 = vector.broadcast %cst_15 : f32 to vector<128x128xf32>
      %c0_16 = arith.constant 0 : index
      %c0_17 = arith.constant 0 : index
      %23 = vector.load %arg10[%c0_16, %c0_17] : memref<128x128xf32, #tpu.memory_space<vmem>>, vector<128x128xf32>
      tpu.vector_store %arg10[%c0_16, %c0_17], %22 {strides = array<i32>} : memref<128x128xf32, #tpu.memory_space<vmem>>, vector<128x128xf32>,
    } else {
    }
    %c0 = arith.constant 0 : index
    %c0_1 = arith.constant 0 : index
    %3 = vector.load %arg3[%c0, %c0_1] : memref<128x128xbf16, #tpu.memory_space<vmem>>, vector<128x128xbf16>
    %c0_2 = arith.constant 0 : index
    %c0_3 = arith.constant 0 : index
    %4 = vector.load %arg5[%c0_2, %c0_3] : memref<1x128xf32, #tpu.memory_space<vmem>>, vector<1x128xf32>
    %5 = arith.truncf %4 : vector<1x128xf32> to vector<1x128xbf16>
    %c0_4 = arith.constant 0 : index
    %c0_5 = arith.constant 0 : index
    %6 = vector.load %arg6[%c0_4, %c0_5] : memref<1x128xf32, #tpu.memory_space<vmem>>, vector<1x128xf32>
    %7 = arith.truncf %6 : vector<1x128xf32> to vector<1x128xbf16>
    %8 = vector.broadcast %5 : vector<1x128xbf16> to vector<128x128xbf16>
    %9 = arith.mulf %3, %8 : vector<128x128xbf16>
    %10 = vector.broadcast %7 : vector<1x128xbf16> to vector<128x128xbf16>
    %11 = arith.addf %9, %10 : vector<128x128xbf16>
    %cst = arith.constant 0.000000e+00 : bf16
    %12 = vector.broadcast %cst : bf16 to vector<128x128xbf16>
    %13 = arith.maximumf %11, %12 : vector<128x128xbf16>
    %c0_6 = arith.constant 0 : index
    %c0_7 = arith.constant 0 : index
    %14 = vector.load %arg10[%c0_6, %c0_7] : memref<128x128xf32, #tpu.memory_space<vmem>>, vector<128x128xf32>
    %c0_8 = arith.constant 0 : index
    %c0_9 = arith.constant 0 : index
    %15 = vector.load %arg4[%c0_8, %c0_9] : memref<128x128xbf16, #tpu.memory_space<vmem>>, vector<128x128xbf16>
    %cst_10 = arith.constant dense<0.000000e+00> : vector<128x128xf32>
    %16 = tpu.matmul %13, %15, %cst_10 {dimension_numbers = #tpu.dot_dimension_numbers<[1], [0], [0], [1], [0, 0, 1, 1], [], []>} : vector<128x128xbf16>, vector<128x128xbf16>, vector<128x128xf32> -> vector<128x128xf32>
    %17 = arith.addf %14, %16 : vector<128x128xf32>
    %c0_11 = arith.constant 0 : index
    %c0_12 = arith.constant 0 : index
    %18 = vector.load %arg10[%c0_11, %c0_12] : memref<128x128xf32, #tpu.memory_space<vmem>>, vector<128x128xf32>
    tpu.vector_store %arg10[%c0_11, %c0_12], %17 {strides = array<i32>} : memref<128x128xf32, #tpu.memory_space<vmem>>, vector<128x128xf32>,
    %c0_i32_13 = arith.constant 0 : i32
    %19 = arith.cmpi eq, %arg2, %c0_i32_13 : i32
    %20 = arith.extui %19 : i1 to i32
    %c0_i32_14 = arith.constant 0 : i32
    %21 = arith.cmpi ne, %20, %c0_i32_14 : i32
    scf.if %21 {
      %c0_15 = arith.constant 0 : index
      %c0_16 = arith.constant 0 : index
      %22 = vector.load %arg10[%c0_15, %c0_16] : memref<128x128xf32, #tpu.memory_space<vmem>>, vector<128x128xf32>
      %c0_17 = arith.constant 0 : index
      %c0_18 = arith.constant 0 : index
      %23 = vector.load %arg7[%c0_17, %c0_18] : memref<1x128xf32, #tpu.memory_space<vmem>>, vector<1x128xf32>
      %24 = vector.broadcast %23 : vector<1x128xf32> to vector<128x128xf32>
      %25 = arith.mulf %22, %24 : vector<128x128xf32>
      %c0_19 = arith.constant 0 : index
      %c0_20 = arith.constant 0 : index
      %26 = vector.load %arg8[%c0_19, %c0_20] : memref<1x128xf32, #tpu.memory_space<vmem>>, vector<1x128xf32>
      %27 = vector.broadcast %26 : vector<1x128xf32> to vector<128x128xf32>
      %28 = arith.addf %25, %27 : vector<128x128xf32>
      %cst_21 = arith.constant 0.000000e+00 : f32
      %29 = vector.broadcast %cst_21 : f32 to vector<128x128xf32>
      %30 = arith.maximumf %28, %29 : vector<128x128xf32>
      %31 = arith.truncf %30 : vector<128x128xf32> to vector<128x128xbf16>
      %c0_22 = arith.constant 0 : index
      %c0_23 = arith.constant 0 : index
      %32 = vector.load %arg9[%c0_22, %c0_23] : memref<128x128xbf16, #tpu.memory_space<vmem>>, vector<128x128xbf16>
      tpu.vector_store %arg9[%c0_22, %c0_23], %31 {strides = array<i32>} : memref<128x128xbf16, #tpu.memory_space<vmem>>, vector<128x128xbf16>,
    } else {
    }
    return
  }
  func.func @transform_0(%arg0: i32, %arg1: i32, %arg2: i32) -> (i32, i32) {
    %c0_i32 = arith.constant 0 : i32
    return %arg0, %arg2 : i32, i32
  }
  func.func @transform_1(%arg0: i32, %arg1: i32, %arg2: i32) -> (i32, i32) {
    %c0_i32 = arith.constant 0 : i32
    return %arg2, %arg1 : i32, i32
  }
  func.func @transform_2(%arg0: i32, %arg1: i32, %arg2: i32) -> (i32, i32) {
    %c0_i32 = arith.constant 0 : i32
    %c0_i32_0 = arith.constant 0 : i32
    return %c0_i32, %arg2 : i32, i32
  }
  func.func @transform_3(%arg0: i32, %arg1: i32, %arg2: i32) -> (i32, i32) {
    %c0_i32 = arith.constant 0 : i32
    %c0_i32_0 = arith.constant 0 : i32
    return %c0_i32, %arg2 : i32, i32
  }
  func.func @transform_4(%arg0: i32, %arg1: i32, %arg2: i32) -> (i32, i32) {
    %c0_i32 = arith.constant 0 : i32
    %c0_i32_0 = arith.constant 0 : i32
    return %c0_i32, %arg1 : i32, i32
  }
  func.func @transform_5(%arg0: i32, %arg1: i32, %arg2: i32) -> (i32, i32) {
    %c0_i32 = arith.constant 0 : i32
    %c0_i32_0 = arith.constant 0 : i32
    return %c0_i32, %arg1 : i32, i32
  }
  func.func @transform_6(%arg0: i32, %arg1: i32, %arg2: i32) -> (i32, i32) {
    %c0_i32 = arith.constant 0 : i32
    return %arg0, %arg1 : i32, i32
  }
}

module attributes {stable_mosaic.version = 11 : i64} {
  func.func @kernel(%arg0: i32, %arg1: i32, %arg2: i32, %arg3: memref<128x384xbf16, #tpu.memory_space<vmem>>, %arg4: memref<384x128xbf16, #tpu.memory_space<vmem>>, %arg5: memref<128x128xbf16, #tpu.memory_space<vmem>>, %arg6: memref<128x128xf32, #tpu.memory_space<vmem>>) attributes {dimension_semantics = [#tpu.dimension_semantics<parallel>, #tpu.dimension_semantics<parallel>, #tpu.dimension_semantics<arbitrary>], iteration_bounds = array<i64: 1, 1, 1>, scalar_prefetch = 0 : i64, scratch_operands = 1 : i64, tpu.core_type = #tpu.core_type<tc>, window_params = [{transform_indices = @transform_0, window_bounds = array<i64: 128, 384>}, {transform_indices = @transform_1, window_bounds = array<i64: 384, 128>}, {transform_indices = @transform_2, window_bounds = array<i64: 128, 128>}]} {
    %c0_i32 = arith.constant 0 : i32
    %0 = arith.cmpi eq, %arg2, %c0_i32 : i32
    %1 = arith.extui %0 : i1 to i32
    %c0_i32_0 = arith.constant 0 : i32
    %2 = arith.cmpi ne, %1, %c0_i32_0 : i32
    scf.if %2 {
      %cst_10 = arith.constant 0.000000e+00 : f32
      %12 = vector.broadcast %cst_10 : f32 to vector<128x128xf32>
      %c0_11 = arith.constant 0 : index
      %c0_12 = arith.constant 0 : index
      %13 = vector.load %arg6[%c0_11, %c0_12] : memref<128x128xf32, #tpu.memory_space<vmem>>, vector<128x128xf32>
      tpu.vector_store %arg6[%c0_11, %c0_12], %12 {strides = array<i32>} : memref<128x128xf32, #tpu.memory_space<vmem>>, vector<128x128xf32>,
    } else {
    }
    %c0 = arith.constant 0 : index
    %c0_1 = arith.constant 0 : index
    %3 = vector.load %arg3[%c0, %c0_1] : memref<128x384xbf16, #tpu.memory_space<vmem>>, vector<128x384xbf16>
    %c0_2 = arith.constant 0 : index
    %c0_3 = arith.constant 0 : index
    %4 = vector.load %arg6[%c0_2, %c0_3] : memref<128x128xf32, #tpu.memory_space<vmem>>, vector<128x128xf32>
    %c0_4 = arith.constant 0 : index
    %c0_5 = arith.constant 0 : index
    %5 = vector.load %arg4[%c0_4, %c0_5] : memref<384x128xbf16, #tpu.memory_space<vmem>>, vector<384x128xbf16>
    %cst = arith.constant dense<0.000000e+00> : vector<128x128xf32>
    %6 = tpu.matmul %3, %5, %cst {dimension_numbers = #tpu.dot_dimension_numbers<[1], [0], [0], [1], [0, 0, 1, 1], [], []>} : vector<128x384xbf16>, vector<384x128xbf16>, vector<128x128xf32> -> vector<128x128xf32>
    %7 = arith.addf %4, %6 : vector<128x128xf32>
    %c0_6 = arith.constant 0 : index
    %c0_7 = arith.constant 0 : index
    %8 = vector.load %arg6[%c0_6, %c0_7] : memref<128x128xf32, #tpu.memory_space<vmem>>, vector<128x128xf32>
    tpu.vector_store %arg6[%c0_6, %c0_7], %7 {strides = array<i32>} : memref<128x128xf32, #tpu.memory_space<vmem>>, vector<128x128xf32>,
    %c0_i32_8 = arith.constant 0 : i32
    %9 = arith.cmpi eq, %arg2, %c0_i32_8 : i32
    %10 = arith.extui %9 : i1 to i32
    %c0_i32_9 = arith.constant 0 : i32
    %11 = arith.cmpi ne, %10, %c0_i32_9 : i32
    scf.if %11 {
      %c0_10 = arith.constant 0 : index
      %c0_11 = arith.constant 0 : index
      %12 = vector.load %arg6[%c0_10, %c0_11] : memref<128x128xf32, #tpu.memory_space<vmem>>, vector<128x128xf32>
      %13 = arith.truncf %12 : vector<128x128xf32> to vector<128x128xbf16>
      %c0_12 = arith.constant 0 : index
      %c0_13 = arith.constant 0 : index
      %14 = vector.load %arg5[%c0_12, %c0_13] : memref<128x128xbf16, #tpu.memory_space<vmem>>, vector<128x128xbf16>
      tpu.vector_store %arg5[%c0_12, %c0_13], %13 {strides = array<i32>} : memref<128x128xbf16, #tpu.memory_space<vmem>>, vector<128x128xbf16>,
    } else {
    }
    return
  }
  func.func @transform_0(%arg0: i32, %arg1: i32, %arg2: i32) -> (i32, i32) {
    %c0_i32 = arith.constant 0 : i32
    return %arg0, %arg2 : i32, i32
  }
  func.func @transform_1(%arg0: i32, %arg1: i32, %arg2: i32) -> (i32, i32) {
    %c0_i32 = arith.constant 0 : i32
    return %arg2, %arg1 : i32, i32
  }
  func.func @transform_2(%arg0: i32, %arg1: i32, %arg2: i32) -> (i32, i32) {
    %c0_i32 = arith.constant 0 : i32
    return %arg0, %arg1 : i32, i32
  }
}

module attributes {stable_mosaic.version = 11 : i64} {
  func.func @kernel(%arg0: i32, %arg1: i32, %arg2: i32, %arg3: memref<128x128xbf16, #tpu.memory_space<vmem>>, %arg4: memref<128x128xbf16, #tpu.memory_space<vmem>>, %arg5: memref<1x128xf32, #tpu.memory_space<vmem>>, %arg6: memref<1x128xf32, #tpu.memory_space<vmem>>, %arg7: memref<128x128xbf16, #tpu.memory_space<vmem>>, %arg8: memref<128x128xf32, #tpu.memory_space<vmem>>) attributes {dimension_semantics = [#tpu.dimension_semantics<parallel>, #tpu.dimension_semantics<parallel>, #tpu.dimension_semantics<arbitrary>], iteration_bounds = array<i64: 1, 1, 1>, scalar_prefetch = 0 : i64, scratch_operands = 1 : i64, tpu.core_type = #tpu.core_type<tc>, window_params = [{transform_indices = @transform_0, window_bounds = array<i64: 128, 128>}, {transform_indices = @transform_1, window_bounds = array<i64: 128, 128>}, {transform_indices = @transform_2, window_bounds = array<i64: 1, 128>}, {transform_indices = @transform_3, window_bounds = array<i64: 1, 128>}, {transform_indices = @transform_4, window_bounds = array<i64: 128, 128>}]} {
    %c0_i32 = arith.constant 0 : i32
    %0 = arith.cmpi eq, %arg2, %c0_i32 : i32
    %1 = arith.extui %0 : i1 to i32
    %c0_i32_0 = arith.constant 0 : i32
    %2 = arith.cmpi ne, %1, %c0_i32_0 : i32
    scf.if %2 {
      %cst_15 = arith.constant 0.000000e+00 : f32
      %22 = vector.broadcast %cst_15 : f32 to vector<128x128xf32>
      %c0_16 = arith.constant 0 : index
      %c0_17 = arith.constant 0 : index
      %23 = vector.load %arg8[%c0_16, %c0_17] : memref<128x128xf32, #tpu.memory_space<vmem>>, vector<128x128xf32>
      tpu.vector_store %arg8[%c0_16, %c0_17], %22 {strides = array<i32>} : memref<128x128xf32, #tpu.memory_space<vmem>>, vector<128x128xf32>,
    } else {
    }
    %c0 = arith.constant 0 : index
    %c0_1 = arith.constant 0 : index
    %3 = vector.load %arg3[%c0, %c0_1] : memref<128x128xbf16, #tpu.memory_space<vmem>>, vector<128x128xbf16>
    %c0_2 = arith.constant 0 : index
    %c0_3 = arith.constant 0 : index
    %4 = vector.load %arg5[%c0_2, %c0_3] : memref<1x128xf32, #tpu.memory_space<vmem>>, vector<1x128xf32>
    %5 = arith.truncf %4 : vector<1x128xf32> to vector<1x128xbf16>
    %c0_4 = arith.constant 0 : index
    %c0_5 = arith.constant 0 : index
    %6 = vector.load %arg6[%c0_4, %c0_5] : memref<1x128xf32, #tpu.memory_space<vmem>>, vector<1x128xf32>
    %7 = arith.truncf %6 : vector<1x128xf32> to vector<1x128xbf16>
    %8 = vector.broadcast %5 : vector<1x128xbf16> to vector<128x128xbf16>
    %9 = arith.mulf %3, %8 : vector<128x128xbf16>
    %10 = vector.broadcast %7 : vector<1x128xbf16> to vector<128x128xbf16>
    %11 = arith.addf %9, %10 : vector<128x128xbf16>
    %cst = arith.constant 0.000000e+00 : bf16
    %12 = vector.broadcast %cst : bf16 to vector<128x128xbf16>
    %13 = arith.maximumf %11, %12 : vector<128x128xbf16>
    %c0_6 = arith.constant 0 : index
    %c0_7 = arith.constant 0 : index
    %14 = vector.load %arg8[%c0_6, %c0_7] : memref<128x128xf32, #tpu.memory_space<vmem>>, vector<128x128xf32>
    %c0_8 = arith.constant 0 : index
    %c0_9 = arith.constant 0 : index
    %15 = vector.load %arg4[%c0_8, %c0_9] : memref<128x128xbf16, #tpu.memory_space<vmem>>, vector<128x128xbf16>
    %cst_10 = arith.constant dense<0.000000e+00> : vector<128x128xf32>
    %16 = tpu.matmul %13, %15, %cst_10 {dimension_numbers = #tpu.dot_dimension_numbers<[1], [0], [0], [1], [0, 0, 1, 1], [], []>} : vector<128x128xbf16>, vector<128x128xbf16>, vector<128x128xf32> -> vector<128x128xf32>
    %17 = arith.addf %14, %16 : vector<128x128xf32>
    %c0_11 = arith.constant 0 : index
    %c0_12 = arith.constant 0 : index
    %18 = vector.load %arg8[%c0_11, %c0_12] : memref<128x128xf32, #tpu.memory_space<vmem>>, vector<128x128xf32>
    tpu.vector_store %arg8[%c0_11, %c0_12], %17 {strides = array<i32>} : memref<128x128xf32, #tpu.memory_space<vmem>>, vector<128x128xf32>,
    %c0_i32_13 = arith.constant 0 : i32
    %19 = arith.cmpi eq, %arg2, %c0_i32_13 : i32
    %20 = arith.extui %19 : i1 to i32
    %c0_i32_14 = arith.constant 0 : i32
    %21 = arith.cmpi ne, %20, %c0_i32_14 : i32
    scf.if %21 {
      %c0_15 = arith.constant 0 : index
      %c0_16 = arith.constant 0 : index
      %22 = vector.load %arg8[%c0_15, %c0_16] : memref<128x128xf32, #tpu.memory_space<vmem>>, vector<128x128xf32>
      %23 = arith.truncf %22 : vector<128x128xf32> to vector<128x128xbf16>
      %c0_17 = arith.constant 0 : index
      %c0_18 = arith.constant 0 : index
      %24 = vector.load %arg7[%c0_17, %c0_18] : memref<128x128xbf16, #tpu.memory_space<vmem>>, vector<128x128xbf16>
      tpu.vector_store %arg7[%c0_17, %c0_18], %23 {strides = array<i32>} : memref<128x128xbf16, #tpu.memory_space<vmem>>, vector<128x128xbf16>,
    } else {
    }
    return
  }
  func.func @transform_0(%arg0: i32, %arg1: i32, %arg2: i32) -> (i32, i32) {
    %c0_i32 = arith.constant 0 : i32
    return %arg0, %arg2 : i32, i32
  }
  func.func @transform_1(%arg0: i32, %arg1: i32, %arg2: i32) -> (i32, i32) {
    %c0_i32 = arith.constant 0 : i32
    return %arg2, %arg1 : i32, i32
  }
  func.func @transform_2(%arg0: i32, %arg1: i32, %arg2: i32) -> (i32, i32) {
    %c0_i32 = arith.constant 0 : i32
    %c0_i32_0 = arith.constant 0 : i32
    return %c0_i32, %arg2 : i32, i32
  }
  func.func @transform_3(%arg0: i32, %arg1: i32, %arg2: i32) -> (i32, i32) {
    %c0_i32 = arith.constant 0 : i32
    %c0_i32_0 = arith.constant 0 : i32
    return %c0_i32, %arg2 : i32, i32
  }
  func.func @transform_4(%arg0: i32, %arg1: i32, %arg2: i32) -> (i32, i32) {
    %c0_i32 = arith.constant 0 : i32
    return %arg0, %arg1 : i32, i32
  }
}

module attributes {stable_mosaic.version = 11 : i64} {
  func.func @kernel(%arg0: i32, %arg1: i32, %arg2: i32, %arg3: memref<32x128xbf16, #tpu.memory_space<vmem>>, %arg4: memref<128x128xbf16, #tpu.memory_space<vmem>>, %arg5: memref<1x128xf32, #tpu.memory_space<vmem>>, %arg6: memref<1x128xf32, #tpu.memory_space<vmem>>, %arg7: memref<1x128xf32, #tpu.memory_space<vmem>>, %arg8: memref<1x128xf32, #tpu.memory_space<vmem>>, %arg9: memref<32x128xbf16, #tpu.memory_space<vmem>>, %arg10: memref<32x128xf32, #tpu.memory_space<vmem>>) attributes {dimension_semantics = [#tpu.dimension_semantics<parallel>, #tpu.dimension_semantics<parallel>, #tpu.dimension_semantics<arbitrary>], iteration_bounds = array<i64: 1, 1, 1>, scalar_prefetch = 0 : i64, scratch_operands = 1 : i64, tpu.core_type = #tpu.core_type<tc>, window_params = [{transform_indices = @transform_0, window_bounds = array<i64: 32, 128>}, {transform_indices = @transform_1, window_bounds = array<i64: 128, 128>}, {transform_indices = @transform_2, window_bounds = array<i64: 1, 128>}, {transform_indices = @transform_3, window_bounds = array<i64: 1, 128>}, {transform_indices = @transform_4, window_bounds = array<i64: 1, 128>}, {transform_indices = @transform_5, window_bounds = array<i64: 1, 128>}, {transform_indices = @transform_6, window_bounds = array<i64: 32, 128>}]} {
    %c0_i32 = arith.constant 0 : i32
    %0 = arith.cmpi eq, %arg2, %c0_i32 : i32
    %1 = arith.extui %0 : i1 to i32
    %c0_i32_0 = arith.constant 0 : i32
    %2 = arith.cmpi ne, %1, %c0_i32_0 : i32
    scf.if %2 {
      %cst_15 = arith.constant 0.000000e+00 : f32
      %22 = vector.broadcast %cst_15 : f32 to vector<32x128xf32>
      %c0_16 = arith.constant 0 : index
      %c0_17 = arith.constant 0 : index
      %23 = vector.load %arg10[%c0_16, %c0_17] : memref<32x128xf32, #tpu.memory_space<vmem>>, vector<32x128xf32>
      tpu.vector_store %arg10[%c0_16, %c0_17], %22 {strides = array<i32>} : memref<32x128xf32, #tpu.memory_space<vmem>>, vector<32x128xf32>,
    } else {
    }
    %c0 = arith.constant 0 : index
    %c0_1 = arith.constant 0 : index
    %3 = vector.load %arg3[%c0, %c0_1] : memref<32x128xbf16, #tpu.memory_space<vmem>>, vector<32x128xbf16>
    %c0_2 = arith.constant 0 : index
    %c0_3 = arith.constant 0 : index
    %4 = vector.load %arg5[%c0_2, %c0_3] : memref<1x128xf32, #tpu.memory_space<vmem>>, vector<1x128xf32>
    %5 = arith.truncf %4 : vector<1x128xf32> to vector<1x128xbf16>
    %c0_4 = arith.constant 0 : index
    %c0_5 = arith.constant 0 : index
    %6 = vector.load %arg6[%c0_4, %c0_5] : memref<1x128xf32, #tpu.memory_space<vmem>>, vector<1x128xf32>
    %7 = arith.truncf %6 : vector<1x128xf32> to vector<1x128xbf16>
    %8 = vector.broadcast %5 : vector<1x128xbf16> to vector<32x128xbf16>
    %9 = arith.mulf %3, %8 : vector<32x128xbf16>
    %10 = vector.broadcast %7 : vector<1x128xbf16> to vector<32x128xbf16>
    %11 = arith.addf %9, %10 : vector<32x128xbf16>
    %cst = arith.constant 0.000000e+00 : bf16
    %12 = vector.broadcast %cst : bf16 to vector<32x128xbf16>
    %13 = arith.maximumf %11, %12 : vector<32x128xbf16>
    %c0_6 = arith.constant 0 : index
    %c0_7 = arith.constant 0 : index
    %14 = vector.load %arg10[%c0_6, %c0_7] : memref<32x128xf32, #tpu.memory_space<vmem>>, vector<32x128xf32>
    %c0_8 = arith.constant 0 : index
    %c0_9 = arith.constant 0 : index
    %15 = vector.load %arg4[%c0_8, %c0_9] : memref<128x128xbf16, #tpu.memory_space<vmem>>, vector<128x128xbf16>
    %cst_10 = arith.constant dense<0.000000e+00> : vector<32x128xf32>
    %16 = tpu.matmul %13, %15, %cst_10 {dimension_numbers = #tpu.dot_dimension_numbers<[1], [0], [0], [1], [0, 0, 1, 1], [], []>} : vector<32x128xbf16>, vector<128x128xbf16>, vector<32x128xf32> -> vector<32x128xf32>
    %17 = arith.addf %14, %16 : vector<32x128xf32>
    %c0_11 = arith.constant 0 : index
    %c0_12 = arith.constant 0 : index
    %18 = vector.load %arg10[%c0_11, %c0_12] : memref<32x128xf32, #tpu.memory_space<vmem>>, vector<32x128xf32>
    tpu.vector_store %arg10[%c0_11, %c0_12], %17 {strides = array<i32>} : memref<32x128xf32, #tpu.memory_space<vmem>>, vector<32x128xf32>,
    %c0_i32_13 = arith.constant 0 : i32
    %19 = arith.cmpi eq, %arg2, %c0_i32_13 : i32
    %20 = arith.extui %19 : i1 to i32
    %c0_i32_14 = arith.constant 0 : i32
    %21 = arith.cmpi ne, %20, %c0_i32_14 : i32
    scf.if %21 {
      %c0_15 = arith.constant 0 : index
      %c0_16 = arith.constant 0 : index
      %22 = vector.load %arg10[%c0_15, %c0_16] : memref<32x128xf32, #tpu.memory_space<vmem>>, vector<32x128xf32>
      %c0_17 = arith.constant 0 : index
      %c0_18 = arith.constant 0 : index
      %23 = vector.load %arg7[%c0_17, %c0_18] : memref<1x128xf32, #tpu.memory_space<vmem>>, vector<1x128xf32>
      %24 = vector.broadcast %23 : vector<1x128xf32> to vector<32x128xf32>
      %25 = arith.mulf %22, %24 : vector<32x128xf32>
      %c0_19 = arith.constant 0 : index
      %c0_20 = arith.constant 0 : index
      %26 = vector.load %arg8[%c0_19, %c0_20] : memref<1x128xf32, #tpu.memory_space<vmem>>, vector<1x128xf32>
      %27 = vector.broadcast %26 : vector<1x128xf32> to vector<32x128xf32>
      %28 = arith.addf %25, %27 : vector<32x128xf32>
      %cst_21 = arith.constant 0.000000e+00 : f32
      %29 = vector.broadcast %cst_21 : f32 to vector<32x128xf32>
      %30 = arith.maximumf %28, %29 : vector<32x128xf32>
      %31 = arith.truncf %30 : vector<32x128xf32> to vector<32x128xbf16>
      %c0_22 = arith.constant 0 : index
      %c0_23 = arith.constant 0 : index
      %32 = vector.load %arg9[%c0_22, %c0_23] : memref<32x128xbf16, #tpu.memory_space<vmem>>, vector<32x128xbf16>
      tpu.vector_store %arg9[%c0_22, %c0_23], %31 {strides = array<i32>} : memref<32x128xbf16, #tpu.memory_space<vmem>>, vector<32x128xbf16>,
    } else {
    }
    return
  }
  func.func @transform_0(%arg0: i32, %arg1: i32, %arg2: i32) -> (i32, i32) {
    %c0_i32 = arith.constant 0 : i32
    return %arg0, %arg2 : i32, i32
  }
  func.func @transform_1(%arg0: i32, %arg1: i32, %arg2: i32) -> (i32, i32) {
    %c0_i32 = arith.constant 0 : i32
    return %arg2, %arg1 : i32, i32
  }
  func.func @transform_2(%arg0: i32, %arg1: i32, %arg2: i32) -> (i32, i32) {
    %c0_i32 = arith.constant 0 : i32
    %c0_i32_0 = arith.constant 0 : i32
    return %c0_i32, %arg2 : i32, i32
  }
  func.func @transform_3(%arg0: i32, %arg1: i32, %arg2: i32) -> (i32, i32) {
    %c0_i32 = arith.constant 0 : i32
    %c0_i32_0 = arith.constant 0 : i32
    return %c0_i32, %arg2 : i32, i32
  }
  func.func @transform_4(%arg0: i32, %arg1: i32, %arg2: i32) -> (i32, i32) {
    %c0_i32 = arith.constant 0 : i32
    %c0_i32_0 = arith.constant 0 : i32
    return %c0_i32, %arg1 : i32, i32
  }
  func.func @transform_5(%arg0: i32, %arg1: i32, %arg2: i32) -> (i32, i32) {
    %c0_i32 = arith.constant 0 : i32
    %c0_i32_0 = arith.constant 0 : i32
    return %c0_i32, %arg1 : i32, i32
  }
  func.func @transform_6(%arg0: i32, %arg1: i32, %arg2: i32) -> (i32, i32) {
    %c0_i32 = arith.constant 0 : i32
    return %arg0, %arg1 : i32, i32
  }
}

module attributes {stable_mosaic.version = 11 : i64} {
  func.func @kernel(%arg0: i32, %arg1: i32, %arg2: i32, %arg3: memref<32x384xbf16, #tpu.memory_space<vmem>>, %arg4: memref<384x128xbf16, #tpu.memory_space<vmem>>, %arg5: memref<32x128xbf16, #tpu.memory_space<vmem>>, %arg6: memref<32x128xf32, #tpu.memory_space<vmem>>) attributes {dimension_semantics = [#tpu.dimension_semantics<parallel>, #tpu.dimension_semantics<parallel>, #tpu.dimension_semantics<arbitrary>], iteration_bounds = array<i64: 1, 1, 1>, scalar_prefetch = 0 : i64, scratch_operands = 1 : i64, tpu.core_type = #tpu.core_type<tc>, window_params = [{transform_indices = @transform_0, window_bounds = array<i64: 32, 384>}, {transform_indices = @transform_1, window_bounds = array<i64: 384, 128>}, {transform_indices = @transform_2, window_bounds = array<i64: 32, 128>}]} {
    %c0_i32 = arith.constant 0 : i32
    %0 = arith.cmpi eq, %arg2, %c0_i32 : i32
    %1 = arith.extui %0 : i1 to i32
    %c0_i32_0 = arith.constant 0 : i32
    %2 = arith.cmpi ne, %1, %c0_i32_0 : i32
    scf.if %2 {
      %cst_10 = arith.constant 0.000000e+00 : f32
      %12 = vector.broadcast %cst_10 : f32 to vector<32x128xf32>
      %c0_11 = arith.constant 0 : index
      %c0_12 = arith.constant 0 : index
      %13 = vector.load %arg6[%c0_11, %c0_12] : memref<32x128xf32, #tpu.memory_space<vmem>>, vector<32x128xf32>
      tpu.vector_store %arg6[%c0_11, %c0_12], %12 {strides = array<i32>} : memref<32x128xf32, #tpu.memory_space<vmem>>, vector<32x128xf32>,
    } else {
    }
    %c0 = arith.constant 0 : index
    %c0_1 = arith.constant 0 : index
    %3 = vector.load %arg3[%c0, %c0_1] : memref<32x384xbf16, #tpu.memory_space<vmem>>, vector<32x384xbf16>
    %c0_2 = arith.constant 0 : index
    %c0_3 = arith.constant 0 : index
    %4 = vector.load %arg6[%c0_2, %c0_3] : memref<32x128xf32, #tpu.memory_space<vmem>>, vector<32x128xf32>
    %c0_4 = arith.constant 0 : index
    %c0_5 = arith.constant 0 : index
    %5 = vector.load %arg4[%c0_4, %c0_5] : memref<384x128xbf16, #tpu.memory_space<vmem>>, vector<384x128xbf16>
    %cst = arith.constant dense<0.000000e+00> : vector<32x128xf32>
    %6 = tpu.matmul %3, %5, %cst {dimension_numbers = #tpu.dot_dimension_numbers<[1], [0], [0], [1], [0, 0, 1, 1], [], []>} : vector<32x384xbf16>, vector<384x128xbf16>, vector<32x128xf32> -> vector<32x128xf32>
    %7 = arith.addf %4, %6 : vector<32x128xf32>
    %c0_6 = arith.constant 0 : index
    %c0_7 = arith.constant 0 : index
    %8 = vector.load %arg6[%c0_6, %c0_7] : memref<32x128xf32, #tpu.memory_space<vmem>>, vector<32x128xf32>
    tpu.vector_store %arg6[%c0_6, %c0_7], %7 {strides = array<i32>} : memref<32x128xf32, #tpu.memory_space<vmem>>, vector<32x128xf32>,
    %c0_i32_8 = arith.constant 0 : i32
    %9 = arith.cmpi eq, %arg2, %c0_i32_8 : i32
    %10 = arith.extui %9 : i1 to i32
    %c0_i32_9 = arith.constant 0 : i32
    %11 = arith.cmpi ne, %10, %c0_i32_9 : i32
    scf.if %11 {
      %c0_10 = arith.constant 0 : index
      %c0_11 = arith.constant 0 : index
      %12 = vector.load %arg6[%c0_10, %c0_11] : memref<32x128xf32, #tpu.memory_space<vmem>>, vector<32x128xf32>
      %13 = arith.truncf %12 : vector<32x128xf32> to vector<32x128xbf16>
      %c0_12 = arith.constant 0 : index
      %c0_13 = arith.constant 0 : index
      %14 = vector.load %arg5[%c0_12, %c0_13] : memref<32x128xbf16, #tpu.memory_space<vmem>>, vector<32x128xbf16>
      tpu.vector_store %arg5[%c0_12, %c0_13], %13 {strides = array<i32>} : memref<32x128xbf16, #tpu.memory_space<vmem>>, vector<32x128xbf16>,
    } else {
    }
    return
  }
  func.func @transform_0(%arg0: i32, %arg1: i32, %arg2: i32) -> (i32, i32) {
    %c0_i32 = arith.constant 0 : i32
    return %arg0, %arg2 : i32, i32
  }
  func.func @transform_1(%arg0: i32, %arg1: i32, %arg2: i32) -> (i32, i32) {
    %c0_i32 = arith.constant 0 : i32
    return %arg2, %arg1 : i32, i32
  }
  func.func @transform_2(%arg0: i32, %arg1: i32, %arg2: i32) -> (i32, i32) {
    %c0_i32 = arith.constant 0 : i32
    return %arg0, %arg1 : i32, i32
  }
}

module attributes {stable_mosaic.version = 11 : i64} {
  func.func @kernel(%arg0: i32, %arg1: i32, %arg2: i32, %arg3: memref<32x128xbf16, #tpu.memory_space<vmem>>, %arg4: memref<128x128xbf16, #tpu.memory_space<vmem>>, %arg5: memref<1x128xf32, #tpu.memory_space<vmem>>, %arg6: memref<1x128xf32, #tpu.memory_space<vmem>>, %arg7: memref<32x128xbf16, #tpu.memory_space<vmem>>, %arg8: memref<32x128xf32, #tpu.memory_space<vmem>>) attributes {dimension_semantics = [#tpu.dimension_semantics<parallel>, #tpu.dimension_semantics<parallel>, #tpu.dimension_semantics<arbitrary>], iteration_bounds = array<i64: 1, 1, 1>, scalar_prefetch = 0 : i64, scratch_operands = 1 : i64, tpu.core_type = #tpu.core_type<tc>, window_params = [{transform_indices = @transform_0, window_bounds = array<i64: 32, 128>}, {transform_indices = @transform_1, window_bounds = array<i64: 128, 128>}, {transform_indices = @transform_2, window_bounds = array<i64: 1, 128>}, {transform_indices = @transform_3, window_bounds = array<i64: 1, 128>}, {transform_indices = @transform_4, window_bounds = array<i64: 32, 128>}]} {
    %c0_i32 = arith.constant 0 : i32
    %0 = arith.cmpi eq, %arg2, %c0_i32 : i32
    %1 = arith.extui %0 : i1 to i32
    %c0_i32_0 = arith.constant 0 : i32
    %2 = arith.cmpi ne, %1, %c0_i32_0 : i32
    scf.if %2 {
      %cst_15 = arith.constant 0.000000e+00 : f32
      %22 = vector.broadcast %cst_15 : f32 to vector<32x128xf32>
      %c0_16 = arith.constant 0 : index
      %c0_17 = arith.constant 0 : index
      %23 = vector.load %arg8[%c0_16, %c0_17] : memref<32x128xf32, #tpu.memory_space<vmem>>, vector<32x128xf32>
      tpu.vector_store %arg8[%c0_16, %c0_17], %22 {strides = array<i32>} : memref<32x128xf32, #tpu.memory_space<vmem>>, vector<32x128xf32>,
    } else {
    }
    %c0 = arith.constant 0 : index
    %c0_1 = arith.constant 0 : index
    %3 = vector.load %arg3[%c0, %c0_1] : memref<32x128xbf16, #tpu.memory_space<vmem>>, vector<32x128xbf16>
    %c0_2 = arith.constant 0 : index
    %c0_3 = arith.constant 0 : index
    %4 = vector.load %arg5[%c0_2, %c0_3] : memref<1x128xf32, #tpu.memory_space<vmem>>, vector<1x128xf32>
    %5 = arith.truncf %4 : vector<1x128xf32> to vector<1x128xbf16>
    %c0_4 = arith.constant 0 : index
    %c0_5 = arith.constant 0 : index
    %6 = vector.load %arg6[%c0_4, %c0_5] : memref<1x128xf32, #tpu.memory_space<vmem>>, vector<1x128xf32>
    %7 = arith.truncf %6 : vector<1x128xf32> to vector<1x128xbf16>
    %8 = vector.broadcast %5 : vector<1x128xbf16> to vector<32x128xbf16>
    %9 = arith.mulf %3, %8 : vector<32x128xbf16>
    %10 = vector.broadcast %7 : vector<1x128xbf16> to vector<32x128xbf16>
    %11 = arith.addf %9, %10 : vector<32x128xbf16>
    %cst = arith.constant 0.000000e+00 : bf16
    %12 = vector.broadcast %cst : bf16 to vector<32x128xbf16>
    %13 = arith.maximumf %11, %12 : vector<32x128xbf16>
    %c0_6 = arith.constant 0 : index
    %c0_7 = arith.constant 0 : index
    %14 = vector.load %arg8[%c0_6, %c0_7] : memref<32x128xf32, #tpu.memory_space<vmem>>, vector<32x128xf32>
    %c0_8 = arith.constant 0 : index
    %c0_9 = arith.constant 0 : index
    %15 = vector.load %arg4[%c0_8, %c0_9] : memref<128x128xbf16, #tpu.memory_space<vmem>>, vector<128x128xbf16>
    %cst_10 = arith.constant dense<0.000000e+00> : vector<32x128xf32>
    %16 = tpu.matmul %13, %15, %cst_10 {dimension_numbers = #tpu.dot_dimension_numbers<[1], [0], [0], [1], [0, 0, 1, 1], [], []>} : vector<32x128xbf16>, vector<128x128xbf16>, vector<32x128xf32> -> vector<32x128xf32>
    %17 = arith.addf %14, %16 : vector<32x128xf32>
    %c0_11 = arith.constant 0 : index
    %c0_12 = arith.constant 0 : index
    %18 = vector.load %arg8[%c0_11, %c0_12] : memref<32x128xf32, #tpu.memory_space<vmem>>, vector<32x128xf32>
    tpu.vector_store %arg8[%c0_11, %c0_12], %17 {strides = array<i32>} : memref<32x128xf32, #tpu.memory_space<vmem>>, vector<32x128xf32>,
    %c0_i32_13 = arith.constant 0 : i32
    %19 = arith.cmpi eq, %arg2, %c0_i32_13 : i32
    %20 = arith.extui %19 : i1 to i32
    %c0_i32_14 = arith.constant 0 : i32
    %21 = arith.cmpi ne, %20, %c0_i32_14 : i32
    scf.if %21 {
      %c0_15 = arith.constant 0 : index
      %c0_16 = arith.constant 0 : index
      %22 = vector.load %arg8[%c0_15, %c0_16] : memref<32x128xf32, #tpu.memory_space<vmem>>, vector<32x128xf32>
      %23 = arith.truncf %22 : vector<32x128xf32> to vector<32x128xbf16>
      %c0_17 = arith.constant 0 : index
      %c0_18 = arith.constant 0 : index
      %24 = vector.load %arg7[%c0_17, %c0_18] : memref<32x128xbf16, #tpu.memory_space<vmem>>, vector<32x128xbf16>
      tpu.vector_store %arg7[%c0_17, %c0_18], %23 {strides = array<i32>} : memref<32x128xbf16, #tpu.memory_space<vmem>>, vector<32x128xbf16>,
    } else {
    }
    return
  }
  func.func @transform_0(%arg0: i32, %arg1: i32, %arg2: i32) -> (i32, i32) {
    %c0_i32 = arith.constant 0 : i32
    return %arg0, %arg2 : i32, i32
  }
  func.func @transform_1(%arg0: i32, %arg1: i32, %arg2: i32) -> (i32, i32) {
    %c0_i32 = arith.constant 0 : i32
    return %arg2, %arg1 : i32, i32
  }
  func.func @transform_2(%arg0: i32, %arg1: i32, %arg2: i32) -> (i32, i32) {
    %c0_i32 = arith.constant 0 : i32
    %c0_i32_0 = arith.constant 0 : i32
    return %c0_i32, %arg2 : i32, i32
  }
  func.func @transform_3(%arg0: i32, %arg1: i32, %arg2: i32) -> (i32, i32) {
    %c0_i32 = arith.constant 0 : i32
    %c0_i32_0 = arith.constant 0 : i32
    return %c0_i32, %arg2 : i32, i32
  }
  func.func @transform_4(%arg0: i32, %arg1: i32, %arg2: i32) -> (i32, i32) {
    %c0_i32 = arith.constant 0 : i32
    return %arg0, %arg1 : i32, i32
  }
}

module attributes {stable_mosaic.version = 11 : i64} {
  func.func @kernel(%arg0: i32, %arg1: i32, %arg2: i32, %arg3: memref<16x128xbf16, #tpu.memory_space<vmem>>, %arg4: memref<128x128xbf16, #tpu.memory_space<vmem>>, %arg5: memref<1x128xf32, #tpu.memory_space<vmem>>, %arg6: memref<1x128xf32, #tpu.memory_space<vmem>>, %arg7: memref<1x128xf32, #tpu.memory_space<vmem>>, %arg8: memref<1x128xf32, #tpu.memory_space<vmem>>, %arg9: memref<16x128xbf16, #tpu.memory_space<vmem>>, %arg10: memref<16x128xf32, #tpu.memory_space<vmem>>) attributes {dimension_semantics = [#tpu.dimension_semantics<parallel>, #tpu.dimension_semantics<parallel>, #tpu.dimension_semantics<arbitrary>], iteration_bounds = array<i64: 1, 1, 1>, scalar_prefetch = 0 : i64, scratch_operands = 1 : i64, tpu.core_type = #tpu.core_type<tc>, window_params = [{transform_indices = @transform_0, window_bounds = array<i64: 16, 128>}, {transform_indices = @transform_1, window_bounds = array<i64: 128, 128>}, {transform_indices = @transform_2, window_bounds = array<i64: 1, 128>}, {transform_indices = @transform_3, window_bounds = array<i64: 1, 128>}, {transform_indices = @transform_4, window_bounds = array<i64: 1, 128>}, {transform_indices = @transform_5, window_bounds = array<i64: 1, 128>}, {transform_indices = @transform_6, window_bounds = array<i64: 16, 128>}]} {
    %c0_i32 = arith.constant 0 : i32
    %0 = arith.cmpi eq, %arg2, %c0_i32 : i32
    %1 = arith.extui %0 : i1 to i32
    %c0_i32_0 = arith.constant 0 : i32
    %2 = arith.cmpi ne, %1, %c0_i32_0 : i32
    scf.if %2 {
      %cst_15 = arith.constant 0.000000e+00 : f32
      %22 = vector.broadcast %cst_15 : f32 to vector<16x128xf32>
      %c0_16 = arith.constant 0 : index
      %c0_17 = arith.constant 0 : index
      %23 = vector.load %arg10[%c0_16, %c0_17] : memref<16x128xf32, #tpu.memory_space<vmem>>, vector<16x128xf32>
      tpu.vector_store %arg10[%c0_16, %c0_17], %22 {strides = array<i32>} : memref<16x128xf32, #tpu.memory_space<vmem>>, vector<16x128xf32>,
    } else {
    }
    %c0 = arith.constant 0 : index
    %c0_1 = arith.constant 0 : index
    %3 = vector.load %arg3[%c0, %c0_1] : memref<16x128xbf16, #tpu.memory_space<vmem>>, vector<16x128xbf16>
    %c0_2 = arith.constant 0 : index
    %c0_3 = arith.constant 0 : index
    %4 = vector.load %arg5[%c0_2, %c0_3] : memref<1x128xf32, #tpu.memory_space<vmem>>, vector<1x128xf32>
    %5 = arith.truncf %4 : vector<1x128xf32> to vector<1x128xbf16>
    %c0_4 = arith.constant 0 : index
    %c0_5 = arith.constant 0 : index
    %6 = vector.load %arg6[%c0_4, %c0_5] : memref<1x128xf32, #tpu.memory_space<vmem>>, vector<1x128xf32>
    %7 = arith.truncf %6 : vector<1x128xf32> to vector<1x128xbf16>
    %8 = vector.broadcast %5 : vector<1x128xbf16> to vector<16x128xbf16>
    %9 = arith.mulf %3, %8 : vector<16x128xbf16>
    %10 = vector.broadcast %7 : vector<1x128xbf16> to vector<16x128xbf16>
    %11 = arith.addf %9, %10 : vector<16x128xbf16>
    %cst = arith.constant 0.000000e+00 : bf16
    %12 = vector.broadcast %cst : bf16 to vector<16x128xbf16>
    %13 = arith.maximumf %11, %12 : vector<16x128xbf16>
    %c0_6 = arith.constant 0 : index
    %c0_7 = arith.constant 0 : index
    %14 = vector.load %arg10[%c0_6, %c0_7] : memref<16x128xf32, #tpu.memory_space<vmem>>, vector<16x128xf32>
    %c0_8 = arith.constant 0 : index
    %c0_9 = arith.constant 0 : index
    %15 = vector.load %arg4[%c0_8, %c0_9] : memref<128x128xbf16, #tpu.memory_space<vmem>>, vector<128x128xbf16>
    %cst_10 = arith.constant dense<0.000000e+00> : vector<16x128xf32>
    %16 = tpu.matmul %13, %15, %cst_10 {dimension_numbers = #tpu.dot_dimension_numbers<[1], [0], [0], [1], [0, 0, 1, 1], [], []>} : vector<16x128xbf16>, vector<128x128xbf16>, vector<16x128xf32> -> vector<16x128xf32>
    %17 = arith.addf %14, %16 : vector<16x128xf32>
    %c0_11 = arith.constant 0 : index
    %c0_12 = arith.constant 0 : index
    %18 = vector.load %arg10[%c0_11, %c0_12] : memref<16x128xf32, #tpu.memory_space<vmem>>, vector<16x128xf32>
    tpu.vector_store %arg10[%c0_11, %c0_12], %17 {strides = array<i32>} : memref<16x128xf32, #tpu.memory_space<vmem>>, vector<16x128xf32>,
    %c0_i32_13 = arith.constant 0 : i32
    %19 = arith.cmpi eq, %arg2, %c0_i32_13 : i32
    %20 = arith.extui %19 : i1 to i32
    %c0_i32_14 = arith.constant 0 : i32
    %21 = arith.cmpi ne, %20, %c0_i32_14 : i32
    scf.if %21 {
      %c0_15 = arith.constant 0 : index
      %c0_16 = arith.constant 0 : index
      %22 = vector.load %arg10[%c0_15, %c0_16] : memref<16x128xf32, #tpu.memory_space<vmem>>, vector<16x128xf32>
      %c0_17 = arith.constant 0 : index
      %c0_18 = arith.constant 0 : index
      %23 = vector.load %arg7[%c0_17, %c0_18] : memref<1x128xf32, #tpu.memory_space<vmem>>, vector<1x128xf32>
      %24 = vector.broadcast %23 : vector<1x128xf32> to vector<16x128xf32>
      %25 = arith.mulf %22, %24 : vector<16x128xf32>
      %c0_19 = arith.constant 0 : index
      %c0_20 = arith.constant 0 : index
      %26 = vector.load %arg8[%c0_19, %c0_20] : memref<1x128xf32, #tpu.memory_space<vmem>>, vector<1x128xf32>
      %27 = vector.broadcast %26 : vector<1x128xf32> to vector<16x128xf32>
      %28 = arith.addf %25, %27 : vector<16x128xf32>
      %cst_21 = arith.constant 0.000000e+00 : f32
      %29 = vector.broadcast %cst_21 : f32 to vector<16x128xf32>
      %30 = arith.maximumf %28, %29 : vector<16x128xf32>
      %31 = arith.truncf %30 : vector<16x128xf32> to vector<16x128xbf16>
      %c0_22 = arith.constant 0 : index
      %c0_23 = arith.constant 0 : index
      %32 = vector.load %arg9[%c0_22, %c0_23] : memref<16x128xbf16, #tpu.memory_space<vmem>>, vector<16x128xbf16>
      tpu.vector_store %arg9[%c0_22, %c0_23], %31 {strides = array<i32>} : memref<16x128xbf16, #tpu.memory_space<vmem>>, vector<16x128xbf16>,
    } else {
    }
    return
  }
  func.func @transform_0(%arg0: i32, %arg1: i32, %arg2: i32) -> (i32, i32) {
    %c0_i32 = arith.constant 0 : i32
    return %arg0, %arg2 : i32, i32
  }
  func.func @transform_1(%arg0: i32, %arg1: i32, %arg2: i32) -> (i32, i32) {
    %c0_i32 = arith.constant 0 : i32
    return %arg2, %arg1 : i32, i32
  }
  func.func @transform_2(%arg0: i32, %arg1: i32, %arg2: i32) -> (i32, i32) {
    %c0_i32 = arith.constant 0 : i32
    %c0_i32_0 = arith.constant 0 : i32
    return %c0_i32, %arg2 : i32, i32
  }
  func.func @transform_3(%arg0: i32, %arg1: i32, %arg2: i32) -> (i32, i32) {
    %c0_i32 = arith.constant 0 : i32
    %c0_i32_0 = arith.constant 0 : i32
    return %c0_i32, %arg2 : i32, i32
  }
  func.func @transform_4(%arg0: i32, %arg1: i32, %arg2: i32) -> (i32, i32) {
    %c0_i32 = arith.constant 0 : i32
    %c0_i32_0 = arith.constant 0 : i32
    return %c0_i32, %arg1 : i32, i32
  }
  func.func @transform_5(%arg0: i32, %arg1: i32, %arg2: i32) -> (i32, i32) {
    %c0_i32 = arith.constant 0 : i32
    %c0_i32_0 = arith.constant 0 : i32
    return %c0_i32, %arg1 : i32, i32
  }
  func.func @transform_6(%arg0: i32, %arg1: i32, %arg2: i32) -> (i32, i32) {
    %c0_i32 = arith.constant 0 : i32
    return %arg0, %arg1 : i32, i32
  }
}

module attributes {stable_mosaic.version = 11 : i64} {
  func.func @kernel(%arg0: i32, %arg1: i32, %arg2: i32, %arg3: memref<16x384xbf16, #tpu.memory_space<vmem>>, %arg4: memref<384x128xbf16, #tpu.memory_space<vmem>>, %arg5: memref<16x128xbf16, #tpu.memory_space<vmem>>, %arg6: memref<16x128xf32, #tpu.memory_space<vmem>>) attributes {dimension_semantics = [#tpu.dimension_semantics<parallel>, #tpu.dimension_semantics<parallel>, #tpu.dimension_semantics<arbitrary>], iteration_bounds = array<i64: 1, 1, 1>, scalar_prefetch = 0 : i64, scratch_operands = 1 : i64, tpu.core_type = #tpu.core_type<tc>, window_params = [{transform_indices = @transform_0, window_bounds = array<i64: 16, 384>}, {transform_indices = @transform_1, window_bounds = array<i64: 384, 128>}, {transform_indices = @transform_2, window_bounds = array<i64: 16, 128>}]} {
    %c0_i32 = arith.constant 0 : i32
    %0 = arith.cmpi eq, %arg2, %c0_i32 : i32
    %1 = arith.extui %0 : i1 to i32
    %c0_i32_0 = arith.constant 0 : i32
    %2 = arith.cmpi ne, %1, %c0_i32_0 : i32
    scf.if %2 {
      %cst_10 = arith.constant 0.000000e+00 : f32
      %12 = vector.broadcast %cst_10 : f32 to vector<16x128xf32>
      %c0_11 = arith.constant 0 : index
      %c0_12 = arith.constant 0 : index
      %13 = vector.load %arg6[%c0_11, %c0_12] : memref<16x128xf32, #tpu.memory_space<vmem>>, vector<16x128xf32>
      tpu.vector_store %arg6[%c0_11, %c0_12], %12 {strides = array<i32>} : memref<16x128xf32, #tpu.memory_space<vmem>>, vector<16x128xf32>,
    } else {
    }
    %c0 = arith.constant 0 : index
    %c0_1 = arith.constant 0 : index
    %3 = vector.load %arg3[%c0, %c0_1] : memref<16x384xbf16, #tpu.memory_space<vmem>>, vector<16x384xbf16>
    %c0_2 = arith.constant 0 : index
    %c0_3 = arith.constant 0 : index
    %4 = vector.load %arg6[%c0_2, %c0_3] : memref<16x128xf32, #tpu.memory_space<vmem>>, vector<16x128xf32>
    %c0_4 = arith.constant 0 : index
    %c0_5 = arith.constant 0 : index
    %5 = vector.load %arg4[%c0_4, %c0_5] : memref<384x128xbf16, #tpu.memory_space<vmem>>, vector<384x128xbf16>
    %cst = arith.constant dense<0.000000e+00> : vector<16x128xf32>
    %6 = tpu.matmul %3, %5, %cst {dimension_numbers = #tpu.dot_dimension_numbers<[1], [0], [0], [1], [0, 0, 1, 1], [], []>} : vector<16x384xbf16>, vector<384x128xbf16>, vector<16x128xf32> -> vector<16x128xf32>
    %7 = arith.addf %4, %6 : vector<16x128xf32>
    %c0_6 = arith.constant 0 : index
    %c0_7 = arith.constant 0 : index
    %8 = vector.load %arg6[%c0_6, %c0_7] : memref<16x128xf32, #tpu.memory_space<vmem>>, vector<16x128xf32>
    tpu.vector_store %arg6[%c0_6, %c0_7], %7 {strides = array<i32>} : memref<16x128xf32, #tpu.memory_space<vmem>>, vector<16x128xf32>,
    %c0_i32_8 = arith.constant 0 : i32
    %9 = arith.cmpi eq, %arg2, %c0_i32_8 : i32
    %10 = arith.extui %9 : i1 to i32
    %c0_i32_9 = arith.constant 0 : i32
    %11 = arith.cmpi ne, %10, %c0_i32_9 : i32
    scf.if %11 {
      %c0_10 = arith.constant 0 : index
      %c0_11 = arith.constant 0 : index
      %12 = vector.load %arg6[%c0_10, %c0_11] : memref<16x128xf32, #tpu.memory_space<vmem>>, vector<16x128xf32>
      %13 = arith.truncf %12 : vector<16x128xf32> to vector<16x128xbf16>
      %c0_12 = arith.constant 0 : index
      %c0_13 = arith.constant 0 : index
      %14 = vector.load %arg5[%c0_12, %c0_13] : memref<16x128xbf16, #tpu.memory_space<vmem>>, vector<16x128xbf16>
      tpu.vector_store %arg5[%c0_12, %c0_13], %13 {strides = array<i32>} : memref<16x128xbf16, #tpu.memory_space<vmem>>, vector<16x128xbf16>,
    } else {
    }
    return
  }
  func.func @transform_0(%arg0: i32, %arg1: i32, %arg2: i32) -> (i32, i32) {
    %c0_i32 = arith.constant 0 : i32
    return %arg0, %arg2 : i32, i32
  }
  func.func @transform_1(%arg0: i32, %arg1: i32, %arg2: i32) -> (i32, i32) {
    %c0_i32 = arith.constant 0 : i32
    return %arg2, %arg1 : i32, i32
  }
  func.func @transform_2(%arg0: i32, %arg1: i32, %arg2: i32) -> (i32, i32) {
    %c0_i32 = arith.constant 0 : i32
    return %arg0, %arg1 : i32, i32
  }
}

module attributes {stable_mosaic.version = 11 : i64} {
  func.func @kernel(%arg0: i32, %arg1: i32, %arg2: i32, %arg3: memref<16x128xbf16, #tpu.memory_space<vmem>>, %arg4: memref<128x128xbf16, #tpu.memory_space<vmem>>, %arg5: memref<1x128xf32, #tpu.memory_space<vmem>>, %arg6: memref<1x128xf32, #tpu.memory_space<vmem>>, %arg7: memref<16x128xbf16, #tpu.memory_space<vmem>>, %arg8: memref<16x128xf32, #tpu.memory_space<vmem>>) attributes {dimension_semantics = [#tpu.dimension_semantics<parallel>, #tpu.dimension_semantics<parallel>, #tpu.dimension_semantics<arbitrary>], iteration_bounds = array<i64: 1, 1, 1>, scalar_prefetch = 0 : i64, scratch_operands = 1 : i64, tpu.core_type = #tpu.core_type<tc>, window_params = [{transform_indices = @transform_0, window_bounds = array<i64: 16, 128>}, {transform_indices = @transform_1, window_bounds = array<i64: 128, 128>}, {transform_indices = @transform_2, window_bounds = array<i64: 1, 128>}, {transform_indices = @transform_3, window_bounds = array<i64: 1, 128>}, {transform_indices = @transform_4, window_bounds = array<i64: 16, 128>}]} {
    %c0_i32 = arith.constant 0 : i32
    %0 = arith.cmpi eq, %arg2, %c0_i32 : i32
    %1 = arith.extui %0 : i1 to i32
    %c0_i32_0 = arith.constant 0 : i32
    %2 = arith.cmpi ne, %1, %c0_i32_0 : i32
    scf.if %2 {
      %cst_15 = arith.constant 0.000000e+00 : f32
      %22 = vector.broadcast %cst_15 : f32 to vector<16x128xf32>
      %c0_16 = arith.constant 0 : index
      %c0_17 = arith.constant 0 : index
      %23 = vector.load %arg8[%c0_16, %c0_17] : memref<16x128xf32, #tpu.memory_space<vmem>>, vector<16x128xf32>
      tpu.vector_store %arg8[%c0_16, %c0_17], %22 {strides = array<i32>} : memref<16x128xf32, #tpu.memory_space<vmem>>, vector<16x128xf32>,
    } else {
    }
    %c0 = arith.constant 0 : index
    %c0_1 = arith.constant 0 : index
    %3 = vector.load %arg3[%c0, %c0_1] : memref<16x128xbf16, #tpu.memory_space<vmem>>, vector<16x128xbf16>
    %c0_2 = arith.constant 0 : index
    %c0_3 = arith.constant 0 : index
    %4 = vector.load %arg5[%c0_2, %c0_3] : memref<1x128xf32, #tpu.memory_space<vmem>>, vector<1x128xf32>
    %5 = arith.truncf %4 : vector<1x128xf32> to vector<1x128xbf16>
    %c0_4 = arith.constant 0 : index
    %c0_5 = arith.constant 0 : index
    %6 = vector.load %arg6[%c0_4, %c0_5] : memref<1x128xf32, #tpu.memory_space<vmem>>, vector<1x128xf32>
    %7 = arith.truncf %6 : vector<1x128xf32> to vector<1x128xbf16>
    %8 = vector.broadcast %5 : vector<1x128xbf16> to vector<16x128xbf16>
    %9 = arith.mulf %3, %8 : vector<16x128xbf16>
    %10 = vector.broadcast %7 : vector<1x128xbf16> to vector<16x128xbf16>
    %11 = arith.addf %9, %10 : vector<16x128xbf16>
    %cst = arith.constant 0.000000e+00 : bf16
    %12 = vector.broadcast %cst : bf16 to vector<16x128xbf16>
    %13 = arith.maximumf %11, %12 : vector<16x128xbf16>
    %c0_6 = arith.constant 0 : index
    %c0_7 = arith.constant 0 : index
    %14 = vector.load %arg8[%c0_6, %c0_7] : memref<16x128xf32, #tpu.memory_space<vmem>>, vector<16x128xf32>
    %c0_8 = arith.constant 0 : index
    %c0_9 = arith.constant 0 : index
    %15 = vector.load %arg4[%c0_8, %c0_9] : memref<128x128xbf16, #tpu.memory_space<vmem>>, vector<128x128xbf16>
    %cst_10 = arith.constant dense<0.000000e+00> : vector<16x128xf32>
    %16 = tpu.matmul %13, %15, %cst_10 {dimension_numbers = #tpu.dot_dimension_numbers<[1], [0], [0], [1], [0, 0, 1, 1], [], []>} : vector<16x128xbf16>, vector<128x128xbf16>, vector<16x128xf32> -> vector<16x128xf32>
    %17 = arith.addf %14, %16 : vector<16x128xf32>
    %c0_11 = arith.constant 0 : index
    %c0_12 = arith.constant 0 : index
    %18 = vector.load %arg8[%c0_11, %c0_12] : memref<16x128xf32, #tpu.memory_space<vmem>>, vector<16x128xf32>
    tpu.vector_store %arg8[%c0_11, %c0_12], %17 {strides = array<i32>} : memref<16x128xf32, #tpu.memory_space<vmem>>, vector<16x128xf32>,
    %c0_i32_13 = arith.constant 0 : i32
    %19 = arith.cmpi eq, %arg2, %c0_i32_13 : i32
    %20 = arith.extui %19 : i1 to i32
    %c0_i32_14 = arith.constant 0 : i32
    %21 = arith.cmpi ne, %20, %c0_i32_14 : i32
    scf.if %21 {
      %c0_15 = arith.constant 0 : index
      %c0_16 = arith.constant 0 : index
      %22 = vector.load %arg8[%c0_15, %c0_16] : memref<16x128xf32, #tpu.memory_space<vmem>>, vector<16x128xf32>
      %23 = arith.truncf %22 : vector<16x128xf32> to vector<16x128xbf16>
      %c0_17 = arith.constant 0 : index
      %c0_18 = arith.constant 0 : index
      %24 = vector.load %arg7[%c0_17, %c0_18] : memref<16x128xbf16, #tpu.memory_space<vmem>>, vector<16x128xbf16>
      tpu.vector_store %arg7[%c0_17, %c0_18], %23 {strides = array<i32>} : memref<16x128xbf16, #tpu.memory_space<vmem>>, vector<16x128xbf16>,
    } else {
    }
    return
  }
  func.func @transform_0(%arg0: i32, %arg1: i32, %arg2: i32) -> (i32, i32) {
    %c0_i32 = arith.constant 0 : i32
    return %arg0, %arg2 : i32, i32
  }
  func.func @transform_1(%arg0: i32, %arg1: i32, %arg2: i32) -> (i32, i32) {
    %c0_i32 = arith.constant 0 : i32
    return %arg2, %arg1 : i32, i32
  }
  func.func @transform_2(%arg0: i32, %arg1: i32, %arg2: i32) -> (i32, i32) {
    %c0_i32 = arith.constant 0 : i32
    %c0_i32_0 = arith.constant 0 : i32
    return %c0_i32, %arg2 : i32, i32
  }
  func.func @transform_3(%arg0: i32, %arg1: i32, %arg2: i32) -> (i32, i32) {
    %c0_i32 = arith.constant 0 : i32
    %c0_i32_0 = arith.constant 0 : i32
    return %c0_i32, %arg2 : i32, i32
  }
  func.func @transform_4(%arg0: i32, %arg1: i32, %arg2: i32) -> (i32, i32) {
    %c0_i32 = arith.constant 0 : i32
    return %arg0, %arg1 : i32, i32
  }
}

module attributes {stable_mosaic.version = 11 : i64} {
  func.func @kernel(%arg0: i32, %arg1: memref<1x1x128xbf16, #tpu.memory_space<vmem>>, %arg2: memref<1x128xf32, #tpu.memory_space<vmem>>, %arg3: memref<1x128xf32, #tpu.memory_space<vmem>>, %arg4: memref<1x1x128xf32, #tpu.memory_space<vmem>>) attributes {dimension_semantics = [#tpu.dimension_semantics<parallel>], iteration_bounds = array<i64: 2>, scalar_prefetch = 0 : i64, scratch_operands = 0 : i64, tpu.core_type = #tpu.core_type<tc>, window_params = [{transform_indices = @transform_0, window_bounds = array<i64: 1, 1, 128>}, {pipeline_mode = #tpu.pipeline_mode<synchronous>, transform_indices = @transform_1, window_bounds = array<i64: 1, 128>}, {pipeline_mode = #tpu.pipeline_mode<synchronous>, transform_indices = @transform_2, window_bounds = array<i64: 1, 128>}, {transform_indices = @transform_3, window_bounds = array<i64: 1, 1, 128>}]} {
    %c0 = arith.constant 0 : index
    %c0_0 = arith.constant 0 : index
    %c0_1 = arith.constant 0 : index
    %0 = vector.load %arg1[%c0, %c0_0, %c0_1] : memref<1x1x128xbf16, #tpu.memory_space<vmem>>, vector<1x1x128xbf16>
    %1 = arith.extf %0 : vector<1x1x128xbf16> to vector<1x1x128xf32>
    %c0_2 = arith.constant 0 : index
    %c0_3 = arith.constant 0 : index
    %2 = vector.load %arg2[%c0_2, %c0_3] : memref<1x128xf32, #tpu.memory_space<vmem>>, vector<1x128xf32>
    %3 = vector.shape_cast %2 : vector<1x128xf32> to vector<1x1x128xf32>
    %4 = arith.mulf %1, %3 : vector<1x1x128xf32>
    %c0_4 = arith.constant 0 : index
    %c0_5 = arith.constant 0 : index
    %5 = vector.load %arg3[%c0_4, %c0_5] : memref<1x128xf32, #tpu.memory_space<vmem>>, vector<1x128xf32>
    %6 = vector.shape_cast %5 : vector<1x128xf32> to vector<1x1x128xf32>
    %7 = arith.addf %4, %6 : vector<1x1x128xf32>
    %cst = arith.constant 0.000000e+00 : f32
    %8 = vector.broadcast %cst : f32 to vector<1x1x128xf32>
    %9 = arith.maximumf %7, %8 : vector<1x1x128xf32>
    %cst_6 = arith.constant dense<0.000000e+00> : vector<1x128xf32>
    %10 = vector.multi_reduction <add>, %9, %cst_6 [1] : vector<1x1x128xf32> to vector<1x128xf32>
    %11 = vector.shape_cast %10 : vector<1x128xf32> to vector<1x1x128xf32>
    %cst_7 = arith.constant 1.000000e+00 : f32
    %12 = vector.broadcast %cst_7 : f32 to vector<1x1x128xf32>
    %13 = arith.mulf %11, %12 : vector<1x1x128xf32>
    %c0_8 = arith.constant 0 : index
    %c0_9 = arith.constant 0 : index
    %c0_10 = arith.constant 0 : index
    %14 = vector.load %arg4[%c0_8, %c0_9, %c0_10] : memref<1x1x128xf32, #tpu.memory_space<vmem>>, vector<1x1x128xf32>
    tpu.vector_store %arg4[%c0_8, %c0_9, %c0_10], %13 {strides = array<i32>} : memref<1x1x128xf32, #tpu.memory_space<vmem>>, vector<1x1x128xf32>,
    return
  }
  func.func @transform_0(%arg0: i32) -> (i32, i32, i32) {
    %c0_i32 = arith.constant 0 : i32
    %c0_i32_0 = arith.constant 0 : i32
    %c0_i32_1 = arith.constant 0 : i32
    return %arg0, %c0_i32, %c0_i32_0 : i32, i32, i32
  }
  func.func @transform_1(%arg0: i32) -> (i32, i32) {
    %c0_i32 = arith.constant 0 : i32
    %c0_i32_0 = arith.constant 0 : i32
    %c0_i32_1 = arith.constant 0 : i32
    return %c0_i32, %c0_i32_0 : i32, i32
  }
  func.func @transform_2(%arg0: i32) -> (i32, i32) {
    %c0_i32 = arith.constant 0 : i32
    %c0_i32_0 = arith.constant 0 : i32
    %c0_i32_1 = arith.constant 0 : i32
    return %c0_i32, %c0_i32_0 : i32, i32
  }
  func.func @transform_3(%arg0: i32) -> (i32, i32, i32) {
    %c0_i32 = arith.constant 0 : i32
    %c0_i32_0 = arith.constant 0 : i32
    %c0_i32_1 = arith.constant 0 : i32
    return %arg0, %c0_i32, %c0_i32_0 : i32, i32, i32
  }
}

</mosaic_0001>

<llo_original>
// kernel: densenet_finetune_forward.21
$region0: #{densenet_finetune_forward.21}
  #allocation0 [shape = 'u32[]', space=smem, size = 0x4, offset = 0x4, fixed_abs, tag = 'smem constant byte address 0x4 - core index']
  #allocation1 [shape = 'u32[144,128]{1,0:T(1,128)}', space=vmem, size = 0x12000, scoped, tag = 'internal scratch']
  #allocation2 [shape = 'f32[512,128]{1,0:T(8,128)}', space=vmem, size = 0x40000, scoped, tag = 'scratch operand']
  %s0 = inlined_call_operand.vmem [shape: bf16[512,256], index: 0, kind: input, shape index: {}]
  %s1 = inlined_call_operand.vmem [shape: bf16[256,128], index: 1, kind: input, shape index: {}]
  %s2 = inlined_call_operand.vmem [shape: f32[1,128], index: 2, kind: input, shape index: {}]
  %s3 = inlined_call_operand.vmem [shape: f32[1,128], index: 3, kind: input, shape index: {}]
  %s4 = inlined_call_operand.vmem [shape: bf16[512,128], index: 4, kind: output, shape index: {}]
  %s5 = sld [smem:[#allocation0]]
  $region34: #{densenet_finetune_forward.21} parent=0
    _
  %s7 = ssub.s32 1, %s5
  %s8 = scalar_select 0, %s7, %s5
  // Predicated region
  $region2: #{densenet_finetune_forward.21} parent=0 // pred_check
    _
  $region3: #{densenet_finetune_forward.21} parent=0 // pred_check_branch
    %10 = sbr.rel (0) target = $region5
  $region4: #{densenet_finetune_forward.21} parent=0 // pred_region
    _
  $region5: #{densenet_finetune_forward.21} parent=0 // pred_fallthru
    _
  // Predicated region
  $region6: #{densenet_finetune_forward.21} parent=0 // pred_check
    _
  $region7: #{densenet_finetune_forward.21} parent=0 // pred_check_branch
    %12 = sbr.rel (0) target = $region9
  $region8: #{densenet_finetune_forward.21} parent=0 // pred_region
    _
  $region9: #{densenet_finetune_forward.21} parent=0 // pred_fallthru
    _
  // Predicated region
  $region10: #{densenet_finetune_forward.21} parent=0 // pred_check
    _
  $region11: #{densenet_finetune_forward.21} parent=0 // pred_check_branch
    %14 = sbr.rel (0) target = $region13
  $region12: #{densenet_finetune_forward.21} parent=0 // pred_region
    _
  $region13: #{densenet_finetune_forward.21} parent=0 // pred_fallthru
    _
  // Predicated region
  $region14: #{densenet_finetune_forward.21} parent=0 // pred_check
    _
  $region15: #{densenet_finetune_forward.21} parent=0 // pred_check_branch
    %16 = sbr.rel (0) target = $region17
  $region16: #{densenet_finetune_forward.21} parent=0 // pred_region
    _
  $region17: #{densenet_finetune_forward.21} parent=0 // pred_fallthru
    _
  %p18 = scmp.eq.s32.totalorder 0, 0
  // Predicated region
  $region18: #{densenet_finetune_forward.21} parent=0 // pred_check
    %p19 = pneg %p18
  $region19: #{densenet_finetune_forward.21} parent=0 // pred_check_branch
    %21 = sbr.rel (%p19) target = $region21
  $region20: #{densenet_finetune_forward.21} parent=0 // pred_region
    %22 = vst [vmem:[#allocation2] sm:$0xff] 0.0
    %23 = vst [vmem:[#allocation2 + $0x8] sm:$0xff] 0.0
    %24 = vst [vmem:[#allocation2 + $0x10] sm:$0xff] 0.0
    %25 = vst [vmem:[#allocation2 + $0x18] sm:$0xff] 0.0
    %26 = vst [vmem:[#allocation2 + $0x20] sm:$0xff] 0.0
    %27 = vst [vmem:[#allocation2 + $0x28] sm:$0xff] 0.0
    %28 = vst [vmem:[#allocation2 + $0x30] sm:$0xff] 0.0
    %29 = vst [vmem:[#allocation2 + $0x38] sm:$0xff] 0.0
    %30 = vst [vmem:[#allocation2 + $0x40] sm:$0xff] 0.0
    %31 = vst [vmem:[#allocation2 + $0x48] sm:$0xff] 0.0
    %32 = vst [vmem:[#allocation2 + $0x50] sm:$0xff] 0.0
    %33 = vst [vmem:[#allocation2 + $0x58] sm:$0xff] 0.0
    %34 = vst [vmem:[#allocation2 + $0x60] sm:$0xff] 0.0
    %35 = vst [vmem:[#allocation2 + $0x68] sm:$0xff] 0.0
    %36 = vst [vmem:[#allocation2 + $0x70] sm:$0xff] 0.0
    %37 = vst [vmem:[#allocation2 + $0x78] sm:$0xff] 0.0
    %38 = vst [vmem:[#allocation2 + $0x80] sm:$0xff] 0.0
    %39 = vst [vmem:[#allocation2 + $0x88] sm:$0xff] 0.0
    %40 = vst [vmem:[#allocation2 + $0x90] sm:$0xff] 0.0
    %41 = vst [vmem:[#allocation2 + $0x98] sm:$0xff] 0.0
    %42 = vst [vmem:[#allocation2 + $0xa0] sm:$0xff] 0.0
    %43 = vst [vmem:[#allocation2 + $0xa8] sm:$0xff] 0.0
    %44 = vst [vmem:[#allocation2 + $0xb0] sm:$0xff] 0.0
    %45 = vst [vmem:[#allocation2 + $0xb8] sm:$0xff] 0.0
    %46 = vst [vmem:[#allocation2 + $0xc0] sm:$0xff] 0.0
    %47 = vst [vmem:[#allocation2 + $0xc8] sm:$0xff] 0.0
    %48 = vst [vmem:[#allocation2 + $0xd0] sm:$0xff] 0.0
    %49 = vst [vmem:[#allocation2 + $0xd8] sm:$0xff] 0.0
    %50 = vst [vmem:[#allocation2 + $0xe0] sm:$0xff] 0.0
    %51 = vst [vmem:[#allocation2 + $0xe8] sm:$0xff] 0.0
    %52 = vst [vmem:[#allocation2 + $0xf0] sm:$0xff] 0.0
    %53 = vst [vmem:[#allocation2 + $0xf8] sm:$0xff] 0.0
    %54 = vst [vmem:[#allocation2 + $0x100] sm:$0xff] 0.0
    %55 = vst [vmem:[#allocation2 + $0x108] sm:$0xff] 0.0
    %56 = vst [vmem:[#allocation2 + $0x110] sm:$0xff] 0.0
    %57 = vst [vmem:[#allocation2 + $0x118] sm:$0xff] 0.0
    %58 = vst [vmem:[#allocation2 + $0x120] sm:$0xff] 0.0
    %59 = vst [vmem:[#allocation2 + $0x128] sm:$0xff] 0.0
    %60 = vst [vmem:[#allocation2 + $0x130] sm:$0xff] 0.0
    %61 = vst [vmem:[#allocation2 + $0x138] sm:$0xff] 0.0
    %62 = vst [vmem:[#allocation2 + $0x140] sm:$0xff] 0.0
    %63 = vst [vmem:[#allocation2 + $0x148] sm:$0xff] 0.0
    %64 = vst [vmem:[#allocation2 + $0x150] sm:$0xff] 0.0
    %65 = vst [vmem:[#allocation2 + $0x158] sm:$0xff] 0.0
    %66 = vst [vmem:[#allocation2 + $0x160] sm:$0xff] 0.0
    %67 = vst [vmem:[#allocation2 + $0x168] sm:$0xff] 0.0
    %68 = vst [vmem:[#allocation2 + $0x170] sm:$0xff] 0.0
    %69 = vst [vmem:[#allocation2 + $0x178] sm:$0xff] 0.0
    %70 = vst [vmem:[#allocation2 + $0x180] sm:$0xff] 0.0
    %71 = vst [vmem:[#allocation2 + $0x188] sm:$0xff] 0.0
    %72 = vst [vmem:[#allocation2 + $0x190] sm:$0xff] 0.0
    %73 = vst [vmem:[#allocation2 + $0x198] sm:$0xff] 0.0
    %74 = vst [vmem:[#allocation2 + $0x1a0] sm:$0xff] 0.0
    %75 = vst [vmem:[#allocation2 + $0x1a8] sm:$0xff] 0.0
    %76 = vst [vmem:[#allocation2 + $0x1b0] sm:$0xff] 0.0
    %77 = vst [vmem:[#allocation2 + $0x1b8] sm:$0xff] 0.0
    %78 = vst [vmem:[#allocation2 + $0x1c0] sm:$0xff] 0.0
    %79 = vst [vmem:[#allocation2 + $0x1c8] sm:$0xff] 0.0
    %80 = vst [vmem:[#allocation2 + $0x1d0] sm:$0xff] 0.0
    %81 = vst [vmem:[#allocation2 + $0x1d8] sm:$0xff] 0.0
    %82 = vst [vmem:[#allocation2 + $0x1e0] sm:$0xff] 0.0
    %83 = vst [vmem:[#allocation2 + $0x1e8] sm:$0xff] 0.0
    %84 = vst [vmem:[#allocation2 + $0x1f0] sm:$0xff] 0.0
    %85 = vst [vmem:[#allocation2 + $0x1f8] sm:$0xff] 0.0
  $region21: #{densenet_finetune_forward.21} parent=0 // pred_fallthru
    _
  %v86 = vld [vmem:[%s0] sm:$0xff]
  %v87 = vld [vmem:[%s0 + $0x8] sm:$0xff]
  %v88 = vld [vmem:[%s0 + $0x10] sm:$0xff]
  %v89 = vld [vmem:[%s0 + $0x18] sm:$0xff]
  %v90 = vld [vmem:[%s0 + $0x20] sm:$0xff]
  %v91 = vld [vmem:[%s0 + $0x28] sm:$0xff]
  %v92 = vld [vmem:[%s0 + $0x30] sm:$0xff]
  %v93 = vld [vmem:[%s0 + $0x38] sm:$0xff]
  %v94 = vld [vmem:[%s0 + $0x40] sm:$0xff]
  %v95 = vld [vmem:[%s0 + $0x48] sm:$0xff]
  %v96 = vld [vmem:[%s0 + $0x50] sm:$0xff]
  %v97 = vld [vmem:[%s0 + $0x58] sm:$0xff]
  %v98 = vld [vmem:[%s0 + $0x60] sm:$0xff]
  %v99 = vld [vmem:[%s0 + $0x68] sm:$0xff]
  %v100 = vld [vmem:[%s0 + $0x70] sm:$0xff]
  %v101 = vld [vmem:[%s0 + $0x78] sm:$0xff]
  %v102 = vld [vmem:[%s0 + $0x80] sm:$0xff]
  %v103 = vld [vmem:[%s0 + $0x88] sm:$0xff]
  %v104 = vld [vmem:[%s0 + $0x90] sm:$0xff]
  %v105 = vld [vmem:[%s0 + $0x98] sm:$0xff]
  %v106 = vld [vmem:[%s0 + $0xa0] sm:$0xff]
  %v107 = vld [vmem:[%s0 + $0xa8] sm:$0xff]
  %v108 = vld [vmem:[%s0 + $0xb0] sm:$0xff]
  %v109 = vld [vmem:[%s0 + $0xb8] sm:$0xff]
  %v110 = vld [vmem:[%s0 + $0xc0] sm:$0xff]
  %v111 = vld [vmem:[%s0 + $0xc8] sm:$0xff]
  %v112 = vld [vmem:[%s0 + $0xd0] sm:$0xff]
  %v113 = vld [vmem:[%s0 + $0xd8] sm:$0xff]
  %v114 = vld [vmem:[%s0 + $0xe0] sm:$0xff]
  %v115 = vld [vmem:[%s0 + $0xe8] sm:$0xff]
  %v116 = vld [vmem:[%s0 + $0xf0] sm:$0xff]
  %v117 = vld [vmem:[%s0 + $0xf8] sm:$0xff]
  %v118 = vld [vmem:[%s0 + $0x100] sm:$0xff]
  %v119 = vld [vmem:[%s0 + $0x108] sm:$0xff]
  %v120 = vld [vmem:[%s0 + $0x110] sm:$0xff]
  %v121 = vld [vmem:[%s0 + $0x118] sm:$0xff]
  %v122 = vld [vmem:[%s0 + $0x120] sm:$0xff]
  %v123 = vld [vmem:[%s0 + $0x128] sm:$0xff]
  %v124 = vld [vmem:[%s0 + $0x130] sm:$0xff]
  %v125 = vld [vmem:[%s0 + $0x138] sm:$0xff]
  %v126 = vld [vmem:[%s0 + $0x140] sm:$0xff]
  %v127 = vld [vmem:[%s0 + $0x148] sm:$0xff]
  %v128 = vld [vmem:[%s0 + $0x150] sm:$0xff]
  %v129 = vld [vmem:[%s0 + $0x158] sm:$0xff]
  %v130 = vld [vmem:[%s0 + $0x160] sm:$0xff]
  %v131 = vld [vmem:[%s0 + $0x168] sm:$0xff]
  %v132 = vld [vmem:[%s0 + $0x170] sm:$0xff]
  %v133 = vld [vmem:[%s0 + $0x178] sm:$0xff]
  %v134 = vld [vmem:[%s0 + $0x180] sm:$0xff]
  %v135 = vld [vmem:[%s0 + $0x188] sm:$0xff]
  %v136 = vld [vmem:[%s0 + $0x190] sm:$0xff]
  %v137 = vld [vmem:[%s0 + $0x198] sm:$0xff]
  %v138 = vld [vmem:[%s0 + $0x1a0] sm:$0xff]
  %v139 = vld [vmem:[%s0 + $0x1a8] sm:$0xff]
  %v140 = vld [vmem:[%s0 + $0x1b0] sm:$0xff]
  %v141 = vld [vmem:[%s0 + $0x1b8] sm:$0xff]
  %v142 = vld [vmem:[%s0 + $0x1c0] sm:$0xff]
  %v143 = vld [vmem:[%s0 + $0x1c8] sm:$0xff]
  %v144 = vld [vmem:[%s0 + $0x1d0] sm:$0xff]
  %v145 = vld [vmem:[%s0 + $0x1d8] sm:$0xff]
  %v146 = vld [vmem:[%s0 + $0x1e0] sm:$0xff]
  %v147 = vld [vmem:[%s0 + $0x1e8] sm:$0xff]
  %v148 = vld [vmem:[%s0 + $0x1f0] sm:$0xff]
  %v149 = vld [vmem:[%s0 + $0x1f8] sm:$0xff]
  %v150 = vld [vmem:[#allocation2] sm:$0xff]
  %v151 = vld [vmem:[#allocation2 + $0x8] sm:$0xff]
  %v152 = vld [vmem:[#allocation2 + $0x10] sm:$0xff]
  %v153 = vld [vmem:[#allocation2 + $0x18] sm:$0xff]
  %v154 = vld [vmem:[#allocation2 + $0x20] sm:$0xff]
  %v155 = vld [vmem:[#allocation2 + $0x28] sm:$0xff]
  %v156 = vld [vmem:[#allocation2 + $0x30] sm:$0xff]
  %v157 = vld [vmem:[#allocation2 + $0x38] sm:$0xff]
  %v158 = vld [vmem:[#allocation2 + $0x40] sm:$0xff]
  %v159 = vld [vmem:[#allocation2 + $0x48] sm:$0xff]
  %v160 = vld [vmem:[#allocation2 + $0x50] sm:$0xff]
  %v161 = vld [vmem:[#allocation2 + $0x58] sm:$0xff]
  %v162 = vld [vmem:[#allocation2 + $0x60] sm:$0xff]
  %v163 = vld [vmem:[#allocation2 + $0x68] sm:$0xff]
  %v164 = vld [vmem:[#allocation2 + $0x70] sm:$0xff]
  %v165 = vld [vmem:[#allocation2 + $0x78] sm:$0xff]
  %v166 = vld [vmem:[#allocation2 + $0x80] sm:$0xff]
  %v167 = vld [vmem:[#allocation2 + $0x88] sm:$0xff]
  %v168 = vld [vmem:[#allocation2 + $0x90] sm:$0xff]
  %v169 = vld [vmem:[#allocation2 + $0x98] sm:$0xff]
  %v170 = vld [vmem:[#allocation2 + $0xa0] sm:$0xff]
  %v171 = vld [vmem:[#allocation2 + $0xa8] sm:$0xff]
  %v172 = vld [vmem:[#allocation2 + $0xb0] sm:$0xff]
  %v173 = vld [vmem:[#allocation2 + $0xb8] sm:$0xff]
  %v174 = vld [vmem:[#allocation2 + $0xc0] sm:$0xff]
  %v175 = vld [vmem:[#allocation2 + $0xc8] sm:$0xff]
  %v176 = vld [vmem:[#allocation2 + $0xd0] sm:$0xff]
  %v177 = vld [vmem:[#allocation2 + $0xd8] sm:$0xff]
  %v178 = vld [vmem:[#allocation2 + $0xe0] sm:$0xff]
  %v179 = vld [vmem:[#allocation2 + $0xe8] sm:$0xff]
  %v180 = vld [vmem:[#allocation2 + $0xf0] sm:$0xff]
  %v181 = vld [vmem:[#allocation2 + $0xf8] sm:$0xff]
  %v182 = vld [vmem:[#allocation2 + $0x100] sm:$0xff]
  %v183 = vld [vmem:[#allocation2 + $0x108] sm:$0xff]
  %v184 = vld [vmem:[#allocation2 + $0x110] sm:$0xff]
  %v185 = vld [vmem:[#allocation2 + $0x118] sm:$0xff]
  %v186 = vld [vmem:[#allocation2 + $0x120] sm:$0xff]
  %v187 = vld [vmem:[#allocation2 + $0x128] sm:$0xff]
  %v188 = vld [vmem:[#allocation2 + $0x130] sm:$0xff]
  %v189 = vld [vmem:[#allocation2 + $0x138] sm:$0xff]
  %v190 = vld [vmem:[#allocation2 + $0x140] sm:$0xff]
  %v191 = vld [vmem:[#allocation2 + $0x148] sm:$0xff]
  %v192 = vld [vmem:[#allocation2 + $0x150] sm:$0xff]
  %v193 = vld [vmem:[#allocation2 + $0x158] sm:$0xff]
  %v194 = vld [vmem:[#allocation2 + $0x160] sm:$0xff]
  %v195 = vld [vmem:[#allocation2 + $0x168] sm:$0xff]
  %v196 = vld [vmem:[#allocation2 + $0x170] sm:$0xff]
  %v197 = vld [vmem:[#allocation2 + $0x178] sm:$0xff]
  %v198 = vld [vmem:[#allocation2 + $0x180] sm:$0xff]
  %v199 = vld [vmem:[#allocation2 + $0x188] sm:$0xff]
  %v200 = vld [vmem:[#allocation2 + $0x190] sm:$0xff]
  %v201 = vld [vmem:[#allocation2 + $0x198] sm:$0xff]
  %v202 = vld [vmem:[#allocation2 + $0x1a0] sm:$0xff]
  %v203 = vld [vmem:[#allocation2 + $0x1a8] sm:$0xff]
  %v204 = vld [vmem:[#allocation2 + $0x1b0] sm:$0xff]
  %v205 = vld [vmem:[#allocation2 + $0x1b8] sm:$0xff]
  %v206 = vld [vmem:[#allocation2 + $0x1c0] sm:$0xff]
  %v207 = vld [vmem:[#allocation2 + $0x1c8] sm:$0xff]
  %v208 = vld [vmem:[#allocation2 + $0x1d0] sm:$0xff]
  %v209 = vld [vmem:[#allocation2 + $0x1d8] sm:$0xff]
  %v210 = vld [vmem:[#allocation2 + $0x1e0] sm:$0xff]
  %v211 = vld [vmem:[#allocation2 + $0x1e8] sm:$0xff]
  %v212 = vld [vmem:[#allocation2 + $0x1f0] sm:$0xff]
  %v213 = vld [vmem:[#allocation2 + $0x1f8] sm:$0xff]
  %v214 = vld [vmem:[%s1] sm:$0xf]
  %v215 = vld [vmem:[%s1 + $0x4] sm:$0xf]
  %v216 = vld [vmem:[%s1 + $0x8] sm:$0xf]
  %v217 = vld [vmem:[%s1 + $0xc] sm:$0xf]
  %v218 = vld [vmem:[%s1 + $0x10] sm:$0xf]
  %v219 = vld [vmem:[%s1 + $0x14] sm:$0xf]
  %v220 = vld [vmem:[%s1 + $0x18] sm:$0xf]
  %v221 = vld [vmem:[%s1 + $0x1c] sm:$0xf]
  %v222 = vld [vmem:[%s1 + $0x20] sm:$0xf]
  %v223 = vld [vmem:[%s1 + $0x24] sm:$0xf]
  %v224 = vld [vmem:[%s1 + $0x28] sm:$0xf]
  %v225 = vld [vmem:[%s1 + $0x2c] sm:$0xf]
  %v226 = vld [vmem:[%s1 + $0x30] sm:$0xf]
  %v227 = vld [vmem:[%s1 + $0x34] sm:$0xf]
  %v228 = vld [vmem:[%s1 + $0x38] sm:$0xf]
  %v229 = vld [vmem:[%s1 + $0x3c] sm:$0xf]
  %v230 = vld [vmem:[%s1 + $0x40] sm:$0xf]
  %v231 = vld [vmem:[%s1 + $0x44] sm:$0xf]
  %v232 = vld [vmem:[%s1 + $0x48] sm:$0xf]
  %v233 = vld [vmem:[%s1 + $0x4c] sm:$0xf]
  %v234 = vld [vmem:[%s1 + $0x50] sm:$0xf]
  %v235 = vld [vmem:[%s1 + $0x54] sm:$0xf]
  %v236 = vld [vmem:[%s1 + $0x58] sm:$0xf]
  %v237 = vld [vmem:[%s1 + $0x5c] sm:$0xf]
  %v238 = vld [vmem:[%s1 + $0x60] sm:$0xf]
  %v239 = vld [vmem:[%s1 + $0x64] sm:$0xf]
  %v240 = vld [vmem:[%s1 + $0x68] sm:$0xf]
  %v241 = vld [vmem:[%s1 + $0x6c] sm:$0xf]
  %v242 = vld [vmem:[%s1 + $0x70] sm:$0xf]
  %v243 = vld [vmem:[%s1 + $0x74] sm:$0xf]
  %v244 = vld [vmem:[%s1 + $0x78] sm:$0xf]
  %v245 = vld [vmem:[%s1 + $0x7c] sm:$0xf]
  %v310 = vunpack.c.l.b16 %v86
  %v311 = vunpack.c.h.b16 %v86
  %v312 = vunpack.c.l.b16 %v87
  %v313 = vunpack.c.h.b16 %v87
  %v314 = vunpack.c.l.b16 %v88
  %v315 = vunpack.c.h.b16 %v88
  %v316 = vunpack.c.l.b16 %v89
  %v317 = vunpack.c.h.b16 %v89
  %v318 = vunpack.c.l.b16 %v90
  %v319 = vunpack.c.h.b16 %v90
  %v320 = vunpack.c.l.b16 %v91
  %v321 = vunpack.c.h.b16 %v91
  %v322 = vunpack.c.l.b16 %v92
  %v323 = vunpack.c.h.b16 %v92
  %v324 = vunpack.c.l.b16 %v93
  %v325 = vunpack.c.h.b16 %v93
  %v326 = vunpack.c.l.b16 %v94
  %v327 = vunpack.c.h.b16 %v94
  %v328 = vunpack.c.l.b16 %v95
  %v329 = vunpack.c.h.b16 %v95
  %v330 = vunpack.c.l.b16 %v96
  %v331 = vunpack.c.h.b16 %v96
  %v332 = vunpack.c.l.b16 %v97
  %v333 = vunpack.c.h.b16 %v97
  %v334 = vunpack.c.l.b16 %v98
  %v335 = vunpack.c.h.b16 %v98
  %v336 = vunpack.c.l.b16 %v99
  %v337 = vunpack.c.h.b16 %v99
  %v338 = vunpack.c.l.b16 %v100
  %v339 = vunpack.c.h.b16 %v100
  %v340 = vunpack.c.l.b16 %v101
  %v341 = vunpack.c.h.b16 %v101
  %v342 = vunpack.c.l.b16 %v102
  %v343 = vunpack.c.h.b16 %v102
  %v344 = vunpack.c.l.b16 %v103
  %v345 = vunpack.c.h.b16 %v103
  %v346 = vunpack.c.l.b16 %v104
  %v347 = vunpack.c.h.b16 %v104
  %v348 = vunpack.c.l.b16 %v105
  %v349 = vunpack.c.h.b16 %v105
  %v350 = vunpack.c.l.b16 %v106
  %v351 = vunpack.c.h.b16 %v106
  %v352 = vunpack.c.l.b16 %v107
  %v353 = vunpack.c.h.b16 %v107
  %v354 = vunpack.c.l.b16 %v108
  %v355 = vunpack.c.h.b16 %v108
  %v356 = vunpack.c.l.b16 %v109
  %v357 = vunpack.c.h.b16 %v109
  %v358 = vunpack.c.l.b16 %v110
  %v359 = vunpack.c.h.b16 %v110
  %v360 = vunpack.c.l.b16 %v111
  %v361 = vunpack.c.h.b16 %v111
  %v362 = vunpack.c.l.b16 %v112
  %v363 = vunpack.c.h.b16 %v112
  %v364 = vunpack.c.l.b16 %v113
  %v365 = vunpack.c.h.b16 %v113
  %v366 = vunpack.c.l.b16 %v114
  %v367 = vunpack.c.h.b16 %v114
  %v368 = vunpack.c.l.b16 %v115
  %v369 = vunpack.c.h.b16 %v115
  %v370 = vunpack.c.l.b16 %v116
  %v371 = vunpack.c.h.b16 %v116
  %v372 = vunpack.c.l.b16 %v117
  %v373 = vunpack.c.h.b16 %v117
  %v374 = vunpack.c.l.b16 %v118
  %v375 = vunpack.c.h.b16 %v118
  %v376 = vunpack.c.l.b16 %v119
  %v377 = vunpack.c.h.b16 %v119
  %v378 = vunpack.c.l.b16 %v120
  %v379 = vunpack.c.h.b16 %v120
  %v380 = vunpack.c.l.b16 %v121
  %v381 = vunpack.c.h.b16 %v121
  %v382 = vunpack.c.l.b16 %v122
  %v383 = vunpack.c.h.b16 %v122
  %v384 = vunpack.c.l.b16 %v123
  %v385 = vunpack.c.h.b16 %v123
  %v386 = vunpack.c.l.b16 %v124
  %v387 = vunpack.c.h.b16 %v124
  %v388 = vunpack.c.l.b16 %v125
  %v389 = vunpack.c.h.b16 %v125
  %v390 = vunpack.c.l.b16 %v126
  %v391 = vunpack.c.h.b16 %v126
  %v392 = vunpack.c.l.b16 %v127
  %v393 = vunpack.c.h.b16 %v127
  %v394 = vunpack.c.l.b16 %v128
  %v395 = vunpack.c.h.b16 %v128
  %v396 = vunpack.c.l.b16 %v129
  %v397 = vunpack.c.h.b16 %v129
  %v398 = vunpack.c.l.b16 %v130
  %v399 = vunpack.c.h.b16 %v130
  %v400 = vunpack.c.l.b16 %v131
  %v401 = vunpack.c.h.b16 %v131
  %v402 = vunpack.c.l.b16 %v132
  %v403 = vunpack.c.h.b16 %v132
  %v404 = vunpack.c.l.b16 %v133
  %v405 = vunpack.c.h.b16 %v133
  %v406 = vunpack.c.l.b16 %v134
  %v407 = vunpack.c.h.b16 %v134
  %v408 = vunpack.c.l.b16 %v135
  %v409 = vunpack.c.h.b16 %v135
  %v410 = vunpack.c.l.b16 %v136
  %v411 = vunpack.c.h.b16 %v136
  %v412 = vunpack.c.l.b16 %v137
  %v413 = vunpack.c.h.b16 %v137
  %v414 = vunpack.c.l.b16 %v138
  %v415 = vunpack.c.h.b16 %v138
  %v416 = vunpack.c.l.b16 %v139
  %v417 = vunpack.c.h.b16 %v139
  %v418 = vunpack.c.l.b16 %v140
  %v419 = vunpack.c.h.b16 %v140
  %v420 = vunpack.c.l.b16 %v141
  %v421 = vunpack.c.h.b16 %v141
  %v422 = vunpack.c.l.b16 %v142
  %v423 = vunpack.c.h.b16 %v142
  %v424 = vunpack.c.l.b16 %v143
  %v425 = vunpack.c.h.b16 %v143
  %v426 = vunpack.c.l.b16 %v144
  %v427 = vunpack.c.h.b16 %v144
  %v428 = vunpack.c.l.b16 %v145
  %v429 = vunpack.c.h.b16 %v145
  %v430 = vunpack.c.l.b16 %v146
  %v431 = vunpack.c.h.b16 %v146
  %v432 = vunpack.c.l.b16 %v147
  %v433 = vunpack.c.h.b16 %v147
  %v434 = vunpack.c.l.b16 %v148
  %v435 = vunpack.c.h.b16 %v148
  %v436 = vunpack.c.l.b16 %v149
  %v437 = vunpack.c.h.b16 %v149
  %v438 = vpack.c.b16 %v312, %v310
  %v439 = vpack.c.b16 %v313, %v311
  %v440 = vpack.c.b16 %v316, %v314
  %v441 = vpack.c.b16 %v317, %v315
  %v442 = vpack.c.b16 %v320, %v318
  %v443 = vpack.c.b16 %v321, %v319
  %v444 = vpack.c.b16 %v324, %v322
  %v445 = vpack.c.b16 %v325, %v323
  %v446 = vpack.c.b16 %v328, %v326
  %v447 = vpack.c.b16 %v329, %v327
  %v448 = vpack.c.b16 %v332, %v330
  %v449 = vpack.c.b16 %v333, %v331
  %v450 = vpack.c.b16 %v336, %v334
  %v451 = vpack.c.b16 %v337, %v335
  %v452 = vpack.c.b16 %v340, %v338
  %v453 = vpack.c.b16 %v341, %v339
  %v454 = vpack.c.b16 %v344, %v342
  %v455 = vpack.c.b16 %v345, %v343
  %v456 = vpack.c.b16 %v348, %v346
  %v457 = vpack.c.b16 %v349, %v347
  %v458 = vpack.c.b16 %v352, %v350
  %v459 = vpack.c.b16 %v353, %v351
  %v460 = vpack.c.b16 %v356, %v354
  %v461 = vpack.c.b16 %v357, %v355
  %v462 = vpack.c.b16 %v360, %v358
  %v463 = vpack.c.b16 %v361, %v359
  %v464 = vpack.c.b16 %v364, %v362
  %v465 = vpack.c.b16 %v365, %v363
  %v466 = vpack.c.b16 %v368, %v366
  %v467 = vpack.c.b16 %v369, %v367
  %v468 = vpack.c.b16 %v372, %v370
  %v469 = vpack.c.b16 %v373, %v371
  %v470 = vpack.c.b16 %v376, %v374
  %v471 = vpack.c.b16 %v377, %v375
  %v472 = vpack.c.b16 %v380, %v378
  %v473 = vpack.c.b16 %v381, %v379
  %v474 = vpack.c.b16 %v384, %v382
  %v475 = vpack.c.b16 %v385, %v383
  %v476 = vpack.c.b16 %v388, %v386
  %v477 = vpack.c.b16 %v389, %v387
  %v478 = vpack.c.b16 %v392, %v390
  %v479 = vpack.c.b16 %v393, %v391
  %v480 = vpack.c.b16 %v396, %v394
  %v481 = vpack.c.b16 %v397, %v395
  %v482 = vpack.c.b16 %v400, %v398
  %v483 = vpack.c.b16 %v401, %v399
  %v484 = vpack.c.b16 %v404, %v402
  %v485 = vpack.c.b16 %v405, %v403
  %v486 = vpack.c.b16 %v408, %v406
  %v487 = vpack.c.b16 %v409, %v407
  %v488 = vpack.c.b16 %v412, %v410
  %v489 = vpack.c.b16 %v413, %v411
  %v490 = vpack.c.b16 %v416, %v414
  %v491 = vpack.c.b16 %v417, %v415
  %v492 = vpack.c.b16 %v420, %v418
  %v493 = vpack.c.b16 %v421, %v419
  %v494 = vpack.c.b16 %v424, %v422
  %v495 = vpack.c.b16 %v425, %v423
  %v496 = vpack.c.b16 %v428, %v426
  %v497 = vpack.c.b16 %v429, %v427
  %v498 = vpack.c.b16 %v432, %v430
  %v499 = vpack.c.b16 %v433, %v431
  %v500 = vpack.c.b16 %v436, %v434
  %v501 = vpack.c.b16 %v437, %v435
  %v598 = vunpack.c.l.b16 %v214
  %v599 = vunpack.c.l.b16 %v215
  %v600 = vunpack.c.l.b16 %v216
  %v601 = vunpack.c.l.b16 %v217
  %v602 = vunpack.c.l.b16 %v218
  %v603 = vunpack.c.l.b16 %v219
  %v604 = vunpack.c.l.b16 %v220
  %v605 = vunpack.c.l.b16 %v221
  %v606 = vunpack.c.l.b16 %v222
  %v607 = vunpack.c.l.b16 %v223
  %v608 = vunpack.c.l.b16 %v224
  %v609 = vunpack.c.l.b16 %v225
  %v610 = vunpack.c.l.b16 %v226
  %v611 = vunpack.c.l.b16 %v227
  %v612 = vunpack.c.l.b16 %v228
  %v613 = vunpack.c.l.b16 %v229
  %v614 = vunpack.c.l.b16 %v230
  %v615 = vunpack.c.l.b16 %v231
  %v616 = vunpack.c.l.b16 %v232
  %v617 = vunpack.c.l.b16 %v233
  %v618 = vunpack.c.l.b16 %v234
  %v619 = vunpack.c.l.b16 %v235
  %v620 = vunpack.c.l.b16 %v236
  %v621 = vunpack.c.l.b16 %v237
  %v622 = vunpack.c.l.b16 %v238
  %v623 = vunpack.c.l.b16 %v239
  %v624 = vunpack.c.l.b16 %v240
  %v625 = vunpack.c.l.b16 %v241
  %v626 = vunpack.c.l.b16 %v242
  %v627 = vunpack.c.l.b16 %v243
  %v628 = vunpack.c.l.b16 %v244
  %v629 = vunpack.c.l.b16 %v245
  %v630 = vpack.c.b16 %v599, %v598
  %v631 = vpack.c.b16 %v601, %v600
  %v632 = vpack.c.b16 %v603, %v602
  %v633 = vpack.c.b16 %v605, %v604
  %v634 = vpack.c.b16 %v607, %v606
  %v635 = vpack.c.b16 %v609, %v608
  %v636 = vpack.c.b16 %v611, %v610
  %v637 = vpack.c.b16 %v613, %v612
  %v638 = vpack.c.b16 %v615, %v614
  %v639 = vpack.c.b16 %v617, %v616
  %v640 = vpack.c.b16 %v619, %v618
  %v641 = vpack.c.b16 %v621, %v620
  %v642 = vpack.c.b16 %v623, %v622
  %v643 = vpack.c.b16 %v625, %v624
  %v644 = vpack.c.b16 %v627, %v626
  %v645 = vpack.c.b16 %v629, %v628
  %662 = vmatprep.subr.bf16.mxu0 0
  %663 = vmatpush1.bf16.msra.mxu0 %v630
  %664 = vmatprep.subr.bf16.mxu0 0
  %665 = vmatpush1.bf16.msra.mxu0 %v631
  %666 = vmatprep.subr.bf16.mxu0 0
  %667 = vmatpush1.bf16.msra.mxu0 %v632
  %668 = vmatprep.subr.bf16.mxu0 0
  %669 = vmatpush1.bf16.msra.mxu0 %v633
  %670 = vmatprep.subr.bf16.mxu0 0
  %671 = vmatpush1.bf16.msra.mxu0 %v634
  %672 = vmatprep.subr.bf16.mxu0 0
  %673 = vmatpush1.bf16.msra.mxu0 %v635
  %674 = vmatprep.subr.bf16.mxu0 0
  %675 = vmatpush1.bf16.msra.mxu0 %v636
  %676 = vmatprep.subr.bf16.mxu0 0
  %677 = vmatpush1.bf16.msra.mxu0 %v637
  %678 = vmatprep.subr.bf16.mxu0 0
  %679 = vmatpush1.bf16.msra.mxu0 %v638
  %680 = vmatprep.subr.bf16.mxu0 0
  %681 = vmatpush1.bf16.msra.mxu0 %v639
  %682 = vmatprep.subr.bf16.mxu0 0
  %683 = vmatpush1.bf16.msra.mxu0 %v640
  %684 = vmatprep.subr.bf16.mxu0 0
  %685 = vmatpush1.bf16.msra.mxu0 %v641
  %686 = vmatprep.subr.bf16.mxu0 0
  %687 = vmatpush1.bf16.msra.mxu0 %v642
  %688 = vmatprep.subr.bf16.mxu0 0
  %689 = vmatpush1.bf16.msra.mxu0 %v643
  %690 = vmatprep.subr.bf16.mxu0 0
  %691 = vmatpush1.bf16.msra.mxu0 %v644
  %692 = vmatprep.subr.bf16.mxu0 0
  %693 = vmatpush1.bf16.msra.mxu0 %v645
  %694 = vmatprep.mubr.bf16.mxu0 %v439
  %695 = vmatmul.mubr.bf16.gmra.mrb[0].mxu0 %v438
  %v696 = vpop.f32.mrb[0].mxu0
  %v697 = vadd.f32 0.0, %v696
  %v698 = vpop.f32.mrb[0].mxu0
  %v699 = vpop.f32.mrb[0].mxu0
  %v700 = vadd.f32 0.0, %v699
  %v701 = vpop.f32.mrb[0].mxu0
  %702 = vmatprep.mubr.bf16.mxu0 %v441
  %703 = vmatmul.mubr.bf16.gmra.mrb[0].mxu0 %v440
  %v704 = vpop.f32.mrb[0].mxu0
  %v705 = vadd.f32 0.0, %v704
  %v706 = vpop.f32.mrb[0].mxu0
  %v707 = vpop.f32.mrb[0].mxu0
  %v708 = vadd.f32 0.0, %v707
  %v709 = vpop.f32.mrb[0].mxu0
  %710 = vmatprep.mubr.bf16.mxu0 %v443
  %711 = vmatmul.mubr.bf16.gmra.mrb[0].mxu0 %v442
  %v712 = vpop.f32.mrb[0].mxu0
  %v713 = vadd.f32 0.0, %v712
  %v714 = vpop.f32.mrb[0].mxu0
  %v715 = vpop.f32.mrb[0].mxu0
  %v716 = vadd.f32 0.0, %v715
  %v717 = vpop.f32.mrb[0].mxu0
  %718 = vmatprep.mubr.bf16.mxu0 %v445
  %719 = vmatmul.mubr.bf16.gmra.mrb[0].mxu0 %v444
  %v720 = vpop.f32.mrb[0].mxu0
  %v721 = vadd.f32 0.0, %v720
  %v722 = vpop.f32.mrb[0].mxu0
  %v723 = vpop.f32.mrb[0].mxu0
  %v724 = vadd.f32 0.0, %v723
  %v725 = vpop.f32.mrb[0].mxu0
  %726 = vmatprep.mubr.bf16.mxu0 %v447
  %727 = vmatmul.mubr.bf16.gmra.mrb[0].mxu0 %v446
  %v728 = vpop.f32.mrb[0].mxu0
  %v729 = vadd.f32 0.0, %v728
  %v730 = vpop.f32.mrb[0].mxu0
  %v731 = vpop.f32.mrb[0].mxu0
  %v732 = vadd.f32 0.0, %v731
  %v733 = vpop.f32.mrb[0].mxu0
  %734 = vmatprep.mubr.bf16.mxu0 %v449
  %735 = vmatmul.mubr.bf16.gmra.mrb[0].mxu0 %v448
  %v736 = vpop.f32.mrb[0].mxu0
  %v737 = vadd.f32 0.0, %v736
  %v738 = vpop.f32.mrb[0].mxu0
  %v739 = vpop.f32.mrb[0].mxu0
  %v740 = vadd.f32 0.0, %v739
  %v741 = vpop.f32.mrb[0].mxu0
  %742 = vmatprep.mubr.bf16.mxu0 %v451
  %743 = vmatmul.mubr.bf16.gmra.mrb[0].mxu0 %v450
  %v744 = vpop.f32.mrb[0].mxu0
  %v745 = vadd.f32 0.0, %v744
  %v746 = vpop.f32.mrb[0].mxu0
  %v747 = vpop.f32.mrb[0].mxu0
  %v748 = vadd.f32 0.0, %v747
  %v749 = vpop.f32.mrb[0].mxu0
  %750 = vmatprep.mubr.bf16.mxu0 %v453
  %751 = vmatmul.mubr.bf16.gmra.mrb[0].mxu0 %v452
  %v752 = vpop.f32.mrb[0].mxu0
  %v753 = vadd.f32 0.0, %v752
  %v754 = vpop.f32.mrb[0].mxu0
  %v755 = vpop.f32.mrb[0].mxu0
  %v756 = vadd.f32 0.0, %v755
  %v757 = vpop.f32.mrb[0].mxu0
  %758 = vmatprep.mubr.bf16.mxu0 %v455
  %759 = vmatmul.mubr.bf16.gmra.mrb[0].mxu0 %v454
  %v760 = vpop.f32.mrb[0].mxu0
  %v761 = vadd.f32 0.0, %v760
  %v762 = vpop.f32.mrb[0].mxu0
  %v763 = vpop.f32.mrb[0].mxu0
  %v764 = vadd.f32 0.0, %v763
  %v765 = vpop.f32.mrb[0].mxu0
  %766 = vmatprep.mubr.bf16.mxu0 %v457
  %767 = vmatmul.mubr.bf16.gmra.mrb[0].mxu0 %v456
  %v768 = vpop.f32.mrb[0].mxu0
  %v769 = vadd.f32 0.0, %v768
  %v770 = vpop.f32.mrb[0].mxu0
  %v771 = vpop.f32.mrb[0].mxu0
  %v772 = vadd.f32 0.0, %v771
  %v773 = vpop.f32.mrb[0].mxu0
  %774 = vmatprep.mubr.bf16.mxu0 %v459
  %775 = vmatmul.mubr.bf16.gmra.mrb[0].mxu0 %v458
  %v776 = vpop.f32.mrb[0].mxu0
  %v777 = vadd.f32 0.0, %v776
  %v778 = vpop.f32.mrb[0].mxu0
  %v779 = vpop.f32.mrb[0].mxu0
  %v780 = vadd.f32 0.0, %v779
  %v781 = vpop.f32.mrb[0].mxu0
  %782 = vmatprep.mubr.bf16.mxu0 %v461
  %783 = vmatmul.mubr.bf16.gmra.mrb[0].mxu0 %v460
  %v784 = vpop.f32.mrb[0].mxu0
  %v785 = vadd.f32 0.0, %v784
  %v786 = vpop.f32.mrb[0].mxu0
  %v787 = vpop.f32.mrb[0].mxu0
  %v788 = vadd.f32 0.0, %v787
  %v789 = vpop.f32.mrb[0].mxu0
  %790 = vmatprep.mubr.bf16.mxu0 %v463
  %791 = vmatmul.mubr.bf16.gmra.mrb[0].mxu0 %v462
  %v792 = vpop.f32.mrb[0].mxu0
  %v793 = vadd.f32 0.0, %v792
  %v794 = vpop.f32.mrb[0].mxu0
  %v795 = vpop.f32.mrb[0].mxu0
  %v796 = vadd.f32 0.0, %v795
  %v797 = vpop.f32.mrb[0].mxu0
  %798 = vmatprep.mubr.bf16.mxu0 %v465
  %799 = vmatmul.mubr.bf16.gmra.mrb[0].mxu0 %v464
  %v800 = vpop.f32.mrb[0].mxu0
  %v801 = vadd.f32 0.0, %v800
  %v802 = vpop.f32.mrb[0].mxu0
  %v803 = vpop.f32.mrb[0].mxu0
  %v804 = vadd.f32 0.0, %v803
  %v805 = vpop.f32.mrb[0].mxu0
  %806 = vmatprep.mubr.bf16.mxu0 %v467
  %807 = vmatmul.mubr.bf16.gmra.mrb[0].mxu0 %v466
  %v808 = vpop.f32.mrb[0].mxu0
  %v809 = vadd.f32 0.0, %v808
  %v810 = vpop.f32.mrb[0].mxu0
  %v811 = vpop.f32.mrb[0].mxu0
  %v812 = vadd.f32 0.0, %v811
  %v813 = vpop.f32.mrb[0].mxu0
  %814 = vmatprep.mubr.bf16.mxu0 %v469
  %815 = vmatmul.mubr.bf16.gmra.mrb[0].mxu0 %v468
  %v816 = vpop.f32.mrb[0].mxu0
  %v817 = vadd.f32 0.0, %v816
  %v818 = vpop.f32.mrb[0].mxu0
  %v819 = vpop.f32.mrb[0].mxu0
  %v820 = vadd.f32 0.0, %v819
  %v821 = vpop.f32.mrb[0].mxu0
  %822 = vmatprep.mubr.bf16.mxu0 %v471
  %823 = vmatmul.mubr.bf16.gmra.mrb[0].mxu0 %v470
  %v824 = vpop.f32.mrb[0].mxu0
  %v825 = vadd.f32 0.0, %v824
  %v826 = vpop.f32.mrb[0].mxu0
  %v827 = vpop.f32.mrb[0].mxu0
  %v828 = vadd.f32 0.0, %v827
  %v829 = vpop.f32.mrb[0].mxu0
  %830 = vmatprep.mubr.bf16.mxu0 %v473
  %831 = vmatmul.mubr.bf16.gmra.mrb[0].mxu0 %v472
  %v832 = vpop.f32.mrb[0].mxu0
  %v833 = vadd.f32 0.0, %v832
  %v834 = vpop.f32.mrb[0].mxu0
  %v835 = vpop.f32.mrb[0].mxu0
  %v836 = vadd.f32 0.0, %v835
  %v837 = vpop.f32.mrb[0].mxu0
  %838 = vmatprep.mubr.bf16.mxu0 %v475
  %839 = vmatmul.mubr.bf16.gmra.mrb[0].mxu0 %v474
  %v840 = vpop.f32.mrb[0].mxu0
  %v841 = vadd.f32 0.0, %v840
  %v842 = vpop.f32.mrb[0].mxu0
  %v843 = vpop.f32.mrb[0].mxu0
  %v844 = vadd.f32 0.0, %v843
  %v845 = vpop.f32.mrb[0].mxu0
  %846 = vmatprep.mubr.bf16.mxu0 %v477
  %847 = vmatmul.mubr.bf16.gmra.mrb[0].mxu0 %v476
  %v848 = vpop.f32.mrb[0].mxu0
  %v849 = vadd.f32 0.0, %v848
  %v850 = vpop.f32.mrb[0].mxu0
  %v851 = vpop.f32.mrb[0].mxu0
  %v852 = vadd.f32 0.0, %v851
  %v853 = vpop.f32.mrb[0].mxu0
  %854 = vmatprep.mubr.bf16.mxu0 %v479
  %855 = vmatmul.mubr.bf16.gmra.mrb[0].mxu0 %v478
  %v856 = vpop.f32.mrb[0].mxu0
  %v857 = vadd.f32 0.0, %v856
  %v858 = vpop.f32.mrb[0].mxu0
  %v859 = vpop.f32.mrb[0].mxu0
  %v860 = vadd.f32 0.0, %v859
  %v861 = vpop.f32.mrb[0].mxu0
  %862 = vmatprep.mubr.bf16.mxu0 %v481
  %863 = vmatmul.mubr.bf16.gmra.mrb[0].mxu0 %v480
  %v864 = vpop.f32.mrb[0].mxu0
  %v865 = vadd.f32 0.0, %v864
  %v866 = vpop.f32.mrb[0].mxu0
  %v867 = vpop.f32.mrb[0].mxu0
  %v868 = vadd.f32 0.0, %v867
  %v869 = vpop.f32.mrb[0].mxu0
  %870 = vmatprep.mubr.bf16.mxu0 %v483
  %871 = vmatmul.mubr.bf16.gmra.mrb[0].mxu0 %v482
  %v872 = vpop.f32.mrb[0].mxu0
  %v873 = vadd.f32 0.0, %v872
  %v874 = vpop.f32.mrb[0].mxu0
  %v875 = vpop.f32.mrb[0].mxu0
  %v876 = vadd.f32 0.0, %v875
  %v877 = vpop.f32.mrb[0].mxu0
  %878 = vmatprep.mubr.bf16.mxu0 %v485
  %879 = vmatmul.mubr.bf16.gmra.mrb[0].mxu0 %v484
  %v880 = vpop.f32.mrb[0].mxu0
  %v881 = vadd.f32 0.0, %v880
  %v882 = vpop.f32.mrb[0].mxu0
  %v883 = vpop.f32.mrb[0].mxu0
  %v884 = vadd.f32 0.0, %v883
  %v885 = vpop.f32.mrb[0].mxu0
  %886 = vmatprep.mubr.bf16.mxu0 %v487
  %887 = vmatmul.mubr.bf16.gmra.mrb[0].mxu0 %v486
  %v888 = vpop.f32.mrb[0].mxu0
  %v889 = vadd.f32 0.0, %v888
  %v890 = vpop.f32.mrb[0].mxu0
  %v891 = vpop.f32.mrb[0].mxu0
  %v892 = vadd.f32 0.0, %v891
  %v893 = vpop.f32.mrb[0].mxu0
  %894 = vmatprep.mubr.bf16.mxu0 %v489
  %895 = vmatmul.mubr.bf16.gmra.mrb[0].mxu0 %v488
  %v896 = vpop.f32.mrb[0].mxu0
  %v897 = vadd.f32 0.0, %v896
  %v898 = vpop.f32.mrb[0].mxu0
  %v899 = vpop.f32.mrb[0].mxu0
  %v900 = vadd.f32 0.0, %v899
  %v901 = vpop.f32.mrb[0].mxu0
  %902 = vmatprep.mubr.bf16.mxu0 %v491
  %903 = vmatmul.mubr.bf16.gmra.mrb[0].mxu0 %v490
  %v904 = vpop.f32.mrb[0].mxu0
  %v905 = vadd.f32 0.0, %v904
  %v906 = vpop.f32.mrb[0].mxu0
  %v907 = vpop.f32.mrb[0].mxu0
  %v908 = vadd.f32 0.0, %v907
  %v909 = vpop.f32.mrb[0].mxu0
  %910 = vmatprep.mubr.bf16.mxu0 %v493
  %911 = vmatmul.mubr.bf16.gmra.mrb[0].mxu0 %v492
  %v912 = vpop.f32.mrb[0].mxu0
  %v913 = vadd.f32 0.0, %v912
  %v914 = vpop.f32.mrb[0].mxu0
  %v915 = vpop.f32.mrb[0].mxu0
  %v916 = vadd.f32 0.0, %v915
  %v917 = vpop.f32.mrb[0].mxu0
  %918 = vmatprep.mubr.bf16.mxu0 %v495
  %919 = vmatmul.mubr.bf16.gmra.mrb[0].mxu0 %v494
  %v920 = vpop.f32.mrb[0].mxu0
  %v921 = vadd.f32 0.0, %v920
  %v922 = vpop.f32.mrb[0].mxu0
  %v923 = vpop.f32.mrb[0].mxu0
  %v924 = vadd.f32 0.0, %v923
  %v925 = vpop.f32.mrb[0].mxu0
  %926 = vmatprep.mubr.bf16.mxu0 %v497
  %927 = vmatmul.mubr.bf16.gmra.mrb[0].mxu0 %v496
  %v928 = vpop.f32.mrb[0].mxu0
  %v929 = vadd.f32 0.0, %v928
  %v930 = vpop.f32.mrb[0].mxu0
  %v931 = vpop.f32.mrb[0].mxu0
  %v932 = vadd.f32 0.0, %v931
  %v933 = vpop.f32.mrb[0].mxu0
  %934 = vmatprep.mubr.bf16.mxu0 %v499
  %935 = vmatmul.mubr.bf16.gmra.mrb[0].mxu0 %v498
  %v936 = vpop.f32.mrb[0].mxu0
  %v937 = vadd.f32 0.0, %v936
  %v938 = vpop.f32.mrb[0].mxu0
  %v939 = vpop.f32.mrb[0].mxu0
  %v940 = vadd.f32 0.0, %v939
  %v941 = vpop.f32.mrb[0].mxu0
  %942 = vmatprep.mubr.bf16.mxu0 %v501
  %943 = vmatmul.mubr.bf16.gmra.mrb[0].mxu0 %v500
  %v944 = vpop.f32.mrb[0].mxu0
  %v945 = vadd.f32 0.0, %v944
  %v946 = vpop.f32.mrb[0].mxu0
  %v947 = vpop.f32.mrb[0].mxu0
  %v948 = vadd.f32 0.0, %v947
  %v949 = vpop.f32.mrb[0].mxu0
  %950 = vdwg.mxu0
  %v951 = vadd.f32 %v150, %v697
  %v952 = vadd.f32 %v151, %v700
  %v953 = vadd.f32 %v152, %v705
  %v954 = vadd.f32 %v153, %v708
  %v955 = vadd.f32 %v154, %v713
  %v956 = vadd.f32 %v155, %v716
  %v957 = vadd.f32 %v156, %v721
  %v958 = vadd.f32 %v157, %v724
  %v959 = vadd.f32 %v158, %v729
  %v960 = vadd.f32 %v159, %v732
  %v961 = vadd.f32 %v160, %v737
  %v962 = vadd.f32 %v161, %v740
  %v963 = vadd.f32 %v162, %v745
  %v964 = vadd.f32 %v163, %v748
  %v965 = vadd.f32 %v164, %v753
  %v966 = vadd.f32 %v165, %v756
  %v967 = vadd.f32 %v166, %v761
  %v968 = vadd.f32 %v167, %v764
  %v969 = vadd.f32 %v168, %v769
  %v970 = vadd.f32 %v169, %v772
  %v971 = vadd.f32 %v170, %v777
  %v972 = vadd.f32 %v171, %v780
  %v973 = vadd.f32 %v172, %v785
  %v974 = vadd.f32 %v173, %v788
  %v975 = vadd.f32 %v174, %v793
  %v976 = vadd.f32 %v175, %v796
  %v977 = vadd.f32 %v176, %v801
  %v978 = vadd.f32 %v177, %v804
  %v979 = vadd.f32 %v178, %v809
  %v980 = vadd.f32 %v179, %v812
  %v981 = vadd.f32 %v180, %v817
  %v982 = vadd.f32 %v181, %v820
  %v983 = vadd.f32 %v182, %v825
  %v984 = vadd.f32 %v183, %v828
  %v985 = vadd.f32 %v184, %v833
  %v986 = vadd.f32 %v185, %v836
  %v987 = vadd.f32 %v186, %v841
  %v988 = vadd.f32 %v187, %v844
  %v989 = vadd.f32 %v188, %v849
  %v990 = vadd.f32 %v189, %v852
  %v991 = vadd.f32 %v190, %v857
  %v992 = vadd.f32 %v191, %v860
  %v993 = vadd.f32 %v192, %v865
  %v994 = vadd.f32 %v193, %v868
  %v995 = vadd.f32 %v194, %v873
  %v996 = vadd.f32 %v195, %v876
  %v997 = vadd.f32 %v196, %v881
  %v998 = vadd.f32 %v197, %v884
  %v999 = vadd.f32 %v198, %v889
  %v1000 = vadd.f32 %v199, %v892
  %v1001 = vadd.f32 %v200, %v897
  %v1002 = vadd.f32 %v201, %v900
  %v1003 = vadd.f32 %v202, %v905
  %v1004 = vadd.f32 %v203, %v908
  %v1005 = vadd.f32 %v204, %v913
  %v1006 = vadd.f32 %v205, %v916
  %v1007 = vadd.f32 %v206, %v921
  %v1008 = vadd.f32 %v207, %v924
  %v1009 = vadd.f32 %v208, %v929
  %v1010 = vadd.f32 %v209, %v932
  %v1011 = vadd.f32 %v210, %v937
  %v1012 = vadd.f32 %v211, %v940
  %v1013 = vadd.f32 %v212, %v945
  %v1014 = vadd.f32 %v213, %v948
  %1015 = vst [vmem:[#allocation2] sm:$0xff] %v951
  %1016 = vst [vmem:[#allocation2 + $0x8] sm:$0xff] %v952
  %1017 = vst [vmem:[#allocation2 + $0x10] sm:$0xff] %v953
  %1018 = vst [vmem:[#allocation2 + $0x18] sm:$0xff] %v954
  %1019 = vst [vmem:[#allocation2 + $0x20] sm:$0xff] %v955
  %1020 = vst [vmem:[#allocation2 + $0x28] sm:$0xff] %v956
  %1021 = vst [vmem:[#allocation2 + $0x30] sm:$0xff] %v957
  %1022 = vst [vmem:[#allocation2 + $0x38] sm:$0xff] %v958
  %1023 = vst [vmem:[#allocation2 + $0x40] sm:$0xff] %v959
  %1024 = vst [vmem:[#allocation2 + $0x48] sm:$0xff] %v960
  %1025 = vst [vmem:[#allocation2 + $0x50] sm:$0xff] %v961
  %1026 = vst [vmem:[#allocation2 + $0x58] sm:$0xff] %v962
  %1027 = vst [vmem:[#allocation2 + $0x60] sm:$0xff] %v963
  %1028 = vst [vmem:[#allocation2 + $0x68] sm:$0xff] %v964
  %1029 = vst [vmem:[#allocation2 + $0x70] sm:$0xff] %v965
  %1030 = vst [vmem:[#allocation2 + $0x78] sm:$0xff] %v966
  %1031 = vst [vmem:[#allocation2 + $0x80] sm:$0xff] %v967
  %1032 = vst [vmem:[#allocation2 + $0x88] sm:$0xff] %v968
  %1033 = vst [vmem:[#allocation2 + $0x90] sm:$0xff] %v969
  %1034 = vst [vmem:[#allocation2 + $0x98] sm:$0xff] %v970
  %1035 = vst [vmem:[#allocation2 + $0xa0] sm:$0xff] %v971
  %1036 = vst [vmem:[#allocation2 + $0xa8] sm:$0xff] %v972
  %1037 = vst [vmem:[#allocation2 + $0xb0] sm:$0xff] %v973
  %1038 = vst [vmem:[#allocation2 + $0xb8] sm:$0xff] %v974
  %1039 = vst [vmem:[#allocation2 + $0xc0] sm:$0xff] %v975
  %1040 = vst [vmem:[#allocation2 + $0xc8] sm:$0xff] %v976
  %1041 = vst [vmem:[#allocation2 + $0xd0] sm:$0xff] %v977
  %1042 = vst [vmem:[#allocation2 + $0xd8] sm:$0xff] %v978
  %1043 = vst [vmem:[#allocation2 + $0xe0] sm:$0xff] %v979
  %1044 = vst [vmem:[#allocation2 + $0xe8] sm:$0xff] %v980
  %1045 = vst [vmem:[#allocation2 + $0xf0] sm:$0xff] %v981
  %1046 = vst [vmem:[#allocation2 + $0xf8] sm:$0xff] %v982
  %1047 = vst [vmem:[#allocation2 + $0x100] sm:$0xff] %v983
  %1048 = vst [vmem:[#allocation2 + $0x108] sm:$0xff] %v984
  %1049 = vst [vmem:[#allocation2 + $0x110] sm:$0xff] %v985
  %1050 = vst [vmem:[#allocation2 + $0x118] sm:$0xff] %v986
  %1051 = vst [vmem:[#allocation2 + $0x120] sm:$0xff] %v987
  %1052 = vst [vmem:[#allocation2 + $0x128] sm:$0xff] %v988
  %1053 = vst [vmem:[#allocation2 + $0x130] sm:$0xff] %v989
  %1054 = vst [vmem:[#allocation2 + $0x138] sm:$0xff] %v990
  %1055 = vst [vmem:[#allocation2 + $0x140] sm:$0xff] %v991
  %1056 = vst [vmem:[#allocation2 + $0x148] sm:$0xff] %v992
  %1057 = vst [vmem:[#allocation2 + $0x150] sm:$0xff] %v993
  %1058 = vst [vmem:[#allocation2 + $0x158] sm:$0xff] %v994
  %1059 = vst [vmem:[#allocation2 + $0x160] sm:$0xff] %v995
  %1060 = vst [vmem:[#allocation2 + $0x168] sm:$0xff] %v996
  %1061 = vst [vmem:[#allocation2 + $0x170] sm:$0xff] %v997
  %1062 = vst [vmem:[#allocation2 + $0x178] sm:$0xff] %v998
  %1063 = vst [vmem:[#allocation2 + $0x180] sm:$0xff] %v999
  %1064 = vst [vmem:[#allocation2 + $0x188] sm:$0xff] %v1000
  %1065 = vst [vmem:[#allocation2 + $0x190] sm:$0xff] %v1001
  %1066 = vst [vmem:[#allocation2 + $0x198] sm:$0xff] %v1002
  %1067 = vst [vmem:[#allocation2 + $0x1a0] sm:$0xff] %v1003
  %1068 = vst [vmem:[#allocation2 + $0x1a8] sm:$0xff] %v1004
  %1069 = vst [vmem:[#allocation2 + $0x1b0] sm:$0xff] %v1005
  %1070 = vst [vmem:[#allocation2 + $0x1b8] sm:$0xff] %v1006
  %1071 = vst [vmem:[#allocation2 + $0x1c0] sm:$0xff] %v1007
  %1072 = vst [vmem:[#allocation2 + $0x1c8] sm:$0xff] %v1008
  %1073 = vst [vmem:[#allocation2 + $0x1d0] sm:$0xff] %v1009
  %1074 = vst [vmem:[#allocation2 + $0x1d8] sm:$0xff] %v1010
  %1075 = vst [vmem:[#allocation2 + $0x1e0] sm:$0xff] %v1011
  %1076 = vst [vmem:[#allocation2 + $0x1e8] sm:$0xff] %v1012
  %1077 = vst [vmem:[#allocation2 + $0x1f0] sm:$0xff] %v1013
  %1078 = vst [vmem:[#allocation2 + $0x1f8] sm:$0xff] %v1014
  // Predicated region
  $region22: #{densenet_finetune_forward.21} parent=0 // pred_check
    %p1079 = pneg %p18
  $region23: #{densenet_finetune_forward.21} parent=0 // pred_check_branch
    %1081 = sbr.rel (%p1079) target = $region25
  $region24: #{densenet_finetune_forward.21} parent=0 // pred_region
    %v1082 = vld [vmem:[#allocation2] sm:$0xff]
    %v1083 = vld [vmem:[#allocation2 + $0x8] sm:$0xff]
    %v1084 = vld [vmem:[#allocation2 + $0x10] sm:$0xff]
    %v1085 = vld [vmem:[#allocation2 + $0x18] sm:$0xff]
    %v1086 = vld [vmem:[#allocation2 + $0x20] sm:$0xff]
    %v1087 = vld [vmem:[#allocation2 + $0x28] sm:$0xff]
    %v1088 = vld [vmem:[#allocation2 + $0x30] sm:$0xff]
    %v1089 = vld [vmem:[#allocation2 + $0x38] sm:$0xff]
    %v1090 = vld [vmem:[#allocation2 + $0x40] sm:$0xff]
    %v1091 = vld [vmem:[#allocation2 + $0x48] sm:$0xff]
    %v1092 = vld [vmem:[#allocation2 + $0x50] sm:$0xff]
    %v1093 = vld [vmem:[#allocation2 + $0x58] sm:$0xff]
    %v1094 = vld [vmem:[#allocation2 + $0x60] sm:$0xff]
    %v1095 = vld [vmem:[#allocation2 + $0x68] sm:$0xff]
    %v1096 = vld [vmem:[#allocation2 + $0x70] sm:$0xff]
    %v1097 = vld [vmem:[#allocation2 + $0x78] sm:$0xff]
    %v1098 = vld [vmem:[#allocation2 + $0x80] sm:$0xff]
    %v1099 = vld [vmem:[#allocation2 + $0x88] sm:$0xff]
    %v1100 = vld [vmem:[#allocation2 + $0x90] sm:$0xff]
    %v1101 = vld [vmem:[#allocation2 + $0x98] sm:$0xff]
    %v1102 = vld [vmem:[#allocation2 + $0xa0] sm:$0xff]
    %v1103 = vld [vmem:[#allocation2 + $0xa8] sm:$0xff]
    %v1104 = vld [vmem:[#allocation2 + $0xb0] sm:$0xff]
    %v1105 = vld [vmem:[#allocation2 + $0xb8] sm:$0xff]
    %v1106 = vld [vmem:[#allocation2 + $0xc0] sm:$0xff]
    %v1107 = vld [vmem:[#allocation2 + $0xc8] sm:$0xff]
    %v1108 = vld [vmem:[#allocation2 + $0xd0] sm:$0xff]
    %v1109 = vld [vmem:[#allocation2 + $0xd8] sm:$0xff]
    %v1110 = vld [vmem:[#allocation2 + $0xe0] sm:$0xff]
    %v1111 = vld [vmem:[#allocation2 + $0xe8] sm:$0xff]
    %v1112 = vld [vmem:[#allocation2 + $0xf0] sm:$0xff]
    %v1113 = vld [vmem:[#allocation2 + $0xf8] sm:$0xff]
    %v1114 = vld [vmem:[#allocation2 + $0x100] sm:$0xff]
    %v1115 = vld [vmem:[#allocation2 + $0x108] sm:$0xff]
    %v1116 = vld [vmem:[#allocation2 + $0x110] sm:$0xff]
    %v1117 = vld [vmem:[#allocation2 + $0x118] sm:$0xff]
    %v1118 = vld [vmem:[#allocation2 + $0x120] sm:$0xff]
    %v1119 = vld [vmem:[#allocation2 + $0x128] sm:$0xff]
    %v1120 = vld [vmem:[#allocation2 + $0x130] sm:$0xff]
    %v1121 = vld [vmem:[#allocation2 + $0x138] sm:$0xff]
    %v1122 = vld [vmem:[#allocation2 + $0x140] sm:$0xff]
    %v1123 = vld [vmem:[#allocation2 + $0x148] sm:$0xff]
    %v1124 = vld [vmem:[#allocation2 + $0x150] sm:$0xff]
    %v1125 = vld [vmem:[#allocation2 + $0x158] sm:$0xff]
    %v1126 = vld [vmem:[#allocation2 + $0x160] sm:$0xff]
    %v1127 = vld [vmem:[#allocation2 + $0x168] sm:$0xff]
    %v1128 = vld [vmem:[#allocation2 + $0x170] sm:$0xff]
    %v1129 = vld [vmem:[#allocation2 + $0x178] sm:$0xff]
    %v1130 = vld [vmem:[#allocation2 + $0x180] sm:$0xff]
    %v1131 = vld [vmem:[#allocation2 + $0x188] sm:$0xff]
    %v1132 = vld [vmem:[#allocation2 + $0x190] sm:$0xff]
    %v1133 = vld [vmem:[#allocation2 + $0x198] sm:$0xff]
    %v1134 = vld [vmem:[#allocation2 + $0x1a0] sm:$0xff]
    %v1135 = vld [vmem:[#allocation2 + $0x1a8] sm:$0xff]
    %v1136 = vld [vmem:[#allocation2 + $0x1b0] sm:$0xff]
    %v1137 = vld [vmem:[#allocation2 + $0x1b8] sm:$0xff]
    %v1138 = vld [vmem:[#allocation2 + $0x1c0] sm:$0xff]
    %v1139 = vld [vmem:[#allocation2 + $0x1c8] sm:$0xff]
    %v1140 = vld [vmem:[#allocation2 + $0x1d0] sm:$0xff]
    %v1141 = vld [vmem:[#allocation2 + $0x1d8] sm:$0xff]
    %v1142 = vld [vmem:[#allocation2 + $0x1e0] sm:$0xff]
    %v1143 = vld [vmem:[#allocation2 + $0x1e8] sm:$0xff]
    %v1144 = vld [vmem:[#allocation2 + $0x1f0] sm:$0xff]
    %v1145 = vld [vmem:[#allocation2 + $0x1f8] sm:$0xff]
    %v1146 = vld [vmem:[%s2] sm:$0x1]
    %v1148 = vlaneseq
    %v1149 = vshrl.u32 %v1148, 7
    %v1150 = vsub.s32 0, %v1149
    %v1151 = vrot.slane %v1146, %v1150
    %v1153 = vmul.f32 %v1082, %v1151
    %v1154 = vmul.f32 %v1083, %v1151
    %v1155 = vmul.f32 %v1084, %v1151
    %v1156 = vmul.f32 %v1085, %v1151
    %v1157 = vmul.f32 %v1086, %v1151
    %v1158 = vmul.f32 %v1087, %v1151
    %v1159 = vmul.f32 %v1088, %v1151
    %v1160 = vmul.f32 %v1089, %v1151
    %v1161 = vmul.f32 %v1090, %v1151
    %v1162 = vmul.f32 %v1091, %v1151
    %v1163 = vmul.f32 %v1092, %v1151
    %v1164 = vmul.f32 %v1093, %v1151
    %v1165 = vmul.f32 %v1094, %v1151
    %v1166 = vmul.f32 %v1095, %v1151
    %v1167 = vmul.f32 %v1096, %v1151
    %v1168 = vmul.f32 %v1097, %v1151
    %v1169 = vmul.f32 %v1098, %v1151
    %v1170 = vmul.f32 %v1099, %v1151
    %v1171 = vmul.f32 %v1100, %v1151
    %v1172 = vmul.f32 %v1101, %v1151
    %v1173 = vmul.f32 %v1102, %v1151
    %v1174 = vmul.f32 %v1103, %v1151
    %v1175 = vmul.f32 %v1104, %v1151
    %v1176 = vmul.f32 %v1105, %v1151
    %v1177 = vmul.f32 %v1106, %v1151
    %v1178 = vmul.f32 %v1107, %v1151
    %v1179 = vmul.f32 %v1108, %v1151
    %v1180 = vmul.f32 %v1109, %v1151
    %v1181 = vmul.f32 %v1110, %v1151
    %v1182 = vmul.f32 %v1111, %v1151
    %v1183 = vmul.f32 %v1112, %v1151
    %v1184 = vmul.f32 %v1113, %v1151
    %v1185 = vmul.f32 %v1114, %v1151
    %v1186 = vmul.f32 %v1115, %v1151
    %v1187 = vmul.f32 %v1116, %v1151
    %v1188 = vmul.f32 %v1117, %v1151
    %v1189 = vmul.f32 %v1118, %v1151
    %v1190 = vmul.f32 %v1119, %v1151
    %v1191 = vmul.f32 %v1120, %v1151
    %v1192 = vmul.f32 %v1121, %v1151
    %v1193 = vmul.f32 %v1122, %v1151
    %v1194 = vmul.f32 %v1123, %v1151
    %v1195 = vmul.f32 %v1124, %v1151
    %v1196 = vmul.f32 %v1125, %v1151
    %v1197 = vmul.f32 %v1126, %v1151
    %v1198 = vmul.f32 %v1127, %v1151
    %v1199 = vmul.f32 %v1128, %v1151
    %v1200 = vmul.f32 %v1129, %v1151
    %v1201 = vmul.f32 %v1130, %v1151
    %v1202 = vmul.f32 %v1131, %v1151
    %v1203 = vmul.f32 %v1132, %v1151
    %v1204 = vmul.f32 %v1133, %v1151
    %v1205 = vmul.f32 %v1134, %v1151
    %v1206 = vmul.f32 %v1135, %v1151
    %v1207 = vmul.f32 %v1136, %v1151
    %v1208 = vmul.f32 %v1137, %v1151
    %v1209 = vmul.f32 %v1138, %v1151
    %v1210 = vmul.f32 %v1139, %v1151
    %v1211 = vmul.f32 %v1140, %v1151
    %v1212 = vmul.f32 %v1141, %v1151
    %v1213 = vmul.f32 %v1142, %v1151
    %v1214 = vmul.f32 %v1143, %v1151
    %v1215 = vmul.f32 %v1144, %v1151
    %v1216 = vmul.f32 %v1145, %v1151
    %v1217 = vld [vmem:[%s3] sm:$0x1]
    %v1219 = vlaneseq
    %v1220 = vshrl.u32 %v1219, 7
    %v1221 = vsub.s32 0, %v1220
    %v1222 = vrot.slane %v1217, %v1221
    %v1224 = vadd.f32 %v1153, %v1222
    %v1225 = vadd.f32 %v1154, %v1222
    %v1226 = vadd.f32 %v1155, %v1222
    %v1227 = vadd.f32 %v1156, %v1222
    %v1228 = vadd.f32 %v1157, %v1222
    %v1229 = vadd.f32 %v1158, %v1222
    %v1230 = vadd.f32 %v1159, %v1222
    %v1231 = vadd.f32 %v1160, %v1222
    %v1232 = vadd.f32 %v1161, %v1222
    %v1233 = vadd.f32 %v1162, %v1222
    %v1234 = vadd.f32 %v1163, %v1222
    %v1235 = vadd.f32 %v1164, %v1222
    %v1236 = vadd.f32 %v1165, %v1222
    %v1237 = vadd.f32 %v1166, %v1222
    %v1238 = vadd.f32 %v1167, %v1222
    %v1239 = vadd.f32 %v1168, %v1222
    %v1240 = vadd.f32 %v1169, %v1222
    %v1241 = vadd.f32 %v1170, %v1222
    %v1242 = vadd.f32 %v1171, %v1222
    %v1243 = vadd.f32 %v1172, %v1222
    %v1244 = vadd.f32 %v1173, %v1222
    %v1245 = vadd.f32 %v1174, %v1222
    %v1246 = vadd.f32 %v1175, %v1222
    %v1247 = vadd.f32 %v1176, %v1222
    %v1248 = vadd.f32 %v1177, %v1222
    %v1249 = vadd.f32 %v1178, %v1222
    %v1250 = vadd.f32 %v1179, %v1222
    %v1251 = vadd.f32 %v1180, %v1222
    %v1252 = vadd.f32 %v1181, %v1222
    %v1253 = vadd.f32 %v1182, %v1222
    %v1254 = vadd.f32 %v1183, %v1222
    %v1255 = vadd.f32 %v1184, %v1222
    %v1256 = vadd.f32 %v1185, %v1222
    %v1257 = vadd.f32 %v1186, %v1222
    %v1258 = vadd.f32 %v1187, %v1222
    %v1259 = vadd.f32 %v1188, %v1222
    %v1260 = vadd.f32 %v1189, %v1222
    %v1261 = vadd.f32 %v1190, %v1222
    %v1262 = vadd.f32 %v1191, %v1222
    %v1263 = vadd.f32 %v1192, %v1222
    %v1264 = vadd.f32 %v1193, %v1222
    %v1265 = vadd.f32 %v1194, %v1222
    %v1266 = vadd.f32 %v1195, %v1222
    %v1267 = vadd.f32 %v1196, %v1222
    %v1268 = vadd.f32 %v1197, %v1222
    %v1269 = vadd.f32 %v1198, %v1222
    %v1270 = vadd.f32 %v1199, %v1222
    %v1271 = vadd.f32 %v1200, %v1222
    %v1272 = vadd.f32 %v1201, %v1222
    %v1273 = vadd.f32 %v1202, %v1222
    %v1274 = vadd.f32 %v1203, %v1222
    %v1275 = vadd.f32 %v1204, %v1222
    %v1276 = vadd.f32 %v1205, %v1222
    %v1277 = vadd.f32 %v1206, %v1222
    %v1278 = vadd.f32 %v1207, %v1222
    %v1279 = vadd.f32 %v1208, %v1222
    %v1280 = vadd.f32 %v1209, %v1222
    %v1281 = vadd.f32 %v1210, %v1222
    %v1282 = vadd.f32 %v1211, %v1222
    %v1283 = vadd.f32 %v1212, %v1222
    %v1284 = vadd.f32 %v1213, %v1222
    %v1285 = vadd.f32 %v1214, %v1222
    %v1286 = vadd.f32 %v1215, %v1222
    %v1287 = vadd.f32 %v1216, %v1222
    %v1288 = vmax.f32 %v1224, 0.0
    %v1289 = vmax.f32 %v1225, 0.0
    %v1290 = vmax.f32 %v1226, 0.0
    %v1291 = vmax.f32 %v1227, 0.0
    %v1292 = vmax.f32 %v1228, 0.0
    %v1293 = vmax.f32 %v1229, 0.0
    %v1294 = vmax.f32 %v1230, 0.0
    %v1295 = vmax.f32 %v1231, 0.0
    %v1296 = vmax.f32 %v1232, 0.0
    %v1297 = vmax.f32 %v1233, 0.0
    %v1298 = vmax.f32 %v1234, 0.0
    %v1299 = vmax.f32 %v1235, 0.0
    %v1300 = vmax.f32 %v1236, 0.0
    %v1301 = vmax.f32 %v1237, 0.0
    %v1302 = vmax.f32 %v1238, 0.0
    %v1303 = vmax.f32 %v1239, 0.0
    %v1304 = vmax.f32 %v1240, 0.0
    %v1305 = vmax.f32 %v1241, 0.0
    %v1306 = vmax.f32 %v1242, 0.0
    %v1307 = vmax.f32 %v1243, 0.0
    %v1308 = vmax.f32 %v1244, 0.0
    %v1309 = vmax.f32 %v1245, 0.0
    %v1310 = vmax.f32 %v1246, 0.0
    %v1311 = vmax.f32 %v1247, 0.0
    %v1312 = vmax.f32 %v1248, 0.0
    %v1313 = vmax.f32 %v1249, 0.0
    %v1314 = vmax.f32 %v1250, 0.0
    %v1315 = vmax.f32 %v1251, 0.0
    %v1316 = vmax.f32 %v1252, 0.0
    %v1317 = vmax.f32 %v1253, 0.0
    %v1318 = vmax.f32 %v1254, 0.0
    %v1319 = vmax.f32 %v1255, 0.0
    %v1320 = vmax.f32 %v1256, 0.0
    %v1321 = vmax.f32 %v1257, 0.0
    %v1322 = vmax.f32 %v1258, 0.0
    %v1323 = vmax.f32 %v1259, 0.0
    %v1324 = vmax.f32 %v1260, 0.0
    %v1325 = vmax.f32 %v1261, 0.0
    %v1326 = vmax.f32 %v1262, 0.0
    %v1327 = vmax.f32 %v1263, 0.0
    %v1328 = vmax.f32 %v1264, 0.0
    %v1329 = vmax.f32 %v1265, 0.0
    %v1330 = vmax.f32 %v1266, 0.0
    %v1331 = vmax.f32 %v1267, 0.0
    %v1332 = vmax.f32 %v1268, 0.0
    %v1333 = vmax.f32 %v1269, 0.0
    %v1334 = vmax.f32 %v1270, 0.0
    %v1335 = vmax.f32 %v1271, 0.0
    %v1336 = vmax.f32 %v1272, 0.0
    %v1337 = vmax.f32 %v1273, 0.0
    %v1338 = vmax.f32 %v1274, 0.0
    %v1339 = vmax.f32 %v1275, 0.0
    %v1340 = vmax.f32 %v1276, 0.0
    %v1341 = vmax.f32 %v1277, 0.0
    %v1342 = vmax.f32 %v1278, 0.0
    %v1343 = vmax.f32 %v1279, 0.0
    %v1344 = vmax.f32 %v1280, 0.0
    %v1345 = vmax.f32 %v1281, 0.0
    %v1346 = vmax.f32 %v1282, 0.0
    %v1347 = vmax.f32 %v1283, 0.0
    %v1348 = vmax.f32 %v1284, 0.0
    %v1349 = vmax.f32 %v1285, 0.0
    %v1350 = vmax.f32 %v1286, 0.0
    %v1351 = vmax.f32 %v1287, 0.0
    %v1352 = vpack.c.bf16 %v1289, %v1288
    %v1353 = vpack.c.bf16 %v1291, %v1290
    %v1354 = vpack.c.bf16 %v1293, %v1292
    %v1355 = vpack.c.bf16 %v1295, %v1294
    %v1356 = vpack.c.bf16 %v1297, %v1296
    %v1357 = vpack.c.bf16 %v1299, %v1298
    %v1358 = vpack.c.bf16 %v1301, %v1300
    %v1359 = vpack.c.bf16 %v1303, %v1302
    %v1360 = vpack.c.bf16 %v1305, %v1304
    %v1361 = vpack.c.bf16 %v1307, %v1306
    %v1362 = vpack.c.bf16 %v1309, %v1308
    %v1363 = vpack.c.bf16 %v1311, %v1310
    %v1364 = vpack.c.bf16 %v1313, %v1312
    %v1365 = vpack.c.bf16 %v1315, %v1314
    %v1366 = vpack.c.bf16 %v1317, %v1316
    %v1367 = vpack.c.bf16 %v1319, %v1318
    %v1368 = vpack.c.bf16 %v1321, %v1320
    %v1369 = vpack.c.bf16 %v1323, %v1322
    %v1370 = vpack.c.bf16 %v1325, %v1324
    %v1371 = vpack.c.bf16 %v1327, %v1326
    %v1372 = vpack.c.bf16 %v1329, %v1328
    %v1373 = vpack.c.bf16 %v1331, %v1330
    %v1374 = vpack.c.bf16 %v1333, %v1332
    %v1375 = vpack.c.bf16 %v1335, %v1334
    %v1376 = vpack.c.bf16 %v1337, %v1336
    %v1377 = vpack.c.bf16 %v1339, %v1338
    %v1378 = vpack.c.bf16 %v1341, %v1340
    %v1379 = vpack.c.bf16 %v1343, %v1342
    %v1380 = vpack.c.bf16 %v1345, %v1344
    %v1381 = vpack.c.bf16 %v1347, %v1346
    %v1382 = vpack.c.bf16 %v1349, %v1348
    %v1383 = vpack.c.bf16 %v1351, %v1350
    %v1416 = vunpack.c.l.b16 %v1352
    %v1417 = vunpack.c.h.b16 %v1352
    %v1418 = vunpack.c.l.b16 %v1353
    %v1419 = vunpack.c.h.b16 %v1353
    %v1420 = vunpack.c.l.b16 %v1354
    %v1421 = vunpack.c.h.b16 %v1354
    %v1422 = vunpack.c.l.b16 %v1355
    %v1423 = vunpack.c.h.b16 %v1355
    %v1424 = vunpack.c.l.b16 %v1356
    %v1425 = vunpack.c.h.b16 %v1356
    %v1426 = vunpack.c.l.b16 %v1357
    %v1427 = vunpack.c.h.b16 %v1357
    %v1428 = vunpack.c.l.b16 %v1358
    %v1429 = vunpack.c.h.b16 %v1358
    %v1430 = vunpack.c.l.b16 %v1359
    %v1431 = vunpack.c.h.b16 %v1359
    %v1432 = vunpack.c.l.b16 %v1360
    %v1433 = vunpack.c.h.b16 %v1360
    %v1434 = vunpack.c.l.b16 %v1361
    %v1435 = vunpack.c.h.b16 %v1361
    %v1436 = vunpack.c.l.b16 %v1362
    %v1437 = vunpack.c.h.b16 %v1362
    %v1438 = vunpack.c.l.b16 %v1363
    %v1439 = vunpack.c.h.b16 %v1363
    %v1440 = vunpack.c.l.b16 %v1364
    %v1441 = vunpack.c.h.b16 %v1364
    %v1442 = vunpack.c.l.b16 %v1365
    %v1443 = vunpack.c.h.b16 %v1365
    %v1444 = vunpack.c.l.b16 %v1366
    %v1445 = vunpack.c.h.b16 %v1366
    %v1446 = vunpack.c.l.b16 %v1367
    %v1447 = vunpack.c.h.b16 %v1367
    %v1448 = vunpack.c.l.b16 %v1368
    %v1449 = vunpack.c.h.b16 %v1368
    %v1450 = vunpack.c.l.b16 %v1369
    %v1451 = vunpack.c.h.b16 %v1369
    %v1452 = vunpack.c.l.b16 %v1370
    %v1453 = vunpack.c.h.b16 %v1370
    %v1454 = vunpack.c.l.b16 %v1371
    %v1455 = vunpack.c.h.b16 %v1371
    %v1456 = vunpack.c.l.b16 %v1372
    %v1457 = vunpack.c.h.b16 %v1372
    %v1458 = vunpack.c.l.b16 %v1373
    %v1459 = vunpack.c.h.b16 %v1373
    %v1460 = vunpack.c.l.b16 %v1374
    %v1461 = vunpack.c.h.b16 %v1374
    %v1462 = vunpack.c.l.b16 %v1375
    %v1463 = vunpack.c.h.b16 %v1375
    %v1464 = vunpack.c.l.b16 %v1376
    %v1465 = vunpack.c.h.b16 %v1376
    %v1466 = vunpack.c.l.b16 %v1377
    %v1467 = vunpack.c.h.b16 %v1377
    %v1468 = vunpack.c.l.b16 %v1378
    %v1469 = vunpack.c.h.b16 %v1378
    %v1470 = vunpack.c.l.b16 %v1379
    %v1471 = vunpack.c.h.b16 %v1379
    %v1472 = vunpack.c.l.b16 %v1380
    %v1473 = vunpack.c.h.b16 %v1380
    %v1474 = vunpack.c.l.b16 %v1381
    %v1475 = vunpack.c.h.b16 %v1381
    %v1476 = vunpack.c.l.b16 %v1382
    %v1477 = vunpack.c.h.b16 %v1382
    %v1478 = vunpack.c.l.b16 %v1383
    %v1479 = vunpack.c.h.b16 %v1383
    %v1480 = vpack.c.b16 %v1416, %v1416
    %v1481 = vpack.c.b16 %v1417, %v1417
    %v1482 = vpack.c.b16 %v1418, %v1418
    %v1483 = vpack.c.b16 %v1419, %v1419
    %v1484 = vpack.c.b16 %v1420, %v1420
    %v1485 = vpack.c.b16 %v1421, %v1421
    %v1486 = vpack.c.b16 %v1422, %v1422
    %v1487 = vpack.c.b16 %v1423, %v1423
    %v1488 = vpack.c.b16 %v1424, %v1424
    %v1489 = vpack.c.b16 %v1425, %v1425
    %v1490 = vpack.c.b16 %v1426, %v1426
    %v1491 = vpack.c.b16 %v1427, %v1427
    %v1492 = vpack.c.b16 %v1428, %v1428
    %v1493 = vpack.c.b16 %v1429, %v1429
    %v1494 = vpack.c.b16 %v1430, %v1430
    %v1495 = vpack.c.b16 %v1431, %v1431
    %v1496 = vpack.c.b16 %v1432, %v1432
    %v1497 = vpack.c.b16 %v1433, %v1433
    %v1498 = vpack.c.b16 %v1434, %v1434
    %v1499 = vpack.c.b16 %v1435, %v1435
    %v1500 = vpack.c.b16 %v1436, %v1436
    %v1501 = vpack.c.b16 %v1437, %v1437
    %v1502 = vpack.c.b16 %v1438, %v1438
    %v1503 = vpack.c.b16 %v1439, %v1439
    %v1504 = vpack.c.b16 %v1440, %v1440
    %v1505 = vpack.c.b16 %v1441, %v1441
    %v1506 = vpack.c.b16 %v1442, %v1442
    %v1507 = vpack.c.b16 %v1443, %v1443
    %v1508 = vpack.c.b16 %v1444, %v1444
    %v1509 = vpack.c.b16 %v1445, %v1445
    %v1510 = vpack.c.b16 %v1446, %v1446
    %v1511 = vpack.c.b16 %v1447, %v1447
    %v1512 = vpack.c.b16 %v1448, %v1448
    %v1513 = vpack.c.b16 %v1449, %v1449
    %v1514 = vpack.c.b16 %v1450, %v1450
    %v1515 = vpack.c.b16 %v1451, %v1451
    %v1516 = vpack.c.b16 %v1452, %v1452
    %v1517 = vpack.c.b16 %v1453, %v1453
    %v1518 = vpack.c.b16 %v1454, %v1454
    %v1519 = vpack.c.b16 %v1455, %v1455
    %v1520 = vpack.c.b16 %v1456, %v1456
    %v1521 = vpack.c.b16 %v1457, %v1457
    %v1522 = vpack.c.b16 %v1458, %v1458
    %v1523 = vpack.c.b16 %v1459, %v1459
    %v1524 = vpack.c.b16 %v1460, %v1460
    %v1525 = vpack.c.b16 %v1461, %v1461
    %v1526 = vpack.c.b16 %v1462, %v1462
    %v1527 = vpack.c.b16 %v1463, %v1463
    %v1528 = vpack.c.b16 %v1464, %v1464
    %v1529 = vpack.c.b16 %v1465, %v1465
    %v1530 = vpack.c.b16 %v1466, %v1466
    %v1531 = vpack.c.b16 %v1467, %v1467
    %v1532 = vpack.c.b16 %v1468, %v1468
    %v1533 = vpack.c.b16 %v1469, %v1469
    %v1534 = vpack.c.b16 %v1470, %v1470
    %v1535 = vpack.c.b16 %v1471, %v1471
    %v1536 = vpack.c.b16 %v1472, %v1472
    %v1537 = vpack.c.b16 %v1473, %v1473
    %v1538 = vpack.c.b16 %v1474, %v1474
    %v1539 = vpack.c.b16 %v1475, %v1475
    %v1540 = vpack.c.b16 %v1476, %v1476
    %v1541 = vpack.c.b16 %v1477, %v1477
    %v1542 = vpack.c.b16 %v1478, %v1478
    %v1543 = vpack.c.b16 %v1479, %v1479
    %1608 = vst [vmem:[%s4] sm:$0xf] %v1480
    %1609 = vst [vmem:[%s4 + $0x4] sm:$0xf] %v1481
    %1610 = vst [vmem:[%s4 + $0x8] sm:$0xf] %v1482
    %1611 = vst [vmem:[%s4 + $0xc] sm:$0xf] %v1483
    %1612 = vst [vmem:[%s4 + $0x10] sm:$0xf] %v1484
    %1613 = vst [vmem:[%s4 + $0x14] sm:$0xf] %v1485
    %1614 = vst [vmem:[%s4 + $0x18] sm:$0xf] %v1486
    %1615 = vst [vmem:[%s4 + $0x1c] sm:$0xf] %v1487
    %1616 = vst [vmem:[%s4 + $0x20] sm:$0xf] %v1488
    %1617 = vst [vmem:[%s4 + $0x24] sm:$0xf] %v1489
    %1618 = vst [vmem:[%s4 + $0x28] sm:$0xf] %v1490
    %1619 = vst [vmem:[%s4 + $0x2c] sm:$0xf] %v1491
    %1620 = vst [vmem:[%s4 + $0x30] sm:$0xf] %v1492
    %1621 = vst [vmem:[%s4 + $0x34] sm:$0xf] %v1493
    %1622 = vst [vmem:[%s4 + $0x38] sm:$0xf] %v1494
    %1623 = vst [vmem:[%s4 + $0x3c] sm:$0xf] %v1495
    %1624 = vst [vmem:[%s4 + $0x40] sm:$0xf] %v1496
    %1625 = vst [vmem:[%s4 + $0x44] sm:$0xf] %v1497
    %1626 = vst [vmem:[%s4 + $0x48] sm:$0xf] %v1498
    %1627 = vst [vmem:[%s4 + $0x4c] sm:$0xf] %v1499
    %1628 = vst [vmem:[%s4 + $0x50] sm:$0xf] %v1500
    %1629 = vst [vmem:[%s4 + $0x54] sm:$0xf] %v1501
    %1630 = vst [vmem:[%s4 + $0x58] sm:$0xf] %v1502
    %1631 = vst [vmem:[%s4 + $0x5c] sm:$0xf] %v1503
    %1632 = vst [vmem:[%s4 + $0x60] sm:$0xf] %v1504
    %1633 = vst [vmem:[%s4 + $0x64] sm:$0xf] %v1505
    %1634 = vst [vmem:[%s4 + $0x68] sm:$0xf] %v1506
    %1635 = vst [vmem:[%s4 + $0x6c] sm:$0xf] %v1507
    %1636 = vst [vmem:[%s4 + $0x70] sm:$0xf] %v1508
    %1637 = vst [vmem:[%s4 + $0x74] sm:$0xf] %v1509
    %1638 = vst [vmem:[%s4 + $0x78] sm:$0xf] %v1510
    %1639 = vst [vmem:[%s4 + $0x7c] sm:$0xf] %v1511
    %1640 = vst [vmem:[%s4 + $0x80] sm:$0xf] %v1512
    %1641 = vst [vmem:[%s4 + $0x84] sm:$0xf] %v1513
    %1642 = vst [vmem:[%s4 + $0x88] sm:$0xf] %v1514
    %1643 = vst [vmem:[%s4 + $0x8c] sm:$0xf] %v1515
    %1644 = vst [vmem:[%s4 + $0x90] sm:$0xf] %v1516
    %1645 = vst [vmem:[%s4 + $0x94] sm:$0xf] %v1517
    %1646 = vst [vmem:[%s4 + $0x98] sm:$0xf] %v1518
    %1647 = vst [vmem:[%s4 + $0x9c] sm:$0xf] %v1519
    %1648 = vst [vmem:[%s4 + $0xa0] sm:$0xf] %v1520
    %1649 = vst [vmem:[%s4 + $0xa4] sm:$0xf] %v1521
    %1650 = vst [vmem:[%s4 + $0xa8] sm:$0xf] %v1522
    %1651 = vst [vmem:[%s4 + $0xac] sm:$0xf] %v1523
    %1652 = vst [vmem:[%s4 + $0xb0] sm:$0xf] %v1524
    %1653 = vst [vmem:[%s4 + $0xb4] sm:$0xf] %v1525
    %1654 = vst [vmem:[%s4 + $0xb8] sm:$0xf] %v1526
    %1655 = vst [vmem:[%s4 + $0xbc] sm:$0xf] %v1527
    %1656 = vst [vmem:[%s4 + $0xc0] sm:$0xf] %v1528
    %1657 = vst [vmem:[%s4 + $0xc4] sm:$0xf] %v1529
    %1658 = vst [vmem:[%s4 + $0xc8] sm:$0xf] %v1530
    %1659 = vst [vmem:[%s4 + $0xcc] sm:$0xf] %v1531
    %1660 = vst [vmem:[%s4 + $0xd0] sm:$0xf] %v1532
    %1661 = vst [vmem:[%s4 + $0xd4] sm:$0xf] %v1533
    %1662 = vst [vmem:[%s4 + $0xd8] sm:$0xf] %v1534
    %1663 = vst [vmem:[%s4 + $0xdc] sm:$0xf] %v1535
    %1664 = vst [vmem:[%s4 + $0xe0] sm:$0xf] %v1536
    %1665 = vst [vmem:[%s4 + $0xe4] sm:$0xf] %v1537
    %1666 = vst [vmem:[%s4 + $0xe8] sm:$0xf] %v1538
    %1667 = vst [vmem:[%s4 + $0xec] sm:$0xf] %v1539
    %1668 = vst [vmem:[%s4 + $0xf0] sm:$0xf] %v1540
    %1669 = vst [vmem:[%s4 + $0xf4] sm:$0xf] %v1541
    %1670 = vst [vmem:[%s4 + $0xf8] sm:$0xf] %v1542
    %1671 = vst [vmem:[%s4 + $0xfc] sm:$0xf] %v1543
  $region25: #{densenet_finetune_forward.21} parent=0 // pred_fallthru
    _
  // Predicated region
  $region26: #{densenet_finetune_forward.21} parent=0 // pred_check
    _
  $region27: #{densenet_finetune_forward.21} parent=0 // pred_check_branch
    %1673 = sbr.rel (0) target = $region29
  $region28: #{densenet_finetune_forward.21} parent=0 // pred_region
    _
  $region29: #{densenet_finetune_forward.21} parent=0 // pred_fallthru
    _
  // Predicated region
  $region30: #{densenet_finetune_forward.21} parent=0 // pred_check
    _
  $region31: #{densenet_finetune_forward.21} parent=0 // pred_check_branch
    %1675 = sbr.rel (0) target = $region33
  $region32: #{densenet_finetune_forward.21} parent=0 // pred_region
    _
  $region33: #{densenet_finetune_forward.21} parent=0 // pred_fallthru
    _

// kernel: densenet_finetune_forward.22
$region0: #{densenet_finetune_forward.22}
  #allocation0 [shape = 'u32[]', space=smem, size = 0x4, offset = 0x4, fixed_abs, tag = 'smem constant byte address 0x4 - core index']
  #allocation1 [shape = 'u32[144,128]{1,0:T(1,128)}', space=vmem, size = 0x12000, scoped, tag = 'internal scratch']
  #allocation2 [shape = 'f32[128,128]{1,0:T(8,128)}', space=vmem, size = 0x10000, scoped, tag = 'scratch operand']
  %s0 = inlined_call_operand.vmem [shape: bf16[128,128], index: 0, kind: input, shape index: {}]
  %s1 = inlined_call_operand.vmem [shape: bf16[128,128], index: 1, kind: input, shape index: {}]
  %s2 = inlined_call_operand.vmem [shape: f32[1,128], index: 2, kind: input, shape index: {}]
  %s3 = inlined_call_operand.vmem [shape: f32[1,128], index: 3, kind: input, shape index: {}]
  %s4 = inlined_call_operand.vmem [shape: f32[1,128], index: 4, kind: input, shape index: {}]
  %s5 = inlined_call_operand.vmem [shape: f32[1,128], index: 5, kind: input, shape index: {}]
  %s6 = inlined_call_operand.vmem [shape: bf16[128,128], index: 6, kind: output, shape index: {}]
  %s7 = sld [smem:[#allocation0]]
  $region42: #{densenet_finetune_forward.22} parent=0
    _
  %s9 = ssub.s32 1, %s7
  %s10 = scalar_select 0, %s9, %s7
  // Predicated region
  $region2: #{densenet_finetune_forward.22} parent=0 // pred_check
    _
  $region3: #{densenet_finetune_forward.22} parent=0 // pred_check_branch
    %12 = sbr.rel (0) target = $region5
  $region4: #{densenet_finetune_forward.22} parent=0 // pred_region
    _
  $region5: #{densenet_finetune_forward.22} parent=0 // pred_fallthru
    _
  // Predicated region
  $region6: #{densenet_finetune_forward.22} parent=0 // pred_check
    _
  $region7: #{densenet_finetune_forward.22} parent=0 // pred_check_branch
    %14 = sbr.rel (0) target = $region9
  $region8: #{densenet_finetune_forward.22} parent=0 // pred_region
    _
  $region9: #{densenet_finetune_forward.22} parent=0 // pred_fallthru
    _
  // Predicated region
  $region10: #{densenet_finetune_forward.22} parent=0 // pred_check
    _
  $region11: #{densenet_finetune_forward.22} parent=0 // pred_check_branch
    %16 = sbr.rel (0) target = $region13
  $region12: #{densenet_finetune_forward.22} parent=0 // pred_region
    _
  $region13: #{densenet_finetune_forward.22} parent=0 // pred_fallthru
    _
  // Predicated region
  $region14: #{densenet_finetune_forward.22} parent=0 // pred_check
    _
  $region15: #{densenet_finetune_forward.22} parent=0 // pred_check_branch
    %18 = sbr.rel (0) target = $region17
  $region16: #{densenet_finetune_forward.22} parent=0 // pred_region
    _
  $region17: #{densenet_finetune_forward.22} parent=0 // pred_fallthru
    _
  // Predicated region
  $region18: #{densenet_finetune_forward.22} parent=0 // pred_check
    _
  $region19: #{densenet_finetune_forward.22} parent=0 // pred_check_branch
    %20 = sbr.rel (0) target = $region21
  $region20: #{densenet_finetune_forward.22} parent=0 // pred_region
    _
  $region21: #{densenet_finetune_forward.22} parent=0 // pred_fallthru
    _
  // Predicated region
  $region22: #{densenet_finetune_forward.22} parent=0 // pred_check
    _
  $region23: #{densenet_finetune_forward.22} parent=0 // pred_check_branch
    %22 = sbr.rel (0) target = $region25
  $region24: #{densenet_finetune_forward.22} parent=0 // pred_region
    _
  $region25: #{densenet_finetune_forward.22} parent=0 // pred_fallthru
    _
  %p24 = scmp.eq.s32.totalorder 0, 0
  // Predicated region
  $region26: #{densenet_finetune_forward.22} parent=0 // pred_check
    %p25 = pneg %p24
  $region27: #{densenet_finetune_forward.22} parent=0 // pred_check_branch
    %27 = sbr.rel (%p25) target = $region29
  $region28: #{densenet_finetune_forward.22} parent=0 // pred_region
    %28 = vst [vmem:[#allocation2] sm:$0xff] 0.0
    %29 = vst [vmem:[#allocation2 + $0x8] sm:$0xff] 0.0
    %30 = vst [vmem:[#allocation2 + $0x10] sm:$0xff] 0.0
    %31 = vst [vmem:[#allocation2 + $0x18] sm:$0xff] 0.0
    %32 = vst [vmem:[#allocation2 + $0x20] sm:$0xff] 0.0
    %33 = vst [vmem:[#allocation2 + $0x28] sm:$0xff] 0.0
    %34 = vst [vmem:[#allocation2 + $0x30] sm:$0xff] 0.0
    %35 = vst [vmem:[#allocation2 + $0x38] sm:$0xff] 0.0
    %36 = vst [vmem:[#allocation2 + $0x40] sm:$0xff] 0.0
    %37 = vst [vmem:[#allocation2 + $0x48] sm:$0xff] 0.0
    %38 = vst [vmem:[#allocation2 + $0x50] sm:$0xff] 0.0
    %39 = vst [vmem:[#allocation2 + $0x58] sm:$0xff] 0.0
    %40 = vst [vmem:[#allocation2 + $0x60] sm:$0xff] 0.0
    %41 = vst [vmem:[#allocation2 + $0x68] sm:$0xff] 0.0
    %42 = vst [vmem:[#allocation2 + $0x70] sm:$0xff] 0.0
    %43 = vst [vmem:[#allocation2 + $0x78] sm:$0xff] 0.0
  $region29: #{densenet_finetune_forward.22} parent=0 // pred_fallthru
    _
  %v44 = vld [vmem:[%s0] sm:$0xf]
  %v45 = vld [vmem:[%s0 + $0x4] sm:$0xf]
  %v46 = vld [vmem:[%s0 + $0x8] sm:$0xf]
  %v47 = vld [vmem:[%s0 + $0xc] sm:$0xf]
  %v48 = vld [vmem:[%s0 + $0x10] sm:$0xf]
  %v49 = vld [vmem:[%s0 + $0x14] sm:$0xf]
  %v50 = vld [vmem:[%s0 + $0x18] sm:$0xf]
  %v51 = vld [vmem:[%s0 + $0x1c] sm:$0xf]
  %v52 = vld [vmem:[%s0 + $0x20] sm:$0xf]
  %v53 = vld [vmem:[%s0 + $0x24] sm:$0xf]
  %v54 = vld [vmem:[%s0 + $0x28] sm:$0xf]
  %v55 = vld [vmem:[%s0 + $0x2c] sm:$0xf]
  %v56 = vld [vmem:[%s0 + $0x30] sm:$0xf]
  %v57 = vld [vmem:[%s0 + $0x34] sm:$0xf]
  %v58 = vld [vmem:[%s0 + $0x38] sm:$0xf]
  %v59 = vld [vmem:[%s0 + $0x3c] sm:$0xf]
  %v60 = vld [vmem:[%s2] sm:$0x1]
  %v61 = vpack.c.bf16 %v60, %v60
  %v62 = vld [vmem:[%s3] sm:$0x1]
  %v63 = vpack.c.bf16 %v62, %v62
  %v65 = vpack.i.b16 %v61, %v61
  %v67 = vlaneseq
  %v68 = vshrl.u32 %v67, 7
  %v69 = vsub.s32 0, %v68
  %v70 = vrot.slane %v65, %v69
  %v72 = vunpack.c.l.b16 %v70
  %v73 = vpack.c.b16 %v72, %v72
  %v75 = vmul.bf16 %v44, %v73
  %v76 = vmul.bf16 %v45, %v73
  %v77 = vmul.bf16 %v46, %v73
  %v78 = vmul.bf16 %v47, %v73
  %v79 = vmul.bf16 %v48, %v73
  %v80 = vmul.bf16 %v49, %v73
  %v81 = vmul.bf16 %v50, %v73
  %v82 = vmul.bf16 %v51, %v73
  %v83 = vmul.bf16 %v52, %v73
  %v84 = vmul.bf16 %v53, %v73
  %v85 = vmul.bf16 %v54, %v73
  %v86 = vmul.bf16 %v55, %v73
  %v87 = vmul.bf16 %v56, %v73
  %v88 = vmul.bf16 %v57, %v73
  %v89 = vmul.bf16 %v58, %v73
  %v90 = vmul.bf16 %v59, %v73
  %v92 = vpack.i.b16 %v63, %v63
  %v94 = vlaneseq
  %v95 = vshrl.u32 %v94, 7
  %v96 = vsub.s32 0, %v95
  %v97 = vrot.slane %v92, %v96
  %v99 = vunpack.c.l.b16 %v97
  %v100 = vpack.c.b16 %v99, %v99
  %v102 = vadd.bf16 %v75, %v100
  %v103 = vadd.bf16 %v76, %v100
  %v104 = vadd.bf16 %v77, %v100
  %v105 = vadd.bf16 %v78, %v100
  %v106 = vadd.bf16 %v79, %v100
  %v107 = vadd.bf16 %v80, %v100
  %v108 = vadd.bf16 %v81, %v100
  %v109 = vadd.bf16 %v82, %v100
  %v110 = vadd.bf16 %v83, %v100
  %v111 = vadd.bf16 %v84, %v100
  %v112 = vadd.bf16 %v85, %v100
  %v113 = vadd.bf16 %v86, %v100
  %v114 = vadd.bf16 %v87, %v100
  %v115 = vadd.bf16 %v88, %v100
  %v116 = vadd.bf16 %v89, %v100
  %v117 = vadd.bf16 %v90, %v100
  %v118 = vmax.bf16 %v102, 0
  %v119 = vmax.bf16 %v103, 0
  %v120 = vmax.bf16 %v104, 0
  %v121 = vmax.bf16 %v105, 0
  %v122 = vmax.bf16 %v106, 0
  %v123 = vmax.bf16 %v107, 0
  %v124 = vmax.bf16 %v108, 0
  %v125 = vmax.bf16 %v109, 0
  %v126 = vmax.bf16 %v110, 0
  %v127 = vmax.bf16 %v111, 0
  %v128 = vmax.bf16 %v112, 0
  %v129 = vmax.bf16 %v113, 0
  %v130 = vmax.bf16 %v114, 0
  %v131 = vmax.bf16 %v115, 0
  %v132 = vmax.bf16 %v116, 0
  %v133 = vmax.bf16 %v117, 0
  %v134 = vld [vmem:[#allocation2] sm:$0xff]
  %v135 = vld [vmem:[#allocation2 + $0x8] sm:$0xff]
  %v136 = vld [vmem:[#allocation2 + $0x10] sm:$0xff]
  %v137 = vld [vmem:[#allocation2 + $0x18] sm:$0xff]
  %v138 = vld [vmem:[#allocation2 + $0x20] sm:$0xff]
  %v139 = vld [vmem:[#allocation2 + $0x28] sm:$0xff]
  %v140 = vld [vmem:[#allocation2 + $0x30] sm:$0xff]
  %v141 = vld [vmem:[#allocation2 + $0x38] sm:$0xff]
  %v142 = vld [vmem:[#allocation2 + $0x40] sm:$0xff]
  %v143 = vld [vmem:[#allocation2 + $0x48] sm:$0xff]
  %v144 = vld [vmem:[#allocation2 + $0x50] sm:$0xff]
  %v145 = vld [vmem:[#allocation2 + $0x58] sm:$0xff]
  %v146 = vld [vmem:[#allocation2 + $0x60] sm:$0xff]
  %v147 = vld [vmem:[#allocation2 + $0x68] sm:$0xff]
  %v148 = vld [vmem:[#allocation2 + $0x70] sm:$0xff]
  %v149 = vld [vmem:[#allocation2 + $0x78] sm:$0xff]
  %v150 = vld [vmem:[%s1] sm:$0xf]
  %v151 = vld [vmem:[%s1 + $0x4] sm:$0xf]
  %v152 = vld [vmem:[%s1 + $0x8] sm:$0xf]
  %v153 = vld [vmem:[%s1 + $0xc] sm:$0xf]
  %v154 = vld [vmem:[%s1 + $0x10] sm:$0xf]
  %v155 = vld [vmem:[%s1 + $0x14] sm:$0xf]
  %v156 = vld [vmem:[%s1 + $0x18] sm:$0xf]
  %v157 = vld [vmem:[%s1 + $0x1c] sm:$0xf]
  %v158 = vld [vmem:[%s1 + $0x20] sm:$0xf]
  %v159 = vld [vmem:[%s1 + $0x24] sm:$0xf]
  %v160 = vld [vmem:[%s1 + $0x28] sm:$0xf]
  %v161 = vld [vmem:[%s1 + $0x2c] sm:$0xf]
  %v162 = vld [vmem:[%s1 + $0x30] sm:$0xf]
  %v163 = vld [vmem:[%s1 + $0x34] sm:$0xf]
  %v164 = vld [vmem:[%s1 + $0x38] sm:$0xf]
  %v165 = vld [vmem:[%s1 + $0x3c] sm:$0xf]
  %v182 = vunpack.c.l.b16 %v118
  %v183 = vunpack.c.l.b16 %v119
  %v184 = vunpack.c.l.b16 %v120
  %v185 = vunpack.c.l.b16 %v121
  %v186 = vunpack.c.l.b16 %v122
  %v187 = vunpack.c.l.b16 %v123
  %v188 = vunpack.c.l.b16 %v124
  %v189 = vunpack.c.l.b16 %v125
  %v190 = vunpack.c.l.b16 %v126
  %v191 = vunpack.c.l.b16 %v127
  %v192 = vunpack.c.l.b16 %v128
  %v193 = vunpack.c.l.b16 %v129
  %v194 = vunpack.c.l.b16 %v130
  %v195 = vunpack.c.l.b16 %v131
  %v196 = vunpack.c.l.b16 %v132
  %v197 = vunpack.c.l.b16 %v133
  %v198 = vpack.c.b16 %v183, %v182
  %v199 = vpack.c.b16 %v185, %v184
  %v200 = vpack.c.b16 %v187, %v186
  %v201 = vpack.c.b16 %v189, %v188
  %v202 = vpack.c.b16 %v191, %v190
  %v203 = vpack.c.b16 %v193, %v192
  %v204 = vpack.c.b16 %v195, %v194
  %v205 = vpack.c.b16 %v197, %v196
  %v230 = vunpack.c.l.b16 %v150
  %v231 = vunpack.c.l.b16 %v151
  %v232 = vunpack.c.l.b16 %v152
  %v233 = vunpack.c.l.b16 %v153
  %v234 = vunpack.c.l.b16 %v154
  %v235 = vunpack.c.l.b16 %v155
  %v236 = vunpack.c.l.b16 %v156
  %v237 = vunpack.c.l.b16 %v157
  %v238 = vunpack.c.l.b16 %v158
  %v239 = vunpack.c.l.b16 %v159
  %v240 = vunpack.c.l.b16 %v160
  %v241 = vunpack.c.l.b16 %v161
  %v242 = vunpack.c.l.b16 %v162
  %v243 = vunpack.c.l.b16 %v163
  %v244 = vunpack.c.l.b16 %v164
  %v245 = vunpack.c.l.b16 %v165
  %v246 = vpack.c.b16 %v231, %v230
  %v247 = vpack.c.b16 %v233, %v232
  %v248 = vpack.c.b16 %v235, %v234
  %v249 = vpack.c.b16 %v237, %v236
  %v250 = vpack.c.b16 %v239, %v238
  %v251 = vpack.c.b16 %v241, %v240
  %v252 = vpack.c.b16 %v243, %v242
  %v253 = vpack.c.b16 %v245, %v244
  %262 = vmatprep.subr.bf16.mxu0 0
  %263 = vmatpush1.bf16.msra.mxu0 %v246
  %264 = vmatprep.subr.bf16.mxu0 0
  %265 = vmatpush1.bf16.msra.mxu0 %v247
  %266 = vmatprep.subr.bf16.mxu0 0
  %267 = vmatpush1.bf16.msra.mxu0 %v248
  %268 = vmatprep.subr.bf16.mxu0 0
  %269 = vmatpush1.bf16.msra.mxu0 %v249
  %270 = vmatprep.subr.bf16.mxu0 0
  %271 = vmatpush1.bf16.msra.mxu0 %v250
  %272 = vmatprep.subr.bf16.mxu0 0
  %273 = vmatpush1.bf16.msra.mxu0 %v251
  %274 = vmatprep.subr.bf16.mxu0 0
  %275 = vmatpush1.bf16.msra.mxu0 %v252
  %276 = vmatprep.subr.bf16.mxu0 0
  %277 = vmatpush1.bf16.msra.mxu0 %v253
  %278 = vmatprep.subr.bf16.mxu0 0
  %279 = vmatpush1.bf16.msra.mxu0 0
  %280 = vmatprep.subr.bf16.mxu0 0
  %281 = vmatpush1.bf16.msra.mxu0 0
  %282 = vmatprep.subr.bf16.mxu0 0
  %283 = vmatpush1.bf16.msra.mxu0 0
  %284 = vmatprep.subr.bf16.mxu0 0
  %285 = vmatpush1.bf16.msra.mxu0 0
  %286 = vmatprep.subr.bf16.mxu0 0
  %287 = vmatpush1.bf16.msra.mxu0 0
  %288 = vmatprep.subr.bf16.mxu0 0
  %289 = vmatpush1.bf16.msra.mxu0 0
  %290 = vmatprep.subr.bf16.mxu0 0
  %291 = vmatpush1.bf16.msra.mxu0 0
  %292 = vmatprep.subr.bf16.mxu0 0
  %293 = vmatpush1.bf16.msra.mxu0 0
  %294 = vmatprep.mubr.bf16.mxu0 0
  %295 = vmatmul.mubr.bf16.gmra.mrb[0].mxu0 %v198
  %v296 = vpop.f32.mrb[0].mxu0
  %v297 = vadd.f32 0.0, %v296
  %v298 = vpop.f32.mrb[0].mxu0
  %v299 = vpop.f32.mrb[0].mxu0
  %v300 = vadd.f32 0.0, %v299
  %v301 = vpop.f32.mrb[0].mxu0
  %302 = vmatprep.mubr.bf16.mxu0 0
  %303 = vmatmul.mubr.bf16.gmra.mrb[0].mxu0 %v199
  %v304 = vpop.f32.mrb[0].mxu0
  %v305 = vadd.f32 0.0, %v304
  %v306 = vpop.f32.mrb[0].mxu0
  %v307 = vpop.f32.mrb[0].mxu0
  %v308 = vadd.f32 0.0, %v307
  %v309 = vpop.f32.mrb[0].mxu0
  %310 = vmatprep.mubr.bf16.mxu0 0
  %311 = vmatmul.mubr.bf16.gmra.mrb[0].mxu0 %v200
  %v312 = vpop.f32.mrb[0].mxu0
  %v313 = vadd.f32 0.0, %v312
  %v314 = vpop.f32.mrb[0].mxu0
  %v315 = vpop.f32.mrb[0].mxu0
  %v316 = vadd.f32 0.0, %v315
  %v317 = vpop.f32.mrb[0].mxu0
  %318 = vmatprep.mubr.bf16.mxu0 0
  %319 = vmatmul.mubr.bf16.gmra.mrb[0].mxu0 %v201
  %v320 = vpop.f32.mrb[0].mxu0
  %v321 = vadd.f32 0.0, %v320
  %v322 = vpop.f32.mrb[0].mxu0
  %v323 = vpop.f32.mrb[0].mxu0
  %v324 = vadd.f32 0.0, %v323
  %v325 = vpop.f32.mrb[0].mxu0
  %326 = vmatprep.mubr.bf16.mxu0 0
  %327 = vmatmul.mubr.bf16.gmra.mrb[0].mxu0 %v202
  %v328 = vpop.f32.mrb[0].mxu0
  %v329 = vadd.f32 0.0, %v328
  %v330 = vpop.f32.mrb[0].mxu0
  %v331 = vpop.f32.mrb[0].mxu0
  %v332 = vadd.f32 0.0, %v331
  %v333 = vpop.f32.mrb[0].mxu0
  %334 = vmatprep.mubr.bf16.mxu0 0
  %335 = vmatmul.mubr.bf16.gmra.mrb[0].mxu0 %v203
  %v336 = vpop.f32.mrb[0].mxu0
  %v337 = vadd.f32 0.0, %v336
  %v338 = vpop.f32.mrb[0].mxu0
  %v339 = vpop.f32.mrb[0].mxu0
  %v340 = vadd.f32 0.0, %v339
  %v341 = vpop.f32.mrb[0].mxu0
  %342 = vmatprep.mubr.bf16.mxu0 0
  %343 = vmatmul.mubr.bf16.gmra.mrb[0].mxu0 %v204
  %v344 = vpop.f32.mrb[0].mxu0
  %v345 = vadd.f32 0.0, %v344
  %v346 = vpop.f32.mrb[0].mxu0
  %v347 = vpop.f32.mrb[0].mxu0
  %v348 = vadd.f32 0.0, %v347
  %v349 = vpop.f32.mrb[0].mxu0
  %350 = vmatprep.mubr.bf16.mxu0 0
  %351 = vmatmul.mubr.bf16.gmra.mrb[0].mxu0 %v205
  %v352 = vpop.f32.mrb[0].mxu0
  %v353 = vadd.f32 0.0, %v352
  %v354 = vpop.f32.mrb[0].mxu0
  %v355 = vpop.f32.mrb[0].mxu0
  %v356 = vadd.f32 0.0, %v355
  %v357 = vpop.f32.mrb[0].mxu0
  %358 = vdwg.mxu0
  %v359 = vadd.f32 %v134, %v297
  %v360 = vadd.f32 %v135, %v300
  %v361 = vadd.f32 %v136, %v305
  %v362 = vadd.f32 %v137, %v308
  %v363 = vadd.f32 %v138, %v313
  %v364 = vadd.f32 %v139, %v316
  %v365 = vadd.f32 %v140, %v321
  %v366 = vadd.f32 %v141, %v324
  %v367 = vadd.f32 %v142, %v329
  %v368 = vadd.f32 %v143, %v332
  %v369 = vadd.f32 %v144, %v337
  %v370 = vadd.f32 %v145, %v340
  %v371 = vadd.f32 %v146, %v345
  %v372 = vadd.f32 %v147, %v348
  %v373 = vadd.f32 %v148, %v353
  %v374 = vadd.f32 %v149, %v356
  %375 = vst [vmem:[#allocation2] sm:$0xff] %v359
  %376 = vst [vmem:[#allocation2 + $0x8] sm:$0xff] %v360
  %377 = vst [vmem:[#allocation2 + $0x10] sm:$0xff] %v361
  %378 = vst [vmem:[#allocation2 + $0x18] sm:$0xff] %v362
  %379 = vst [vmem:[#allocation2 + $0x20] sm:$0xff] %v363
  %380 = vst [vmem:[#allocation2 + $0x28] sm:$0xff] %v364
  %381 = vst [vmem:[#allocation2 + $0x30] sm:$0xff] %v365
  %382 = vst [vmem:[#allocation2 + $0x38] sm:$0xff] %v366
  %383 = vst [vmem:[#allocation2 + $0x40] sm:$0xff] %v367
  %384 = vst [vmem:[#allocation2 + $0x48] sm:$0xff] %v368
  %385 = vst [vmem:[#allocation2 + $0x50] sm:$0xff] %v369
  %386 = vst [vmem:[#allocation2 + $0x58] sm:$0xff] %v370
  %387 = vst [vmem:[#allocation2 + $0x60] sm:$0xff] %v371
  %388 = vst [vmem:[#allocation2 + $0x68] sm:$0xff] %v372
  %389 = vst [vmem:[#allocation2 + $0x70] sm:$0xff] %v373
  %390 = vst [vmem:[#allocation2 + $0x78] sm:$0xff] %v374
  // Predicated region
  $region30: #{densenet_finetune_forward.22} parent=0 // pred_check
    %p391 = pneg %p24
  $region31: #{densenet_finetune_forward.22} parent=0 // pred_check_branch
    %393 = sbr.rel (%p391) target = $region33
  $region32: #{densenet_finetune_forward.22} parent=0 // pred_region
    %v394 = vld [vmem:[#allocation2] sm:$0xff]
    %v395 = vld [vmem:[#allocation2 + $0x8] sm:$0xff]
    %v396 = vld [vmem:[#allocation2 + $0x10] sm:$0xff]
    %v397 = vld [vmem:[#allocation2 + $0x18] sm:$0xff]
    %v398 = vld [vmem:[#allocation2 + $0x20] sm:$0xff]
    %v399 = vld [vmem:[#allocation2 + $0x28] sm:$0xff]
    %v400 = vld [vmem:[#allocation2 + $0x30] sm:$0xff]
    %v401 = vld [vmem:[#allocation2 + $0x38] sm:$0xff]
    %v402 = vld [vmem:[#allocation2 + $0x40] sm:$0xff]
    %v403 = vld [vmem:[#allocation2 + $0x48] sm:$0xff]
    %v404 = vld [vmem:[#allocation2 + $0x50] sm:$0xff]
    %v405 = vld [vmem:[#allocation2 + $0x58] sm:$0xff]
    %v406 = vld [vmem:[#allocation2 + $0x60] sm:$0xff]
    %v407 = vld [vmem:[#allocation2 + $0x68] sm:$0xff]
    %v408 = vld [vmem:[#allocation2 + $0x70] sm:$0xff]
    %v409 = vld [vmem:[#allocation2 + $0x78] sm:$0xff]
    %v410 = vld [vmem:[%s4] sm:$0x1]
    %v412 = vlaneseq
    %v413 = vshrl.u32 %v412, 7
    %v414 = vsub.s32 0, %v413
    %v415 = vrot.slane %v410, %v414
    %v417 = vmul.f32 %v394, %v415
    %v418 = vmul.f32 %v395, %v415
    %v419 = vmul.f32 %v396, %v415
    %v420 = vmul.f32 %v397, %v415
    %v421 = vmul.f32 %v398, %v415
    %v422 = vmul.f32 %v399, %v415
    %v423 = vmul.f32 %v400, %v415
    %v424 = vmul.f32 %v401, %v415
    %v425 = vmul.f32 %v402, %v415
    %v426 = vmul.f32 %v403, %v415
    %v427 = vmul.f32 %v404, %v415
    %v428 = vmul.f32 %v405, %v415
    %v429 = vmul.f32 %v406, %v415
    %v430 = vmul.f32 %v407, %v415
    %v431 = vmul.f32 %v408, %v415
    %v432 = vmul.f32 %v409, %v415
    %v433 = vld [vmem:[%s5] sm:$0x1]
    %v435 = vlaneseq
    %v436 = vshrl.u32 %v435, 7
    %v437 = vsub.s32 0, %v436
    %v438 = vrot.slane %v433, %v437
    %v440 = vadd.f32 %v417, %v438
    %v441 = vadd.f32 %v418, %v438
    %v442 = vadd.f32 %v419, %v438
    %v443 = vadd.f32 %v420, %v438
    %v444 = vadd.f32 %v421, %v438
    %v445 = vadd.f32 %v422, %v438
    %v446 = vadd.f32 %v423, %v438
    %v447 = vadd.f32 %v424, %v438
    %v448 = vadd.f32 %v425, %v438
    %v449 = vadd.f32 %v426, %v438
    %v450 = vadd.f32 %v427, %v438
    %v451 = vadd.f32 %v428, %v438
    %v452 = vadd.f32 %v429, %v438
    %v453 = vadd.f32 %v430, %v438
    %v454 = vadd.f32 %v431, %v438
    %v455 = vadd.f32 %v432, %v438
    %v456 = vmax.f32 %v440, 0.0
    %v457 = vmax.f32 %v441, 0.0
    %v458 = vmax.f32 %v442, 0.0
    %v459 = vmax.f32 %v443, 0.0
    %v460 = vmax.f32 %v444, 0.0
    %v461 = vmax.f32 %v445, 0.0
    %v462 = vmax.f32 %v446, 0.0
    %v463 = vmax.f32 %v447, 0.0
    %v464 = vmax.f32 %v448, 0.0
    %v465 = vmax.f32 %v449, 0.0
    %v466 = vmax.f32 %v450, 0.0
    %v467 = vmax.f32 %v451, 0.0
    %v468 = vmax.f32 %v452, 0.0
    %v469 = vmax.f32 %v453, 0.0
    %v470 = vmax.f32 %v454, 0.0
    %v471 = vmax.f32 %v455, 0.0
    %v472 = vpack.c.bf16 %v457, %v456
    %v473 = vpack.c.bf16 %v459, %v458
    %v474 = vpack.c.bf16 %v461, %v460
    %v475 = vpack.c.bf16 %v463, %v462
    %v476 = vpack.c.bf16 %v465, %v464
    %v477 = vpack.c.bf16 %v467, %v466
    %v478 = vpack.c.bf16 %v469, %v468
    %v479 = vpack.c.bf16 %v471, %v470
    %v488 = vunpack.c.l.b16 %v472
    %v489 = vunpack.c.h.b16 %v472
    %v490 = vunpack.c.l.b16 %v473
    %v491 = vunpack.c.h.b16 %v473
    %v492 = vunpack.c.l.b16 %v474
    %v493 = vunpack.c.h.b16 %v474
    %v494 = vunpack.c.l.b16 %v475
    %v495 = vunpack.c.h.b16 %v475
    %v496 = vunpack.c.l.b16 %v476
    %v497 = vunpack.c.h.b16 %v476
    %v498 = vunpack.c.l.b16 %v477
    %v499 = vunpack.c.h.b16 %v477
    %v500 = vunpack.c.l.b16 %v478
    %v501 = vunpack.c.h.b16 %v478
    %v502 = vunpack.c.l.b16 %v479
    %v503 = vunpack.c.h.b16 %v479
    %v504 = vpack.c.b16 %v488, %v488
    %v505 = vpack.c.b16 %v489, %v489
    %v506 = vpack.c.b16 %v490, %v490
    %v507 = vpack.c.b16 %v491, %v491
    %v508 = vpack.c.b16 %v492, %v492
    %v509 = vpack.c.b16 %v493, %v493
    %v510 = vpack.c.b16 %v494, %v494
    %v511 = vpack.c.b16 %v495, %v495
    %v512 = vpack.c.b16 %v496, %v496
    %v513 = vpack.c.b16 %v497, %v497
    %v514 = vpack.c.b16 %v498, %v498
    %v515 = vpack.c.b16 %v499, %v499
    %v516 = vpack.c.b16 %v500, %v500
    %v517 = vpack.c.b16 %v501, %v501
    %v518 = vpack.c.b16 %v502, %v502
    %v519 = vpack.c.b16 %v503, %v503
    %536 = vst [vmem:[%s6] sm:$0xf] %v504
    %537 = vst [vmem:[%s6 + $0x4] sm:$0xf] %v505
    %538 = vst [vmem:[%s6 + $0x8] sm:$0xf] %v506
    %539 = vst [vmem:[%s6 + $0xc] sm:$0xf] %v507
    %540 = vst [vmem:[%s6 + $0x10] sm:$0xf] %v508
    %541 = vst [vmem:[%s6 + $0x14] sm:$0xf] %v509
    %542 = vst [vmem:[%s6 + $0x18] sm:$0xf] %v510
    %543 = vst [vmem:[%s6 + $0x1c] sm:$0xf] %v511
    %544 = vst [vmem:[%s6 + $0x20] sm:$0xf] %v512
    %545 = vst [vmem:[%s6 + $0x24] sm:$0xf] %v513
    %546 = vst [vmem:[%s6 + $0x28] sm:$0xf] %v514
    %547 = vst [vmem:[%s6 + $0x2c] sm:$0xf] %v515
    %548 = vst [vmem:[%s6 + $0x30] sm:$0xf] %v516
    %549 = vst [vmem:[%s6 + $0x34] sm:$0xf] %v517
    %550 = vst [vmem:[%s6 + $0x38] sm:$0xf] %v518
    %551 = vst [vmem:[%s6 + $0x3c] sm:$0xf] %v519
  $region33: #{densenet_finetune_forward.22} parent=0 // pred_fallthru
    _
  // Predicated region
  $region34: #{densenet_finetune_forward.22} parent=0 // pred_check
    _
  $region35: #{densenet_finetune_forward.22} parent=0 // pred_check_branch
    %553 = sbr.rel (0) target = $region37
  $region36: #{densenet_finetune_forward.22} parent=0 // pred_region
    _
  $region37: #{densenet_finetune_forward.22} parent=0 // pred_fallthru
    _
  // Predicated region
  $region38: #{densenet_finetune_forward.22} parent=0 // pred_check
    _
  $region39: #{densenet_finetune_forward.22} parent=0 // pred_check_branch
    %555 = sbr.rel (0) target = $region41
  $region40: #{densenet_finetune_forward.22} parent=0 // pred_region
    _
  $region41: #{densenet_finetune_forward.22} parent=0 // pred_fallthru
    _

// kernel: densenet_finetune_forward.23
$region0: #{densenet_finetune_forward.23}
  #allocation0 [shape = 'u32[]', space=smem, size = 0x4, offset = 0x4, fixed_abs, tag = 'smem constant byte address 0x4 - core index']
  #allocation1 [shape = 'u32[144,128]{1,0:T(1,128)}', space=vmem, size = 0x12000, scoped, tag = 'internal scratch']
  #allocation2 [shape = 'f32[128,128]{1,0:T(8,128)}', space=vmem, size = 0x10000, scoped, tag = 'scratch operand']
  %s0 = inlined_call_operand.vmem [shape: bf16[128,384], index: 0, kind: input, shape index: {}]
  %s1 = inlined_call_operand.vmem [shape: bf16[384,128], index: 1, kind: input, shape index: {}]
  %s2 = inlined_call_operand.vmem [shape: bf16[128,128], index: 2, kind: output, shape index: {}]
  %s3 = sld [smem:[#allocation0]]
  $region26: #{densenet_finetune_forward.23} parent=0
    _
  %s5 = ssub.s32 1, %s3
  %s6 = scalar_select 0, %s5, %s3
  // Predicated region
  $region2: #{densenet_finetune_forward.23} parent=0 // pred_check
    _
  $region3: #{densenet_finetune_forward.23} parent=0 // pred_check_branch
    %8 = sbr.rel (0) target = $region5
  $region4: #{densenet_finetune_forward.23} parent=0 // pred_region
    _
  $region5: #{densenet_finetune_forward.23} parent=0 // pred_fallthru
    _
  // Predicated region
  $region6: #{densenet_finetune_forward.23} parent=0 // pred_check
    _
  $region7: #{densenet_finetune_forward.23} parent=0 // pred_check_branch
    %10 = sbr.rel (0) target = $region9
  $region8: #{densenet_finetune_forward.23} parent=0 // pred_region
    _
  $region9: #{densenet_finetune_forward.23} parent=0 // pred_fallthru
    _
  %p12 = scmp.eq.s32.totalorder 0, 0
  // Predicated region
  $region10: #{densenet_finetune_forward.23} parent=0 // pred_check
    %p13 = pneg %p12
  $region11: #{densenet_finetune_forward.23} parent=0 // pred_check_branch
    %15 = sbr.rel (%p13) target = $region13
  $region12: #{densenet_finetune_forward.23} parent=0 // pred_region
    %16 = vst [vmem:[#allocation2] sm:$0xff] 0.0
    %17 = vst [vmem:[#allocation2 + $0x8] sm:$0xff] 0.0
    %18 = vst [vmem:[#allocation2 + $0x10] sm:$0xff] 0.0
    %19 = vst [vmem:[#allocation2 + $0x18] sm:$0xff] 0.0
    %20 = vst [vmem:[#allocation2 + $0x20] sm:$0xff] 0.0
    %21 = vst [vmem:[#allocation2 + $0x28] sm:$0xff] 0.0
    %22 = vst [vmem:[#allocation2 + $0x30] sm:$0xff] 0.0
    %23 = vst [vmem:[#allocation2 + $0x38] sm:$0xff] 0.0
    %24 = vst [vmem:[#allocation2 + $0x40] sm:$0xff] 0.0
    %25 = vst [vmem:[#allocation2 + $0x48] sm:$0xff] 0.0
    %26 = vst [vmem:[#allocation2 + $0x50] sm:$0xff] 0.0
    %27 = vst [vmem:[#allocation2 + $0x58] sm:$0xff] 0.0
    %28 = vst [vmem:[#allocation2 + $0x60] sm:$0xff] 0.0
    %29 = vst [vmem:[#allocation2 + $0x68] sm:$0xff] 0.0
    %30 = vst [vmem:[#allocation2 + $0x70] sm:$0xff] 0.0
    %31 = vst [vmem:[#allocation2 + $0x78] sm:$0xff] 0.0
  $region13: #{densenet_finetune_forward.23} parent=0 // pred_fallthru
    _
  %v32 = vld [vmem:[%s0] sm:$0xff]
  %v33 = vld [vmem:[%s0 + $0x8] sm:$0xf]
  %v34 = vld [vmem:[%s0 + $0xc] sm:$0xff]
  %v35 = vld [vmem:[%s0 + $0x14] sm:$0xf]
  %v36 = vld [vmem:[%s0 + $0x18] sm:$0xff]
  %v37 = vld [vmem:[%s0 + $0x20] sm:$0xf]
  %v38 = vld [vmem:[%s0 + $0x24] sm:$0xff]
  %v39 = vld [vmem:[%s0 + $0x2c] sm:$0xf]
  %v40 = vld [vmem:[%s0 + $0x30] sm:$0xff]
  %v41 = vld [vmem:[%s0 + $0x38] sm:$0xf]
  %v42 = vld [vmem:[%s0 + $0x3c] sm:$0xff]
  %v43 = vld [vmem:[%s0 + $0x44] sm:$0xf]
  %v44 = vld [vmem:[%s0 + $0x48] sm:$0xff]
  %v45 = vld [vmem:[%s0 + $0x50] sm:$0xf]
  %v46 = vld [vmem:[%s0 + $0x54] sm:$0xff]
  %v47 = vld [vmem:[%s0 + $0x5c] sm:$0xf]
  %v48 = vld [vmem:[%s0 + $0x60] sm:$0xff]
  %v49 = vld [vmem:[%s0 + $0x68] sm:$0xf]
  %v50 = vld [vmem:[%s0 + $0x6c] sm:$0xff]
  %v51 = vld [vmem:[%s0 + $0x74] sm:$0xf]
  %v52 = vld [vmem:[%s0 + $0x78] sm:$0xff]
  %v53 = vld [vmem:[%s0 + $0x80] sm:$0xf]
  %v54 = vld [vmem:[%s0 + $0x84] sm:$0xff]
  %v55 = vld [vmem:[%s0 + $0x8c] sm:$0xf]
  %v56 = vld [vmem:[%s0 + $0x90] sm:$0xff]
  %v57 = vld [vmem:[%s0 + $0x98] sm:$0xf]
  %v58 = vld [vmem:[%s0 + $0x9c] sm:$0xff]
  %v59 = vld [vmem:[%s0 + $0xa4] sm:$0xf]
  %v60 = vld [vmem:[%s0 + $0xa8] sm:$0xff]
  %v61 = vld [vmem:[%s0 + $0xb0] sm:$0xf]
  %v62 = vld [vmem:[%s0 + $0xb4] sm:$0xff]
  %v63 = vld [vmem:[%s0 + $0xbc] sm:$0xf]
  %v64 = vld [vmem:[#allocation2] sm:$0xff]
  %v65 = vld [vmem:[#allocation2 + $0x8] sm:$0xff]
  %v66 = vld [vmem:[#allocation2 + $0x10] sm:$0xff]
  %v67 = vld [vmem:[#allocation2 + $0x18] sm:$0xff]
  %v68 = vld [vmem:[#allocation2 + $0x20] sm:$0xff]
  %v69 = vld [vmem:[#allocation2 + $0x28] sm:$0xff]
  %v70 = vld [vmem:[#allocation2 + $0x30] sm:$0xff]
  %v71 = vld [vmem:[#allocation2 + $0x38] sm:$0xff]
  %v72 = vld [vmem:[#allocation2 + $0x40] sm:$0xff]
  %v73 = vld [vmem:[#allocation2 + $0x48] sm:$0xff]
  %v74 = vld [vmem:[#allocation2 + $0x50] sm:$0xff]
  %v75 = vld [vmem:[#allocation2 + $0x58] sm:$0xff]
  %v76 = vld [vmem:[#allocation2 + $0x60] sm:$0xff]
  %v77 = vld [vmem:[#allocation2 + $0x68] sm:$0xff]
  %v78 = vld [vmem:[#allocation2 + $0x70] sm:$0xff]
  %v79 = vld [vmem:[#allocation2 + $0x78] sm:$0xff]
  %v80 = vld [vmem:[%s1] sm:$0xf]
  %v81 = vld [vmem:[%s1 + $0x4] sm:$0xf]
  %v82 = vld [vmem:[%s1 + $0x8] sm:$0xf]
  %v83 = vld [vmem:[%s1 + $0xc] sm:$0xf]
  %v84 = vld [vmem:[%s1 + $0x10] sm:$0xf]
  %v85 = vld [vmem:[%s1 + $0x14] sm:$0xf]
  %v86 = vld [vmem:[%s1 + $0x18] sm:$0xf]
  %v87 = vld [vmem:[%s1 + $0x1c] sm:$0xf]
  %v88 = vld [vmem:[%s1 + $0x20] sm:$0xf]
  %v89 = vld [vmem:[%s1 + $0x24] sm:$0xf]
  %v90 = vld [vmem:[%s1 + $0x28] sm:$0xf]
  %v91 = vld [vmem:[%s1 + $0x2c] sm:$0xf]
  %v92 = vld [vmem:[%s1 + $0x30] sm:$0xf]
  %v93 = vld [vmem:[%s1 + $0x34] sm:$0xf]
  %v94 = vld [vmem:[%s1 + $0x38] sm:$0xf]
  %v95 = vld [vmem:[%s1 + $0x3c] sm:$0xf]
  %v96 = vld [vmem:[%s1 + $0x40] sm:$0xf]
  %v97 = vld [vmem:[%s1 + $0x44] sm:$0xf]
  %v98 = vld [vmem:[%s1 + $0x48] sm:$0xf]
  %v99 = vld [vmem:[%s1 + $0x4c] sm:$0xf]
  %v100 = vld [vmem:[%s1 + $0x50] sm:$0xf]
  %v101 = vld [vmem:[%s1 + $0x54] sm:$0xf]
  %v102 = vld [vmem:[%s1 + $0x58] sm:$0xf]
  %v103 = vld [vmem:[%s1 + $0x5c] sm:$0xf]
  %v104 = vld [vmem:[%s1 + $0x60] sm:$0xf]
  %v105 = vld [vmem:[%s1 + $0x64] sm:$0xf]
  %v106 = vld [vmem:[%s1 + $0x68] sm:$0xf]
  %v107 = vld [vmem:[%s1 + $0x6c] sm:$0xf]
  %v108 = vld [vmem:[%s1 + $0x70] sm:$0xf]
  %v109 = vld [vmem:[%s1 + $0x74] sm:$0xf]
  %v110 = vld [vmem:[%s1 + $0x78] sm:$0xf]
  %v111 = vld [vmem:[%s1 + $0x7c] sm:$0xf]
  %v112 = vld [vmem:[%s1 + $0x80] sm:$0xf]
  %v113 = vld [vmem:[%s1 + $0x84] sm:$0xf]
  %v114 = vld [vmem:[%s1 + $0x88] sm:$0xf]
  %v115 = vld [vmem:[%s1 + $0x8c] sm:$0xf]
  %v116 = vld [vmem:[%s1 + $0x90] sm:$0xf]
  %v117 = vld [vmem:[%s1 + $0x94] sm:$0xf]
  %v118 = vld [vmem:[%s1 + $0x98] sm:$0xf]
  %v119 = vld [vmem:[%s1 + $0x9c] sm:$0xf]
  %v120 = vld [vmem:[%s1 + $0xa0] sm:$0xf]
  %v121 = vld [vmem:[%s1 + $0xa4] sm:$0xf]
  %v122 = vld [vmem:[%s1 + $0xa8] sm:$0xf]
  %v123 = vld [vmem:[%s1 + $0xac] sm:$0xf]
  %v124 = vld [vmem:[%s1 + $0xb0] sm:$0xf]
  %v125 = vld [vmem:[%s1 + $0xb4] sm:$0xf]
  %v126 = vld [vmem:[%s1 + $0xb8] sm:$0xf]
  %v127 = vld [vmem:[%s1 + $0xbc] sm:$0xf]
  %v160 = vunpack.c.l.b16 %v32
  %v161 = vunpack.c.h.b16 %v32
  %v162 = vunpack.c.l.b16 %v33
  %v163 = vunpack.c.l.b16 %v34
  %v164 = vunpack.c.h.b16 %v34
  %v165 = vunpack.c.l.b16 %v35
  %v166 = vunpack.c.l.b16 %v36
  %v167 = vunpack.c.h.b16 %v36
  %v168 = vunpack.c.l.b16 %v37
  %v169 = vunpack.c.l.b16 %v38
  %v170 = vunpack.c.h.b16 %v38
  %v171 = vunpack.c.l.b16 %v39
  %v172 = vunpack.c.l.b16 %v40
  %v173 = vunpack.c.h.b16 %v40
  %v174 = vunpack.c.l.b16 %v41
  %v175 = vunpack.c.l.b16 %v42
  %v176 = vunpack.c.h.b16 %v42
  %v177 = vunpack.c.l.b16 %v43
  %v178 = vunpack.c.l.b16 %v44
  %v179 = vunpack.c.h.b16 %v44
  %v180 = vunpack.c.l.b16 %v45
  %v181 = vunpack.c.l.b16 %v46
  %v182 = vunpack.c.h.b16 %v46
  %v183 = vunpack.c.l.b16 %v47
  %v184 = vunpack.c.l.b16 %v48
  %v185 = vunpack.c.h.b16 %v48
  %v186 = vunpack.c.l.b16 %v49
  %v187 = vunpack.c.l.b16 %v50
  %v188 = vunpack.c.h.b16 %v50
  %v189 = vunpack.c.l.b16 %v51
  %v190 = vunpack.c.l.b16 %v52
  %v191 = vunpack.c.h.b16 %v52
  %v192 = vunpack.c.l.b16 %v53
  %v193 = vunpack.c.l.b16 %v54
  %v194 = vunpack.c.h.b16 %v54
  %v195 = vunpack.c.l.b16 %v55
  %v196 = vunpack.c.l.b16 %v56
  %v197 = vunpack.c.h.b16 %v56
  %v198 = vunpack.c.l.b16 %v57
  %v199 = vunpack.c.l.b16 %v58
  %v200 = vunpack.c.h.b16 %v58
  %v201 = vunpack.c.l.b16 %v59
  %v202 = vunpack.c.l.b16 %v60
  %v203 = vunpack.c.h.b16 %v60
  %v204 = vunpack.c.l.b16 %v61
  %v205 = vunpack.c.l.b16 %v62
  %v206 = vunpack.c.h.b16 %v62
  %v207 = vunpack.c.l.b16 %v63
  %v208 = vpack.c.b16 %v163, %v160
  %v209 = vpack.c.b16 %v164, %v161
  %v210 = vpack.c.b16 %v165, %v162
  %v211 = vpack.c.b16 %v169, %v166
  %v212 = vpack.c.b16 %v170, %v167
  %v213 = vpack.c.b16 %v171, %v168
  %v214 = vpack.c.b16 %v175, %v172
  %v215 = vpack.c.b16 %v176, %v173
  %v216 = vpack.c.b16 %v177, %v174
  %v217 = vpack.c.b16 %v181, %v178
  %v218 = vpack.c.b16 %v182, %v179
  %v219 = vpack.c.b16 %v183, %v180
  %v220 = vpack.c.b16 %v187, %v184
  %v221 = vpack.c.b16 %v188, %v185
  %v222 = vpack.c.b16 %v189, %v186
  %v223 = vpack.c.b16 %v193, %v190
  %v224 = vpack.c.b16 %v194, %v191
  %v225 = vpack.c.b16 %v195, %v192
  %v226 = vpack.c.b16 %v199, %v196
  %v227 = vpack.c.b16 %v200, %v197
  %v228 = vpack.c.b16 %v201, %v198
  %v229 = vpack.c.b16 %v205, %v202
  %v230 = vpack.c.b16 %v206, %v203
  %v231 = vpack.c.b16 %v207, %v204
  %v304 = vunpack.c.l.b16 %v80
  %v305 = vunpack.c.l.b16 %v81
  %v306 = vunpack.c.l.b16 %v82
  %v307 = vunpack.c.l.b16 %v83
  %v308 = vunpack.c.l.b16 %v84
  %v309 = vunpack.c.l.b16 %v85
  %v310 = vunpack.c.l.b16 %v86
  %v311 = vunpack.c.l.b16 %v87
  %v312 = vunpack.c.l.b16 %v88
  %v313 = vunpack.c.l.b16 %v89
  %v314 = vunpack.c.l.b16 %v90
  %v315 = vunpack.c.l.b16 %v91
  %v316 = vunpack.c.l.b16 %v92
  %v317 = vunpack.c.l.b16 %v93
  %v318 = vunpack.c.l.b16 %v94
  %v319 = vunpack.c.l.b16 %v95
  %v320 = vunpack.c.l.b16 %v96
  %v321 = vunpack.c.l.b16 %v97
  %v322 = vunpack.c.l.b16 %v98
  %v323 = vunpack.c.l.b16 %v99
  %v324 = vunpack.c.l.b16 %v100
  %v325 = vunpack.c.l.b16 %v101
  %v326 = vunpack.c.l.b16 %v102
  %v327 = vunpack.c.l.b16 %v103
  %v328 = vunpack.c.l.b16 %v104
  %v329 = vunpack.c.l.b16 %v105
  %v330 = vunpack.c.l.b16 %v106
  %v331 = vunpack.c.l.b16 %v107
  %v332 = vunpack.c.l.b16 %v108
  %v333 = vunpack.c.l.b16 %v109
  %v334 = vunpack.c.l.b16 %v110
  %v335 = vunpack.c.l.b16 %v111
  %v336 = vunpack.c.l.b16 %v112
  %v337 = vunpack.c.l.b16 %v113
  %v338 = vunpack.c.l.b16 %v114
  %v339 = vunpack.c.l.b16 %v115
  %v340 = vunpack.c.l.b16 %v116
  %v341 = vunpack.c.l.b16 %v117
  %v342 = vunpack.c.l.b16 %v118
  %v343 = vunpack.c.l.b16 %v119
  %v344 = vunpack.c.l.b16 %v120
  %v345 = vunpack.c.l.b16 %v121
  %v346 = vunpack.c.l.b16 %v122
  %v347 = vunpack.c.l.b16 %v123
  %v348 = vunpack.c.l.b16 %v124
  %v349 = vunpack.c.l.b16 %v125
  %v350 = vunpack.c.l.b16 %v126
  %v351 = vunpack.c.l.b16 %v127
  %v352 = vpack.c.b16 %v305, %v304
  %v353 = vpack.c.b16 %v307, %v306
  %v354 = vpack.c.b16 %v309, %v308
  %v355 = vpack.c.b16 %v311, %v310
  %v356 = vpack.c.b16 %v313, %v312
  %v357 = vpack.c.b16 %v315, %v314
  %v358 = vpack.c.b16 %v317, %v316
  %v359 = vpack.c.b16 %v319, %v318
  %v360 = vpack.c.b16 %v321, %v320
  %v361 = vpack.c.b16 %v323, %v322
  %v362 = vpack.c.b16 %v325, %v324
  %v363 = vpack.c.b16 %v327, %v326
  %v364 = vpack.c.b16 %v329, %v328
  %v365 = vpack.c.b16 %v331, %v330
  %v366 = vpack.c.b16 %v333, %v332
  %v367 = vpack.c.b16 %v335, %v334
  %v368 = vpack.c.b16 %v337, %v336
  %v369 = vpack.c.b16 %v339, %v338
  %v370 = vpack.c.b16 %v341, %v340
  %v371 = vpack.c.b16 %v343, %v342
  %v372 = vpack.c.b16 %v345, %v344
  %v373 = vpack.c.b16 %v347, %v346
  %v374 = vpack.c.b16 %v349, %v348
  %v375 = vpack.c.b16 %v351, %v350
  %400 = vmatprep.subr.bf16.mxu0 0
  %401 = vmatpush1.bf16.msra.mxu0 %v352
  %402 = vmatprep.subr.bf16.mxu0 0
  %403 = vmatpush1.bf16.msra.mxu0 %v353
  %404 = vmatprep.subr.bf16.mxu0 0
  %405 = vmatpush1.bf16.msra.mxu0 %v354
  %406 = vmatprep.subr.bf16.mxu0 0
  %407 = vmatpush1.bf16.msra.mxu0 %v355
  %408 = vmatprep.subr.bf16.mxu0 0
  %409 = vmatpush1.bf16.msra.mxu0 %v356
  %410 = vmatprep.subr.bf16.mxu0 0
  %411 = vmatpush1.bf16.msra.mxu0 %v357
  %412 = vmatprep.subr.bf16.mxu0 0
  %413 = vmatpush1.bf16.msra.mxu0 %v358
  %414 = vmatprep.subr.bf16.mxu0 0
  %415 = vmatpush1.bf16.msra.mxu0 %v359
  %416 = vmatprep.subr.bf16.mxu0 0
  %417 = vmatpush1.bf16.msra.mxu0 %v360
  %418 = vmatprep.subr.bf16.mxu0 0
  %419 = vmatpush1.bf16.msra.mxu0 %v361
  %420 = vmatprep.subr.bf16.mxu0 0
  %421 = vmatpush1.bf16.msra.mxu0 %v362
  %422 = vmatprep.subr.bf16.mxu0 0
  %423 = vmatpush1.bf16.msra.mxu0 %v363
  %424 = vmatprep.subr.bf16.mxu0 0
  %425 = vmatpush1.bf16.msra.mxu0 %v364
  %426 = vmatprep.subr.bf16.mxu0 0
  %427 = vmatpush1.bf16.msra.mxu0 %v365
  %428 = vmatprep.subr.bf16.mxu0 0
  %429 = vmatpush1.bf16.msra.mxu0 %v366
  %430 = vmatprep.subr.bf16.mxu0 0
  %431 = vmatpush1.bf16.msra.mxu0 %v367
  %432 = vmatprep.mubr.bf16.mxu0 %v209
  %433 = vmatmul.mubr.bf16.gmra.mrb[0].mxu0 %v208
  %v434 = vpop.f32.mrb[0].mxu0
  %v435 = vadd.f32 0.0, %v434
  %v436 = vpop.f32.mrb[0].mxu0
  %v437 = vpop.f32.mrb[0].mxu0
  %v438 = vadd.f32 0.0, %v437
  %v439 = vpop.f32.mrb[0].mxu0
  %440 = vmatprep.mubr.bf16.mxu0 %v212
  %441 = vmatmul.mubr.bf16.gmra.mrb[0].mxu0 %v211
  %v442 = vpop.f32.mrb[0].mxu0
  %v443 = vadd.f32 0.0, %v442
  %v444 = vpop.f32.mrb[0].mxu0
  %v445 = vpop.f32.mrb[0].mxu0
  %v446 = vadd.f32 0.0, %v445
  %v447 = vpop.f32.mrb[0].mxu0
  %448 = vmatprep.mubr.bf16.mxu0 %v215
  %449 = vmatmul.mubr.bf16.gmra.mrb[0].mxu0 %v214
  %v450 = vpop.f32.mrb[0].mxu0
  %v451 = vadd.f32 0.0, %v450
  %v452 = vpop.f32.mrb[0].mxu0
  %v453 = vpop.f32.mrb[0].mxu0
  %v454 = vadd.f32 0.0, %v453
  %v455 = vpop.f32.mrb[0].mxu0
  %456 = vmatprep.mubr.bf16.mxu0 %v218
  %457 = vmatmul.mubr.bf16.gmra.mrb[0].mxu0 %v217
  %v458 = vpop.f32.mrb[0].mxu0
  %v459 = vadd.f32 0.0, %v458
  %v460 = vpop.f32.mrb[0].mxu0
  %v461 = vpop.f32.mrb[0].mxu0
  %v462 = vadd.f32 0.0, %v461
  %v463 = vpop.f32.mrb[0].mxu0
  %464 = vmatprep.mubr.bf16.mxu0 %v221
  %465 = vmatmul.mubr.bf16.gmra.mrb[0].mxu0 %v220
  %v466 = vpop.f32.mrb[0].mxu0
  %v467 = vadd.f32 0.0, %v466
  %v468 = vpop.f32.mrb[0].mxu0
  %v469 = vpop.f32.mrb[0].mxu0
  %v470 = vadd.f32 0.0, %v469
  %v471 = vpop.f32.mrb[0].mxu0
  %472 = vmatprep.mubr.bf16.mxu0 %v224
  %473 = vmatmul.mubr.bf16.gmra.mrb[0].mxu0 %v223
  %v474 = vpop.f32.mrb[0].mxu0
  %v475 = vadd.f32 0.0, %v474
  %v476 = vpop.f32.mrb[0].mxu0
  %v477 = vpop.f32.mrb[0].mxu0
  %v478 = vadd.f32 0.0, %v477
  %v479 = vpop.f32.mrb[0].mxu0
  %480 = vmatprep.mubr.bf16.mxu0 %v227
  %481 = vmatmul.mubr.bf16.gmra.mrb[0].mxu0 %v226
  %v482 = vpop.f32.mrb[0].mxu0
  %v483 = vadd.f32 0.0, %v482
  %v484 = vpop.f32.mrb[0].mxu0
  %v485 = vpop.f32.mrb[0].mxu0
  %v486 = vadd.f32 0.0, %v485
  %v487 = vpop.f32.mrb[0].mxu0
  %488 = vmatprep.mubr.bf16.mxu0 %v230
  %489 = vmatmul.mubr.bf16.gmra.mrb[0].mxu0 %v229
  %v490 = vpop.f32.mrb[0].mxu0
  %v491 = vadd.f32 0.0, %v490
  %v492 = vpop.f32.mrb[0].mxu0
  %v493 = vpop.f32.mrb[0].mxu0
  %v494 = vadd.f32 0.0, %v493
  %v495 = vpop.f32.mrb[0].mxu0
  %496 = vdwg.mxu0
  %497 = vmatprep.subr.bf16.mxu0 0
  %498 = vmatpush1.bf16.msra.mxu0 %v368
  %499 = vmatprep.subr.bf16.mxu0 0
  %500 = vmatpush1.bf16.msra.mxu0 %v369
  %501 = vmatprep.subr.bf16.mxu0 0
  %502 = vmatpush1.bf16.msra.mxu0 %v370
  %503 = vmatprep.subr.bf16.mxu0 0
  %504 = vmatpush1.bf16.msra.mxu0 %v371
  %505 = vmatprep.subr.bf16.mxu0 0
  %506 = vmatpush1.bf16.msra.mxu0 %v372
  %507 = vmatprep.subr.bf16.mxu0 0
  %508 = vmatpush1.bf16.msra.mxu0 %v373
  %509 = vmatprep.subr.bf16.mxu0 0
  %510 = vmatpush1.bf16.msra.mxu0 %v374
  %511 = vmatprep.subr.bf16.mxu0 0
  %512 = vmatpush1.bf16.msra.mxu0 %v375
  %513 = vmatprep.subr.bf16.mxu0 0
  %514 = vmatpush1.bf16.msra.mxu0 0
  %515 = vmatprep.subr.bf16.mxu0 0
  %516 = vmatpush1.bf16.msra.mxu0 0
  %517 = vmatprep.subr.bf16.mxu0 0
  %518 = vmatpush1.bf16.msra.mxu0 0
  %519 = vmatprep.subr.bf16.mxu0 0
  %520 = vmatpush1.bf16.msra.mxu0 0
  %521 = vmatprep.subr.bf16.mxu0 0
  %522 = vmatpush1.bf16.msra.mxu0 0
  %523 = vmatprep.subr.bf16.mxu0 0
  %524 = vmatpush1.bf16.msra.mxu0 0
  %525 = vmatprep.subr.bf16.mxu0 0
  %526 = vmatpush1.bf16.msra.mxu0 0
  %527 = vmatprep.subr.bf16.mxu0 0
  %528 = vmatpush1.bf16.msra.mxu0 0
  %529 = vmatprep.mubr.bf16.mxu0 0
  %530 = vmatmul.mubr.bf16.gmra.mrb[0].mxu0 %v210
  %v531 = vpop.f32.mrb[0].mxu0
  %v532 = vadd.f32 %v435, %v531
  %v533 = vpop.f32.mrb[0].mxu0
  %v534 = vpop.f32.mrb[0].mxu0
  %v535 = vadd.f32 %v438, %v534
  %v536 = vpop.f32.mrb[0].mxu0
  %537 = vmatprep.mubr.bf16.mxu0 0
  %538 = vmatmul.mubr.bf16.gmra.mrb[0].mxu0 %v213
  %v539 = vpop.f32.mrb[0].mxu0
  %v540 = vadd.f32 %v443, %v539
  %v541 = vpop.f32.mrb[0].mxu0
  %v542 = vpop.f32.mrb[0].mxu0
  %v543 = vadd.f32 %v446, %v542
  %v544 = vpop.f32.mrb[0].mxu0
  %545 = vmatprep.mubr.bf16.mxu0 0
  %546 = vmatmul.mubr.bf16.gmra.mrb[0].mxu0 %v216
  %v547 = vpop.f32.mrb[0].mxu0
  %v548 = vadd.f32 %v451, %v547
  %v549 = vpop.f32.mrb[0].mxu0
  %v550 = vpop.f32.mrb[0].mxu0
  %v551 = vadd.f32 %v454, %v550
  %v552 = vpop.f32.mrb[0].mxu0
  %553 = vmatprep.mubr.bf16.mxu0 0
  %554 = vmatmul.mubr.bf16.gmra.mrb[0].mxu0 %v219
  %v555 = vpop.f32.mrb[0].mxu0
  %v556 = vadd.f32 %v459, %v555
  %v557 = vpop.f32.mrb[0].mxu0
  %v558 = vpop.f32.mrb[0].mxu0
  %v559 = vadd.f32 %v462, %v558
  %v560 = vpop.f32.mrb[0].mxu0
  %561 = vmatprep.mubr.bf16.mxu0 0
  %562 = vmatmul.mubr.bf16.gmra.mrb[0].mxu0 %v222
  %v563 = vpop.f32.mrb[0].mxu0
  %v564 = vadd.f32 %v467, %v563
  %v565 = vpop.f32.mrb[0].mxu0
  %v566 = vpop.f32.mrb[0].mxu0
  %v567 = vadd.f32 %v470, %v566
  %v568 = vpop.f32.mrb[0].mxu0
  %569 = vmatprep.mubr.bf16.mxu0 0
  %570 = vmatmul.mubr.bf16.gmra.mrb[0].mxu0 %v225
  %v571 = vpop.f32.mrb[0].mxu0
  %v572 = vadd.f32 %v475, %v571
  %v573 = vpop.f32.mrb[0].mxu0
  %v574 = vpop.f32.mrb[0].mxu0
  %v575 = vadd.f32 %v478, %v574
  %v576 = vpop.f32.mrb[0].mxu0
  %577 = vmatprep.mubr.bf16.mxu0 0
  %578 = vmatmul.mubr.bf16.gmra.mrb[0].mxu0 %v228
  %v579 = vpop.f32.mrb[0].mxu0
  %v580 = vadd.f32 %v483, %v579
  %v581 = vpop.f32.mrb[0].mxu0
  %v582 = vpop.f32.mrb[0].mxu0
  %v583 = vadd.f32 %v486, %v582
  %v584 = vpop.f32.mrb[0].mxu0
  %585 = vmatprep.mubr.bf16.mxu0 0
  %586 = vmatmul.mubr.bf16.gmra.mrb[0].mxu0 %v231
  %v587 = vpop.f32.mrb[0].mxu0
  %v588 = vadd.f32 %v491, %v587
  %v589 = vpop.f32.mrb[0].mxu0
  %v590 = vpop.f32.mrb[0].mxu0
  %v591 = vadd.f32 %v494, %v590
  %v592 = vpop.f32.mrb[0].mxu0
  %593 = vdwg.mxu0
  %v594 = vadd.f32 %v64, %v532
  %v595 = vadd.f32 %v65, %v535
  %v596 = vadd.f32 %v66, %v540
  %v597 = vadd.f32 %v67, %v543
  %v598 = vadd.f32 %v68, %v548
  %v599 = vadd.f32 %v69, %v551
  %v600 = vadd.f32 %v70, %v556
  %v601 = vadd.f32 %v71, %v559
  %v602 = vadd.f32 %v72, %v564
  %v603 = vadd.f32 %v73, %v567
  %v604 = vadd.f32 %v74, %v572
  %v605 = vadd.f32 %v75, %v575
  %v606 = vadd.f32 %v76, %v580
  %v607 = vadd.f32 %v77, %v583
  %v608 = vadd.f32 %v78, %v588
  %v609 = vadd.f32 %v79, %v591
  %610 = vst [vmem:[#allocation2] sm:$0xff] %v594
  %611 = vst [vmem:[#allocation2 + $0x8] sm:$0xff] %v595
  %612 = vst [vmem:[#allocation2 + $0x10] sm:$0xff] %v596
  %613 = vst [vmem:[#allocation2 + $0x18] sm:$0xff] %v597
  %614 = vst [vmem:[#allocation2 + $0x20] sm:$0xff] %v598
  %615 = vst [vmem:[#allocation2 + $0x28] sm:$0xff] %v599
  %616 = vst [vmem:[#allocation2 + $0x30] sm:$0xff] %v600
  %617 = vst [vmem:[#allocation2 + $0x38] sm:$0xff] %v601
  %618 = vst [vmem:[#allocation2 + $0x40] sm:$0xff] %v602
  %619 = vst [vmem:[#allocation2 + $0x48] sm:$0xff] %v603
  %620 = vst [vmem:[#allocation2 + $0x50] sm:$0xff] %v604
  %621 = vst [vmem:[#allocation2 + $0x58] sm:$0xff] %v605
  %622 = vst [vmem:[#allocation2 + $0x60] sm:$0xff] %v606
  %623 = vst [vmem:[#allocation2 + $0x68] sm:$0xff] %v607
  %624 = vst [vmem:[#allocation2 + $0x70] sm:$0xff] %v608
  %625 = vst [vmem:[#allocation2 + $0x78] sm:$0xff] %v609
  // Predicated region
  $region14: #{densenet_finetune_forward.23} parent=0 // pred_check
    %p626 = pneg %p12
  $region15: #{densenet_finetune_forward.23} parent=0 // pred_check_branch
    %628 = sbr.rel (%p626) target = $region17
  $region16: #{densenet_finetune_forward.23} parent=0 // pred_region
    %v629 = vld [vmem:[#allocation2] sm:$0xff]
    %v630 = vld [vmem:[#allocation2 + $0x8] sm:$0xff]
    %v631 = vld [vmem:[#allocation2 + $0x10] sm:$0xff]
    %v632 = vld [vmem:[#allocation2 + $0x18] sm:$0xff]
    %v633 = vld [vmem:[#allocation2 + $0x20] sm:$0xff]
    %v634 = vld [vmem:[#allocation2 + $0x28] sm:$0xff]
    %v635 = vld [vmem:[#allocation2 + $0x30] sm:$0xff]
    %v636 = vld [vmem:[#allocation2 + $0x38] sm:$0xff]
    %v637 = vld [vmem:[#allocation2 + $0x40] sm:$0xff]
    %v638 = vld [vmem:[#allocation2 + $0x48] sm:$0xff]
    %v639 = vld [vmem:[#allocation2 + $0x50] sm:$0xff]
    %v640 = vld [vmem:[#allocation2 + $0x58] sm:$0xff]
    %v641 = vld [vmem:[#allocation2 + $0x60] sm:$0xff]
    %v642 = vld [vmem:[#allocation2 + $0x68] sm:$0xff]
    %v643 = vld [vmem:[#allocation2 + $0x70] sm:$0xff]
    %v644 = vld [vmem:[#allocation2 + $0x78] sm:$0xff]
    %v645 = vpack.c.bf16 %v630, %v629
    %v646 = vpack.c.bf16 %v632, %v631
    %v647 = vpack.c.bf16 %v634, %v633
    %v648 = vpack.c.bf16 %v636, %v635
    %v649 = vpack.c.bf16 %v638, %v637
    %v650 = vpack.c.bf16 %v640, %v639
    %v651 = vpack.c.bf16 %v642, %v641
    %v652 = vpack.c.bf16 %v644, %v643
    %v661 = vunpack.c.l.b16 %v645
    %v662 = vunpack.c.h.b16 %v645
    %v663 = vunpack.c.l.b16 %v646
    %v664 = vunpack.c.h.b16 %v646
    %v665 = vunpack.c.l.b16 %v647
    %v666 = vunpack.c.h.b16 %v647
    %v667 = vunpack.c.l.b16 %v648
    %v668 = vunpack.c.h.b16 %v648
    %v669 = vunpack.c.l.b16 %v649
    %v670 = vunpack.c.h.b16 %v649
    %v671 = vunpack.c.l.b16 %v650
    %v672 = vunpack.c.h.b16 %v650
    %v673 = vunpack.c.l.b16 %v651
    %v674 = vunpack.c.h.b16 %v651
    %v675 = vunpack.c.l.b16 %v652
    %v676 = vunpack.c.h.b16 %v652
    %v677 = vpack.c.b16 %v661, %v661
    %v678 = vpack.c.b16 %v662, %v662
    %v679 = vpack.c.b16 %v663, %v663
    %v680 = vpack.c.b16 %v664, %v664
    %v681 = vpack.c.b16 %v665, %v665
    %v682 = vpack.c.b16 %v666, %v666
    %v683 = vpack.c.b16 %v667, %v667
    %v684 = vpack.c.b16 %v668, %v668
    %v685 = vpack.c.b16 %v669, %v669
    %v686 = vpack.c.b16 %v670, %v670
    %v687 = vpack.c.b16 %v671, %v671
    %v688 = vpack.c.b16 %v672, %v672
    %v689 = vpack.c.b16 %v673, %v673
    %v690 = vpack.c.b16 %v674, %v674
    %v691 = vpack.c.b16 %v675, %v675
    %v692 = vpack.c.b16 %v676, %v676
    %709 = vst [vmem:[%s2] sm:$0xf] %v677
    %710 = vst [vmem:[%s2 + $0x4] sm:$0xf] %v678
    %711 = vst [vmem:[%s2 + $0x8] sm:$0xf] %v679
    %712 = vst [vmem:[%s2 + $0xc] sm:$0xf] %v680
    %713 = vst [vmem:[%s2 + $0x10] sm:$0xf] %v681
    %714 = vst [vmem:[%s2 + $0x14] sm:$0xf] %v682
    %715 = vst [vmem:[%s2 + $0x18] sm:$0xf] %v683
    %716 = vst [vmem:[%s2 + $0x1c] sm:$0xf] %v684
    %717 = vst [vmem:[%s2 + $0x20] sm:$0xf] %v685
    %718 = vst [vmem:[%s2 + $0x24] sm:$0xf] %v686
    %719 = vst [vmem:[%s2 + $0x28] sm:$0xf] %v687
    %720 = vst [vmem:[%s2 + $0x2c] sm:$0xf] %v688
    %721 = vst [vmem:[%s2 + $0x30] sm:$0xf] %v689
    %722 = vst [vmem:[%s2 + $0x34] sm:$0xf] %v690
    %723 = vst [vmem:[%s2 + $0x38] sm:$0xf] %v691
    %724 = vst [vmem:[%s2 + $0x3c] sm:$0xf] %v692
  $region17: #{densenet_finetune_forward.23} parent=0 // pred_fallthru
    _
  // Predicated region
  $region18: #{densenet_finetune_forward.23} parent=0 // pred_check
    _
  $region19: #{densenet_finetune_forward.23} parent=0 // pred_check_branch
    %726 = sbr.rel (0) target = $region21
  $region20: #{densenet_finetune_forward.23} parent=0 // pred_region
    _
  $region21: #{densenet_finetune_forward.23} parent=0 // pred_fallthru
    _
  // Predicated region
  $region22: #{densenet_finetune_forward.23} parent=0 // pred_check
    _
  $region23: #{densenet_finetune_forward.23} parent=0 // pred_check_branch
    %728 = sbr.rel (0) target = $region25
  $region24: #{densenet_finetune_forward.23} parent=0 // pred_region
    _
  $region25: #{densenet_finetune_forward.23} parent=0 // pred_fallthru
    _

// kernel: densenet_finetune_forward.26
$region0: #{densenet_finetune_forward.26}
  #allocation0 [shape = 'u32[]', space=smem, size = 0x4, offset = 0x4, fixed_abs, tag = 'smem constant byte address 0x4 - core index']
  #allocation1 [shape = 'u32[144,128]{1,0:T(1,128)}', space=vmem, size = 0x12000, scoped, tag = 'internal scratch']
  #allocation2 [shape = 'f32[128,128]{1,0:T(8,128)}', space=vmem, size = 0x10000, scoped, tag = 'scratch operand']
  %s0 = inlined_call_operand.vmem [shape: bf16[128,128], index: 0, kind: input, shape index: {}]
  %s1 = inlined_call_operand.vmem [shape: bf16[128,128], index: 1, kind: input, shape index: {}]
  %s2 = inlined_call_operand.vmem [shape: f32[1,128], index: 2, kind: input, shape index: {}]
  %s3 = inlined_call_operand.vmem [shape: f32[1,128], index: 3, kind: input, shape index: {}]
  %s4 = inlined_call_operand.vmem [shape: bf16[128,128], index: 4, kind: output, shape index: {}]
  %s5 = sld [smem:[#allocation0]]
  $region34: #{densenet_finetune_forward.26} parent=0
    _
  %s7 = ssub.s32 1, %s5
  %s8 = scalar_select 0, %s7, %s5
  // Predicated region
  $region2: #{densenet_finetune_forward.26} parent=0 // pred_check
    _
  $region3: #{densenet_finetune_forward.26} parent=0 // pred_check_branch
    %10 = sbr.rel (0) target = $region5
  $region4: #{densenet_finetune_forward.26} parent=0 // pred_region
    _
  $region5: #{densenet_finetune_forward.26} parent=0 // pred_fallthru
    _
  // Predicated region
  $region6: #{densenet_finetune_forward.26} parent=0 // pred_check
    _
  $region7: #{densenet_finetune_forward.26} parent=0 // pred_check_branch
    %12 = sbr.rel (0) target = $region9
  $region8: #{densenet_finetune_forward.26} parent=0 // pred_region
    _
  $region9: #{densenet_finetune_forward.26} parent=0 // pred_fallthru
    _
  // Predicated region
  $region10: #{densenet_finetune_forward.26} parent=0 // pred_check
    _
  $region11: #{densenet_finetune_forward.26} parent=0 // pred_check_branch
    %14 = sbr.rel (0) target = $region13
  $region12: #{densenet_finetune_forward.26} parent=0 // pred_region
    _
  $region13: #{densenet_finetune_forward.26} parent=0 // pred_fallthru
    _
  // Predicated region
  $region14: #{densenet_finetune_forward.26} parent=0 // pred_check
    _
  $region15: #{densenet_finetune_forward.26} parent=0 // pred_check_branch
    %16 = sbr.rel (0) target = $region17
  $region16: #{densenet_finetune_forward.26} parent=0 // pred_region
    _
  $region17: #{densenet_finetune_forward.26} parent=0 // pred_fallthru
    _
  %p18 = scmp.eq.s32.totalorder 0, 0
  // Predicated region
  $region18: #{densenet_finetune_forward.26} parent=0 // pred_check
    %p19 = pneg %p18
  $region19: #{densenet_finetune_forward.26} parent=0 // pred_check_branch
    %21 = sbr.rel (%p19) target = $region21
  $region20: #{densenet_finetune_forward.26} parent=0 // pred_region
    %22 = vst [vmem:[#allocation2] sm:$0xff] 0.0
    %23 = vst [vmem:[#allocation2 + $0x8] sm:$0xff] 0.0
    %24 = vst [vmem:[#allocation2 + $0x10] sm:$0xff] 0.0
    %25 = vst [vmem:[#allocation2 + $0x18] sm:$0xff] 0.0
    %26 = vst [vmem:[#allocation2 + $0x20] sm:$0xff] 0.0
    %27 = vst [vmem:[#allocation2 + $0x28] sm:$0xff] 0.0
    %28 = vst [vmem:[#allocation2 + $0x30] sm:$0xff] 0.0
    %29 = vst [vmem:[#allocation2 + $0x38] sm:$0xff] 0.0
    %30 = vst [vmem:[#allocation2 + $0x40] sm:$0xff] 0.0
    %31 = vst [vmem:[#allocation2 + $0x48] sm:$0xff] 0.0
    %32 = vst [vmem:[#allocation2 + $0x50] sm:$0xff] 0.0
    %33 = vst [vmem:[#allocation2 + $0x58] sm:$0xff] 0.0
    %34 = vst [vmem:[#allocation2 + $0x60] sm:$0xff] 0.0
    %35 = vst [vmem:[#allocation2 + $0x68] sm:$0xff] 0.0
    %36 = vst [vmem:[#allocation2 + $0x70] sm:$0xff] 0.0
    %37 = vst [vmem:[#allocation2 + $0x78] sm:$0xff] 0.0
  $region21: #{densenet_finetune_forward.26} parent=0 // pred_fallthru
    _
  %v38 = vld [vmem:[%s0] sm:$0xf]
  %v39 = vld [vmem:[%s0 + $0x4] sm:$0xf]
  %v40 = vld [vmem:[%s0 + $0x8] sm:$0xf]
  %v41 = vld [vmem:[%s0 + $0xc] sm:$0xf]
  %v42 = vld [vmem:[%s0 + $0x10] sm:$0xf]
  %v43 = vld [vmem:[%s0 + $0x14] sm:$0xf]
  %v44 = vld [vmem:[%s0 + $0x18] sm:$0xf]
  %v45 = vld [vmem:[%s0 + $0x1c] sm:$0xf]
  %v46 = vld [vmem:[%s0 + $0x20] sm:$0xf]
  %v47 = vld [vmem:[%s0 + $0x24] sm:$0xf]
  %v48 = vld [vmem:[%s0 + $0x28] sm:$0xf]
  %v49 = vld [vmem:[%s0 + $0x2c] sm:$0xf]
  %v50 = vld [vmem:[%s0 + $0x30] sm:$0xf]
  %v51 = vld [vmem:[%s0 + $0x34] sm:$0xf]
  %v52 = vld [vmem:[%s0 + $0x38] sm:$0xf]
  %v53 = vld [vmem:[%s0 + $0x3c] sm:$0xf]
  %v54 = vld [vmem:[%s2] sm:$0x1]
  %v55 = vpack.c.bf16 %v54, %v54
  %v56 = vld [vmem:[%s3] sm:$0x1]
  %v57 = vpack.c.bf16 %v56, %v56
  %v59 = vpack.i.b16 %v55, %v55
  %v61 = vlaneseq
  %v62 = vshrl.u32 %v61, 7
  %v63 = vsub.s32 0, %v62
  %v64 = vrot.slane %v59, %v63
  %v66 = vunpack.c.l.b16 %v64
  %v67 = vpack.c.b16 %v66, %v66
  %v69 = vmul.bf16 %v38, %v67
  %v70 = vmul.bf16 %v39, %v67
  %v71 = vmul.bf16 %v40, %v67
  %v72 = vmul.bf16 %v41, %v67
  %v73 = vmul.bf16 %v42, %v67
  %v74 = vmul.bf16 %v43, %v67
  %v75 = vmul.bf16 %v44, %v67
  %v76 = vmul.bf16 %v45, %v67
  %v77 = vmul.bf16 %v46, %v67
  %v78 = vmul.bf16 %v47, %v67
  %v79 = vmul.bf16 %v48, %v67
  %v80 = vmul.bf16 %v49, %v67
  %v81 = vmul.bf16 %v50, %v67
  %v82 = vmul.bf16 %v51, %v67
  %v83 = vmul.bf16 %v52, %v67
  %v84 = vmul.bf16 %v53, %v67
  %v86 = vpack.i.b16 %v57, %v57
  %v88 = vlaneseq
  %v89 = vshrl.u32 %v88, 7
  %v90 = vsub.s32 0, %v89
  %v91 = vrot.slane %v86, %v90
  %v93 = vunpack.c.l.b16 %v91
  %v94 = vpack.c.b16 %v93, %v93
  %v96 = vadd.bf16 %v69, %v94
  %v97 = vadd.bf16 %v70, %v94
  %v98 = vadd.bf16 %v71, %v94
  %v99 = vadd.bf16 %v72, %v94
  %v100 = vadd.bf16 %v73, %v94
  %v101 = vadd.bf16 %v74, %v94
  %v102 = vadd.bf16 %v75, %v94
  %v103 = vadd.bf16 %v76, %v94
  %v104 = vadd.bf16 %v77, %v94
  %v105 = vadd.bf16 %v78, %v94
  %v106 = vadd.bf16 %v79, %v94
  %v107 = vadd.bf16 %v80, %v94
  %v108 = vadd.bf16 %v81, %v94
  %v109 = vadd.bf16 %v82, %v94
  %v110 = vadd.bf16 %v83, %v94
  %v111 = vadd.bf16 %v84, %v94
  %v112 = vmax.bf16 %v96, 0
  %v113 = vmax.bf16 %v97, 0
  %v114 = vmax.bf16 %v98, 0
  %v115 = vmax.bf16 %v99, 0
  %v116 = vmax.bf16 %v100, 0
  %v117 = vmax.bf16 %v101, 0
  %v118 = vmax.bf16 %v102, 0
  %v119 = vmax.bf16 %v103, 0
  %v120 = vmax.bf16 %v104, 0
  %v121 = vmax.bf16 %v105, 0
  %v122 = vmax.bf16 %v106, 0
  %v123 = vmax.bf16 %v107, 0
  %v124 = vmax.bf16 %v108, 0
  %v125 = vmax.bf16 %v109, 0
  %v126 = vmax.bf16 %v110, 0
  %v127 = vmax.bf16 %v111, 0
  %v128 = vld [vmem:[#allocation2] sm:$0xff]
  %v129 = vld [vmem:[#allocation2 + $0x8] sm:$0xff]
  %v130 = vld [vmem:[#allocation2 + $0x10] sm:$0xff]
  %v131 = vld [vmem:[#allocation2 + $0x18] sm:$0xff]
  %v132 = vld [vmem:[#allocation2 + $0x20] sm:$0xff]
  %v133 = vld [vmem:[#allocation2 + $0x28] sm:$0xff]
  %v134 = vld [vmem:[#allocation2 + $0x30] sm:$0xff]
  %v135 = vld [vmem:[#allocation2 + $0x38] sm:$0xff]
  %v136 = vld [vmem:[#allocation2 + $0x40] sm:$0xff]
  %v137 = vld [vmem:[#allocation2 + $0x48] sm:$0xff]
  %v138 = vld [vmem:[#allocation2 + $0x50] sm:$0xff]
  %v139 = vld [vmem:[#allocation2 + $0x58] sm:$0xff]
  %v140 = vld [vmem:[#allocation2 + $0x60] sm:$0xff]
  %v141 = vld [vmem:[#allocation2 + $0x68] sm:$0xff]
  %v142 = vld [vmem:[#allocation2 + $0x70] sm:$0xff]
  %v143 = vld [vmem:[#allocation2 + $0x78] sm:$0xff]
  %v144 = vld [vmem:[%s1] sm:$0xf]
  %v145 = vld [vmem:[%s1 + $0x4] sm:$0xf]
  %v146 = vld [vmem:[%s1 + $0x8] sm:$0xf]
  %v147 = vld [vmem:[%s1 + $0xc] sm:$0xf]
  %v148 = vld [vmem:[%s1 + $0x10] sm:$0xf]
  %v149 = vld [vmem:[%s1 + $0x14] sm:$0xf]
  %v150 = vld [vmem:[%s1 + $0x18] sm:$0xf]
  %v151 = vld [vmem:[%s1 + $0x1c] sm:$0xf]
  %v152 = vld [vmem:[%s1 + $0x20] sm:$0xf]
  %v153 = vld [vmem:[%s1 + $0x24] sm:$0xf]
  %v154 = vld [vmem:[%s1 + $0x28] sm:$0xf]
  %v155 = vld [vmem:[%s1 + $0x2c] sm:$0xf]
  %v156 = vld [vmem:[%s1 + $0x30] sm:$0xf]
  %v157 = vld [vmem:[%s1 + $0x34] sm:$0xf]
  %v158 = vld [vmem:[%s1 + $0x38] sm:$0xf]
  %v159 = vld [vmem:[%s1 + $0x3c] sm:$0xf]
  %v176 = vunpack.c.l.b16 %v112
  %v177 = vunpack.c.l.b16 %v113
  %v178 = vunpack.c.l.b16 %v114
  %v179 = vunpack.c.l.b16 %v115
  %v180 = vunpack.c.l.b16 %v116
  %v181 = vunpack.c.l.b16 %v117
  %v182 = vunpack.c.l.b16 %v118
  %v183 = vunpack.c.l.b16 %v119
  %v184 = vunpack.c.l.b16 %v120
  %v185 = vunpack.c.l.b16 %v121
  %v186 = vunpack.c.l.b16 %v122
  %v187 = vunpack.c.l.b16 %v123
  %v188 = vunpack.c.l.b16 %v124
  %v189 = vunpack.c.l.b16 %v125
  %v190 = vunpack.c.l.b16 %v126
  %v191 = vunpack.c.l.b16 %v127
  %v192 = vpack.c.b16 %v177, %v176
  %v193 = vpack.c.b16 %v179, %v178
  %v194 = vpack.c.b16 %v181, %v180
  %v195 = vpack.c.b16 %v183, %v182
  %v196 = vpack.c.b16 %v185, %v184
  %v197 = vpack.c.b16 %v187, %v186
  %v198 = vpack.c.b16 %v189, %v188
  %v199 = vpack.c.b16 %v191, %v190
  %v224 = vunpack.c.l.b16 %v144
  %v225 = vunpack.c.l.b16 %v145
  %v226 = vunpack.c.l.b16 %v146
  %v227 = vunpack.c.l.b16 %v147
  %v228 = vunpack.c.l.b16 %v148
  %v229 = vunpack.c.l.b16 %v149
  %v230 = vunpack.c.l.b16 %v150
  %v231 = vunpack.c.l.b16 %v151
  %v232 = vunpack.c.l.b16 %v152
  %v233 = vunpack.c.l.b16 %v153
  %v234 = vunpack.c.l.b16 %v154
  %v235 = vunpack.c.l.b16 %v155
  %v236 = vunpack.c.l.b16 %v156
  %v237 = vunpack.c.l.b16 %v157
  %v238 = vunpack.c.l.b16 %v158
  %v239 = vunpack.c.l.b16 %v159
  %v240 = vpack.c.b16 %v225, %v224
  %v241 = vpack.c.b16 %v227, %v226
  %v242 = vpack.c.b16 %v229, %v228
  %v243 = vpack.c.b16 %v231, %v230
  %v244 = vpack.c.b16 %v233, %v232
  %v245 = vpack.c.b16 %v235, %v234
  %v246 = vpack.c.b16 %v237, %v236
  %v247 = vpack.c.b16 %v239, %v238
  %256 = vmatprep.subr.bf16.mxu0 0
  %257 = vmatpush1.bf16.msra.mxu0 %v240
  %258 = vmatprep.subr.bf16.mxu0 0
  %259 = vmatpush1.bf16.msra.mxu0 %v241
  %260 = vmatprep.subr.bf16.mxu0 0
  %261 = vmatpush1.bf16.msra.mxu0 %v242
  %262 = vmatprep.subr.bf16.mxu0 0
  %263 = vmatpush1.bf16.msra.mxu0 %v243
  %264 = vmatprep.subr.bf16.mxu0 0
  %265 = vmatpush1.bf16.msra.mxu0 %v244
  %266 = vmatprep.subr.bf16.mxu0 0
  %267 = vmatpush1.bf16.msra.mxu0 %v245
  %268 = vmatprep.subr.bf16.mxu0 0
  %269 = vmatpush1.bf16.msra.mxu0 %v246
  %270 = vmatprep.subr.bf16.mxu0 0
  %271 = vmatpush1.bf16.msra.mxu0 %v247
  %272 = vmatprep.subr.bf16.mxu0 0
  %273 = vmatpush1.bf16.msra.mxu0 0
  %274 = vmatprep.subr.bf16.mxu0 0
  %275 = vmatpush1.bf16.msra.mxu0 0
  %276 = vmatprep.subr.bf16.mxu0 0
  %277 = vmatpush1.bf16.msra.mxu0 0
  %278 = vmatprep.subr.bf16.mxu0 0
  %279 = vmatpush1.bf16.msra.mxu0 0
  %280 = vmatprep.subr.bf16.mxu0 0
  %281 = vmatpush1.bf16.msra.mxu0 0
  %282 = vmatprep.subr.bf16.mxu0 0
  %283 = vmatpush1.bf16.msra.mxu0 0
  %284 = vmatprep.subr.bf16.mxu0 0
  %285 = vmatpush1.bf16.msra.mxu0 0
  %286 = vmatprep.subr.bf16.mxu0 0
  %287 = vmatpush1.bf16.msra.mxu0 0
  %288 = vmatprep.mubr.bf16.mxu0 0
  %289 = vmatmul.mubr.bf16.gmra.mrb[0].mxu0 %v192
  %v290 = vpop.f32.mrb[0].mxu0
  %v291 = vadd.f32 0.0, %v290
  %v292 = vpop.f32.mrb[0].mxu0
  %v293 = vpop.f32.mrb[0].mxu0
  %v294 = vadd.f32 0.0, %v293
  %v295 = vpop.f32.mrb[0].mxu0
  %296 = vmatprep.mubr.bf16.mxu0 0
  %297 = vmatmul.mubr.bf16.gmra.mrb[0].mxu0 %v193
  %v298 = vpop.f32.mrb[0].mxu0
  %v299 = vadd.f32 0.0, %v298
  %v300 = vpop.f32.mrb[0].mxu0
  %v301 = vpop.f32.mrb[0].mxu0
  %v302 = vadd.f32 0.0, %v301
  %v303 = vpop.f32.mrb[0].mxu0
  %304 = vmatprep.mubr.bf16.mxu0 0
  %305 = vmatmul.mubr.bf16.gmra.mrb[0].mxu0 %v194
  %v306 = vpop.f32.mrb[0].mxu0
  %v307 = vadd.f32 0.0, %v306
  %v308 = vpop.f32.mrb[0].mxu0
  %v309 = vpop.f32.mrb[0].mxu0
  %v310 = vadd.f32 0.0, %v309
  %v311 = vpop.f32.mrb[0].mxu0
  %312 = vmatprep.mubr.bf16.mxu0 0
  %313 = vmatmul.mubr.bf16.gmra.mrb[0].mxu0 %v195
  %v314 = vpop.f32.mrb[0].mxu0
  %v315 = vadd.f32 0.0, %v314
  %v316 = vpop.f32.mrb[0].mxu0
  %v317 = vpop.f32.mrb[0].mxu0
  %v318 = vadd.f32 0.0, %v317
  %v319 = vpop.f32.mrb[0].mxu0
  %320 = vmatprep.mubr.bf16.mxu0 0
  %321 = vmatmul.mubr.bf16.gmra.mrb[0].mxu0 %v196
  %v322 = vpop.f32.mrb[0].mxu0
  %v323 = vadd.f32 0.0, %v322
  %v324 = vpop.f32.mrb[0].mxu0
  %v325 = vpop.f32.mrb[0].mxu0
  %v326 = vadd.f32 0.0, %v325
  %v327 = vpop.f32.mrb[0].mxu0
  %328 = vmatprep.mubr.bf16.mxu0 0
  %329 = vmatmul.mubr.bf16.gmra.mrb[0].mxu0 %v197
  %v330 = vpop.f32.mrb[0].mxu0
  %v331 = vadd.f32 0.0, %v330
  %v332 = vpop.f32.mrb[0].mxu0
  %v333 = vpop.f32.mrb[0].mxu0
  %v334 = vadd.f32 0.0, %v333
  %v335 = vpop.f32.mrb[0].mxu0
  %336 = vmatprep.mubr.bf16.mxu0 0
  %337 = vmatmul.mubr.bf16.gmra.mrb[0].mxu0 %v198
  %v338 = vpop.f32.mrb[0].mxu0
  %v339 = vadd.f32 0.0, %v338
  %v340 = vpop.f32.mrb[0].mxu0
  %v341 = vpop.f32.mrb[0].mxu0
  %v342 = vadd.f32 0.0, %v341
  %v343 = vpop.f32.mrb[0].mxu0
  %344 = vmatprep.mubr.bf16.mxu0 0
  %345 = vmatmul.mubr.bf16.gmra.mrb[0].mxu0 %v199
  %v346 = vpop.f32.mrb[0].mxu0
  %v347 = vadd.f32 0.0, %v346
  %v348 = vpop.f32.mrb[0].mxu0
  %v349 = vpop.f32.mrb[0].mxu0
  %v350 = vadd.f32 0.0, %v349
  %v351 = vpop.f32.mrb[0].mxu0
  %352 = vdwg.mxu0
  %v353 = vadd.f32 %v128, %v291
  %v354 = vadd.f32 %v129, %v294
  %v355 = vadd.f32 %v130, %v299
  %v356 = vadd.f32 %v131, %v302
  %v357 = vadd.f32 %v132, %v307
  %v358 = vadd.f32 %v133, %v310
  %v359 = vadd.f32 %v134, %v315
  %v360 = vadd.f32 %v135, %v318
  %v361 = vadd.f32 %v136, %v323
  %v362 = vadd.f32 %v137, %v326
  %v363 = vadd.f32 %v138, %v331
  %v364 = vadd.f32 %v139, %v334
  %v365 = vadd.f32 %v140, %v339
  %v366 = vadd.f32 %v141, %v342
  %v367 = vadd.f32 %v142, %v347
  %v368 = vadd.f32 %v143, %v350
  %369 = vst [vmem:[#allocation2] sm:$0xff] %v353
  %370 = vst [vmem:[#allocation2 + $0x8] sm:$0xff] %v354
  %371 = vst [vmem:[#allocation2 + $0x10] sm:$0xff] %v355
  %372 = vst [vmem:[#allocation2 + $0x18] sm:$0xff] %v356
  %373 = vst [vmem:[#allocation2 + $0x20] sm:$0xff] %v357
  %374 = vst [vmem:[#allocation2 + $0x28] sm:$0xff] %v358
  %375 = vst [vmem:[#allocation2 + $0x30] sm:$0xff] %v359
  %376 = vst [vmem:[#allocation2 + $0x38] sm:$0xff] %v360
  %377 = vst [vmem:[#allocation2 + $0x40] sm:$0xff] %v361
  %378 = vst [vmem:[#allocation2 + $0x48] sm:$0xff] %v362
  %379 = vst [vmem:[#allocation2 + $0x50] sm:$0xff] %v363
  %380 = vst [vmem:[#allocation2 + $0x58] sm:$0xff] %v364
  %381 = vst [vmem:[#allocation2 + $0x60] sm:$0xff] %v365
  %382 = vst [vmem:[#allocation2 + $0x68] sm:$0xff] %v366
  %383 = vst [vmem:[#allocation2 + $0x70] sm:$0xff] %v367
  %384 = vst [vmem:[#allocation2 + $0x78] sm:$0xff] %v368
  // Predicated region
  $region22: #{densenet_finetune_forward.26} parent=0 // pred_check
    %p385 = pneg %p18
  $region23: #{densenet_finetune_forward.26} parent=0 // pred_check_branch
    %387 = sbr.rel (%p385) target = $region25
  $region24: #{densenet_finetune_forward.26} parent=0 // pred_region
    %v388 = vld [vmem:[#allocation2] sm:$0xff]
    %v389 = vld [vmem:[#allocation2 + $0x8] sm:$0xff]
    %v390 = vld [vmem:[#allocation2 + $0x10] sm:$0xff]
    %v391 = vld [vmem:[#allocation2 + $0x18] sm:$0xff]
    %v392 = vld [vmem:[#allocation2 + $0x20] sm:$0xff]
    %v393 = vld [vmem:[#allocation2 + $0x28] sm:$0xff]
    %v394 = vld [vmem:[#allocation2 + $0x30] sm:$0xff]
    %v395 = vld [vmem:[#allocation2 + $0x38] sm:$0xff]
    %v396 = vld [vmem:[#allocation2 + $0x40] sm:$0xff]
    %v397 = vld [vmem:[#allocation2 + $0x48] sm:$0xff]
    %v398 = vld [vmem:[#allocation2 + $0x50] sm:$0xff]
    %v399 = vld [vmem:[#allocation2 + $0x58] sm:$0xff]
    %v400 = vld [vmem:[#allocation2 + $0x60] sm:$0xff]
    %v401 = vld [vmem:[#allocation2 + $0x68] sm:$0xff]
    %v402 = vld [vmem:[#allocation2 + $0x70] sm:$0xff]
    %v403 = vld [vmem:[#allocation2 + $0x78] sm:$0xff]
    %v404 = vpack.c.bf16 %v389, %v388
    %v405 = vpack.c.bf16 %v391, %v390
    %v406 = vpack.c.bf16 %v393, %v392
    %v407 = vpack.c.bf16 %v395, %v394
    %v408 = vpack.c.bf16 %v397, %v396
    %v409 = vpack.c.bf16 %v399, %v398
    %v410 = vpack.c.bf16 %v401, %v400
    %v411 = vpack.c.bf16 %v403, %v402
    %v420 = vunpack.c.l.b16 %v404
    %v421 = vunpack.c.h.b16 %v404
    %v422 = vunpack.c.l.b16 %v405
    %v423 = vunpack.c.h.b16 %v405
    %v424 = vunpack.c.l.b16 %v406
    %v425 = vunpack.c.h.b16 %v406
    %v426 = vunpack.c.l.b16 %v407
    %v427 = vunpack.c.h.b16 %v407
    %v428 = vunpack.c.l.b16 %v408
    %v429 = vunpack.c.h.b16 %v408
    %v430 = vunpack.c.l.b16 %v409
    %v431 = vunpack.c.h.b16 %v409
    %v432 = vunpack.c.l.b16 %v410
    %v433 = vunpack.c.h.b16 %v410
    %v434 = vunpack.c.l.b16 %v411
    %v435 = vunpack.c.h.b16 %v411
    %v436 = vpack.c.b16 %v420, %v420
    %v437 = vpack.c.b16 %v421, %v421
    %v438 = vpack.c.b16 %v422, %v422
    %v439 = vpack.c.b16 %v423, %v423
    %v440 = vpack.c.b16 %v424, %v424
    %v441 = vpack.c.b16 %v425, %v425
    %v442 = vpack.c.b16 %v426, %v426
    %v443 = vpack.c.b16 %v427, %v427
    %v444 = vpack.c.b16 %v428, %v428
    %v445 = vpack.c.b16 %v429, %v429
    %v446 = vpack.c.b16 %v430, %v430
    %v447 = vpack.c.b16 %v431, %v431
    %v448 = vpack.c.b16 %v432, %v432
    %v449 = vpack.c.b16 %v433, %v433
    %v450 = vpack.c.b16 %v434, %v434
    %v451 = vpack.c.b16 %v435, %v435
    %468 = vst [vmem:[%s4] sm:$0xf] %v436
    %469 = vst [vmem:[%s4 + $0x4] sm:$0xf] %v437
    %470 = vst [vmem:[%s4 + $0x8] sm:$0xf] %v438
    %471 = vst [vmem:[%s4 + $0xc] sm:$0xf] %v439
    %472 = vst [vmem:[%s4 + $0x10] sm:$0xf] %v440
    %473 = vst [vmem:[%s4 + $0x14] sm:$0xf] %v441
    %474 = vst [vmem:[%s4 + $0x18] sm:$0xf] %v442
    %475 = vst [vmem:[%s4 + $0x1c] sm:$0xf] %v443
    %476 = vst [vmem:[%s4 + $0x20] sm:$0xf] %v444
    %477 = vst [vmem:[%s4 + $0x24] sm:$0xf] %v445
    %478 = vst [vmem:[%s4 + $0x28] sm:$0xf] %v446
    %479 = vst [vmem:[%s4 + $0x2c] sm:$0xf] %v447
    %480 = vst [vmem:[%s4 + $0x30] sm:$0xf] %v448
    %481 = vst [vmem:[%s4 + $0x34] sm:$0xf] %v449
    %482 = vst [vmem:[%s4 + $0x38] sm:$0xf] %v450
    %483 = vst [vmem:[%s4 + $0x3c] sm:$0xf] %v451
  $region25: #{densenet_finetune_forward.26} parent=0 // pred_fallthru
    _
  // Predicated region
  $region26: #{densenet_finetune_forward.26} parent=0 // pred_check
    _
  $region27: #{densenet_finetune_forward.26} parent=0 // pred_check_branch
    %485 = sbr.rel (0) target = $region29
  $region28: #{densenet_finetune_forward.26} parent=0 // pred_region
    _
  $region29: #{densenet_finetune_forward.26} parent=0 // pred_fallthru
    _
  // Predicated region
  $region30: #{densenet_finetune_forward.26} parent=0 // pred_check
    _
  $region31: #{densenet_finetune_forward.26} parent=0 // pred_check_branch
    %487 = sbr.rel (0) target = $region33
  $region32: #{densenet_finetune_forward.26} parent=0 // pred_region
    _
  $region33: #{densenet_finetune_forward.26} parent=0 // pred_fallthru
    _

// kernel: densenet_finetune_forward.27
$region0: #{densenet_finetune_forward.27}
  #allocation0 [shape = 'u32[]', space=smem, size = 0x4, offset = 0x4, fixed_abs, tag = 'smem constant byte address 0x4 - core index']
  #allocation1 [shape = 'u32[144,128]{1,0:T(1,128)}', space=vmem, size = 0x12000, scoped, tag = 'internal scratch']
  #allocation2 [shape = 'f32[32,128]{1,0:T(8,128)}', space=vmem, size = 0x4000, scoped, tag = 'scratch operand']
  %s0 = inlined_call_operand.vmem [shape: bf16[32,128], index: 0, kind: input, shape index: {}]
  %s1 = inlined_call_operand.vmem [shape: bf16[128,128], index: 1, kind: input, shape index: {}]
  %s2 = inlined_call_operand.vmem [shape: f32[1,128], index: 2, kind: input, shape index: {}]
  %s3 = inlined_call_operand.vmem [shape: f32[1,128], index: 3, kind: input, shape index: {}]
  %s4 = inlined_call_operand.vmem [shape: f32[1,128], index: 4, kind: input, shape index: {}]
  %s5 = inlined_call_operand.vmem [shape: f32[1,128], index: 5, kind: input, shape index: {}]
  %s6 = inlined_call_operand.vmem [shape: bf16[32,128], index: 6, kind: output, shape index: {}]
  %s7 = sld [smem:[#allocation0]]
  $region42: #{densenet_finetune_forward.27} parent=0
    _
  %s9 = ssub.s32 1, %s7
  %s10 = scalar_select 0, %s9, %s7
  // Predicated region
  $region2: #{densenet_finetune_forward.27} parent=0 // pred_check
    _
  $region3: #{densenet_finetune_forward.27} parent=0 // pred_check_branch
    %12 = sbr.rel (0) target = $region5
  $region4: #{densenet_finetune_forward.27} parent=0 // pred_region
    _
  $region5: #{densenet_finetune_forward.27} parent=0 // pred_fallthru
    _
  // Predicated region
  $region6: #{densenet_finetune_forward.27} parent=0 // pred_check
    _
  $region7: #{densenet_finetune_forward.27} parent=0 // pred_check_branch
    %14 = sbr.rel (0) target = $region9
  $region8: #{densenet_finetune_forward.27} parent=0 // pred_region
    _
  $region9: #{densenet_finetune_forward.27} parent=0 // pred_fallthru
    _
  // Predicated region
  $region10: #{densenet_finetune_forward.27} parent=0 // pred_check
    _
  $region11: #{densenet_finetune_forward.27} parent=0 // pred_check_branch
    %16 = sbr.rel (0) target = $region13
  $region12: #{densenet_finetune_forward.27} parent=0 // pred_region
    _
  $region13: #{densenet_finetune_forward.27} parent=0 // pred_fallthru
    _
  // Predicated region
  $region14: #{densenet_finetune_forward.27} parent=0 // pred_check
    _
  $region15: #{densenet_finetune_forward.27} parent=0 // pred_check_branch
    %18 = sbr.rel (0) target = $region17
  $region16: #{densenet_finetune_forward.27} parent=0 // pred_region
    _
  $region17: #{densenet_finetune_forward.27} parent=0 // pred_fallthru
    _
  // Predicated region
  $region18: #{densenet_finetune_forward.27} parent=0 // pred_check
    _
  $region19: #{densenet_finetune_forward.27} parent=0 // pred_check_branch
    %20 = sbr.rel (0) target = $region21
  $region20: #{densenet_finetune_forward.27} parent=0 // pred_region
    _
  $region21: #{densenet_finetune_forward.27} parent=0 // pred_fallthru
    _
  // Predicated region
  $region22: #{densenet_finetune_forward.27} parent=0 // pred_check
    _
  $region23: #{densenet_finetune_forward.27} parent=0 // pred_check_branch
    %22 = sbr.rel (0) target = $region25
  $region24: #{densenet_finetune_forward.27} parent=0 // pred_region
    _
  $region25: #{densenet_finetune_forward.27} parent=0 // pred_fallthru
    _
  %p24 = scmp.eq.s32.totalorder 0, 0
  // Predicated region
  $region26: #{densenet_finetune_forward.27} parent=0 // pred_check
    %p25 = pneg %p24
  $region27: #{densenet_finetune_forward.27} parent=0 // pred_check_branch
    %27 = sbr.rel (%p25) target = $region29
  $region28: #{densenet_finetune_forward.27} parent=0 // pred_region
    %28 = vst [vmem:[#allocation2] sm:$0xff] 0.0
    %29 = vst [vmem:[#allocation2 + $0x8] sm:$0xff] 0.0
    %30 = vst [vmem:[#allocation2 + $0x10] sm:$0xff] 0.0
    %31 = vst [vmem:[#allocation2 + $0x18] sm:$0xff] 0.0
  $region29: #{densenet_finetune_forward.27} parent=0 // pred_fallthru
    _
  %v32 = vld [vmem:[%s0] sm:$0xf]
  %v33 = vld [vmem:[%s0 + $0x4] sm:$0xf]
  %v34 = vld [vmem:[%s0 + $0x8] sm:$0xf]
  %v35 = vld [vmem:[%s0 + $0xc] sm:$0xf]
  %v36 = vld [vmem:[%s2] sm:$0x1]
  %v37 = vpack.c.bf16 %v36, %v36
  %v38 = vld [vmem:[%s3] sm:$0x1]
  %v39 = vpack.c.bf16 %v38, %v38
  %v41 = vpack.i.b16 %v37, %v37
  %v43 = vlaneseq
  %v44 = vshrl.u32 %v43, 7
  %v45 = vsub.s32 0, %v44
  %v46 = vrot.slane %v41, %v45
  %v48 = vunpack.c.l.b16 %v46
  %v49 = vpack.c.b16 %v48, %v48
  %v51 = vmul.bf16 %v32, %v49
  %v52 = vmul.bf16 %v33, %v49
  %v53 = vmul.bf16 %v34, %v49
  %v54 = vmul.bf16 %v35, %v49
  %v56 = vpack.i.b16 %v39, %v39
  %v58 = vlaneseq
  %v59 = vshrl.u32 %v58, 7
  %v60 = vsub.s32 0, %v59
  %v61 = vrot.slane %v56, %v60
  %v63 = vunpack.c.l.b16 %v61
  %v64 = vpack.c.b16 %v63, %v63
  %v66 = vadd.bf16 %v51, %v64
  %v67 = vadd.bf16 %v52, %v64
  %v68 = vadd.bf16 %v53, %v64
  %v69 = vadd.bf16 %v54, %v64
  %v70 = vmax.bf16 %v66, 0
  %v71 = vmax.bf16 %v67, 0
  %v72 = vmax.bf16 %v68, 0
  %v73 = vmax.bf16 %v69, 0
  %v74 = vld [vmem:[#allocation2] sm:$0xff]
  %v75 = vld [vmem:[#allocation2 + $0x8] sm:$0xff]
  %v76 = vld [vmem:[#allocation2 + $0x10] sm:$0xff]
  %v77 = vld [vmem:[#allocation2 + $0x18] sm:$0xff]
  %v78 = vld [vmem:[%s1] sm:$0xf]
  %v79 = vld [vmem:[%s1 + $0x4] sm:$0xf]
  %v80 = vld [vmem:[%s1 + $0x8] sm:$0xf]
  %v81 = vld [vmem:[%s1 + $0xc] sm:$0xf]
  %v82 = vld [vmem:[%s1 + $0x10] sm:$0xf]
  %v83 = vld [vmem:[%s1 + $0x14] sm:$0xf]
  %v84 = vld [vmem:[%s1 + $0x18] sm:$0xf]
  %v85 = vld [vmem:[%s1 + $0x1c] sm:$0xf]
  %v86 = vld [vmem:[%s1 + $0x20] sm:$0xf]
  %v87 = vld [vmem:[%s1 + $0x24] sm:$0xf]
  %v88 = vld [vmem:[%s1 + $0x28] sm:$0xf]
  %v89 = vld [vmem:[%s1 + $0x2c] sm:$0xf]
  %v90 = vld [vmem:[%s1 + $0x30] sm:$0xf]
  %v91 = vld [vmem:[%s1 + $0x34] sm:$0xf]
  %v92 = vld [vmem:[%s1 + $0x38] sm:$0xf]
  %v93 = vld [vmem:[%s1 + $0x3c] sm:$0xf]
  %v98 = vunpack.c.l.b16 %v70
  %v99 = vunpack.c.l.b16 %v71
  %v100 = vunpack.c.l.b16 %v72
  %v101 = vunpack.c.l.b16 %v73
  %v102 = vpack.c.b16 %v99, %v98
  %v103 = vpack.c.b16 %v101, %v100
  %v122 = vunpack.c.l.b16 %v78
  %v123 = vunpack.c.l.b16 %v79
  %v124 = vunpack.c.l.b16 %v80
  %v125 = vunpack.c.l.b16 %v81
  %v126 = vunpack.c.l.b16 %v82
  %v127 = vunpack.c.l.b16 %v83
  %v128 = vunpack.c.l.b16 %v84
  %v129 = vunpack.c.l.b16 %v85
  %v130 = vunpack.c.l.b16 %v86
  %v131 = vunpack.c.l.b16 %v87
  %v132 = vunpack.c.l.b16 %v88
  %v133 = vunpack.c.l.b16 %v89
  %v134 = vunpack.c.l.b16 %v90
  %v135 = vunpack.c.l.b16 %v91
  %v136 = vunpack.c.l.b16 %v92
  %v137 = vunpack.c.l.b16 %v93
  %v138 = vpack.c.b16 %v123, %v122
  %v139 = vpack.c.b16 %v125, %v124
  %v140 = vpack.c.b16 %v127, %v126
  %v141 = vpack.c.b16 %v129, %v128
  %v142 = vpack.c.b16 %v131, %v130
  %v143 = vpack.c.b16 %v133, %v132
  %v144 = vpack.c.b16 %v135, %v134
  %v145 = vpack.c.b16 %v137, %v136
  %154 = vmatprep.subr.bf16.mxu0 0
  %155 = vmatpush1.bf16.msra.mxu0 %v138
  %156 = vmatprep.subr.bf16.mxu0 0
  %157 = vmatpush1.bf16.msra.mxu0 %v139
  %158 = vmatprep.subr.bf16.mxu0 0
  %159 = vmatpush1.bf16.msra.mxu0 %v140
  %160 = vmatprep.subr.bf16.mxu0 0
  %161 = vmatpush1.bf16.msra.mxu0 %v141
  %162 = vmatprep.subr.bf16.mxu0 0
  %163 = vmatpush1.bf16.msra.mxu0 %v142
  %164 = vmatprep.subr.bf16.mxu0 0
  %165 = vmatpush1.bf16.msra.mxu0 %v143
  %166 = vmatprep.subr.bf16.mxu0 0
  %167 = vmatpush1.bf16.msra.mxu0 %v144
  %168 = vmatprep.subr.bf16.mxu0 0
  %169 = vmatpush1.bf16.msra.mxu0 %v145
  %170 = vmatprep.subr.bf16.mxu0 0
  %171 = vmatpush1.bf16.msra.mxu0 0
  %172 = vmatprep.subr.bf16.mxu0 0
  %173 = vmatpush1.bf16.msra.mxu0 0
  %174 = vmatprep.subr.bf16.mxu0 0
  %175 = vmatpush1.bf16.msra.mxu0 0
  %176 = vmatprep.subr.bf16.mxu0 0
  %177 = vmatpush1.bf16.msra.mxu0 0
  %178 = vmatprep.subr.bf16.mxu0 0
  %179 = vmatpush1.bf16.msra.mxu0 0
  %180 = vmatprep.subr.bf16.mxu0 0
  %181 = vmatpush1.bf16.msra.mxu0 0
  %182 = vmatprep.subr.bf16.mxu0 0
  %183 = vmatpush1.bf16.msra.mxu0 0
  %184 = vmatprep.subr.bf16.mxu0 0
  %185 = vmatpush1.bf16.msra.mxu0 0
  %186 = vmatprep.mubr.bf16.mxu0 0
  %187 = vmatmul.mubr.bf16.gmra.mrb[0].mxu0 %v102
  %v188 = vpop.f32.mrb[0].mxu0
  %v189 = vadd.f32 0.0, %v188
  %v190 = vpop.f32.mrb[0].mxu0
  %v191 = vpop.f32.mrb[0].mxu0
  %v192 = vadd.f32 0.0, %v191
  %v193 = vpop.f32.mrb[0].mxu0
  %194 = vmatprep.mubr.bf16.mxu0 0
  %195 = vmatmul.mubr.bf16.gmra.mrb[0].mxu0 %v103
  %v196 = vpop.f32.mrb[0].mxu0
  %v197 = vadd.f32 0.0, %v196
  %v198 = vpop.f32.mrb[0].mxu0
  %v199 = vpop.f32.mrb[0].mxu0
  %v200 = vadd.f32 0.0, %v199
  %v201 = vpop.f32.mrb[0].mxu0
  %202 = vdwg.mxu0
  %v203 = vadd.f32 %v74, %v189
  %v204 = vadd.f32 %v75, %v192
  %v205 = vadd.f32 %v76, %v197
  %v206 = vadd.f32 %v77, %v200
  %207 = vst [vmem:[#allocation2] sm:$0xff] %v203
  %208 = vst [vmem:[#allocation2 + $0x8] sm:$0xff] %v204
  %209 = vst [vmem:[#allocation2 + $0x10] sm:$0xff] %v205
  %210 = vst [vmem:[#allocation2 + $0x18] sm:$0xff] %v206
  // Predicated region
  $region30: #{densenet_finetune_forward.27} parent=0 // pred_check
    %p211 = pneg %p24
  $region31: #{densenet_finetune_forward.27} parent=0 // pred_check_branch
    %213 = sbr.rel (%p211) target = $region33
  $region32: #{densenet_finetune_forward.27} parent=0 // pred_region
    %v214 = vld [vmem:[#allocation2] sm:$0xff]
    %v215 = vld [vmem:[#allocation2 + $0x8] sm:$0xff]
    %v216 = vld [vmem:[#allocation2 + $0x10] sm:$0xff]
    %v217 = vld [vmem:[#allocation2 + $0x18] sm:$0xff]
    %v218 = vld [vmem:[%s4] sm:$0x1]
    %v220 = vlaneseq
    %v221 = vshrl.u32 %v220, 7
    %v222 = vsub.s32 0, %v221
    %v223 = vrot.slane %v218, %v222
    %v225 = vmul.f32 %v214, %v223
    %v226 = vmul.f32 %v215, %v223
    %v227 = vmul.f32 %v216, %v223
    %v228 = vmul.f32 %v217, %v223
    %v229 = vld [vmem:[%s5] sm:$0x1]
    %v231 = vlaneseq
    %v232 = vshrl.u32 %v231, 7
    %v233 = vsub.s32 0, %v232
    %v234 = vrot.slane %v229, %v233
    %v236 = vadd.f32 %v225, %v234
    %v237 = vadd.f32 %v226, %v234
    %v238 = vadd.f32 %v227, %v234
    %v239 = vadd.f32 %v228, %v234
    %v240 = vmax.f32 %v236, 0.0
    %v241 = vmax.f32 %v237, 0.0
    %v242 = vmax.f32 %v238, 0.0
    %v243 = vmax.f32 %v239, 0.0
    %v244 = vpack.c.bf16 %v241, %v240
    %v245 = vpack.c.bf16 %v243, %v242
    %v248 = vunpack.c.l.b16 %v244
    %v249 = vunpack.c.h.b16 %v244
    %v250 = vunpack.c.l.b16 %v245
    %v251 = vunpack.c.h.b16 %v245
    %v252 = vpack.c.b16 %v248, %v248
    %v253 = vpack.c.b16 %v249, %v249
    %v254 = vpack.c.b16 %v250, %v250
    %v255 = vpack.c.b16 %v251, %v251
    %260 = vst [vmem:[%s6] sm:$0xf] %v252
    %261 = vst [vmem:[%s6 + $0x4] sm:$0xf] %v253
    %262 = vst [vmem:[%s6 + $0x8] sm:$0xf] %v254
    %263 = vst [vmem:[%s6 + $0xc] sm:$0xf] %v255
  $region33: #{densenet_finetune_forward.27} parent=0 // pred_fallthru
    _
  // Predicated region
  $region34: #{densenet_finetune_forward.27} parent=0 // pred_check
    _
  $region35: #{densenet_finetune_forward.27} parent=0 // pred_check_branch
    %265 = sbr.rel (0) target = $region37
  $region36: #{densenet_finetune_forward.27} parent=0 // pred_region
    _
  $region37: #{densenet_finetune_forward.27} parent=0 // pred_fallthru
    _
  // Predicated region
  $region38: #{densenet_finetune_forward.27} parent=0 // pred_check
    _
  $region39: #{densenet_finetune_forward.27} parent=0 // pred_check_branch
    %267 = sbr.rel (0) target = $region41
  $region40: #{densenet_finetune_forward.27} parent=0 // pred_region
    _
  $region41: #{densenet_finetune_forward.27} parent=0 // pred_fallthru
    _

// kernel: densenet_finetune_forward.28
$region0: #{densenet_finetune_forward.28}
  #allocation0 [shape = 'u32[]', space=smem, size = 0x4, offset = 0x4, fixed_abs, tag = 'smem constant byte address 0x4 - core index']
  #allocation1 [shape = 'u32[144,128]{1,0:T(1,128)}', space=vmem, size = 0x12000, scoped, tag = 'internal scratch']
  #allocation2 [shape = 'f32[32,128]{1,0:T(8,128)}', space=vmem, size = 0x4000, scoped, tag = 'scratch operand']
  %s0 = inlined_call_operand.vmem [shape: bf16[32,384], index: 0, kind: input, shape index: {}]
  %s1 = inlined_call_operand.vmem [shape: bf16[384,128], index: 1, kind: input, shape index: {}]
  %s2 = inlined_call_operand.vmem [shape: bf16[32,128], index: 2, kind: output, shape index: {}]
  %s3 = sld [smem:[#allocation0]]
  $region26: #{densenet_finetune_forward.28} parent=0
    _
  %s5 = ssub.s32 1, %s3
  %s6 = scalar_select 0, %s5, %s3
  // Predicated region
  $region2: #{densenet_finetune_forward.28} parent=0 // pred_check
    _
  $region3: #{densenet_finetune_forward.28} parent=0 // pred_check_branch
    %8 = sbr.rel (0) target = $region5
  $region4: #{densenet_finetune_forward.28} parent=0 // pred_region
    _
  $region5: #{densenet_finetune_forward.28} parent=0 // pred_fallthru
    _
  // Predicated region
  $region6: #{densenet_finetune_forward.28} parent=0 // pred_check
    _
  $region7: #{densenet_finetune_forward.28} parent=0 // pred_check_branch
    %10 = sbr.rel (0) target = $region9
  $region8: #{densenet_finetune_forward.28} parent=0 // pred_region
    _
  $region9: #{densenet_finetune_forward.28} parent=0 // pred_fallthru
    _
  %p12 = scmp.eq.s32.totalorder 0, 0
  // Predicated region
  $region10: #{densenet_finetune_forward.28} parent=0 // pred_check
    %p13 = pneg %p12
  $region11: #{densenet_finetune_forward.28} parent=0 // pred_check_branch
    %15 = sbr.rel (%p13) target = $region13
  $region12: #{densenet_finetune_forward.28} parent=0 // pred_region
    %16 = vst [vmem:[#allocation2] sm:$0xff] 0.0
    %17 = vst [vmem:[#allocation2 + $0x8] sm:$0xff] 0.0
    %18 = vst [vmem:[#allocation2 + $0x10] sm:$0xff] 0.0
    %19 = vst [vmem:[#allocation2 + $0x18] sm:$0xff] 0.0
  $region13: #{densenet_finetune_forward.28} parent=0 // pred_fallthru
    _
  %v20 = vld [vmem:[%s0] sm:$0xff]
  %v21 = vld [vmem:[%s0 + $0x8] sm:$0xf]
  %v22 = vld [vmem:[%s0 + $0xc] sm:$0xff]
  %v23 = vld [vmem:[%s0 + $0x14] sm:$0xf]
  %v24 = vld [vmem:[%s0 + $0x18] sm:$0xff]
  %v25 = vld [vmem:[%s0 + $0x20] sm:$0xf]
  %v26 = vld [vmem:[%s0 + $0x24] sm:$0xff]
  %v27 = vld [vmem:[%s0 + $0x2c] sm:$0xf]
  %v28 = vld [vmem:[#allocation2] sm:$0xff]
  %v29 = vld [vmem:[#allocation2 + $0x8] sm:$0xff]
  %v30 = vld [vmem:[#allocation2 + $0x10] sm:$0xff]
  %v31 = vld [vmem:[#allocation2 + $0x18] sm:$0xff]
  %v32 = vld [vmem:[%s1] sm:$0xf]
  %v33 = vld [vmem:[%s1 + $0x4] sm:$0xf]
  %v34 = vld [vmem:[%s1 + $0x8] sm:$0xf]
  %v35 = vld [vmem:[%s1 + $0xc] sm:$0xf]
  %v36 = vld [vmem:[%s1 + $0x10] sm:$0xf]
  %v37 = vld [vmem:[%s1 + $0x14] sm:$0xf]
  %v38 = vld [vmem:[%s1 + $0x18] sm:$0xf]
  %v39 = vld [vmem:[%s1 + $0x1c] sm:$0xf]
  %v40 = vld [vmem:[%s1 + $0x20] sm:$0xf]
  %v41 = vld [vmem:[%s1 + $0x24] sm:$0xf]
  %v42 = vld [vmem:[%s1 + $0x28] sm:$0xf]
  %v43 = vld [vmem:[%s1 + $0x2c] sm:$0xf]
  %v44 = vld [vmem:[%s1 + $0x30] sm:$0xf]
  %v45 = vld [vmem:[%s1 + $0x34] sm:$0xf]
  %v46 = vld [vmem:[%s1 + $0x38] sm:$0xf]
  %v47 = vld [vmem:[%s1 + $0x3c] sm:$0xf]
  %v48 = vld [vmem:[%s1 + $0x40] sm:$0xf]
  %v49 = vld [vmem:[%s1 + $0x44] sm:$0xf]
  %v50 = vld [vmem:[%s1 + $0x48] sm:$0xf]
  %v51 = vld [vmem:[%s1 + $0x4c] sm:$0xf]
  %v52 = vld [vmem:[%s1 + $0x50] sm:$0xf]
  %v53 = vld [vmem:[%s1 + $0x54] sm:$0xf]
  %v54 = vld [vmem:[%s1 + $0x58] sm:$0xf]
  %v55 = vld [vmem:[%s1 + $0x5c] sm:$0xf]
  %v56 = vld [vmem:[%s1 + $0x60] sm:$0xf]
  %v57 = vld [vmem:[%s1 + $0x64] sm:$0xf]
  %v58 = vld [vmem:[%s1 + $0x68] sm:$0xf]
  %v59 = vld [vmem:[%s1 + $0x6c] sm:$0xf]
  %v60 = vld [vmem:[%s1 + $0x70] sm:$0xf]
  %v61 = vld [vmem:[%s1 + $0x74] sm:$0xf]
  %v62 = vld [vmem:[%s1 + $0x78] sm:$0xf]
  %v63 = vld [vmem:[%s1 + $0x7c] sm:$0xf]
  %v64 = vld [vmem:[%s1 + $0x80] sm:$0xf]
  %v65 = vld [vmem:[%s1 + $0x84] sm:$0xf]
  %v66 = vld [vmem:[%s1 + $0x88] sm:$0xf]
  %v67 = vld [vmem:[%s1 + $0x8c] sm:$0xf]
  %v68 = vld [vmem:[%s1 + $0x90] sm:$0xf]
  %v69 = vld [vmem:[%s1 + $0x94] sm:$0xf]
  %v70 = vld [vmem:[%s1 + $0x98] sm:$0xf]
  %v71 = vld [vmem:[%s1 + $0x9c] sm:$0xf]
  %v72 = vld [vmem:[%s1 + $0xa0] sm:$0xf]
  %v73 = vld [vmem:[%s1 + $0xa4] sm:$0xf]
  %v74 = vld [vmem:[%s1 + $0xa8] sm:$0xf]
  %v75 = vld [vmem:[%s1 + $0xac] sm:$0xf]
  %v76 = vld [vmem:[%s1 + $0xb0] sm:$0xf]
  %v77 = vld [vmem:[%s1 + $0xb4] sm:$0xf]
  %v78 = vld [vmem:[%s1 + $0xb8] sm:$0xf]
  %v79 = vld [vmem:[%s1 + $0xbc] sm:$0xf]
  %v88 = vunpack.c.l.b16 %v20
  %v89 = vunpack.c.h.b16 %v20
  %v90 = vunpack.c.l.b16 %v21
  %v91 = vunpack.c.l.b16 %v22
  %v92 = vunpack.c.h.b16 %v22
  %v93 = vunpack.c.l.b16 %v23
  %v94 = vunpack.c.l.b16 %v24
  %v95 = vunpack.c.h.b16 %v24
  %v96 = vunpack.c.l.b16 %v25
  %v97 = vunpack.c.l.b16 %v26
  %v98 = vunpack.c.h.b16 %v26
  %v99 = vunpack.c.l.b16 %v27
  %v100 = vpack.c.b16 %v91, %v88
  %v101 = vpack.c.b16 %v92, %v89
  %v102 = vpack.c.b16 %v93, %v90
  %v103 = vpack.c.b16 %v97, %v94
  %v104 = vpack.c.b16 %v98, %v95
  %v105 = vpack.c.b16 %v99, %v96
  %v160 = vunpack.c.l.b16 %v32
  %v161 = vunpack.c.l.b16 %v33
  %v162 = vunpack.c.l.b16 %v34
  %v163 = vunpack.c.l.b16 %v35
  %v164 = vunpack.c.l.b16 %v36
  %v165 = vunpack.c.l.b16 %v37
  %v166 = vunpack.c.l.b16 %v38
  %v167 = vunpack.c.l.b16 %v39
  %v168 = vunpack.c.l.b16 %v40
  %v169 = vunpack.c.l.b16 %v41
  %v170 = vunpack.c.l.b16 %v42
  %v171 = vunpack.c.l.b16 %v43
  %v172 = vunpack.c.l.b16 %v44
  %v173 = vunpack.c.l.b16 %v45
  %v174 = vunpack.c.l.b16 %v46
  %v175 = vunpack.c.l.b16 %v47
  %v176 = vunpack.c.l.b16 %v48
  %v177 = vunpack.c.l.b16 %v49
  %v178 = vunpack.c.l.b16 %v50
  %v179 = vunpack.c.l.b16 %v51
  %v180 = vunpack.c.l.b16 %v52
  %v181 = vunpack.c.l.b16 %v53
  %v182 = vunpack.c.l.b16 %v54
  %v183 = vunpack.c.l.b16 %v55
  %v184 = vunpack.c.l.b16 %v56
  %v185 = vunpack.c.l.b16 %v57
  %v186 = vunpack.c.l.b16 %v58
  %v187 = vunpack.c.l.b16 %v59
  %v188 = vunpack.c.l.b16 %v60
  %v189 = vunpack.c.l.b16 %v61
  %v190 = vunpack.c.l.b16 %v62
  %v191 = vunpack.c.l.b16 %v63
  %v192 = vunpack.c.l.b16 %v64
  %v193 = vunpack.c.l.b16 %v65
  %v194 = vunpack.c.l.b16 %v66
  %v195 = vunpack.c.l.b16 %v67
  %v196 = vunpack.c.l.b16 %v68
  %v197 = vunpack.c.l.b16 %v69
  %v198 = vunpack.c.l.b16 %v70
  %v199 = vunpack.c.l.b16 %v71
  %v200 = vunpack.c.l.b16 %v72
  %v201 = vunpack.c.l.b16 %v73
  %v202 = vunpack.c.l.b16 %v74
  %v203 = vunpack.c.l.b16 %v75
  %v204 = vunpack.c.l.b16 %v76
  %v205 = vunpack.c.l.b16 %v77
  %v206 = vunpack.c.l.b16 %v78
  %v207 = vunpack.c.l.b16 %v79
  %v208 = vpack.c.b16 %v161, %v160
  %v209 = vpack.c.b16 %v163, %v162
  %v210 = vpack.c.b16 %v165, %v164
  %v211 = vpack.c.b16 %v167, %v166
  %v212 = vpack.c.b16 %v169, %v168
  %v213 = vpack.c.b16 %v171, %v170
  %v214 = vpack.c.b16 %v173, %v172
  %v215 = vpack.c.b16 %v175, %v174
  %v216 = vpack.c.b16 %v177, %v176
  %v217 = vpack.c.b16 %v179, %v178
  %v218 = vpack.c.b16 %v181, %v180
  %v219 = vpack.c.b16 %v183, %v182
  %v220 = vpack.c.b16 %v185, %v184
  %v221 = vpack.c.b16 %v187, %v186
  %v222 = vpack.c.b16 %v189, %v188
  %v223 = vpack.c.b16 %v191, %v190
  %v224 = vpack.c.b16 %v193, %v192
  %v225 = vpack.c.b16 %v195, %v194
  %v226 = vpack.c.b16 %v197, %v196
  %v227 = vpack.c.b16 %v199, %v198
  %v228 = vpack.c.b16 %v201, %v200
  %v229 = vpack.c.b16 %v203, %v202
  %v230 = vpack.c.b16 %v205, %v204
  %v231 = vpack.c.b16 %v207, %v206
  %256 = vmatprep.subr.bf16.mxu0 0
  %257 = vmatpush1.bf16.msra.mxu0 %v208
  %258 = vmatprep.subr.bf16.mxu0 0
  %259 = vmatpush1.bf16.msra.mxu0 %v209
  %260 = vmatprep.subr.bf16.mxu0 0
  %261 = vmatpush1.bf16.msra.mxu0 %v210
  %262 = vmatprep.subr.bf16.mxu0 0
  %263 = vmatpush1.bf16.msra.mxu0 %v211
  %264 = vmatprep.subr.bf16.mxu0 0
  %265 = vmatpush1.bf16.msra.mxu0 %v212
  %266 = vmatprep.subr.bf16.mxu0 0
  %267 = vmatpush1.bf16.msra.mxu0 %v213
  %268 = vmatprep.subr.bf16.mxu0 0
  %269 = vmatpush1.bf16.msra.mxu0 %v214
  %270 = vmatprep.subr.bf16.mxu0 0
  %271 = vmatpush1.bf16.msra.mxu0 %v215
  %272 = vmatprep.subr.bf16.mxu0 0
  %273 = vmatpush1.bf16.msra.mxu0 %v216
  %274 = vmatprep.subr.bf16.mxu0 0
  %275 = vmatpush1.bf16.msra.mxu0 %v217
  %276 = vmatprep.subr.bf16.mxu0 0
  %277 = vmatpush1.bf16.msra.mxu0 %v218
  %278 = vmatprep.subr.bf16.mxu0 0
  %279 = vmatpush1.bf16.msra.mxu0 %v219
  %280 = vmatprep.subr.bf16.mxu0 0
  %281 = vmatpush1.bf16.msra.mxu0 %v220
  %282 = vmatprep.subr.bf16.mxu0 0
  %283 = vmatpush1.bf16.msra.mxu0 %v221
  %284 = vmatprep.subr.bf16.mxu0 0
  %285 = vmatpush1.bf16.msra.mxu0 %v222
  %286 = vmatprep.subr.bf16.mxu0 0
  %287 = vmatpush1.bf16.msra.mxu0 %v223
  %288 = vmatprep.mubr.bf16.mxu0 %v101
  %289 = vmatmul.mubr.bf16.gmra.mrb[0].mxu0 %v100
  %v290 = vpop.f32.mrb[0].mxu0
  %v291 = vadd.f32 0.0, %v290
  %v292 = vpop.f32.mrb[0].mxu0
  %v293 = vpop.f32.mrb[0].mxu0
  %v294 = vadd.f32 0.0, %v293
  %v295 = vpop.f32.mrb[0].mxu0
  %296 = vmatprep.mubr.bf16.mxu0 %v104
  %297 = vmatmul.mubr.bf16.gmra.mrb[0].mxu0 %v103
  %v298 = vpop.f32.mrb[0].mxu0
  %v299 = vadd.f32 0.0, %v298
  %v300 = vpop.f32.mrb[0].mxu0
  %v301 = vpop.f32.mrb[0].mxu0
  %v302 = vadd.f32 0.0, %v301
  %v303 = vpop.f32.mrb[0].mxu0
  %304 = vdwg.mxu0
  %305 = vmatprep.subr.bf16.mxu0 0
  %306 = vmatpush1.bf16.msra.mxu0 %v224
  %307 = vmatprep.subr.bf16.mxu0 0
  %308 = vmatpush1.bf16.msra.mxu0 %v225
  %309 = vmatprep.subr.bf16.mxu0 0
  %310 = vmatpush1.bf16.msra.mxu0 %v226
  %311 = vmatprep.subr.bf16.mxu0 0
  %312 = vmatpush1.bf16.msra.mxu0 %v227
  %313 = vmatprep.subr.bf16.mxu0 0
  %314 = vmatpush1.bf16.msra.mxu0 %v228
  %315 = vmatprep.subr.bf16.mxu0 0
  %316 = vmatpush1.bf16.msra.mxu0 %v229
  %317 = vmatprep.subr.bf16.mxu0 0
  %318 = vmatpush1.bf16.msra.mxu0 %v230
  %319 = vmatprep.subr.bf16.mxu0 0
  %320 = vmatpush1.bf16.msra.mxu0 %v231
  %321 = vmatprep.subr.bf16.mxu0 0
  %322 = vmatpush1.bf16.msra.mxu0 0
  %323 = vmatprep.subr.bf16.mxu0 0
  %324 = vmatpush1.bf16.msra.mxu0 0
  %325 = vmatprep.subr.bf16.mxu0 0
  %326 = vmatpush1.bf16.msra.mxu0 0
  %327 = vmatprep.subr.bf16.mxu0 0
  %328 = vmatpush1.bf16.msra.mxu0 0
  %329 = vmatprep.subr.bf16.mxu0 0
  %330 = vmatpush1.bf16.msra.mxu0 0
  %331 = vmatprep.subr.bf16.mxu0 0
  %332 = vmatpush1.bf16.msra.mxu0 0
  %333 = vmatprep.subr.bf16.mxu0 0
  %334 = vmatpush1.bf16.msra.mxu0 0
  %335 = vmatprep.subr.bf16.mxu0 0
  %336 = vmatpush1.bf16.msra.mxu0 0
  %337 = vmatprep.mubr.bf16.mxu0 0
  %338 = vmatmul.mubr.bf16.gmra.mrb[0].mxu0 %v102
  %v339 = vpop.f32.mrb[0].mxu0
  %v340 = vadd.f32 %v291, %v339
  %v341 = vpop.f32.mrb[0].mxu0
  %v342 = vpop.f32.mrb[0].mxu0
  %v343 = vadd.f32 %v294, %v342
  %v344 = vpop.f32.mrb[0].mxu0
  %345 = vmatprep.mubr.bf16.mxu0 0
  %346 = vmatmul.mubr.bf16.gmra.mrb[0].mxu0 %v105
  %v347 = vpop.f32.mrb[0].mxu0
  %v348 = vadd.f32 %v299, %v347
  %v349 = vpop.f32.mrb[0].mxu0
  %v350 = vpop.f32.mrb[0].mxu0
  %v351 = vadd.f32 %v302, %v350
  %v352 = vpop.f32.mrb[0].mxu0
  %353 = vdwg.mxu0
  %v354 = vadd.f32 %v28, %v340
  %v355 = vadd.f32 %v29, %v343
  %v356 = vadd.f32 %v30, %v348
  %v357 = vadd.f32 %v31, %v351
  %358 = vst [vmem:[#allocation2] sm:$0xff] %v354
  %359 = vst [vmem:[#allocation2 + $0x8] sm:$0xff] %v355
  %360 = vst [vmem:[#allocation2 + $0x10] sm:$0xff] %v356
  %361 = vst [vmem:[#allocation2 + $0x18] sm:$0xff] %v357
  // Predicated region
  $region14: #{densenet_finetune_forward.28} parent=0 // pred_check
    %p362 = pneg %p12
  $region15: #{densenet_finetune_forward.28} parent=0 // pred_check_branch
    %364 = sbr.rel (%p362) target = $region17
  $region16: #{densenet_finetune_forward.28} parent=0 // pred_region
    %v365 = vld [vmem:[#allocation2] sm:$0xff]
    %v366 = vld [vmem:[#allocation2 + $0x8] sm:$0xff]
    %v367 = vld [vmem:[#allocation2 + $0x10] sm:$0xff]
    %v368 = vld [vmem:[#allocation2 + $0x18] sm:$0xff]
    %v369 = vpack.c.bf16 %v366, %v365
    %v370 = vpack.c.bf16 %v368, %v367
    %v373 = vunpack.c.l.b16 %v369
    %v374 = vunpack.c.h.b16 %v369
    %v375 = vunpack.c.l.b16 %v370
    %v376 = vunpack.c.h.b16 %v370
    %v377 = vpack.c.b16 %v373, %v373
    %v378 = vpack.c.b16 %v374, %v374
    %v379 = vpack.c.b16 %v375, %v375
    %v380 = vpack.c.b16 %v376, %v376
    %385 = vst [vmem:[%s2] sm:$0xf] %v377
    %386 = vst [vmem:[%s2 + $0x4] sm:$0xf] %v378
    %387 = vst [vmem:[%s2 + $0x8] sm:$0xf] %v379
    %388 = vst [vmem:[%s2 + $0xc] sm:$0xf] %v380
  $region17: #{densenet_finetune_forward.28} parent=0 // pred_fallthru
    _
  // Predicated region
  $region18: #{densenet_finetune_forward.28} parent=0 // pred_check
    _
  $region19: #{densenet_finetune_forward.28} parent=0 // pred_check_branch
    %390 = sbr.rel (0) target = $region21
  $region20: #{densenet_finetune_forward.28} parent=0 // pred_region
    _
  $region21: #{densenet_finetune_forward.28} parent=0 // pred_fallthru
    _
  // Predicated region
  $region22: #{densenet_finetune_forward.28} parent=0 // pred_check
    _
  $region23: #{densenet_finetune_forward.28} parent=0 // pred_check_branch
    %392 = sbr.rel (0) target = $region25
  $region24: #{densenet_finetune_forward.28} parent=0 // pred_region
    _
  $region25: #{densenet_finetune_forward.28} parent=0 // pred_fallthru
    _

// kernel: densenet_finetune_forward.31
$region0: #{densenet_finetune_forward.31}
  #allocation0 [shape = 'u32[]', space=smem, size = 0x4, offset = 0x4, fixed_abs, tag = 'smem constant byte address 0x4 - core index']
  #allocation1 [shape = 'u32[144,128]{1,0:T(1,128)}', space=vmem, size = 0x12000, scoped, tag = 'internal scratch']
  #allocation2 [shape = 'f32[32,128]{1,0:T(8,128)}', space=vmem, size = 0x4000, scoped, tag = 'scratch operand']
  %s0 = inlined_call_operand.vmem [shape: bf16[32,128], index: 0, kind: input, shape index: {}]
  %s1 = inlined_call_operand.vmem [shape: bf16[128,128], index: 1, kind: input, shape index: {}]
  %s2 = inlined_call_operand.vmem [shape: f32[1,128], index: 2, kind: input, shape index: {}]
  %s3 = inlined_call_operand.vmem [shape: f32[1,128], index: 3, kind: input, shape index: {}]
  %s4 = inlined_call_operand.vmem [shape: bf16[32,128], index: 4, kind: output, shape index: {}]
  %s5 = sld [smem:[#allocation0]]
  $region34: #{densenet_finetune_forward.31} parent=0
    _
  %s7 = ssub.s32 1, %s5
  %s8 = scalar_select 0, %s7, %s5
  // Predicated region
  $region2: #{densenet_finetune_forward.31} parent=0 // pred_check
    _
  $region3: #{densenet_finetune_forward.31} parent=0 // pred_check_branch
    %10 = sbr.rel (0) target = $region5
  $region4: #{densenet_finetune_forward.31} parent=0 // pred_region
    _
  $region5: #{densenet_finetune_forward.31} parent=0 // pred_fallthru
    _
  // Predicated region
  $region6: #{densenet_finetune_forward.31} parent=0 // pred_check
    _
  $region7: #{densenet_finetune_forward.31} parent=0 // pred_check_branch
    %12 = sbr.rel (0) target = $region9
  $region8: #{densenet_finetune_forward.31} parent=0 // pred_region
    _
  $region9: #{densenet_finetune_forward.31} parent=0 // pred_fallthru
    _
  // Predicated region
  $region10: #{densenet_finetune_forward.31} parent=0 // pred_check
    _
  $region11: #{densenet_finetune_forward.31} parent=0 // pred_check_branch
    %14 = sbr.rel (0) target = $region13
  $region12: #{densenet_finetune_forward.31} parent=0 // pred_region
    _
  $region13: #{densenet_finetune_forward.31} parent=0 // pred_fallthru
    _
  // Predicated region
  $region14: #{densenet_finetune_forward.31} parent=0 // pred_check
    _
  $region15: #{densenet_finetune_forward.31} parent=0 // pred_check_branch
    %16 = sbr.rel (0) target = $region17
  $region16: #{densenet_finetune_forward.31} parent=0 // pred_region
    _
  $region17: #{densenet_finetune_forward.31} parent=0 // pred_fallthru
    _
  %p18 = scmp.eq.s32.totalorder 0, 0
  // Predicated region
  $region18: #{densenet_finetune_forward.31} parent=0 // pred_check
    %p19 = pneg %p18
  $region19: #{densenet_finetune_forward.31} parent=0 // pred_check_branch
    %21 = sbr.rel (%p19) target = $region21
  $region20: #{densenet_finetune_forward.31} parent=0 // pred_region
    %22 = vst [vmem:[#allocation2] sm:$0xff] 0.0
    %23 = vst [vmem:[#allocation2 + $0x8] sm:$0xff] 0.0
    %24 = vst [vmem:[#allocation2 + $0x10] sm:$0xff] 0.0
    %25 = vst [vmem:[#allocation2 + $0x18] sm:$0xff] 0.0
  $region21: #{densenet_finetune_forward.31} parent=0 // pred_fallthru
    _
  %v26 = vld [vmem:[%s0] sm:$0xf]
  %v27 = vld [vmem:[%s0 + $0x4] sm:$0xf]
  %v28 = vld [vmem:[%s0 + $0x8] sm:$0xf]
  %v29 = vld [vmem:[%s0 + $0xc] sm:$0xf]
  %v30 = vld [vmem:[%s2] sm:$0x1]
  %v31 = vpack.c.bf16 %v30, %v30
  %v32 = vld [vmem:[%s3] sm:$0x1]
  %v33 = vpack.c.bf16 %v32, %v32
  %v35 = vpack.i.b16 %v31, %v31
  %v37 = vlaneseq
  %v38 = vshrl.u32 %v37, 7
  %v39 = vsub.s32 0, %v38
  %v40 = vrot.slane %v35, %v39
  %v42 = vunpack.c.l.b16 %v40
  %v43 = vpack.c.b16 %v42, %v42
  %v45 = vmul.bf16 %v26, %v43
  %v46 = vmul.bf16 %v27, %v43
  %v47 = vmul.bf16 %v28, %v43
  %v48 = vmul.bf16 %v29, %v43
  %v50 = vpack.i.b16 %v33, %v33
  %v52 = vlaneseq
  %v53 = vshrl.u32 %v52, 7
  %v54 = vsub.s32 0, %v53
  %v55 = vrot.slane %v50, %v54
  %v57 = vunpack.c.l.b16 %v55
  %v58 = vpack.c.b16 %v57, %v57
  %v60 = vadd.bf16 %v45, %v58
  %v61 = vadd.bf16 %v46, %v58
  %v62 = vadd.bf16 %v47, %v58
  %v63 = vadd.bf16 %v48, %v58
  %v64 = vmax.bf16 %v60, 0
  %v65 = vmax.bf16 %v61, 0
  %v66 = vmax.bf16 %v62, 0
  %v67 = vmax.bf16 %v63, 0
  %v68 = vld [vmem:[#allocation2] sm:$0xff]
  %v69 = vld [vmem:[#allocation2 + $0x8] sm:$0xff]
  %v70 = vld [vmem:[#allocation2 + $0x10] sm:$0xff]
  %v71 = vld [vmem:[#allocation2 + $0x18] sm:$0xff]
  %v72 = vld [vmem:[%s1] sm:$0xf]
  %v73 = vld [vmem:[%s1 + $0x4] sm:$0xf]
  %v74 = vld [vmem:[%s1 + $0x8] sm:$0xf]
  %v75 = vld [vmem:[%s1 + $0xc] sm:$0xf]
  %v76 = vld [vmem:[%s1 + $0x10] sm:$0xf]
  %v77 = vld [vmem:[%s1 + $0x14] sm:$0xf]
  %v78 = vld [vmem:[%s1 + $0x18] sm:$0xf]
  %v79 = vld [vmem:[%s1 + $0x1c] sm:$0xf]
  %v80 = vld [vmem:[%s1 + $0x20] sm:$0xf]
  %v81 = vld [vmem:[%s1 + $0x24] sm:$0xf]
  %v82 = vld [vmem:[%s1 + $0x28] sm:$0xf]
  %v83 = vld [vmem:[%s1 + $0x2c] sm:$0xf]
  %v84 = vld [vmem:[%s1 + $0x30] sm:$0xf]
  %v85 = vld [vmem:[%s1 + $0x34] sm:$0xf]
  %v86 = vld [vmem:[%s1 + $0x38] sm:$0xf]
  %v87 = vld [vmem:[%s1 + $0x3c] sm:$0xf]
  %v92 = vunpack.c.l.b16 %v64
  %v93 = vunpack.c.l.b16 %v65
  %v94 = vunpack.c.l.b16 %v66
  %v95 = vunpack.c.l.b16 %v67
  %v96 = vpack.c.b16 %v93, %v92
  %v97 = vpack.c.b16 %v95, %v94
  %v116 = vunpack.c.l.b16 %v72
  %v117 = vunpack.c.l.b16 %v73
  %v118 = vunpack.c.l.b16 %v74
  %v119 = vunpack.c.l.b16 %v75
  %v120 = vunpack.c.l.b16 %v76
  %v121 = vunpack.c.l.b16 %v77
  %v122 = vunpack.c.l.b16 %v78
  %v123 = vunpack.c.l.b16 %v79
  %v124 = vunpack.c.l.b16 %v80
  %v125 = vunpack.c.l.b16 %v81
  %v126 = vunpack.c.l.b16 %v82
  %v127 = vunpack.c.l.b16 %v83
  %v128 = vunpack.c.l.b16 %v84
  %v129 = vunpack.c.l.b16 %v85
  %v130 = vunpack.c.l.b16 %v86
  %v131 = vunpack.c.l.b16 %v87
  %v132 = vpack.c.b16 %v117, %v116
  %v133 = vpack.c.b16 %v119, %v118
  %v134 = vpack.c.b16 %v121, %v120
  %v135 = vpack.c.b16 %v123, %v122
  %v136 = vpack.c.b16 %v125, %v124
  %v137 = vpack.c.b16 %v127, %v126
  %v138 = vpack.c.b16 %v129, %v128
  %v139 = vpack.c.b16 %v131, %v130
  %148 = vmatprep.subr.bf16.mxu0 0
  %149 = vmatpush1.bf16.msra.mxu0 %v132
  %150 = vmatprep.subr.bf16.mxu0 0
  %151 = vmatpush1.bf16.msra.mxu0 %v133
  %152 = vmatprep.subr.bf16.mxu0 0
  %153 = vmatpush1.bf16.msra.mxu0 %v134
  %154 = vmatprep.subr.bf16.mxu0 0
  %155 = vmatpush1.bf16.msra.mxu0 %v135
  %156 = vmatprep.subr.bf16.mxu0 0
  %157 = vmatpush1.bf16.msra.mxu0 %v136
  %158 = vmatprep.subr.bf16.mxu0 0
  %159 = vmatpush1.bf16.msra.mxu0 %v137
  %160 = vmatprep.subr.bf16.mxu0 0
  %161 = vmatpush1.bf16.msra.mxu0 %v138
  %162 = vmatprep.subr.bf16.mxu0 0
  %163 = vmatpush1.bf16.msra.mxu0 %v139
  %164 = vmatprep.subr.bf16.mxu0 0
  %165 = vmatpush1.bf16.msra.mxu0 0
  %166 = vmatprep.subr.bf16.mxu0 0
  %167 = vmatpush1.bf16.msra.mxu0 0
  %168 = vmatprep.subr.bf16.mxu0 0
  %169 = vmatpush1.bf16.msra.mxu0 0
  %170 = vmatprep.subr.bf16.mxu0 0
  %171 = vmatpush1.bf16.msra.mxu0 0
  %172 = vmatprep.subr.bf16.mxu0 0
  %173 = vmatpush1.bf16.msra.mxu0 0
  %174 = vmatprep.subr.bf16.mxu0 0
  %175 = vmatpush1.bf16.msra.mxu0 0
  %176 = vmatprep.subr.bf16.mxu0 0
  %177 = vmatpush1.bf16.msra.mxu0 0
  %178 = vmatprep.subr.bf16.mxu0 0
  %179 = vmatpush1.bf16.msra.mxu0 0
  %180 = vmatprep.mubr.bf16.mxu0 0
  %181 = vmatmul.mubr.bf16.gmra.mrb[0].mxu0 %v96
  %v182 = vpop.f32.mrb[0].mxu0
  %v183 = vadd.f32 0.0, %v182
  %v184 = vpop.f32.mrb[0].mxu0
  %v185 = vpop.f32.mrb[0].mxu0
  %v186 = vadd.f32 0.0, %v185
  %v187 = vpop.f32.mrb[0].mxu0
  %188 = vmatprep.mubr.bf16.mxu0 0
  %189 = vmatmul.mubr.bf16.gmra.mrb[0].mxu0 %v97
  %v190 = vpop.f32.mrb[0].mxu0
  %v191 = vadd.f32 0.0, %v190
  %v192 = vpop.f32.mrb[0].mxu0
  %v193 = vpop.f32.mrb[0].mxu0
  %v194 = vadd.f32 0.0, %v193
  %v195 = vpop.f32.mrb[0].mxu0
  %196 = vdwg.mxu0
  %v197 = vadd.f32 %v68, %v183
  %v198 = vadd.f32 %v69, %v186
  %v199 = vadd.f32 %v70, %v191
  %v200 = vadd.f32 %v71, %v194
  %201 = vst [vmem:[#allocation2] sm:$0xff] %v197
  %202 = vst [vmem:[#allocation2 + $0x8] sm:$0xff] %v198
  %203 = vst [vmem:[#allocation2 + $0x10] sm:$0xff] %v199
  %204 = vst [vmem:[#allocation2 + $0x18] sm:$0xff] %v200
  // Predicated region
  $region22: #{densenet_finetune_forward.31} parent=0 // pred_check
    %p205 = pneg %p18
  $region23: #{densenet_finetune_forward.31} parent=0 // pred_check_branch
    %207 = sbr.rel (%p205) target = $region25
  $region24: #{densenet_finetune_forward.31} parent=0 // pred_region
    %v208 = vld [vmem:[#allocation2] sm:$0xff]
    %v209 = vld [vmem:[#allocation2 + $0x8] sm:$0xff]
    %v210 = vld [vmem:[#allocation2 + $0x10] sm:$0xff]
    %v211 = vld [vmem:[#allocation2 + $0x18] sm:$0xff]
    %v212 = vpack.c.bf16 %v209, %v208
    %v213 = vpack.c.bf16 %v211, %v210
    %v216 = vunpack.c.l.b16 %v212
    %v217 = vunpack.c.h.b16 %v212
    %v218 = vunpack.c.l.b16 %v213
    %v219 = vunpack.c.h.b16 %v213
    %v220 = vpack.c.b16 %v216, %v216
    %v221 = vpack.c.b16 %v217, %v217
    %v222 = vpack.c.b16 %v218, %v218
    %v223 = vpack.c.b16 %v219, %v219
    %228 = vst [vmem:[%s4] sm:$0xf] %v220
    %229 = vst [vmem:[%s4 + $0x4] sm:$0xf] %v221
    %230 = vst [vmem:[%s4 + $0x8] sm:$0xf] %v222
    %231 = vst [vmem:[%s4 + $0xc] sm:$0xf] %v223
  $region25: #{densenet_finetune_forward.31} parent=0 // pred_fallthru
    _
  // Predicated region
  $region26: #{densenet_finetune_forward.31} parent=0 // pred_check
    _
  $region27: #{densenet_finetune_forward.31} parent=0 // pred_check_branch
    %233 = sbr.rel (0) target = $region29
  $region28: #{densenet_finetune_forward.31} parent=0 // pred_region
    _
  $region29: #{densenet_finetune_forward.31} parent=0 // pred_fallthru
    _
  // Predicated region
  $region30: #{densenet_finetune_forward.31} parent=0 // pred_check
    _
  $region31: #{densenet_finetune_forward.31} parent=0 // pred_check_branch
    %235 = sbr.rel (0) target = $region33
  $region32: #{densenet_finetune_forward.31} parent=0 // pred_region
    _
  $region33: #{densenet_finetune_forward.31} parent=0 // pred_fallthru
    _

// kernel: densenet_finetune_forward.32
$region0: #{densenet_finetune_forward.32}
  #allocation0 [shape = 'u32[]', space=smem, size = 0x4, offset = 0x4, fixed_abs, tag = 'smem constant byte address 0x4 - core index']
  #allocation1 [shape = 'u32[144,128]{1,0:T(1,128)}', space=vmem, size = 0x12000, scoped, tag = 'internal scratch']
  #allocation2 [shape = 'f32[16,128]{1,0:T(8,128)}', space=vmem, size = 0x2000, scoped, tag = 'scratch operand']
  %s0 = inlined_call_operand.vmem [shape: bf16[16,128], index: 0, kind: input, shape index: {}]
  %s1 = inlined_call_operand.vmem [shape: bf16[128,128], index: 1, kind: input, shape index: {}]
  %s2 = inlined_call_operand.vmem [shape: f32[1,128], index: 2, kind: input, shape index: {}]
  %s3 = inlined_call_operand.vmem [shape: f32[1,128], index: 3, kind: input, shape index: {}]
  %s4 = inlined_call_operand.vmem [shape: f32[1,128], index: 4, kind: input, shape index: {}]
  %s5 = inlined_call_operand.vmem [shape: f32[1,128], index: 5, kind: input, shape index: {}]
  %s6 = inlined_call_operand.vmem [shape: bf16[16,128], index: 6, kind: output, shape index: {}]
  %s7 = sld [smem:[#allocation0]]
  $region42: #{densenet_finetune_forward.32} parent=0
    _
  %s9 = ssub.s32 1, %s7
  %s10 = scalar_select 0, %s9, %s7
  // Predicated region
  $region2: #{densenet_finetune_forward.32} parent=0 // pred_check
    _
  $region3: #{densenet_finetune_forward.32} parent=0 // pred_check_branch
    %12 = sbr.rel (0) target = $region5
  $region4: #{densenet_finetune_forward.32} parent=0 // pred_region
    _
  $region5: #{densenet_finetune_forward.32} parent=0 // pred_fallthru
    _
  // Predicated region
  $region6: #{densenet_finetune_forward.32} parent=0 // pred_check
    _
  $region7: #{densenet_finetune_forward.32} parent=0 // pred_check_branch
    %14 = sbr.rel (0) target = $region9
  $region8: #{densenet_finetune_forward.32} parent=0 // pred_region
    _
  $region9: #{densenet_finetune_forward.32} parent=0 // pred_fallthru
    _
  // Predicated region
  $region10: #{densenet_finetune_forward.32} parent=0 // pred_check
    _
  $region11: #{densenet_finetune_forward.32} parent=0 // pred_check_branch
    %16 = sbr.rel (0) target = $region13
  $region12: #{densenet_finetune_forward.32} parent=0 // pred_region
    _
  $region13: #{densenet_finetune_forward.32} parent=0 // pred_fallthru
    _
  // Predicated region
  $region14: #{densenet_finetune_forward.32} parent=0 // pred_check
    _
  $region15: #{densenet_finetune_forward.32} parent=0 // pred_check_branch
    %18 = sbr.rel (0) target = $region17
  $region16: #{densenet_finetune_forward.32} parent=0 // pred_region
    _
  $region17: #{densenet_finetune_forward.32} parent=0 // pred_fallthru
    _
  // Predicated region
  $region18: #{densenet_finetune_forward.32} parent=0 // pred_check
    _
  $region19: #{densenet_finetune_forward.32} parent=0 // pred_check_branch
    %20 = sbr.rel (0) target = $region21
  $region20: #{densenet_finetune_forward.32} parent=0 // pred_region
    _
  $region21: #{densenet_finetune_forward.32} parent=0 // pred_fallthru
    _
  // Predicated region
  $region22: #{densenet_finetune_forward.32} parent=0 // pred_check
    _
  $region23: #{densenet_finetune_forward.32} parent=0 // pred_check_branch
    %22 = sbr.rel (0) target = $region25
  $region24: #{densenet_finetune_forward.32} parent=0 // pred_region
    _
  $region25: #{densenet_finetune_forward.32} parent=0 // pred_fallthru
    _
  %p24 = scmp.eq.s32.totalorder 0, 0
  // Predicated region
  $region26: #{densenet_finetune_forward.32} parent=0 // pred_check
    %p25 = pneg %p24
  $region27: #{densenet_finetune_forward.32} parent=0 // pred_check_branch
    %27 = sbr.rel (%p25) target = $region29
  $region28: #{densenet_finetune_forward.32} parent=0 // pred_region
    %28 = vst [vmem:[#allocation2] sm:$0xff] 0.0
    %29 = vst [vmem:[#allocation2 + $0x8] sm:$0xff] 0.0
  $region29: #{densenet_finetune_forward.32} parent=0 // pred_fallthru
    _
  %v30 = vld [vmem:[%s0] sm:$0xf]
  %v31 = vld [vmem:[%s0 + $0x4] sm:$0xf]
  %v32 = vld [vmem:[%s2] sm:$0x1]
  %v33 = vpack.c.bf16 %v32, %v32
  %v34 = vld [vmem:[%s3] sm:$0x1]
  %v35 = vpack.c.bf16 %v34, %v34
  %v37 = vpack.i.b16 %v33, %v33
  %v39 = vlaneseq
  %v40 = vshrl.u32 %v39, 7
  %v41 = vsub.s32 0, %v40
  %v42 = vrot.slane %v37, %v41
  %v44 = vunpack.c.l.b16 %v42
  %v45 = vpack.c.b16 %v44, %v44
  %v47 = vmul.bf16 %v30, %v45
  %v48 = vmul.bf16 %v31, %v45
  %v50 = vpack.i.b16 %v35, %v35
  %v52 = vlaneseq
  %v53 = vshrl.u32 %v52, 7
  %v54 = vsub.s32 0, %v53
  %v55 = vrot.slane %v50, %v54
  %v57 = vunpack.c.l.b16 %v55
  %v58 = vpack.c.b16 %v57, %v57
  %v60 = vadd.bf16 %v47, %v58
  %v61 = vadd.bf16 %v48, %v58
  %v62 = vmax.bf16 %v60, 0
  %v63 = vmax.bf16 %v61, 0
  %v64 = vld [vmem:[#allocation2] sm:$0xff]
  %v65 = vld [vmem:[#allocation2 + $0x8] sm:$0xff]
  %v66 = vld [vmem:[%s1] sm:$0xf]
  %v67 = vld [vmem:[%s1 + $0x4] sm:$0xf]
  %v68 = vld [vmem:[%s1 + $0x8] sm:$0xf]
  %v69 = vld [vmem:[%s1 + $0xc] sm:$0xf]
  %v70 = vld [vmem:[%s1 + $0x10] sm:$0xf]
  %v71 = vld [vmem:[%s1 + $0x14] sm:$0xf]
  %v72 = vld [vmem:[%s1 + $0x18] sm:$0xf]
  %v73 = vld [vmem:[%s1 + $0x1c] sm:$0xf]
  %v74 = vld [vmem:[%s1 + $0x20] sm:$0xf]
  %v75 = vld [vmem:[%s1 + $0x24] sm:$0xf]
  %v76 = vld [vmem:[%s1 + $0x28] sm:$0xf]
  %v77 = vld [vmem:[%s1 + $0x2c] sm:$0xf]
  %v78 = vld [vmem:[%s1 + $0x30] sm:$0xf]
  %v79 = vld [vmem:[%s1 + $0x34] sm:$0xf]
  %v80 = vld [vmem:[%s1 + $0x38] sm:$0xf]
  %v81 = vld [vmem:[%s1 + $0x3c] sm:$0xf]
  %v84 = vunpack.c.l.b16 %v62
  %v85 = vunpack.c.l.b16 %v63
  %v86 = vpack.c.b16 %v85, %v84
  %v104 = vunpack.c.l.b16 %v66
  %v105 = vunpack.c.l.b16 %v67
  %v106 = vunpack.c.l.b16 %v68
  %v107 = vunpack.c.l.b16 %v69
  %v108 = vunpack.c.l.b16 %v70
  %v109 = vunpack.c.l.b16 %v71
  %v110 = vunpack.c.l.b16 %v72
  %v111 = vunpack.c.l.b16 %v73
  %v112 = vunpack.c.l.b16 %v74
  %v113 = vunpack.c.l.b16 %v75
  %v114 = vunpack.c.l.b16 %v76
  %v115 = vunpack.c.l.b16 %v77
  %v116 = vunpack.c.l.b16 %v78
  %v117 = vunpack.c.l.b16 %v79
  %v118 = vunpack.c.l.b16 %v80
  %v119 = vunpack.c.l.b16 %v81
  %v120 = vpack.c.b16 %v105, %v104
  %v121 = vpack.c.b16 %v107, %v106
  %v122 = vpack.c.b16 %v109, %v108
  %v123 = vpack.c.b16 %v111, %v110
  %v124 = vpack.c.b16 %v113, %v112
  %v125 = vpack.c.b16 %v115, %v114
  %v126 = vpack.c.b16 %v117, %v116
  %v127 = vpack.c.b16 %v119, %v118
  %136 = vmatprep.subr.bf16.mxu0 0
  %137 = vmatpush1.bf16.msra.mxu0 %v120
  %138 = vmatprep.subr.bf16.mxu0 0
  %139 = vmatpush1.bf16.msra.mxu0 %v121
  %140 = vmatprep.subr.bf16.mxu0 0
  %141 = vmatpush1.bf16.msra.mxu0 %v122
  %142 = vmatprep.subr.bf16.mxu0 0
  %143 = vmatpush1.bf16.msra.mxu0 %v123
  %144 = vmatprep.subr.bf16.mxu0 0
  %145 = vmatpush1.bf16.msra.mxu0 %v124
  %146 = vmatprep.subr.bf16.mxu0 0
  %147 = vmatpush1.bf16.msra.mxu0 %v125
  %148 = vmatprep.subr.bf16.mxu0 0
  %149 = vmatpush1.bf16.msra.mxu0 %v126
  %150 = vmatprep.subr.bf16.mxu0 0
  %151 = vmatpush1.bf16.msra.mxu0 %v127
  %152 = vmatprep.subr.bf16.mxu0 0
  %153 = vmatpush1.bf16.msra.mxu0 0
  %154 = vmatprep.subr.bf16.mxu0 0
  %155 = vmatpush1.bf16.msra.mxu0 0
  %156 = vmatprep.subr.bf16.mxu0 0
  %157 = vmatpush1.bf16.msra.mxu0 0
  %158 = vmatprep.subr.bf16.mxu0 0
  %159 = vmatpush1.bf16.msra.mxu0 0
  %160 = vmatprep.subr.bf16.mxu0 0
  %161 = vmatpush1.bf16.msra.mxu0 0
  %162 = vmatprep.subr.bf16.mxu0 0
  %163 = vmatpush1.bf16.msra.mxu0 0
  %164 = vmatprep.subr.bf16.mxu0 0
  %165 = vmatpush1.bf16.msra.mxu0 0
  %166 = vmatprep.subr.bf16.mxu0 0
  %167 = vmatpush1.bf16.msra.mxu0 0
  %168 = vmatprep.mubr.bf16.mxu0 0
  %169 = vmatmul.mubr.bf16.gmra.mrb[0].mxu0 %v86
  %v170 = vpop.f32.mrb[0].mxu0
  %v171 = vadd.f32 0.0, %v170
  %v172 = vpop.f32.mrb[0].mxu0
  %v173 = vpop.f32.mrb[0].mxu0
  %v174 = vadd.f32 0.0, %v173
  %v175 = vpop.f32.mrb[0].mxu0
  %176 = vdwg.mxu0
  %v177 = vadd.f32 %v64, %v171
  %v178 = vadd.f32 %v65, %v174
  %179 = vst [vmem:[#allocation2] sm:$0xff] %v177
  %180 = vst [vmem:[#allocation2 + $0x8] sm:$0xff] %v178
  // Predicated region
  $region30: #{densenet_finetune_forward.32} parent=0 // pred_check
    %p181 = pneg %p24
  $region31: #{densenet_finetune_forward.32} parent=0 // pred_check_branch
    %183 = sbr.rel (%p181) target = $region33
  $region32: #{densenet_finetune_forward.32} parent=0 // pred_region
    %v184 = vld [vmem:[#allocation2] sm:$0xff]
    %v185 = vld [vmem:[#allocation2 + $0x8] sm:$0xff]
    %v186 = vld [vmem:[%s4] sm:$0x1]
    %v188 = vlaneseq
    %v189 = vshrl.u32 %v188, 7
    %v190 = vsub.s32 0, %v189
    %v191 = vrot.slane %v186, %v190
    %v193 = vmul.f32 %v184, %v191
    %v194 = vmul.f32 %v185, %v191
    %v195 = vld [vmem:[%s5] sm:$0x1]
    %v197 = vlaneseq
    %v198 = vshrl.u32 %v197, 7
    %v199 = vsub.s32 0, %v198
    %v200 = vrot.slane %v195, %v199
    %v202 = vadd.f32 %v193, %v200
    %v203 = vadd.f32 %v194, %v200
    %v204 = vmax.f32 %v202, 0.0
    %v205 = vmax.f32 %v203, 0.0
    %v206 = vpack.c.bf16 %v205, %v204
    %v208 = vunpack.c.l.b16 %v206
    %v209 = vunpack.c.h.b16 %v206
    %v210 = vpack.c.b16 %v208, %v208
    %v211 = vpack.c.b16 %v209, %v209
    %214 = vst [vmem:[%s6] sm:$0xf] %v210
    %215 = vst [vmem:[%s6 + $0x4] sm:$0xf] %v211
  $region33: #{densenet_finetune_forward.32} parent=0 // pred_fallthru
    _
  // Predicated region
  $region34: #{densenet_finetune_forward.32} parent=0 // pred_check
    _
  $region35: #{densenet_finetune_forward.32} parent=0 // pred_check_branch
    %217 = sbr.rel (0) target = $region37
  $region36: #{densenet_finetune_forward.32} parent=0 // pred_region
    _
  $region37: #{densenet_finetune_forward.32} parent=0 // pred_fallthru
    _
  // Predicated region
  $region38: #{densenet_finetune_forward.32} parent=0 // pred_check
    _
  $region39: #{densenet_finetune_forward.32} parent=0 // pred_check_branch
    %219 = sbr.rel (0) target = $region41
  $region40: #{densenet_finetune_forward.32} parent=0 // pred_region
    _
  $region41: #{densenet_finetune_forward.32} parent=0 // pred_fallthru
    _

// kernel: densenet_finetune_forward.33
$region0: #{densenet_finetune_forward.33}
  #allocation0 [shape = 'u32[]', space=smem, size = 0x4, offset = 0x4, fixed_abs, tag = 'smem constant byte address 0x4 - core index']
  #allocation1 [shape = 'u32[144,128]{1,0:T(1,128)}', space=vmem, size = 0x12000, scoped, tag = 'internal scratch']
  #allocation2 [shape = 'f32[16,128]{1,0:T(8,128)}', space=vmem, size = 0x2000, scoped, tag = 'scratch operand']
  %s0 = inlined_call_operand.vmem [shape: bf16[16,384], index: 0, kind: input, shape index: {}]
  %s1 = inlined_call_operand.vmem [shape: bf16[384,128], index: 1, kind: input, shape index: {}]
  %s2 = inlined_call_operand.vmem [shape: bf16[16,128], index: 2, kind: output, shape index: {}]
  %s3 = sld [smem:[#allocation0]]
  $region26: #{densenet_finetune_forward.33} parent=0
    _
  %s5 = ssub.s32 1, %s3
  %s6 = scalar_select 0, %s5, %s3
  // Predicated region
  $region2: #{densenet_finetune_forward.33} parent=0 // pred_check
    _
  $region3: #{densenet_finetune_forward.33} parent=0 // pred_check_branch
    %8 = sbr.rel (0) target = $region5
  $region4: #{densenet_finetune_forward.33} parent=0 // pred_region
    _
  $region5: #{densenet_finetune_forward.33} parent=0 // pred_fallthru
    _
  // Predicated region
  $region6: #{densenet_finetune_forward.33} parent=0 // pred_check
    _
  $region7: #{densenet_finetune_forward.33} parent=0 // pred_check_branch
    %10 = sbr.rel (0) target = $region9
  $region8: #{densenet_finetune_forward.33} parent=0 // pred_region
    _
  $region9: #{densenet_finetune_forward.33} parent=0 // pred_fallthru
    _
  %p12 = scmp.eq.s32.totalorder 0, 0
  // Predicated region
  $region10: #{densenet_finetune_forward.33} parent=0 // pred_check
    %p13 = pneg %p12
  $region11: #{densenet_finetune_forward.33} parent=0 // pred_check_branch
    %15 = sbr.rel (%p13) target = $region13
  $region12: #{densenet_finetune_forward.33} parent=0 // pred_region
    %16 = vst [vmem:[#allocation2] sm:$0xff] 0.0
    %17 = vst [vmem:[#allocation2 + $0x8] sm:$0xff] 0.0
  $region13: #{densenet_finetune_forward.33} parent=0 // pred_fallthru
    _
  %v18 = vld [vmem:[%s0] sm:$0xff]
  %v19 = vld [vmem:[%s0 + $0x8] sm:$0xf]
  %v20 = vld [vmem:[%s0 + $0xc] sm:$0xff]
  %v21 = vld [vmem:[%s0 + $0x14] sm:$0xf]
  %v22 = vld [vmem:[#allocation2] sm:$0xff]
  %v23 = vld [vmem:[#allocation2 + $0x8] sm:$0xff]
  %v24 = vld [vmem:[%s1] sm:$0xf]
  %v25 = vld [vmem:[%s1 + $0x4] sm:$0xf]
  %v26 = vld [vmem:[%s1 + $0x8] sm:$0xf]
  %v27 = vld [vmem:[%s1 + $0xc] sm:$0xf]
  %v28 = vld [vmem:[%s1 + $0x10] sm:$0xf]
  %v29 = vld [vmem:[%s1 + $0x14] sm:$0xf]
  %v30 = vld [vmem:[%s1 + $0x18] sm:$0xf]
  %v31 = vld [vmem:[%s1 + $0x1c] sm:$0xf]
  %v32 = vld [vmem:[%s1 + $0x20] sm:$0xf]
  %v33 = vld [vmem:[%s1 + $0x24] sm:$0xf]
  %v34 = vld [vmem:[%s1 + $0x28] sm:$0xf]
  %v35 = vld [vmem:[%s1 + $0x2c] sm:$0xf]
  %v36 = vld [vmem:[%s1 + $0x30] sm:$0xf]
  %v37 = vld [vmem:[%s1 + $0x34] sm:$0xf]
  %v38 = vld [vmem:[%s1 + $0x38] sm:$0xf]
  %v39 = vld [vmem:[%s1 + $0x3c] sm:$0xf]
  %v40 = vld [vmem:[%s1 + $0x40] sm:$0xf]
  %v41 = vld [vmem:[%s1 + $0x44] sm:$0xf]
  %v42 = vld [vmem:[%s1 + $0x48] sm:$0xf]
  %v43 = vld [vmem:[%s1 + $0x4c] sm:$0xf]
  %v44 = vld [vmem:[%s1 + $0x50] sm:$0xf]
  %v45 = vld [vmem:[%s1 + $0x54] sm:$0xf]
  %v46 = vld [vmem:[%s1 + $0x58] sm:$0xf]
  %v47 = vld [vmem:[%s1 + $0x5c] sm:$0xf]
  %v48 = vld [vmem:[%s1 + $0x60] sm:$0xf]
  %v49 = vld [vmem:[%s1 + $0x64] sm:$0xf]
  %v50 = vld [vmem:[%s1 + $0x68] sm:$0xf]
  %v51 = vld [vmem:[%s1 + $0x6c] sm:$0xf]
  %v52 = vld [vmem:[%s1 + $0x70] sm:$0xf]
  %v53 = vld [vmem:[%s1 + $0x74] sm:$0xf]
  %v54 = vld [vmem:[%s1 + $0x78] sm:$0xf]
  %v55 = vld [vmem:[%s1 + $0x7c] sm:$0xf]
  %v56 = vld [vmem:[%s1 + $0x80] sm:$0xf]
  %v57 = vld [vmem:[%s1 + $0x84] sm:$0xf]
  %v58 = vld [vmem:[%s1 + $0x88] sm:$0xf]
  %v59 = vld [vmem:[%s1 + $0x8c] sm:$0xf]
  %v60 = vld [vmem:[%s1 + $0x90] sm:$0xf]
  %v61 = vld [vmem:[%s1 + $0x94] sm:$0xf]
  %v62 = vld [vmem:[%s1 + $0x98] sm:$0xf]
  %v63 = vld [vmem:[%s1 + $0x9c] sm:$0xf]
  %v64 = vld [vmem:[%s1 + $0xa0] sm:$0xf]
  %v65 = vld [vmem:[%s1 + $0xa4] sm:$0xf]
  %v66 = vld [vmem:[%s1 + $0xa8] sm:$0xf]
  %v67 = vld [vmem:[%s1 + $0xac] sm:$0xf]
  %v68 = vld [vmem:[%s1 + $0xb0] sm:$0xf]
  %v69 = vld [vmem:[%s1 + $0xb4] sm:$0xf]
  %v70 = vld [vmem:[%s1 + $0xb8] sm:$0xf]
  %v71 = vld [vmem:[%s1 + $0xbc] sm:$0xf]
  %v76 = vunpack.c.l.b16 %v18
  %v77 = vunpack.c.h.b16 %v18
  %v78 = vunpack.c.l.b16 %v19
  %v79 = vunpack.c.l.b16 %v20
  %v80 = vunpack.c.h.b16 %v20
  %v81 = vunpack.c.l.b16 %v21
  %v82 = vpack.c.b16 %v79, %v76
  %v83 = vpack.c.b16 %v80, %v77
  %v84 = vpack.c.b16 %v81, %v78
  %v136 = vunpack.c.l.b16 %v24
  %v137 = vunpack.c.l.b16 %v25
  %v138 = vunpack.c.l.b16 %v26
  %v139 = vunpack.c.l.b16 %v27
  %v140 = vunpack.c.l.b16 %v28
  %v141 = vunpack.c.l.b16 %v29
  %v142 = vunpack.c.l.b16 %v30
  %v143 = vunpack.c.l.b16 %v31
  %v144 = vunpack.c.l.b16 %v32
  %v145 = vunpack.c.l.b16 %v33
  %v146 = vunpack.c.l.b16 %v34
  %v147 = vunpack.c.l.b16 %v35
  %v148 = vunpack.c.l.b16 %v36
  %v149 = vunpack.c.l.b16 %v37
  %v150 = vunpack.c.l.b16 %v38
  %v151 = vunpack.c.l.b16 %v39
  %v152 = vunpack.c.l.b16 %v40
  %v153 = vunpack.c.l.b16 %v41
  %v154 = vunpack.c.l.b16 %v42
  %v155 = vunpack.c.l.b16 %v43
  %v156 = vunpack.c.l.b16 %v44
  %v157 = vunpack.c.l.b16 %v45
  %v158 = vunpack.c.l.b16 %v46
  %v159 = vunpack.c.l.b16 %v47
  %v160 = vunpack.c.l.b16 %v48
  %v161 = vunpack.c.l.b16 %v49
  %v162 = vunpack.c.l.b16 %v50
  %v163 = vunpack.c.l.b16 %v51
  %v164 = vunpack.c.l.b16 %v52
  %v165 = vunpack.c.l.b16 %v53
  %v166 = vunpack.c.l.b16 %v54
  %v167 = vunpack.c.l.b16 %v55
  %v168 = vunpack.c.l.b16 %v56
  %v169 = vunpack.c.l.b16 %v57
  %v170 = vunpack.c.l.b16 %v58
  %v171 = vunpack.c.l.b16 %v59
  %v172 = vunpack.c.l.b16 %v60
  %v173 = vunpack.c.l.b16 %v61
  %v174 = vunpack.c.l.b16 %v62
  %v175 = vunpack.c.l.b16 %v63
  %v176 = vunpack.c.l.b16 %v64
  %v177 = vunpack.c.l.b16 %v65
  %v178 = vunpack.c.l.b16 %v66
  %v179 = vunpack.c.l.b16 %v67
  %v180 = vunpack.c.l.b16 %v68
  %v181 = vunpack.c.l.b16 %v69
  %v182 = vunpack.c.l.b16 %v70
  %v183 = vunpack.c.l.b16 %v71
  %v184 = vpack.c.b16 %v137, %v136
  %v185 = vpack.c.b16 %v139, %v138
  %v186 = vpack.c.b16 %v141, %v140
  %v187 = vpack.c.b16 %v143, %v142
  %v188 = vpack.c.b16 %v145, %v144
  %v189 = vpack.c.b16 %v147, %v146
  %v190 = vpack.c.b16 %v149, %v148
  %v191 = vpack.c.b16 %v151, %v150
  %v192 = vpack.c.b16 %v153, %v152
  %v193 = vpack.c.b16 %v155, %v154
  %v194 = vpack.c.b16 %v157, %v156
  %v195 = vpack.c.b16 %v159, %v158
  %v196 = vpack.c.b16 %v161, %v160
  %v197 = vpack.c.b16 %v163, %v162
  %v198 = vpack.c.b16 %v165, %v164
  %v199 = vpack.c.b16 %v167, %v166
  %v200 = vpack.c.b16 %v169, %v168
  %v201 = vpack.c.b16 %v171, %v170
  %v202 = vpack.c.b16 %v173, %v172
  %v203 = vpack.c.b16 %v175, %v174
  %v204 = vpack.c.b16 %v177, %v176
  %v205 = vpack.c.b16 %v179, %v178
  %v206 = vpack.c.b16 %v181, %v180
  %v207 = vpack.c.b16 %v183, %v182
  %232 = vmatprep.subr.bf16.mxu0 0
  %233 = vmatpush1.bf16.msra.mxu0 %v184
  %234 = vmatprep.subr.bf16.mxu0 0
  %235 = vmatpush1.bf16.msra.mxu0 %v185
  %236 = vmatprep.subr.bf16.mxu0 0
  %237 = vmatpush1.bf16.msra.mxu0 %v186
  %238 = vmatprep.subr.bf16.mxu0 0
  %239 = vmatpush1.bf16.msra.mxu0 %v187
  %240 = vmatprep.subr.bf16.mxu0 0
  %241 = vmatpush1.bf16.msra.mxu0 %v188
  %242 = vmatprep.subr.bf16.mxu0 0
  %243 = vmatpush1.bf16.msra.mxu0 %v189
  %244 = vmatprep.subr.bf16.mxu0 0
  %245 = vmatpush1.bf16.msra.mxu0 %v190
  %246 = vmatprep.subr.bf16.mxu0 0
  %247 = vmatpush1.bf16.msra.mxu0 %v191
  %248 = vmatprep.subr.bf16.mxu0 0
  %249 = vmatpush1.bf16.msra.mxu0 %v192
  %250 = vmatprep.subr.bf16.mxu0 0
  %251 = vmatpush1.bf16.msra.mxu0 %v193
  %252 = vmatprep.subr.bf16.mxu0 0
  %253 = vmatpush1.bf16.msra.mxu0 %v194
  %254 = vmatprep.subr.bf16.mxu0 0
  %255 = vmatpush1.bf16.msra.mxu0 %v195
  %256 = vmatprep.subr.bf16.mxu0 0
  %257 = vmatpush1.bf16.msra.mxu0 %v196
  %258 = vmatprep.subr.bf16.mxu0 0
  %259 = vmatpush1.bf16.msra.mxu0 %v197
  %260 = vmatprep.subr.bf16.mxu0 0
  %261 = vmatpush1.bf16.msra.mxu0 %v198
  %262 = vmatprep.subr.bf16.mxu0 0
  %263 = vmatpush1.bf16.msra.mxu0 %v199
  %264 = vmatprep.mubr.bf16.mxu0 %v83
  %265 = vmatmul.mubr.bf16.gmra.mrb[0].mxu0 %v82
  %v266 = vpop.f32.mrb[0].mxu0
  %v267 = vadd.f32 0.0, %v266
  %v268 = vpop.f32.mrb[0].mxu0
  %v269 = vpop.f32.mrb[0].mxu0
  %v270 = vadd.f32 0.0, %v269
  %v271 = vpop.f32.mrb[0].mxu0
  %272 = vdwg.mxu0
  %273 = vmatprep.subr.bf16.mxu0 0
  %274 = vmatpush1.bf16.msra.mxu0 %v200
  %275 = vmatprep.subr.bf16.mxu0 0
  %276 = vmatpush1.bf16.msra.mxu0 %v201
  %277 = vmatprep.subr.bf16.mxu0 0
  %278 = vmatpush1.bf16.msra.mxu0 %v202
  %279 = vmatprep.subr.bf16.mxu0 0
  %280 = vmatpush1.bf16.msra.mxu0 %v203
  %281 = vmatprep.subr.bf16.mxu0 0
  %282 = vmatpush1.bf16.msra.mxu0 %v204
  %283 = vmatprep.subr.bf16.mxu0 0
  %284 = vmatpush1.bf16.msra.mxu0 %v205
  %285 = vmatprep.subr.bf16.mxu0 0
  %286 = vmatpush1.bf16.msra.mxu0 %v206
  %287 = vmatprep.subr.bf16.mxu0 0
  %288 = vmatpush1.bf16.msra.mxu0 %v207
  %289 = vmatprep.subr.bf16.mxu0 0
  %290 = vmatpush1.bf16.msra.mxu0 0
  %291 = vmatprep.subr.bf16.mxu0 0
  %292 = vmatpush1.bf16.msra.mxu0 0
  %293 = vmatprep.subr.bf16.mxu0 0
  %294 = vmatpush1.bf16.msra.mxu0 0
  %295 = vmatprep.subr.bf16.mxu0 0
  %296 = vmatpush1.bf16.msra.mxu0 0
  %297 = vmatprep.subr.bf16.mxu0 0
  %298 = vmatpush1.bf16.msra.mxu0 0
  %299 = vmatprep.subr.bf16.mxu0 0
  %300 = vmatpush1.bf16.msra.mxu0 0
  %301 = vmatprep.subr.bf16.mxu0 0
  %302 = vmatpush1.bf16.msra.mxu0 0
  %303 = vmatprep.subr.bf16.mxu0 0
  %304 = vmatpush1.bf16.msra.mxu0 0
  %305 = vmatprep.mubr.bf16.mxu0 0
  %306 = vmatmul.mubr.bf16.gmra.mrb[0].mxu0 %v84
  %v307 = vpop.f32.mrb[0].mxu0
  %v308 = vadd.f32 %v267, %v307
  %v309 = vpop.f32.mrb[0].mxu0
  %v310 = vpop.f32.mrb[0].mxu0
  %v311 = vadd.f32 %v270, %v310
  %v312 = vpop.f32.mrb[0].mxu0
  %313 = vdwg.mxu0
  %v314 = vadd.f32 %v22, %v308
  %v315 = vadd.f32 %v23, %v311
  %316 = vst [vmem:[#allocation2] sm:$0xff] %v314
  %317 = vst [vmem:[#allocation2 + $0x8] sm:$0xff] %v315
  // Predicated region
  $region14: #{densenet_finetune_forward.33} parent=0 // pred_check
    %p318 = pneg %p12
  $region15: #{densenet_finetune_forward.33} parent=0 // pred_check_branch
    %320 = sbr.rel (%p318) target = $region17
  $region16: #{densenet_finetune_forward.33} parent=0 // pred_region
    %v321 = vld [vmem:[#allocation2] sm:$0xff]
    %v322 = vld [vmem:[#allocation2 + $0x8] sm:$0xff]
    %v323 = vpack.c.bf16 %v322, %v321
    %v325 = vunpack.c.l.b16 %v323
    %v326 = vunpack.c.h.b16 %v323
    %v327 = vpack.c.b16 %v325, %v325
    %v328 = vpack.c.b16 %v326, %v326
    %331 = vst [vmem:[%s2] sm:$0xf] %v327
    %332 = vst [vmem:[%s2 + $0x4] sm:$0xf] %v328
  $region17: #{densenet_finetune_forward.33} parent=0 // pred_fallthru
    _
  // Predicated region
  $region18: #{densenet_finetune_forward.33} parent=0 // pred_check
    _
  $region19: #{densenet_finetune_forward.33} parent=0 // pred_check_branch
    %334 = sbr.rel (0) target = $region21
  $region20: #{densenet_finetune_forward.33} parent=0 // pred_region
    _
  $region21: #{densenet_finetune_forward.33} parent=0 // pred_fallthru
    _
  // Predicated region
  $region22: #{densenet_finetune_forward.33} parent=0 // pred_check
    _
  $region23: #{densenet_finetune_forward.33} parent=0 // pred_check_branch
    %336 = sbr.rel (0) target = $region25
  $region24: #{densenet_finetune_forward.33} parent=0 // pred_region
    _
  $region25: #{densenet_finetune_forward.33} parent=0 // pred_fallthru
    _

// kernel: densenet_finetune_forward.36
$region0: #{densenet_finetune_forward.36}
  #allocation0 [shape = 'u32[]', space=smem, size = 0x4, offset = 0x4, fixed_abs, tag = 'smem constant byte address 0x4 - core index']
  #allocation1 [shape = 'u32[144,128]{1,0:T(1,128)}', space=vmem, size = 0x12000, scoped, tag = 'internal scratch']
  #allocation2 [shape = 'f32[16,128]{1,0:T(8,128)}', space=vmem, size = 0x2000, scoped, tag = 'scratch operand']
  %s0 = inlined_call_operand.vmem [shape: bf16[16,128], index: 0, kind: input, shape index: {}]
  %s1 = inlined_call_operand.vmem [shape: bf16[128,128], index: 1, kind: input, shape index: {}]
  %s2 = inlined_call_operand.vmem [shape: f32[1,128], index: 2, kind: input, shape index: {}]
  %s3 = inlined_call_operand.vmem [shape: f32[1,128], index: 3, kind: input, shape index: {}]
  %s4 = inlined_call_operand.vmem [shape: bf16[16,128], index: 4, kind: output, shape index: {}]
  %s5 = sld [smem:[#allocation0]]
  $region34: #{densenet_finetune_forward.36} parent=0
    _
  %s7 = ssub.s32 1, %s5
  %s8 = scalar_select 0, %s7, %s5
  // Predicated region
  $region2: #{densenet_finetune_forward.36} parent=0 // pred_check
    _
  $region3: #{densenet_finetune_forward.36} parent=0 // pred_check_branch
    %10 = sbr.rel (0) target = $region5
  $region4: #{densenet_finetune_forward.36} parent=0 // pred_region
    _
  $region5: #{densenet_finetune_forward.36} parent=0 // pred_fallthru
    _
  // Predicated region
  $region6: #{densenet_finetune_forward.36} parent=0 // pred_check
    _
  $region7: #{densenet_finetune_forward.36} parent=0 // pred_check_branch
    %12 = sbr.rel (0) target = $region9
  $region8: #{densenet_finetune_forward.36} parent=0 // pred_region
    _
  $region9: #{densenet_finetune_forward.36} parent=0 // pred_fallthru
    _
  // Predicated region
  $region10: #{densenet_finetune_forward.36} parent=0 // pred_check
    _
  $region11: #{densenet_finetune_forward.36} parent=0 // pred_check_branch
    %14 = sbr.rel (0) target = $region13
  $region12: #{densenet_finetune_forward.36} parent=0 // pred_region
    _
  $region13: #{densenet_finetune_forward.36} parent=0 // pred_fallthru
    _
  // Predicated region
  $region14: #{densenet_finetune_forward.36} parent=0 // pred_check
    _
  $region15: #{densenet_finetune_forward.36} parent=0 // pred_check_branch
    %16 = sbr.rel (0) target = $region17
  $region16: #{densenet_finetune_forward.36} parent=0 // pred_region
    _
  $region17: #{densenet_finetune_forward.36} parent=0 // pred_fallthru
    _
  %p18 = scmp.eq.s32.totalorder 0, 0
  // Predicated region
  $region18: #{densenet_finetune_forward.36} parent=0 // pred_check
    %p19 = pneg %p18
  $region19: #{densenet_finetune_forward.36} parent=0 // pred_check_branch
    %21 = sbr.rel (%p19) target = $region21
  $region20: #{densenet_finetune_forward.36} parent=0 // pred_region
    %22 = vst [vmem:[#allocation2] sm:$0xff] 0.0
    %23 = vst [vmem:[#allocation2 + $0x8] sm:$0xff] 0.0
  $region21: #{densenet_finetune_forward.36} parent=0 // pred_fallthru
    _
  %v24 = vld [vmem:[%s0] sm:$0xf]
  %v25 = vld [vmem:[%s0 + $0x4] sm:$0xf]
  %v26 = vld [vmem:[%s2] sm:$0x1]
  %v27 = vpack.c.bf16 %v26, %v26
  %v28 = vld [vmem:[%s3] sm:$0x1]
  %v29 = vpack.c.bf16 %v28, %v28
  %v31 = vpack.i.b16 %v27, %v27
  %v33 = vlaneseq
  %v34 = vshrl.u32 %v33, 7
  %v35 = vsub.s32 0, %v34
  %v36 = vrot.slane %v31, %v35
  %v38 = vunpack.c.l.b16 %v36
  %v39 = vpack.c.b16 %v38, %v38
  %v41 = vmul.bf16 %v24, %v39
  %v42 = vmul.bf16 %v25, %v39
  %v44 = vpack.i.b16 %v29, %v29
  %v46 = vlaneseq
  %v47 = vshrl.u32 %v46, 7
  %v48 = vsub.s32 0, %v47
  %v49 = vrot.slane %v44, %v48
  %v51 = vunpack.c.l.b16 %v49
  %v52 = vpack.c.b16 %v51, %v51
  %v54 = vadd.bf16 %v41, %v52
  %v55 = vadd.bf16 %v42, %v52
  %v56 = vmax.bf16 %v54, 0
  %v57 = vmax.bf16 %v55, 0
  %v58 = vld [vmem:[#allocation2] sm:$0xff]
  %v59 = vld [vmem:[#allocation2 + $0x8] sm:$0xff]
  %v60 = vld [vmem:[%s1] sm:$0xf]
  %v61 = vld [vmem:[%s1 + $0x4] sm:$0xf]
  %v62 = vld [vmem:[%s1 + $0x8] sm:$0xf]
  %v63 = vld [vmem:[%s1 + $0xc] sm:$0xf]
  %v64 = vld [vmem:[%s1 + $0x10] sm:$0xf]
  %v65 = vld [vmem:[%s1 + $0x14] sm:$0xf]
  %v66 = vld [vmem:[%s1 + $0x18] sm:$0xf]
  %v67 = vld [vmem:[%s1 + $0x1c] sm:$0xf]
  %v68 = vld [vmem:[%s1 + $0x20] sm:$0xf]
  %v69 = vld [vmem:[%s1 + $0x24] sm:$0xf]
  %v70 = vld [vmem:[%s1 + $0x28] sm:$0xf]
  %v71 = vld [vmem:[%s1 + $0x2c] sm:$0xf]
  %v72 = vld [vmem:[%s1 + $0x30] sm:$0xf]
  %v73 = vld [vmem:[%s1 + $0x34] sm:$0xf]
  %v74 = vld [vmem:[%s1 + $0x38] sm:$0xf]
  %v75 = vld [vmem:[%s1 + $0x3c] sm:$0xf]
  %v78 = vunpack.c.l.b16 %v56
  %v79 = vunpack.c.l.b16 %v57
  %v80 = vpack.c.b16 %v79, %v78
  %v98 = vunpack.c.l.b16 %v60
  %v99 = vunpack.c.l.b16 %v61
  %v100 = vunpack.c.l.b16 %v62
  %v101 = vunpack.c.l.b16 %v63
  %v102 = vunpack.c.l.b16 %v64
  %v103 = vunpack.c.l.b16 %v65
  %v104 = vunpack.c.l.b16 %v66
  %v105 = vunpack.c.l.b16 %v67
  %v106 = vunpack.c.l.b16 %v68
  %v107 = vunpack.c.l.b16 %v69
  %v108 = vunpack.c.l.b16 %v70
  %v109 = vunpack.c.l.b16 %v71
  %v110 = vunpack.c.l.b16 %v72
  %v111 = vunpack.c.l.b16 %v73
  %v112 = vunpack.c.l.b16 %v74
  %v113 = vunpack.c.l.b16 %v75
  %v114 = vpack.c.b16 %v99, %v98
  %v115 = vpack.c.b16 %v101, %v100
  %v116 = vpack.c.b16 %v103, %v102
  %v117 = vpack.c.b16 %v105, %v104
  %v118 = vpack.c.b16 %v107, %v106
  %v119 = vpack.c.b16 %v109, %v108
  %v120 = vpack.c.b16 %v111, %v110
  %v121 = vpack.c.b16 %v113, %v112
  %130 = vmatprep.subr.bf16.mxu0 0
  %131 = vmatpush1.bf16.msra.mxu0 %v114
  %132 = vmatprep.subr.bf16.mxu0 0
  %133 = vmatpush1.bf16.msra.mxu0 %v115
  %134 = vmatprep.subr.bf16.mxu0 0
  %135 = vmatpush1.bf16.msra.mxu0 %v116
  %136 = vmatprep.subr.bf16.mxu0 0
  %137 = vmatpush1.bf16.msra.mxu0 %v117
  %138 = vmatprep.subr.bf16.mxu0 0
  %139 = vmatpush1.bf16.msra.mxu0 %v118
  %140 = vmatprep.subr.bf16.mxu0 0
  %141 = vmatpush1.bf16.msra.mxu0 %v119
  %142 = vmatprep.subr.bf16.mxu0 0
  %143 = vmatpush1.bf16.msra.mxu0 %v120
  %144 = vmatprep.subr.bf16.mxu0 0
  %145 = vmatpush1.bf16.msra.mxu0 %v121
  %146 = vmatprep.subr.bf16.mxu0 0
  %147 = vmatpush1.bf16.msra.mxu0 0
  %148 = vmatprep.subr.bf16.mxu0 0
  %149 = vmatpush1.bf16.msra.mxu0 0
  %150 = vmatprep.subr.bf16.mxu0 0
  %151 = vmatpush1.bf16.msra.mxu0 0
  %152 = vmatprep.subr.bf16.mxu0 0
  %153 = vmatpush1.bf16.msra.mxu0 0
  %154 = vmatprep.subr.bf16.mxu0 0
  %155 = vmatpush1.bf16.msra.mxu0 0
  %156 = vmatprep.subr.bf16.mxu0 0
  %157 = vmatpush1.bf16.msra.mxu0 0
  %158 = vmatprep.subr.bf16.mxu0 0
  %159 = vmatpush1.bf16.msra.mxu0 0
  %160 = vmatprep.subr.bf16.mxu0 0
  %161 = vmatpush1.bf16.msra.mxu0 0
  %162 = vmatprep.mubr.bf16.mxu0 0
  %163 = vmatmul.mubr.bf16.gmra.mrb[0].mxu0 %v80
  %v164 = vpop.f32.mrb[0].mxu0
  %v165 = vadd.f32 0.0, %v164
  %v166 = vpop.f32.mrb[0].mxu0
  %v167 = vpop.f32.mrb[0].mxu0
  %v168 = vadd.f32 0.0, %v167
  %v169 = vpop.f32.mrb[0].mxu0
  %170 = vdwg.mxu0
  %v171 = vadd.f32 %v58, %v165
  %v172 = vadd.f32 %v59, %v168
  %173 = vst [vmem:[#allocation2] sm:$0xff] %v171
  %174 = vst [vmem:[#allocation2 + $0x8] sm:$0xff] %v172
  // Predicated region
  $region22: #{densenet_finetune_forward.36} parent=0 // pred_check
    %p175 = pneg %p18
  $region23: #{densenet_finetune_forward.36} parent=0 // pred_check_branch
    %177 = sbr.rel (%p175) target = $region25
  $region24: #{densenet_finetune_forward.36} parent=0 // pred_region
    %v178 = vld [vmem:[#allocation2] sm:$0xff]
    %v179 = vld [vmem:[#allocation2 + $0x8] sm:$0xff]
    %v180 = vpack.c.bf16 %v179, %v178
    %v182 = vunpack.c.l.b16 %v180
    %v183 = vunpack.c.h.b16 %v180
    %v184 = vpack.c.b16 %v182, %v182
    %v185 = vpack.c.b16 %v183, %v183
    %188 = vst [vmem:[%s4] sm:$0xf] %v184
    %189 = vst [vmem:[%s4 + $0x4] sm:$0xf] %v185
  $region25: #{densenet_finetune_forward.36} parent=0 // pred_fallthru
    _
  // Predicated region
  $region26: #{densenet_finetune_forward.36} parent=0 // pred_check
    _
  $region27: #{densenet_finetune_forward.36} parent=0 // pred_check_branch
    %191 = sbr.rel (0) target = $region29
  $region28: #{densenet_finetune_forward.36} parent=0 // pred_region
    _
  $region29: #{densenet_finetune_forward.36} parent=0 // pred_fallthru
    _
  // Predicated region
  $region30: #{densenet_finetune_forward.36} parent=0 // pred_check
    _
  $region31: #{densenet_finetune_forward.36} parent=0 // pred_check_branch
    %193 = sbr.rel (0) target = $region33
  $region32: #{densenet_finetune_forward.36} parent=0 // pred_region
    _
  $region33: #{densenet_finetune_forward.36} parent=0 // pred_fallthru
    _

// kernel: densenet_finetune_forward.41
$region0: #{densenet_finetune_forward.41}
  #allocation0 [shape = 'u32[]', space=smem, size = 0x4, offset = 0x4, fixed_abs, tag = 'smem constant byte address 0x4 - core index']
  #allocation1 [shape = 'u32[144,128]{1,0:T(1,128)}', space=vmem, size = 0x12000, scoped, tag = 'internal scratch']
  %s0 = inlined_call_operand.vmem [shape: bf16[2,1,128], index: 0, kind: input, shape index: {}]
  %s1 = inlined_call_operand.vmem [shape: f32[1,128], index: 1, kind: input, shape index: {}]
  %s2 = inlined_call_operand.vmem [shape: f32[1,128], index: 2, kind: input, shape index: {}]
  %s3 = inlined_call_operand.vmem [shape: f32[2,1,128], index: 3, kind: output, shape index: {}]
  %s4 = sld [smem:[#allocation0]]
  $region45: #{densenet_finetune_forward.41} parent=0
    _
  %s6 = ssub.s32 1, %s4
  %s7 = scalar_select 0, %s6, %s4
  loop: start=0, step=1, limit=4
  $region2: #{densenet_finetune_forward.41} parent=0 // loop_pre_header
    _
  $region3: #{densenet_finetune_forward.41} parent=0 // loop_header
    %s9 = sphi 0, %s13
    %p10 = scmp.ge.s32.totalorder %s9, 4
    %s19 = sphi 0, %s21
    %s22 = sphi 0, %s19
    %s23 = sphi 0, %s22
    %s39 = sphi 0, %s23
    %s43 = sphi 0, %s43
    %s45 = sphi 0, %s43
    %s46 = sphi 0, %s45
    %s60 = sphi 0, %s46
    %s64 = sphi 0, %s64
    %s66 = sphi 0, %s64
    %s67 = sphi 0, %s66
    %s81 = sphi 0, %s67
    %s87 = sphi 0, %s89
    %s90 = sphi 0, %s87
    %s91 = sphi 0, %s90
    %s107 = sphi 0, %s91
  $region4: #{densenet_finetune_forward.41} parent=0 // loop_header_branch
    %12 = sbr.rel (%p10) target = $region8
  $region5: #{densenet_finetune_forward.41} parent=0 // loop_body
    %s14 = ssub.s32 %s9, 1
    %s15 = ssub.s32 %s9, 2
    %s16 = sadd.s32 %s9, 1
    %s17 = ssub.s32 %s9, %s16
    %p18 = scmp.eq.s32.totalorder %s17, 0
    %s20 = sadd.s32 %s19, 1
    %s21 = scalar_select %p18, %s19, %s20
    %p24 = pneg %p18
    %p25 = scmp.eq.s32.totalorder %s9, 1
    %p26 = por %p24, %p25
    %p27 = scmp.ne.s32.totalorder %s19, %s22
    %p28 = scmp.eq.s32.totalorder %s9, 0
    %p29 = por %p27, %p28
    %p30 = scmp.ne.s32.totalorder %s19, %s22
    %p31 = scmp.eq.s32.totalorder %s14, 1
    %p32 = por %p30, %p31
    %p33 = scmp.ne.s32.totalorder %s22, %s23
    %p34 = scmp.eq.s32.totalorder %s14, 0
    %p35 = por %p33, %p34
    %p36 = scmp.ne.s32.totalorder %s22, %s23
    %p37 = scmp.eq.s32.totalorder %s15, 1
    %p38 = por %p36, %p37
    %p40 = scmp.ne.s32.totalorder %s23, %s39
    %p41 = scmp.eq.s32.totalorder %s15, 0
    %p42 = por %p40, %p41
    %s44 = sadd.s32 %s43, 1
    %p47 = scmp.eq.s32.totalorder %s9, 1
    %p48 = scmp.ne.s32.totalorder %s43, %s45
    %p49 = scmp.eq.s32.totalorder %s9, 0
    %p50 = por %p48, %p49
    %p51 = scmp.ne.s32.totalorder %s43, %s45
    %p52 = scmp.eq.s32.totalorder %s14, 1
    %p53 = por %p51, %p52
    %p54 = scmp.ne.s32.totalorder %s45, %s46
    %p55 = scmp.eq.s32.totalorder %s14, 0
    %p56 = por %p54, %p55
    %p57 = scmp.ne.s32.totalorder %s45, %s46
    %p58 = scmp.eq.s32.totalorder %s15, 1
    %p59 = por %p57, %p58
    %p61 = scmp.ne.s32.totalorder %s46, %s60
    %p62 = scmp.eq.s32.totalorder %s15, 0
    %p63 = por %p61, %p62
    %s65 = sadd.s32 %s64, 1
    %p68 = scmp.eq.s32.totalorder %s9, 1
    %p69 = scmp.ne.s32.totalorder %s64, %s66
    %p70 = scmp.eq.s32.totalorder %s9, 0
    %p71 = por %p69, %p70
    %p72 = scmp.ne.s32.totalorder %s64, %s66
    %p73 = scmp.eq.s32.totalorder %s14, 1
    %p74 = por %p72, %p73
    %p75 = scmp.ne.s32.totalorder %s66, %s67
    %p76 = scmp.eq.s32.totalorder %s14, 0
    %p77 = por %p75, %p76
    %p78 = scmp.ne.s32.totalorder %s66, %s67
    %p79 = scmp.eq.s32.totalorder %s15, 1
    %p80 = por %p78, %p79
    %p82 = scmp.ne.s32.totalorder %s67, %s81
    %p83 = scmp.eq.s32.totalorder %s15, 0
    %p84 = por %p82, %p83
    %s85 = ssub.s32 %s9, %s16
    %p86 = scmp.eq.s32.totalorder %s85, 0
    %s88 = sadd.s32 %s87, 1
    %s89 = scalar_select %p86, %s87, %s88
    %p92 = pneg %p86
    %p93 = scmp.eq.s32.totalorder %s9, 1
    %p94 = por %p92, %p93
    %p95 = scmp.ne.s32.totalorder %s87, %s90
    %p96 = scmp.eq.s32.totalorder %s9, 0
    %p97 = por %p95, %p96
    %p98 = scmp.ne.s32.totalorder %s87, %s90
    %p99 = scmp.eq.s32.totalorder %s14, 1
    %p100 = por %p98, %p99
    %p101 = scmp.ne.s32.totalorder %s90, %s91
    %p102 = scmp.eq.s32.totalorder %s14, 0
    %p103 = por %p101, %p102
    %p104 = scmp.ne.s32.totalorder %s90, %s91
    %p105 = scmp.eq.s32.totalorder %s15, 1
    %p106 = por %p104, %p105
    %p108 = scmp.ne.s32.totalorder %s91, %s107
    %p109 = scmp.eq.s32.totalorder %s15, 0
    %p110 = por %p108, %p109
    %p111 = scmp.le.s32.totalorder 1, %s9
    %p112 = scmp.lt.s32.totalorder %s9, 3
    %p113 = pnand %p111, %p112
    %p114 = pneg %p113
    // Predicated region
    $region9: #{densenet_finetune_forward.41} parent=5 // pred_check
      _
    $region10: #{densenet_finetune_forward.41} parent=5 // pred_check_branch
      %116 = sbr.rel (%p113) target = $region12
    $region11: #{densenet_finetune_forward.41} parent=5 // pred_region
      %s117 = ssub.s32 %s9, 1
      // Predicated region
      $region13: #{densenet_finetune_forward.41} parent=11 // pred_check
        %p118 = pneg %p56
      $region14: #{densenet_finetune_forward.41} parent=11 // pred_check_branch
        %120 = sbr.rel (%p118) target = $region16
      $region15: #{densenet_finetune_forward.41} parent=11 // pred_region
        _
      $region16: #{densenet_finetune_forward.41} parent=11 // pred_fallthru
        _
      // Predicated region
      $region17: #{densenet_finetune_forward.41} parent=11 // pred_check
        %p121 = pneg %p77
      $region18: #{densenet_finetune_forward.41} parent=11 // pred_check_branch
        %123 = sbr.rel (%p121) target = $region20
      $region19: #{densenet_finetune_forward.41} parent=11 // pred_region
        _
      $region20: #{densenet_finetune_forward.41} parent=11 // pred_fallthru
        _
    $region12: #{densenet_finetune_forward.41} parent=5 // pred_fallthru
      _
    %p124 = scmp.lt.s32.totalorder %s9, 2
    // Predicated region
    $region21: #{densenet_finetune_forward.41} parent=5 // pred_check
      %p125 = pneg %p124
    $region22: #{densenet_finetune_forward.41} parent=5 // pred_check_branch
      %127 = sbr.rel (%p125) target = $region24
    $region23: #{densenet_finetune_forward.41} parent=5 // pred_region
      // Predicated region
      $region25: #{densenet_finetune_forward.41} parent=23 // pred_check
        %p128 = pneg %p29
      $region26: #{densenet_finetune_forward.41} parent=23 // pred_check_branch
        %130 = sbr.rel (%p128) target = $region28
      $region27: #{densenet_finetune_forward.41} parent=23 // pred_region
        %p131 = scmp.lt.s32.totalorder %s9, 1
        %s132 = scalar_select %p131, %s9, 1
        %s133 = scalar_lea.vmem %s0, %s132
      $region28: #{densenet_finetune_forward.41} parent=23 // pred_fallthru
        _
    $region24: #{densenet_finetune_forward.41} parent=5 // pred_fallthru
      _
    %p134 = scmp.le.s32.totalorder 1, %s9
    %p135 = scmp.lt.s32.totalorder %s9, 3
    %p136 = pnand %p134, %p135
    %p137 = pneg %p136
    // Predicated region
    $region29: #{densenet_finetune_forward.41} parent=5 // pred_check
      _
    $region30: #{densenet_finetune_forward.41} parent=5 // pred_check_branch
      %139 = sbr.rel (%p136) target = $region32
    $region31: #{densenet_finetune_forward.41} parent=5 // pred_region
      %s140 = ssub.s32 %s9, 1
      %p141 = scmp.lt.s32.totalorder %s14, 1
      %s142 = scalar_select %p141, %s14, 1
      %s143 = scalar_lea.vmem %s0, %s142
      %p144 = pneg %p35
      %p145 = pneg %p32
      %p146 = pneg %p56
      %p147 = pneg %p53
      %p148 = pneg %p77
      %p149 = pneg %p74
      %p150 = pneg %p103
      %p151 = pneg %p100
      %p152 = scmp.lt.s32.totalorder %s14, 1
      %s153 = scalar_select %p152, %s14, 1
      %s154 = scalar_lea.vmem %s3, %s153
      %p155 = scmp.lt.s32.totalorder %s14, 1
      %s156 = scalar_select %p155, %s14, 1
      %s157 = scalar_lea.vmem %s0, %s156
      %p158 = scmp.lt.s32.totalorder %s14, 1
      %s159 = scalar_select %p158, %s14, 1
      %s160 = scalar_lea.vmem %s3, %s159
      %v161 = vld [vmem:[%s157] sm:$0x1]
      %v162 = vunpack.c.l.bf16 %v161
      %v163 = vld [vmem:[%s1] sm:$0x1]
      %v164 = vmul.f32 %v162, %v163
      %v165 = vld [vmem:[%s2] sm:$0x1]
      %v166 = vadd.f32 %v164, %v165
      %v167 = vmax.f32 %v166, 0.0
      %v168 = vadd.f32 %v167, 0.0
      %169 = vst [vmem:[%s160] sm:$0x1] %v168
      %p170 = scmp.lt.s32.totalorder %s14, 1
      %s171 = scalar_select %p170, %s14, 1
      %s172 = scalar_lea.vmem %s3, %s171
      // Predicated region
      $region33: #{densenet_finetune_forward.41} parent=31 // pred_check
        %p173 = pneg %p100
      $region34: #{densenet_finetune_forward.41} parent=31 // pred_check_branch
        %175 = sbr.rel (%p173) target = $region36
      $region35: #{densenet_finetune_forward.41} parent=31 // pred_region
        _
      $region36: #{densenet_finetune_forward.41} parent=31 // pred_fallthru
        _
    $region32: #{densenet_finetune_forward.41} parent=5 // pred_fallthru
      _
    %p176 = scmp.le.s32.totalorder 2, %s9
    // Predicated region
    $region37: #{densenet_finetune_forward.41} parent=5 // pred_check
      %p177 = pneg %p176
    $region38: #{densenet_finetune_forward.41} parent=5 // pred_check_branch
      %179 = sbr.rel (%p177) target = $region40
    $region39: #{densenet_finetune_forward.41} parent=5 // pred_region
      %s180 = ssub.s32 %s9, 2
      // Predicated region
      $region41: #{densenet_finetune_forward.41} parent=39 // pred_check
        %p181 = pneg %p106
      $region42: #{densenet_finetune_forward.41} parent=39 // pred_check_branch
        %183 = sbr.rel (%p181) target = $region44
      $region43: #{densenet_finetune_forward.41} parent=39 // pred_region
        %p184 = scmp.lt.s32.totalorder %s15, 1
        %s185 = scalar_select %p184, %s15, 1
        %s186 = scalar_lea.vmem %s3, %s185
      $region44: #{densenet_finetune_forward.41} parent=39 // pred_fallthru
        _
    $region40: #{densenet_finetune_forward.41} parent=5 // pred_fallthru
      _
  $region6: #{densenet_finetune_forward.41} parent=0 // loop_footer
    %s13 = sadd.s32 1, %s9
  $region7: #{densenet_finetune_forward.41} parent=0 // loop_footer_branch
    %8 = sbr.rel target = $region3
  $region8: #{densenet_finetune_forward.41} parent=0 // loop_exit
    _

</llo_original>
